<compile_context>
chip_gen: v7x
topology: tpu7x:2x2x1
jax: 0.10.0
libtpu: 0.0.40
codegen_flags: <defaults>
</compile_context>

<pallas_src>
import functools
import math
import re

import jax
import jax.numpy as jnp
from jax import lax
from jax.experimental import pallas as pl
from jax.experimental.pallas import tpu as pltpu


def clip_layer_kernel(x_ref, mask_ref, ln1_w, ln1_b, wqkv, bqkv, wo, bo,
                      ln2_w, ln2_b, w1, b1, w2, b2,
                      o_ref, qh_s, kh_s, vh_s, attn_s,
                      *, num_heads, bf16_transcendentals):
    f32 = jnp.float32
    bf16 = jnp.bfloat16
    x = x_ref[...]                          # (S, E) f32 (batch dim squeezed)
    S, E = x.shape
    H = num_heads
    Dh = E // H
    eps = 1e-5

    def layernorm(v, w_r, b_r):
        mu = jnp.mean(v, axis=-1, keepdims=True)
        var = jnp.mean((v - mu) ** 2, axis=-1, keepdims=True)
        return (v - mu) * lax.rsqrt(var + eps) * w_r[...] + b_r[...]

    # ---- attention branch ---------------------------------------------------
    residue = x
    h = layernorm(x, ln1_w, ln1_b)

    # 1/sqrt(Dh) is already folded into the q columns of wqkv/bqkv.
    qkv = jnp.dot(h.astype(bf16), wqkv[...],
                  preferred_element_type=f32) + bqkv[...]        # (S, 3E) f32
    qkv_b = qkv.astype(bf16)                # single fp32->bf16 pass over (S,3E)

    # Pack heads into (H, S, Dh) bf16 slabs for the batched MXU einsums.
    for hh in range(H):
        qh_s[hh] = qkv_b[:, 0 * E + hh * Dh: 0 * E + (hh + 1) * Dh]
        kh_s[hh] = qkv_b[:, 1 * E + hh * Dh: 1 * E + (hh + 1) * Dh]
        vh_s[hh] = qkv_b[:, 2 * E + hh * Dh: 2 * E + (hh + 1) * Dh]

    # Batched (over heads) attention on the MXU.
    s = jnp.einsum("hqd,hkd->hqk", qh_s[...], kh_s[...],
                   preferred_element_type=f32)                    # (H, S, S)
    s = s + mask_ref[...][None, :, :]       # causal bias built once in wrapper
    s = s - jnp.max(s, axis=-1, keepdims=True)
    if bf16_transcendentals:                # v6e / v7x: bf16 EUP
        p = jnp.exp(s.astype(bf16))
        denom = jnp.sum(p, axis=-1, keepdims=True, dtype=f32)
    else:                                   # v5e: no bf16 EUP/VPU path
        p_f = jnp.exp(s)
        denom = jnp.sum(p_f, axis=-1, keepdims=True)
        p = p_f.astype(bf16)
    o = jnp.einsum("hqk,hkd->hqd", p, vh_s[...],
                   preferred_element_type=f32)                    # (H, S, Dh)
    # Normalize AFTER the PV matmul: H*S*Dh multiplies instead of H*S*S.
    o = o * pl.reciprocal(denom, approx=True)

    # Merge heads into an (S, E) bf16 slab (halved vst traffic vs fp32).
    for hh in range(H):
        attn_s[:, hh * Dh:(hh + 1) * Dh] = o[hh].astype(bf16)

    attn = jnp.dot(attn_s[...], wo[...], preferred_element_type=f32) + bo[...]
    x2 = attn + residue

    # ---- MLP branch (QuickGELU) ---------------------------------------------
    residue2 = x2
    h2 = layernorm(x2, ln2_w, ln2_b)
    h2 = jnp.dot(h2.astype(bf16), w1[...],
                 preferred_element_type=f32) + b1[...]
    if bf16_transcendentals:                # bf16 sigmoid on v6e/v7x
        h2b = h2.astype(bf16)
        act = h2b * jax.nn.sigmoid(1.702 * h2b)
    else:
        act = (h2 * jax.nn.sigmoid(1.702 * h2)).astype(bf16)
    h2 = jnp.dot(act, w2[...], preferred_element_type=f32) + b2[...]

    o_ref[...] = (h2 + residue2).astype(o_ref.dtype)


def _tpu_generation():
    try:
        kind = jax.devices()[0].device_kind.lower()
    except Exception:
        return 0
    m = re.search(r"(\d+)", kind)
    return int(m.group(1)) if m else 0


def _vmem_budget_bytes():
    """Per-generation VMEM cap with ~20% headroom for compiler scratch."""
    cap = None
    try:
        cap = int(pltpu.get_tpu_info().vmem_capacity_bytes)
    except Exception:
        cap = None
    if not cap:
        cap = (64 << 20) if _tpu_generation() >= 7 else (128 << 20)
    return int(cap * 0.8)        # ~51 MiB on v7x, ~102 MiB on v5e/v6e


def prepare_params(params, num_heads):
    """One-time conversion of fp32 module params to kernel-ready form:
    matmul weights cached in bf16, 1/sqrt(Dh) folded into the q columns of the
    qkv projection, LayerNorm params and biases kept fp32.  clip_layer()
    expects the output of this function."""
    (ln1_w, ln1_b, wqkv, bqkv, wo, bo, ln2_w, ln2_b, w1, b1, w2, b2) = params
    E = wqkv.shape[0]
    Dh = E // num_heads
    scale = 1.0 / math.sqrt(Dh)
    col_scale = jnp.concatenate(
        [jnp.full((1, E), scale, jnp.float32),
         jnp.ones((1, 2 * E), jnp.float32)], axis=1)
    bf16 = jnp.bfloat16
    return [ln1_w, ln1_b,
            (wqkv * col_scale).astype(bf16), bqkv * col_scale,
            wo.astype(bf16), bo,
            ln2_w, ln2_b,
            w1.astype(bf16), b1,
            w2.astype(bf16), b2]


def clip_layer(x, kparams, num_heads):
    """x: (B, S, E) fp32.  kparams: output of prepare_params()."""
    B, S, E = x.shape
    assert E % num_heads == 0, "embedding dim must be divisible by num_heads"
    H = num_heads
    Dh = E // H

    # Pad S to a multiple of 128: lane-dense (H,S,S) scores + full MXU tiles.
    # The causal mask keeps padded keys invisible to real queries; padded rows
    # are sliced off below.
    S_pad = max(128, ((S + 127) // 128) * 128)
    x_in = jnp.pad(x, ((0, 0), (0, S_pad - S), (0, 0))) if S_pad != S else x

    # Causal additive mask built once (grid-invariant input), not per batch
    # step inside the kernel.
    row = lax.broadcasted_iota(jnp.int32, (S_pad, S_pad), 0)
    col = lax.broadcasted_iota(jnp.int32, (S_pad, S_pad), 1)
    mask_bias = jnp.where(col <= row, 0.0, -1e30).astype(jnp.float32)

    bf16_transcendentals = _tpu_generation() >= 6    # bf16 EUP on v6e/v7x only

    # Advisory cost estimate for XLA scheduling around the custom call.
    flops = int(B * (24 * S_pad * E * E + 4 * S_pad * S_pad * E))
    transcendentals = int(B * (H * S_pad * S_pad + 4 * S_pad * E))
    wbytes = sum(int(p.size) * p.dtype.itemsize for p in kparams)
    mbytes = int(mask_bias.size) * 4
    bytes_accessed = int(wbytes + mbytes + 2 * B * S_pad * E * 4)

    # VMEM accounting (weights counted double-buffered in case single
    # buffering is unavailable), clamped to the per-generation budget.
    inter_bytes = (3 * H * S_pad * S_pad * 4 + H * S_pad * S_pad * 2
                   + 3 * H * S_pad * Dh * 2 + S_pad * E * 2
                   + S_pad * 3 * E * 6 + S_pad * 4 * E * 6
                   + 6 * S_pad * E * 4)
    needed = 2 * (wbytes + mbytes) + 4 * S_pad * E * 4 + inter_bytes
    vmem_limit = int(min(max(needed, 32 << 20), _vmem_budget_bytes()))

    kernel = functools.partial(clip_layer_kernel, num_heads=H,
                               bf16_transcendentals=bf16_transcendentals)

    def _call(buffered_weights):
        def static_spec(arr):
            nd = arr.ndim
            kw = {}
            if buffered_weights:
                # Grid-invariant blocks: single-buffer them (saves ~wbytes).
                kw["pipeline_mode"] = pl.Buffered(1)
            return pl.BlockSpec(arr.shape, lambda b, _nd=nd: (0,) * _nd, **kw)

        return pl.pallas_call(
            kernel,
            out_shape=jax.ShapeDtypeStruct((B, S_pad, E), x.dtype),
            grid=(B,),
            in_specs=[pl.BlockSpec((pl.Squeezed(), S_pad, E),
                                   lambda b: (b, 0, 0)),
                      static_spec(mask_bias)]
                     + [static_spec(p) for p in kparams],
            out_specs=pl.BlockSpec((pl.Squeezed(), S_pad, E),
                                   lambda b: (b, 0, 0)),
            scratch_shapes=[
                pltpu.VMEM((H, S_pad, Dh), jnp.bfloat16),   # q heads
                pltpu.VMEM((H, S_pad, Dh), jnp.bfloat16),   # k heads
                pltpu.VMEM((H, S_pad, Dh), jnp.bfloat16),   # v heads
                pltpu.VMEM((S_pad, E), jnp.bfloat16),       # merged head outs
            ],
            compiler_params=pltpu.CompilerParams(
                dimension_semantics=("parallel",),
                vmem_limit_bytes=vmem_limit),
            cost_estimate=pl.CostEstimate(
                flops=flops, transcendentals=transcendentals,
                bytes_accessed=bytes_accessed),
        )(x_in, mask_bias, *kparams)

    try:
        out = _call(True)
    except Exception:
        # pipeline_mode=pl.Buffered(1) not supported on this jax build; the
        # grid-invariant index_maps still mean each block is fetched once.
        out = _call(False)

    return out[:, :S, :] if S_pad != S else out


def init_params(key, embd):
    """Deterministic synthetic fp32 parameters. Linear weights stored as
    (in_features, out_features); 1-D vectors reshaped to (1, N) for TPU."""
    ks = jax.random.split(key, 8)
    s = 0.02
    ln1_w = jnp.ones((1, embd), jnp.float32)
    ln1_b = jnp.zeros((1, embd), jnp.float32)
    wqkv = s * jax.random.normal(ks[0], (embd, 3 * embd), jnp.float32)
    bqkv = s * jax.random.normal(ks[1], (1, 3 * embd), jnp.float32)
    wo = s * jax.random.normal(ks[2], (embd, embd), jnp.float32)
    bo = s * jax.random.normal(ks[3], (1, embd), jnp.float32)
    ln2_w = jnp.ones((1, embd), jnp.float32)
    ln2_b = jnp.zeros((1, embd), jnp.float32)
    w1 = s * jax.random.normal(ks[4], (embd, 4 * embd), jnp.float32)
    b1 = s * jax.random.normal(ks[5], (1, 4 * embd), jnp.float32)
    w2 = s * jax.random.normal(ks[6], (4 * embd, embd), jnp.float32)
    b2 = s * jax.random.normal(ks[7], (1, embd), jnp.float32)
    return [ln1_w, ln1_b, wqkv, bqkv, wo, bo, ln2_w, ln2_b, w1, b1, w2, b2]


def clip_layer_ref(x, params, num_heads):
    """Pure-JAX fp32 reference for correctness checking."""
    (ln1_w, ln1_b, wqkv, bqkv, wo, bo, ln2_w, ln2_b, w1, b1, w2, b2) = params
    B, S, E = x.shape
    Dh = E // num_heads
    eps = 1e-5

    def ln(v, w, b):
        mu = jnp.mean(v, -1, keepdims=True)
        var = jnp.mean((v - mu) ** 2, -1, keepdims=True)
        return (v - mu) / jnp.sqrt(var + eps) * w + b

    res = x
    h = ln(x, ln1_w, ln1_b)
    qkv = h @ wqkv + bqkv
    q, k, v = jnp.split(qkv, 3, axis=-1)
    q = q.reshape(B, S, num_heads, Dh).transpose(0, 2, 1, 3)
    k = k.reshape(B, S, num_heads, Dh).transpose(0, 2, 1, 3)
    v = v.reshape(B, S, num_heads, Dh).transpose(0, 2, 1, 3)
    s = jnp.einsum("bhqd,bhkd->bhqk", q, k) / math.sqrt(Dh)
    mask = jnp.tril(jnp.ones((S, S), bool))
    s = jnp.where(mask, s, -jnp.inf)
    p = jax.nn.softmax(s, axis=-1)
    o = jnp.einsum("bhqk,bhkd->bhqd", p, v).transpose(0, 2, 1, 3).reshape(B, S, E)
    o = o @ wo + bo
    x2 = o + res
    res2 = x2
    h2 = ln(x2, ln2_w, ln2_b)
    h2 = h2 @ w1 + b1
    h2 = h2 * jax.nn.sigmoid(1.702 * h2)
    h2 = h2 @ w2 + b2
    return h2 + res2


if __name__ == "__main__":
    B, S, E, H = 2, 8, 32, 4
    key = jax.random.PRNGKey(0)
    kx, kp = jax.random.split(key)
    x = jax.random.normal(kx, (B, S, E), jnp.float32)
    params = init_params(kp, E)
    kparams = prepare_params(params, num_heads=H)   # one-time bf16 / scale fold

    out = clip_layer(x, kparams, num_heads=H)
    out = jax.block_until_ready(out)

    ref = clip_layer_ref(x, params, num_heads=H)
    assert out.shape == (B, S, E)
    # Kernel uses bf16 matmul operands (fp32 accumulation), bf16 cached
    # weights and approx reciprocal, so compare with a bf16-scale tolerance.
    assert jnp.allclose(out, ref, atol=2e-2, rtol=2e-2), "mismatch vs reference"

    print("KERNEL_OK")
</pallas_src>

<mosaic_0001>
module attributes {stable_mosaic.version = 11 : i64} {
  func.func @clip_layer_kernel(%arg0: i32, %arg1: memref<1x128x32xf32, #tpu.memory_space<vmem>>, %arg2: memref<128x128xf32, #tpu.memory_space<vmem>>, %arg3: memref<1x32xf32, #tpu.memory_space<vmem>>, %arg4: memref<1x32xf32, #tpu.memory_space<vmem>>, %arg5: memref<32x96xbf16, #tpu.memory_space<vmem>>, %arg6: memref<1x96xf32, #tpu.memory_space<vmem>>, %arg7: memref<32x32xbf16, #tpu.memory_space<vmem>>, %arg8: memref<1x32xf32, #tpu.memory_space<vmem>>, %arg9: memref<1x32xf32, #tpu.memory_space<vmem>>, %arg10: memref<1x32xf32, #tpu.memory_space<vmem>>, %arg11: memref<32x128xbf16, #tpu.memory_space<vmem>>, %arg12: memref<1x128xf32, #tpu.memory_space<vmem>>, %arg13: memref<128x32xbf16, #tpu.memory_space<vmem>>, %arg14: memref<1x32xf32, #tpu.memory_space<vmem>>, %arg15: memref<1x128x32xf32, #tpu.memory_space<vmem>>, %arg16: memref<4x128x8xbf16, #tpu.memory_space<vmem>>, %arg17: memref<4x128x8xbf16, #tpu.memory_space<vmem>>, %arg18: memref<4x128x8xbf16, #tpu.memory_space<vmem>>, %arg19: memref<128x32xbf16, #tpu.memory_space<vmem>>) attributes {dimension_semantics = [#tpu.dimension_semantics<parallel>], iteration_bounds = array<i64: 2>, scalar_prefetch = 0 : i64, scratch_operands = 4 : i64, tpu.core_type = #tpu.core_type<tc>, window_params = [{transform_indices = @transform_0, window_bounds = array<i64: 1, 128, 32>}, {pipeline_mode = #tpu.pipeline_mode<synchronous>, transform_indices = @transform_1, window_bounds = array<i64: 128, 128>}, {pipeline_mode = #tpu.pipeline_mode<synchronous>, transform_indices = @transform_2, window_bounds = array<i64: 1, 32>}, {pipeline_mode = #tpu.pipeline_mode<synchronous>, transform_indices = @transform_3, window_bounds = array<i64: 1, 32>}, {pipeline_mode = #tpu.pipeline_mode<synchronous>, transform_indices = @transform_4, window_bounds = array<i64: 32, 96>}, {pipeline_mode = #tpu.pipeline_mode<synchronous>, transform_indices = @transform_5, window_bounds = array<i64: 1, 96>}, {pipeline_mode = #tpu.pipeline_mode<synchronous>, transform_indices = @transform_6, window_bounds = array<i64: 32, 32>}, {pipeline_mode = #tpu.pipeline_mode<synchronous>, transform_indices = @transform_7, window_bounds = array<i64: 1, 32>}, {pipeline_mode = #tpu.pipeline_mode<synchronous>, transform_indices = @transform_8, window_bounds = array<i64: 1, 32>}, {pipeline_mode = #tpu.pipeline_mode<synchronous>, transform_indices = @transform_9, window_bounds = array<i64: 1, 32>}, {pipeline_mode = #tpu.pipeline_mode<synchronous>, transform_indices = @transform_10, window_bounds = array<i64: 32, 128>}, {pipeline_mode = #tpu.pipeline_mode<synchronous>, transform_indices = @transform_11, window_bounds = array<i64: 1, 128>}, {pipeline_mode = #tpu.pipeline_mode<synchronous>, transform_indices = @transform_12, window_bounds = array<i64: 128, 32>}, {pipeline_mode = #tpu.pipeline_mode<synchronous>, transform_indices = @transform_13, window_bounds = array<i64: 1, 32>}, {transform_indices = @transform_14, window_bounds = array<i64: 1, 128, 32>}]} {
    %c0 = arith.constant 0 : index
    %c0_0 = arith.constant 0 : index
    %c0_1 = arith.constant 0 : index
    %0 = vector.load %arg1[%c0, %c0_0, %c0_1] : memref<1x128x32xf32, #tpu.memory_space<vmem>>, vector<1x128x32xf32>
    %1 = vector.shape_cast %0 : vector<1x128x32xf32> to vector<128x32xf32>
    %cst = arith.constant dense<0.000000e+00> : vector<128xf32>
    %2 = vector.multi_reduction <add>, %1, %cst [1] : vector<128x32xf32> to vector<128xf32>
    %3 = vector.shape_cast %2 : vector<128xf32> to vector<128x1xf32>
    %cst_2 = arith.constant 3.200000e+01 : f32
    %4 = vector.broadcast %cst_2 : f32 to vector<128x1xf32>
    %5 = arith.divf %3, %4 : vector<128x1xf32>
    %6 = vector.broadcast %5 : vector<128x1xf32> to vector<128x32xf32>
    %7 = arith.subf %1, %6 : vector<128x32xf32>
    %8 = arith.mulf %7, %7 : vector<128x32xf32>
    %cst_3 = arith.constant dense<0.000000e+00> : vector<128xf32>
    %9 = vector.multi_reduction <add>, %8, %cst_3 [1] : vector<128x32xf32> to vector<128xf32>
    %10 = vector.shape_cast %9 : vector<128xf32> to vector<128x1xf32>
    %cst_4 = arith.constant 3.200000e+01 : f32
    %11 = vector.broadcast %cst_4 : f32 to vector<128x1xf32>
    %12 = arith.divf %10, %11 : vector<128x1xf32>
    %13 = vector.broadcast %5 : vector<128x1xf32> to vector<128x32xf32>
    %14 = arith.subf %1, %13 : vector<128x32xf32>
    %cst_5 = arith.constant 9.99999974E-6 : f32
    %15 = vector.broadcast %cst_5 : f32 to vector<128x1xf32>
    %16 = arith.addf %12, %15 : vector<128x1xf32>
    %17 = math.rsqrt %16 : vector<128x1xf32>
    %18 = vector.broadcast %17 : vector<128x1xf32> to vector<128x32xf32>
    %19 = arith.mulf %14, %18 : vector<128x32xf32>
    %c0_6 = arith.constant 0 : index
    %c0_7 = arith.constant 0 : index
    %20 = vector.load %arg3[%c0_6, %c0_7] : memref<1x32xf32, #tpu.memory_space<vmem>>, vector<1x32xf32>
    %21 = vector.broadcast %20 : vector<1x32xf32> to vector<128x32xf32>
    %22 = arith.mulf %19, %21 : vector<128x32xf32>
    %c0_8 = arith.constant 0 : index
    %c0_9 = arith.constant 0 : index
    %23 = vector.load %arg4[%c0_8, %c0_9] : memref<1x32xf32, #tpu.memory_space<vmem>>, vector<1x32xf32>
    %24 = vector.broadcast %23 : vector<1x32xf32> to vector<128x32xf32>
    %25 = arith.addf %22, %24 : vector<128x32xf32>
    %26 = arith.truncf %25 : vector<128x32xf32> to vector<128x32xbf16>
    %c0_10 = arith.constant 0 : index
    %c0_11 = arith.constant 0 : index
    %27 = vector.load %arg5[%c0_10, %c0_11] : memref<32x96xbf16, #tpu.memory_space<vmem>>, vector<32x96xbf16>
    %cst_12 = arith.constant dense<0.000000e+00> : vector<128x96xf32>
    %28 = tpu.matmul %26, %27, %cst_12 {dimension_numbers = #tpu.dot_dimension_numbers<[1], [0], [0], [1], [0, 0, 1, 1], [], []>} : vector<128x32xbf16>, vector<32x96xbf16>, vector<128x96xf32> -> vector<128x96xf32>
    %c0_13 = arith.constant 0 : index
    %c0_14 = arith.constant 0 : index
    %29 = vector.load %arg6[%c0_13, %c0_14] : memref<1x96xf32, #tpu.memory_space<vmem>>, vector<1x96xf32>
    %30 = vector.broadcast %29 : vector<1x96xf32> to vector<128x96xf32>
    %31 = arith.addf %28, %30 : vector<128x96xf32>
    %32 = arith.truncf %31 : vector<128x96xf32> to vector<128x96xbf16>
    %33 = vector.extract_strided_slice %32 {offsets = [0, 0], sizes = [128, 8], strides = [1, 1]} : vector<128x96xbf16> to vector<128x8xbf16>
    %c0_15 = arith.constant 0 : index
    %c0_16 = arith.constant 0 : index
    %c0_17 = arith.constant 0 : index
    %34 = vector.load %arg16[%c0_15, %c0_16, %c0_17] : memref<4x128x8xbf16, #tpu.memory_space<vmem>>, vector<1x128x8xbf16>
    %35 = vector.shape_cast %34 : vector<1x128x8xbf16> to vector<128x8xbf16>
    %36 = vector.shape_cast %33 : vector<128x8xbf16> to vector<1x128x8xbf16>
    tpu.vector_store %arg16[%c0_15, %c0_16, %c0_17], %36 {strides = array<i32>} : memref<4x128x8xbf16, #tpu.memory_space<vmem>>, vector<1x128x8xbf16>,
    %37 = vector.extract_strided_slice %32 {offsets = [0, 32], sizes = [128, 8], strides = [1, 1]} : vector<128x96xbf16> to vector<128x8xbf16>
    %c0_18 = arith.constant 0 : index
    %c0_19 = arith.constant 0 : index
    %c0_20 = arith.constant 0 : index
    %38 = vector.load %arg17[%c0_18, %c0_19, %c0_20] : memref<4x128x8xbf16, #tpu.memory_space<vmem>>, vector<1x128x8xbf16>
    %39 = vector.shape_cast %38 : vector<1x128x8xbf16> to vector<128x8xbf16>
    %40 = vector.shape_cast %37 : vector<128x8xbf16> to vector<1x128x8xbf16>
    tpu.vector_store %arg17[%c0_18, %c0_19, %c0_20], %40 {strides = array<i32>} : memref<4x128x8xbf16, #tpu.memory_space<vmem>>, vector<1x128x8xbf16>,
    %41 = vector.extract_strided_slice %32 {offsets = [0, 64], sizes = [128, 8], strides = [1, 1]} : vector<128x96xbf16> to vector<128x8xbf16>
    %c0_21 = arith.constant 0 : index
    %c0_22 = arith.constant 0 : index
    %c0_23 = arith.constant 0 : index
    %42 = vector.load %arg18[%c0_21, %c0_22, %c0_23] : memref<4x128x8xbf16, #tpu.memory_space<vmem>>, vector<1x128x8xbf16>
    %43 = vector.shape_cast %42 : vector<1x128x8xbf16> to vector<128x8xbf16>
    %44 = vector.shape_cast %41 : vector<128x8xbf16> to vector<1x128x8xbf16>
    tpu.vector_store %arg18[%c0_21, %c0_22, %c0_23], %44 {strides = array<i32>} : memref<4x128x8xbf16, #tpu.memory_space<vmem>>, vector<1x128x8xbf16>,
    %45 = vector.extract_strided_slice %32 {offsets = [0, 8], sizes = [128, 8], strides = [1, 1]} : vector<128x96xbf16> to vector<128x8xbf16>
    %c1 = arith.constant 1 : index
    %c0_24 = arith.constant 0 : index
    %c0_25 = arith.constant 0 : index
    %46 = vector.load %arg16[%c1, %c0_24, %c0_25] : memref<4x128x8xbf16, #tpu.memory_space<vmem>>, vector<1x128x8xbf16>
    %47 = vector.shape_cast %46 : vector<1x128x8xbf16> to vector<128x8xbf16>
    %48 = vector.shape_cast %45 : vector<128x8xbf16> to vector<1x128x8xbf16>
    tpu.vector_store %arg16[%c1, %c0_24, %c0_25], %48 {strides = array<i32>} : memref<4x128x8xbf16, #tpu.memory_space<vmem>>, vector<1x128x8xbf16>,
    %49 = vector.extract_strided_slice %32 {offsets = [0, 40], sizes = [128, 8], strides = [1, 1]} : vector<128x96xbf16> to vector<128x8xbf16>
    %c1_26 = arith.constant 1 : index
    %c0_27 = arith.constant 0 : index
    %c0_28 = arith.constant 0 : index
    %50 = vector.load %arg17[%c1_26, %c0_27, %c0_28] : memref<4x128x8xbf16, #tpu.memory_space<vmem>>, vector<1x128x8xbf16>
    %51 = vector.shape_cast %50 : vector<1x128x8xbf16> to vector<128x8xbf16>
    %52 = vector.shape_cast %49 : vector<128x8xbf16> to vector<1x128x8xbf16>
    tpu.vector_store %arg17[%c1_26, %c0_27, %c0_28], %52 {strides = array<i32>} : memref<4x128x8xbf16, #tpu.memory_space<vmem>>, vector<1x128x8xbf16>,
    %53 = vector.extract_strided_slice %32 {offsets = [0, 72], sizes = [128, 8], strides = [1, 1]} : vector<128x96xbf16> to vector<128x8xbf16>
    %c1_29 = arith.constant 1 : index
    %c0_30 = arith.constant 0 : index
    %c0_31 = arith.constant 0 : index
    %54 = vector.load %arg18[%c1_29, %c0_30, %c0_31] : memref<4x128x8xbf16, #tpu.memory_space<vmem>>, vector<1x128x8xbf16>
    %55 = vector.shape_cast %54 : vector<1x128x8xbf16> to vector<128x8xbf16>
    %56 = vector.shape_cast %53 : vector<128x8xbf16> to vector<1x128x8xbf16>
    tpu.vector_store %arg18[%c1_29, %c0_30, %c0_31], %56 {strides = array<i32>} : memref<4x128x8xbf16, #tpu.memory_space<vmem>>, vector<1x128x8xbf16>,
    %57 = vector.extract_strided_slice %32 {offsets = [0, 16], sizes = [128, 8], strides = [1, 1]} : vector<128x96xbf16> to vector<128x8xbf16>
    %c2 = arith.constant 2 : index
    %c0_32 = arith.constant 0 : index
    %c0_33 = arith.constant 0 : index
    %58 = vector.load %arg16[%c2, %c0_32, %c0_33] : memref<4x128x8xbf16, #tpu.memory_space<vmem>>, vector<1x128x8xbf16>
    %59 = vector.shape_cast %58 : vector<1x128x8xbf16> to vector<128x8xbf16>
    %60 = vector.shape_cast %57 : vector<128x8xbf16> to vector<1x128x8xbf16>
    tpu.vector_store %arg16[%c2, %c0_32, %c0_33], %60 {strides = array<i32>} : memref<4x128x8xbf16, #tpu.memory_space<vmem>>, vector<1x128x8xbf16>,
    %61 = vector.extract_strided_slice %32 {offsets = [0, 48], sizes = [128, 8], strides = [1, 1]} : vector<128x96xbf16> to vector<128x8xbf16>
    %c2_34 = arith.constant 2 : index
    %c0_35 = arith.constant 0 : index
    %c0_36 = arith.constant 0 : index
    %62 = vector.load %arg17[%c2_34, %c0_35, %c0_36] : memref<4x128x8xbf16, #tpu.memory_space<vmem>>, vector<1x128x8xbf16>
    %63 = vector.shape_cast %62 : vector<1x128x8xbf16> to vector<128x8xbf16>
    %64 = vector.shape_cast %61 : vector<128x8xbf16> to vector<1x128x8xbf16>
    tpu.vector_store %arg17[%c2_34, %c0_35, %c0_36], %64 {strides = array<i32>} : memref<4x128x8xbf16, #tpu.memory_space<vmem>>, vector<1x128x8xbf16>,
    %65 = vector.extract_strided_slice %32 {offsets = [0, 80], sizes = [128, 8], strides = [1, 1]} : vector<128x96xbf16> to vector<128x8xbf16>
    %c2_37 = arith.constant 2 : index
    %c0_38 = arith.constant 0 : index
    %c0_39 = arith.constant 0 : index
    %66 = vector.load %arg18[%c2_37, %c0_38, %c0_39] : memref<4x128x8xbf16, #tpu.memory_space<vmem>>, vector<1x128x8xbf16>
    %67 = vector.shape_cast %66 : vector<1x128x8xbf16> to vector<128x8xbf16>
    %68 = vector.shape_cast %65 : vector<128x8xbf16> to vector<1x128x8xbf16>
    tpu.vector_store %arg18[%c2_37, %c0_38, %c0_39], %68 {strides = array<i32>} : memref<4x128x8xbf16, #tpu.memory_space<vmem>>, vector<1x128x8xbf16>,
    %69 = vector.extract_strided_slice %32 {offsets = [0, 24], sizes = [128, 8], strides = [1, 1]} : vector<128x96xbf16> to vector<128x8xbf16>
    %c3 = arith.constant 3 : index
    %c0_40 = arith.constant 0 : index
    %c0_41 = arith.constant 0 : index
    %70 = vector.load %arg16[%c3, %c0_40, %c0_41] : memref<4x128x8xbf16, #tpu.memory_space<vmem>>, vector<1x128x8xbf16>
    %71 = vector.shape_cast %70 : vector<1x128x8xbf16> to vector<128x8xbf16>
    %72 = vector.shape_cast %69 : vector<128x8xbf16> to vector<1x128x8xbf16>
    tpu.vector_store %arg16[%c3, %c0_40, %c0_41], %72 {strides = array<i32>} : memref<4x128x8xbf16, #tpu.memory_space<vmem>>, vector<1x128x8xbf16>,
    %73 = vector.extract_strided_slice %32 {offsets = [0, 56], sizes = [128, 8], strides = [1, 1]} : vector<128x96xbf16> to vector<128x8xbf16>
    %c3_42 = arith.constant 3 : index
    %c0_43 = arith.constant 0 : index
    %c0_44 = arith.constant 0 : index
    %74 = vector.load %arg17[%c3_42, %c0_43, %c0_44] : memref<4x128x8xbf16, #tpu.memory_space<vmem>>, vector<1x128x8xbf16>
    %75 = vector.shape_cast %74 : vector<1x128x8xbf16> to vector<128x8xbf16>
    %76 = vector.shape_cast %73 : vector<128x8xbf16> to vector<1x128x8xbf16>
    tpu.vector_store %arg17[%c3_42, %c0_43, %c0_44], %76 {strides = array<i32>} : memref<4x128x8xbf16, #tpu.memory_space<vmem>>, vector<1x128x8xbf16>,
    %77 = vector.extract_strided_slice %32 {offsets = [0, 88], sizes = [128, 8], strides = [1, 1]} : vector<128x96xbf16> to vector<128x8xbf16>
    %c3_45 = arith.constant 3 : index
    %c0_46 = arith.constant 0 : index
    %c0_47 = arith.constant 0 : index
    %78 = vector.load %arg18[%c3_45, %c0_46, %c0_47] : memref<4x128x8xbf16, #tpu.memory_space<vmem>>, vector<1x128x8xbf16>
    %79 = vector.shape_cast %78 : vector<1x128x8xbf16> to vector<128x8xbf16>
    %80 = vector.shape_cast %77 : vector<128x8xbf16> to vector<1x128x8xbf16>
    tpu.vector_store %arg18[%c3_45, %c0_46, %c0_47], %80 {strides = array<i32>} : memref<4x128x8xbf16, #tpu.memory_space<vmem>>, vector<1x128x8xbf16>,
    %c0_48 = arith.constant 0 : index
    %c0_49 = arith.constant 0 : index
    %c0_50 = arith.constant 0 : index
    %81 = vector.load %arg16[%c0_48, %c0_49, %c0_50] : memref<4x128x8xbf16, #tpu.memory_space<vmem>>, vector<4x128x8xbf16>
    %c0_51 = arith.constant 0 : index
    %c0_52 = arith.constant 0 : index
    %c0_53 = arith.constant 0 : index
    %82 = vector.load %arg17[%c0_51, %c0_52, %c0_53] : memref<4x128x8xbf16, #tpu.memory_space<vmem>>, vector<4x128x8xbf16>
    "tpu.trace_start"() <{level = 10 : i32, message = "hqd,hkd->hqk"}> : () -> ()
    %cst_54 = arith.constant dense<0.000000e+00> : vector<4x128x128xf32>
    %83 = tpu.matmul %81, %82, %cst_54 {dimension_numbers = #tpu.dot_dimension_numbers<[2], [2], [1], [1], [0, 0, 0, 1, 1, 1], [0], [0]>} : vector<4x128x8xbf16>, vector<4x128x8xbf16>, vector<4x128x128xf32> -> vector<4x128x128xf32>
    "tpu.trace_stop"() : () -> ()
    %c0_55 = arith.constant 0 : index
    %c0_56 = arith.constant 0 : index
    %84 = vector.load %arg2[%c0_55, %c0_56] : memref<128x128xf32, #tpu.memory_space<vmem>>, vector<128x128xf32>
    %85 = vector.shape_cast %84 : vector<128x128xf32> to vector<1x128x128xf32>
    %86 = vector.broadcast %85 : vector<1x128x128xf32> to vector<4x128x128xf32>
    %87 = arith.addf %83, %86 : vector<4x128x128xf32>
    %cst_57 = arith.constant dense<0xFF800000> : vector<4x128xf32>
    %88 = vector.multi_reduction <maximumf>, %87, %cst_57 [2] : vector<4x128x128xf32> to vector<4x128xf32>
    %89 = vector.shape_cast %88 : vector<4x128xf32> to vector<4x128x1xf32>
    %90 = vector.broadcast %89 : vector<4x128x1xf32> to vector<4x128x128xf32>
    %91 = arith.subf %87, %90 : vector<4x128x128xf32>
    %92 = math.exp %91 : vector<4x128x128xf32>
    %cst_58 = arith.constant dense<0.000000e+00> : vector<4x128xf32>
    %93 = vector.multi_reduction <add>, %92, %cst_58 [2] : vector<4x128x128xf32> to vector<4x128xf32>
    %94 = vector.shape_cast %93 : vector<4x128xf32> to vector<4x128x1xf32>
    %95 = arith.truncf %92 : vector<4x128x128xf32> to vector<4x128x128xbf16>
    %c0_59 = arith.constant 0 : index
    %c0_60 = arith.constant 0 : index
    %c0_61 = arith.constant 0 : index
    %96 = vector.load %arg18[%c0_59, %c0_60, %c0_61] : memref<4x128x8xbf16, #tpu.memory_space<vmem>>, vector<4x128x8xbf16>
    "tpu.trace_start"() <{level = 10 : i32, message = "hqk,hkd->hqd"}> : () -> ()
    %cst_62 = arith.constant dense<0.000000e+00> : vector<4x128x8xf32>
    %97 = tpu.matmul %95, %96, %cst_62 {dimension_numbers = #tpu.dot_dimension_numbers<[2], [1], [1], [2], [0, 0, 0, 1, 1, 2], [0], [0]>} : vector<4x128x128xbf16>, vector<4x128x8xbf16>, vector<4x128x8xf32> -> vector<4x128x8xf32>
    "tpu.trace_stop"() : () -> ()
    %98 = tpu.reciprocal %94 {approx = true} : vector<4x128x1xf32> -> vector<4x128x1xf32>
    %99 = vector.broadcast %98 : vector<4x128x1xf32> to vector<4x128x8xf32>
    %100 = arith.mulf %97, %99 : vector<4x128x8xf32>
    %101 = vector.extract_strided_slice %100 {offsets = [0, 0, 0], sizes = [1, 128, 8], strides = [1, 1, 1]} : vector<4x128x8xf32> to vector<1x128x8xf32>
    %102 = vector.shape_cast %101 : vector<1x128x8xf32> to vector<128x8xf32>
    %103 = arith.truncf %102 : vector<128x8xf32> to vector<128x8xbf16>
    %c0_63 = arith.constant 0 : index
    %c0_64 = arith.constant 0 : index
    %104 = vector.load %arg19[%c0_63, %c0_64] : memref<128x32xbf16, #tpu.memory_space<vmem>>, vector<128x8xbf16>
    tpu.vector_store %arg19[%c0_63, %c0_64], %103 {strides = array<i32>} : memref<128x32xbf16, #tpu.memory_space<vmem>>, vector<128x8xbf16>,
    %105 = vector.extract_strided_slice %100 {offsets = [1, 0, 0], sizes = [1, 128, 8], strides = [1, 1, 1]} : vector<4x128x8xf32> to vector<1x128x8xf32>
    %106 = vector.shape_cast %105 : vector<1x128x8xf32> to vector<128x8xf32>
    %107 = arith.truncf %106 : vector<128x8xf32> to vector<128x8xbf16>
    %c0_65 = arith.constant 0 : index
    %c8 = arith.constant 8 : index
    %108 = vector.load %arg19[%c0_65, %c8] : memref<128x32xbf16, #tpu.memory_space<vmem>>, vector<128x8xbf16>
    tpu.vector_store %arg19[%c0_65, %c8], %107 {strides = array<i32>} : memref<128x32xbf16, #tpu.memory_space<vmem>>, vector<128x8xbf16>,
    %109 = vector.extract_strided_slice %100 {offsets = [2, 0, 0], sizes = [1, 128, 8], strides = [1, 1, 1]} : vector<4x128x8xf32> to vector<1x128x8xf32>
    %110 = vector.shape_cast %109 : vector<1x128x8xf32> to vector<128x8xf32>
    %111 = arith.truncf %110 : vector<128x8xf32> to vector<128x8xbf16>
    %c0_66 = arith.constant 0 : index
    %c16 = arith.constant 16 : index
    %112 = vector.load %arg19[%c0_66, %c16] : memref<128x32xbf16, #tpu.memory_space<vmem>>, vector<128x8xbf16>
    tpu.vector_store %arg19[%c0_66, %c16], %111 {strides = array<i32>} : memref<128x32xbf16, #tpu.memory_space<vmem>>, vector<128x8xbf16>,
    %113 = vector.extract_strided_slice %100 {offsets = [3, 0, 0], sizes = [1, 128, 8], strides = [1, 1, 1]} : vector<4x128x8xf32> to vector<1x128x8xf32>
    %114 = vector.shape_cast %113 : vector<1x128x8xf32> to vector<128x8xf32>
    %115 = arith.truncf %114 : vector<128x8xf32> to vector<128x8xbf16>
    %c0_67 = arith.constant 0 : index
    %c24 = arith.constant 24 : index
    %116 = vector.load %arg19[%c0_67, %c24] : memref<128x32xbf16, #tpu.memory_space<vmem>>, vector<128x8xbf16>
    tpu.vector_store %arg19[%c0_67, %c24], %115 {strides = array<i32>} : memref<128x32xbf16, #tpu.memory_space<vmem>>, vector<128x8xbf16>,
    %c0_68 = arith.constant 0 : index
    %c0_69 = arith.constant 0 : index
    %117 = vector.load %arg19[%c0_68, %c0_69] : memref<128x32xbf16, #tpu.memory_space<vmem>>, vector<128x32xbf16>
    %c0_70 = arith.constant 0 : index
    %c0_71 = arith.constant 0 : index
    %118 = vector.load %arg7[%c0_70, %c0_71] : memref<32x32xbf16, #tpu.memory_space<vmem>>, vector<32x32xbf16>
    %cst_72 = arith.constant dense<0.000000e+00> : vector<128x32xf32>
    %119 = tpu.matmul %117, %118, %cst_72 {dimension_numbers = #tpu.dot_dimension_numbers<[1], [0], [0], [1], [0, 0, 1, 1], [], []>} : vector<128x32xbf16>, vector<32x32xbf16>, vector<128x32xf32> -> vector<128x32xf32>
    %c0_73 = arith.constant 0 : index
    %c0_74 = arith.constant 0 : index
    %120 = vector.load %arg8[%c0_73, %c0_74] : memref<1x32xf32, #tpu.memory_space<vmem>>, vector<1x32xf32>
    %121 = vector.broadcast %120 : vector<1x32xf32> to vector<128x32xf32>
    %122 = arith.addf %119, %121 : vector<128x32xf32>
    %123 = arith.addf %122, %1 : vector<128x32xf32>
    %cst_75 = arith.constant dense<0.000000e+00> : vector<128xf32>
    %124 = vector.multi_reduction <add>, %123, %cst_75 [1] : vector<128x32xf32> to vector<128xf32>
    %125 = vector.shape_cast %124 : vector<128xf32> to vector<128x1xf32>
    %cst_76 = arith.constant 3.200000e+01 : f32
    %126 = vector.broadcast %cst_76 : f32 to vector<128x1xf32>
    %127 = arith.divf %125, %126 : vector<128x1xf32>
    %128 = vector.broadcast %127 : vector<128x1xf32> to vector<128x32xf32>
    %129 = arith.subf %123, %128 : vector<128x32xf32>
    %130 = arith.mulf %129, %129 : vector<128x32xf32>
    %cst_77 = arith.constant dense<0.000000e+00> : vector<128xf32>
    %131 = vector.multi_reduction <add>, %130, %cst_77 [1] : vector<128x32xf32> to vector<128xf32>
    %132 = vector.shape_cast %131 : vector<128xf32> to vector<128x1xf32>
    %cst_78 = arith.constant 3.200000e+01 : f32
    %133 = vector.broadcast %cst_78 : f32 to vector<128x1xf32>
    %134 = arith.divf %132, %133 : vector<128x1xf32>
    %135 = vector.broadcast %127 : vector<128x1xf32> to vector<128x32xf32>
    %136 = arith.subf %123, %135 : vector<128x32xf32>
    %cst_79 = arith.constant 9.99999974E-6 : f32
    %137 = vector.broadcast %cst_79 : f32 to vector<128x1xf32>
    %138 = arith.addf %134, %137 : vector<128x1xf32>
    %139 = math.rsqrt %138 : vector<128x1xf32>
    %140 = vector.broadcast %139 : vector<128x1xf32> to vector<128x32xf32>
    %141 = arith.mulf %136, %140 : vector<128x32xf32>
    %c0_80 = arith.constant 0 : index
    %c0_81 = arith.constant 0 : index
    %142 = vector.load %arg9[%c0_80, %c0_81] : memref<1x32xf32, #tpu.memory_space<vmem>>, vector<1x32xf32>
    %143 = vector.broadcast %142 : vector<1x32xf32> to vector<128x32xf32>
    %144 = arith.mulf %141, %143 : vector<128x32xf32>
    %c0_82 = arith.constant 0 : index
    %c0_83 = arith.constant 0 : index
    %145 = vector.load %arg10[%c0_82, %c0_83] : memref<1x32xf32, #tpu.memory_space<vmem>>, vector<1x32xf32>
    %146 = vector.broadcast %145 : vector<1x32xf32> to vector<128x32xf32>
    %147 = arith.addf %144, %146 : vector<128x32xf32>
    %148 = arith.truncf %147 : vector<128x32xf32> to vector<128x32xbf16>
    %c0_84 = arith.constant 0 : index
    %c0_85 = arith.constant 0 : index
    %149 = vector.load %arg11[%c0_84, %c0_85] : memref<32x128xbf16, #tpu.memory_space<vmem>>, vector<32x128xbf16>
    %cst_86 = arith.constant dense<0.000000e+00> : vector<128x128xf32>
    %150 = tpu.matmul %148, %149, %cst_86 {dimension_numbers = #tpu.dot_dimension_numbers<[1], [0], [0], [1], [0, 0, 1, 1], [], []>} : vector<128x32xbf16>, vector<32x128xbf16>, vector<128x128xf32> -> vector<128x128xf32>
    %c0_87 = arith.constant 0 : index
    %c0_88 = arith.constant 0 : index
    %151 = vector.load %arg12[%c0_87, %c0_88] : memref<1x128xf32, #tpu.memory_space<vmem>>, vector<1x128xf32>
    %152 = vector.broadcast %151 : vector<1x128xf32> to vector<128x128xf32>
    %153 = arith.addf %150, %152 : vector<128x128xf32>
    %cst_89 = arith.constant 1.702000e+00 : f32
    %154 = vector.broadcast %cst_89 : f32 to vector<128x128xf32>
    %155 = arith.mulf %154, %153 : vector<128x128xf32>
    %156 = arith.negf %155 : vector<128x128xf32>
    %157 = math.exp %156 : vector<128x128xf32>
    %cst_90 = arith.constant 1.000000e+00 : f32
    %158 = vector.broadcast %cst_90 : f32 to vector<128x128xf32>
    %159 = arith.addf %158, %157 : vector<128x128xf32>
    %160 = arith.divf %158, %159 : vector<128x128xf32>
    %161 = arith.mulf %153, %160 : vector<128x128xf32>
    %162 = arith.truncf %161 : vector<128x128xf32> to vector<128x128xbf16>
    %c0_91 = arith.constant 0 : index
    %c0_92 = arith.constant 0 : index
    %163 = vector.load %arg13[%c0_91, %c0_92] : memref<128x32xbf16, #tpu.memory_space<vmem>>, vector<128x32xbf16>
    %cst_93 = arith.constant dense<0.000000e+00> : vector<128x32xf32>
    %164 = tpu.matmul %162, %163, %cst_93 {dimension_numbers = #tpu.dot_dimension_numbers<[1], [0], [0], [1], [0, 0, 1, 1], [], []>} : vector<128x128xbf16>, vector<128x32xbf16>, vector<128x32xf32> -> vector<128x32xf32>
    %c0_94 = arith.constant 0 : index
    %c0_95 = arith.constant 0 : index
    %165 = vector.load %arg14[%c0_94, %c0_95] : memref<1x32xf32, #tpu.memory_space<vmem>>, vector<1x32xf32>
    %166 = vector.broadcast %165 : vector<1x32xf32> to vector<128x32xf32>
    %167 = arith.addf %164, %166 : vector<128x32xf32>
    %168 = arith.addf %167, %123 : vector<128x32xf32>
    %c0_96 = arith.constant 0 : index
    %c0_97 = arith.constant 0 : index
    %c0_98 = arith.constant 0 : index
    %169 = vector.load %arg15[%c0_96, %c0_97, %c0_98] : memref<1x128x32xf32, #tpu.memory_space<vmem>>, vector<1x128x32xf32>
    %170 = vector.shape_cast %169 : vector<1x128x32xf32> to vector<128x32xf32>
    %171 = vector.shape_cast %168 : vector<128x32xf32> to vector<1x128x32xf32>
    tpu.vector_store %arg15[%c0_96, %c0_97, %c0_98], %171 {strides = array<i32>} : memref<1x128x32xf32, #tpu.memory_space<vmem>>, vector<1x128x32xf32>,
    return
  }
  func.func @transform_0(%arg0: i32) -> (i32, i32, i32) {
    %c0_i32 = arith.constant 0 : i32
    %c0_i32_0 = arith.constant 0 : i32
    %c0_i32_1 = arith.constant 0 : i32
    return %arg0, %c0_i32, %c0_i32_0 : i32, i32, i32
  }
  func.func @transform_1(%arg0: i32) -> (i32, i32) {
    %c0_i32 = arith.constant 0 : i32
    %c0_i32_0 = arith.constant 0 : i32
    %c0_i32_1 = arith.constant 0 : i32
    return %c0_i32, %c0_i32_0 : i32, i32
  }
  func.func @transform_2(%arg0: i32) -> (i32, i32) {
    %c0_i32 = arith.constant 0 : i32
    %c0_i32_0 = arith.constant 0 : i32
    %c0_i32_1 = arith.constant 0 : i32
    return %c0_i32, %c0_i32_0 : i32, i32
  }
  func.func @transform_3(%arg0: i32) -> (i32, i32) {
    %c0_i32 = arith.constant 0 : i32
    %c0_i32_0 = arith.constant 0 : i32
    %c0_i32_1 = arith.constant 0 : i32
    return %c0_i32, %c0_i32_0 : i32, i32
  }
  func.func @transform_4(%arg0: i32) -> (i32, i32) {
    %c0_i32 = arith.constant 0 : i32
    %c0_i32_0 = arith.constant 0 : i32
    %c0_i32_1 = arith.constant 0 : i32
    return %c0_i32, %c0_i32_0 : i32, i32
  }
  func.func @transform_5(%arg0: i32) -> (i32, i32) {
    %c0_i32 = arith.constant 0 : i32
    %c0_i32_0 = arith.constant 0 : i32
    %c0_i32_1 = arith.constant 0 : i32
    return %c0_i32, %c0_i32_0 : i32, i32
  }
  func.func @transform_6(%arg0: i32) -> (i32, i32) {
    %c0_i32 = arith.constant 0 : i32
    %c0_i32_0 = arith.constant 0 : i32
    %c0_i32_1 = arith.constant 0 : i32
    return %c0_i32, %c0_i32_0 : i32, i32
  }
  func.func @transform_7(%arg0: i32) -> (i32, i32) {
    %c0_i32 = arith.constant 0 : i32
    %c0_i32_0 = arith.constant 0 : i32
    %c0_i32_1 = arith.constant 0 : i32
    return %c0_i32, %c0_i32_0 : i32, i32
  }
  func.func @transform_8(%arg0: i32) -> (i32, i32) {
    %c0_i32 = arith.constant 0 : i32
    %c0_i32_0 = arith.constant 0 : i32
    %c0_i32_1 = arith.constant 0 : i32
    return %c0_i32, %c0_i32_0 : i32, i32
  }
  func.func @transform_9(%arg0: i32) -> (i32, i32) {
    %c0_i32 = arith.constant 0 : i32
    %c0_i32_0 = arith.constant 0 : i32
    %c0_i32_1 = arith.constant 0 : i32
    return %c0_i32, %c0_i32_0 : i32, i32
  }
  func.func @transform_10(%arg0: i32) -> (i32, i32) {
    %c0_i32 = arith.constant 0 : i32
    %c0_i32_0 = arith.constant 0 : i32
    %c0_i32_1 = arith.constant 0 : i32
    return %c0_i32, %c0_i32_0 : i32, i32
  }
  func.func @transform_11(%arg0: i32) -> (i32, i32) {
    %c0_i32 = arith.constant 0 : i32
    %c0_i32_0 = arith.constant 0 : i32
    %c0_i32_1 = arith.constant 0 : i32
    return %c0_i32, %c0_i32_0 : i32, i32
  }
  func.func @transform_12(%arg0: i32) -> (i32, i32) {
    %c0_i32 = arith.constant 0 : i32
    %c0_i32_0 = arith.constant 0 : i32
    %c0_i32_1 = arith.constant 0 : i32
    return %c0_i32, %c0_i32_0 : i32, i32
  }
  func.func @transform_13(%arg0: i32) -> (i32, i32) {
    %c0_i32 = arith.constant 0 : i32
    %c0_i32_0 = arith.constant 0 : i32
    %c0_i32_1 = arith.constant 0 : i32
    return %c0_i32, %c0_i32_0 : i32, i32
  }
  func.func @transform_14(%arg0: i32) -> (i32, i32, i32) {
    %c0_i32 = arith.constant 0 : i32
    %c0_i32_0 = arith.constant 0 : i32
    %c0_i32_1 = arith.constant 0 : i32
    return %arg0, %c0_i32, %c0_i32_0 : i32, i32, i32
  }
}

module attributes {stable_mosaic.version = 11 : i64} {
  func.func @clip_layer_kernel(%arg0: i32, %arg1: memref<1x128x32xf32, #tpu.memory_space<vmem>>, %arg2: memref<128x128xf32, #tpu.memory_space<vmem>>, %arg3: memref<1x32xf32, #tpu.memory_space<vmem>>, %arg4: memref<1x32xf32, #tpu.memory_space<vmem>>, %arg5: memref<32x96xbf16, #tpu.memory_space<vmem>>, %arg6: memref<1x96xf32, #tpu.memory_space<vmem>>, %arg7: memref<32x32xbf16, #tpu.memory_space<vmem>>, %arg8: memref<1x32xf32, #tpu.memory_space<vmem>>, %arg9: memref<1x32xf32, #tpu.memory_space<vmem>>, %arg10: memref<1x32xf32, #tpu.memory_space<vmem>>, %arg11: memref<32x128xbf16, #tpu.memory_space<vmem>>, %arg12: memref<1x128xf32, #tpu.memory_space<vmem>>, %arg13: memref<128x32xbf16, #tpu.memory_space<vmem>>, %arg14: memref<1x32xf32, #tpu.memory_space<vmem>>, %arg15: memref<1x128x32xf32, #tpu.memory_space<vmem>>, %arg16: memref<4x128x8xbf16, #tpu.memory_space<vmem>>, %arg17: memref<4x128x8xbf16, #tpu.memory_space<vmem>>, %arg18: memref<4x128x8xbf16, #tpu.memory_space<vmem>>, %arg19: memref<128x32xbf16, #tpu.memory_space<vmem>>) attributes {dimension_semantics = [#tpu.dimension_semantics<parallel>], iteration_bounds = array<i64: 2>, scalar_prefetch = 0 : i64, scratch_operands = 4 : i64, tpu.core_type = #tpu.core_type<tc>, window_params = [{transform_indices = @transform_0, window_bounds = array<i64: 1, 128, 32>}, {pipeline_mode = #tpu.pipeline_mode<synchronous>, transform_indices = @transform_1, window_bounds = array<i64: 128, 128>}, {pipeline_mode = #tpu.pipeline_mode<synchronous>, transform_indices = @transform_2, window_bounds = array<i64: 1, 32>}, {pipeline_mode = #tpu.pipeline_mode<synchronous>, transform_indices = @transform_3, window_bounds = array<i64: 1, 32>}, {pipeline_mode = #tpu.pipeline_mode<synchronous>, transform_indices = @transform_4, window_bounds = array<i64: 32, 96>}, {pipeline_mode = #tpu.pipeline_mode<synchronous>, transform_indices = @transform_5, window_bounds = array<i64: 1, 96>}, {pipeline_mode = #tpu.pipeline_mode<synchronous>, transform_indices = @transform_6, window_bounds = array<i64: 32, 32>}, {pipeline_mode = #tpu.pipeline_mode<synchronous>, transform_indices = @transform_7, window_bounds = array<i64: 1, 32>}, {pipeline_mode = #tpu.pipeline_mode<synchronous>, transform_indices = @transform_8, window_bounds = array<i64: 1, 32>}, {pipeline_mode = #tpu.pipeline_mode<synchronous>, transform_indices = @transform_9, window_bounds = array<i64: 1, 32>}, {pipeline_mode = #tpu.pipeline_mode<synchronous>, transform_indices = @transform_10, window_bounds = array<i64: 32, 128>}, {pipeline_mode = #tpu.pipeline_mode<synchronous>, transform_indices = @transform_11, window_bounds = array<i64: 1, 128>}, {pipeline_mode = #tpu.pipeline_mode<synchronous>, transform_indices = @transform_12, window_bounds = array<i64: 128, 32>}, {pipeline_mode = #tpu.pipeline_mode<synchronous>, transform_indices = @transform_13, window_bounds = array<i64: 1, 32>}, {transform_indices = @transform_14, window_bounds = array<i64: 1, 128, 32>}]} {
    %c0 = arith.constant 0 : index
    %c0_0 = arith.constant 0 : index
    %c0_1 = arith.constant 0 : index
    %0 = vector.load %arg1[%c0, %c0_0, %c0_1] : memref<1x128x32xf32, #tpu.memory_space<vmem>>, vector<1x128x32xf32>
    %1 = vector.shape_cast %0 : vector<1x128x32xf32> to vector<128x32xf32>
    %cst = arith.constant dense<0.000000e+00> : vector<128xf32>
    %2 = vector.multi_reduction <add>, %1, %cst [1] : vector<128x32xf32> to vector<128xf32>
    %3 = vector.shape_cast %2 : vector<128xf32> to vector<128x1xf32>
    %cst_2 = arith.constant 3.200000e+01 : f32
    %4 = vector.broadcast %cst_2 : f32 to vector<128x1xf32>
    %5 = arith.divf %3, %4 : vector<128x1xf32>
    %6 = vector.broadcast %5 : vector<128x1xf32> to vector<128x32xf32>
    %7 = arith.subf %1, %6 : vector<128x32xf32>
    %8 = arith.mulf %7, %7 : vector<128x32xf32>
    %cst_3 = arith.constant dense<0.000000e+00> : vector<128xf32>
    %9 = vector.multi_reduction <add>, %8, %cst_3 [1] : vector<128x32xf32> to vector<128xf32>
    %10 = vector.shape_cast %9 : vector<128xf32> to vector<128x1xf32>
    %cst_4 = arith.constant 3.200000e+01 : f32
    %11 = vector.broadcast %cst_4 : f32 to vector<128x1xf32>
    %12 = arith.divf %10, %11 : vector<128x1xf32>
    %13 = vector.broadcast %5 : vector<128x1xf32> to vector<128x32xf32>
    %14 = arith.subf %1, %13 : vector<128x32xf32>
    %cst_5 = arith.constant 9.99999974E-6 : f32
    %15 = vector.broadcast %cst_5 : f32 to vector<128x1xf32>
    %16 = arith.addf %12, %15 : vector<128x1xf32>
    %17 = math.rsqrt %16 : vector<128x1xf32>
    %18 = vector.broadcast %17 : vector<128x1xf32> to vector<128x32xf32>
    %19 = arith.mulf %14, %18 : vector<128x32xf32>
    %c0_6 = arith.constant 0 : index
    %c0_7 = arith.constant 0 : index
    %20 = vector.load %arg3[%c0_6, %c0_7] : memref<1x32xf32, #tpu.memory_space<vmem>>, vector<1x32xf32>
    %21 = vector.broadcast %20 : vector<1x32xf32> to vector<128x32xf32>
    %22 = arith.mulf %19, %21 : vector<128x32xf32>
    %c0_8 = arith.constant 0 : index
    %c0_9 = arith.constant 0 : index
    %23 = vector.load %arg4[%c0_8, %c0_9] : memref<1x32xf32, #tpu.memory_space<vmem>>, vector<1x32xf32>
    %24 = vector.broadcast %23 : vector<1x32xf32> to vector<128x32xf32>
    %25 = arith.addf %22, %24 : vector<128x32xf32>
    %26 = arith.truncf %25 : vector<128x32xf32> to vector<128x32xbf16>
    %c0_10 = arith.constant 0 : index
    %c0_11 = arith.constant 0 : index
    %27 = vector.load %arg5[%c0_10, %c0_11] : memref<32x96xbf16, #tpu.memory_space<vmem>>, vector<32x96xbf16>
    %cst_12 = arith.constant dense<0.000000e+00> : vector<128x96xf32>
    %28 = tpu.matmul %26, %27, %cst_12 {dimension_numbers = #tpu.dot_dimension_numbers<[1], [0], [0], [1], [0, 0, 1, 1], [], []>} : vector<128x32xbf16>, vector<32x96xbf16>, vector<128x96xf32> -> vector<128x96xf32>
    %c0_13 = arith.constant 0 : index
    %c0_14 = arith.constant 0 : index
    %29 = vector.load %arg6[%c0_13, %c0_14] : memref<1x96xf32, #tpu.memory_space<vmem>>, vector<1x96xf32>
    %30 = vector.broadcast %29 : vector<1x96xf32> to vector<128x96xf32>
    %31 = arith.addf %28, %30 : vector<128x96xf32>
    %32 = arith.truncf %31 : vector<128x96xf32> to vector<128x96xbf16>
    %33 = vector.extract_strided_slice %32 {offsets = [0, 0], sizes = [128, 8], strides = [1, 1]} : vector<128x96xbf16> to vector<128x8xbf16>
    %c0_15 = arith.constant 0 : index
    %c0_16 = arith.constant 0 : index
    %c0_17 = arith.constant 0 : index
    %34 = vector.load %arg16[%c0_15, %c0_16, %c0_17] : memref<4x128x8xbf16, #tpu.memory_space<vmem>>, vector<1x128x8xbf16>
    %35 = vector.shape_cast %34 : vector<1x128x8xbf16> to vector<128x8xbf16>
    %36 = vector.shape_cast %33 : vector<128x8xbf16> to vector<1x128x8xbf16>
    tpu.vector_store %arg16[%c0_15, %c0_16, %c0_17], %36 {strides = array<i32>} : memref<4x128x8xbf16, #tpu.memory_space<vmem>>, vector<1x128x8xbf16>,
    %37 = vector.extract_strided_slice %32 {offsets = [0, 32], sizes = [128, 8], strides = [1, 1]} : vector<128x96xbf16> to vector<128x8xbf16>
    %c0_18 = arith.constant 0 : index
    %c0_19 = arith.constant 0 : index
    %c0_20 = arith.constant 0 : index
    %38 = vector.load %arg17[%c0_18, %c0_19, %c0_20] : memref<4x128x8xbf16, #tpu.memory_space<vmem>>, vector<1x128x8xbf16>
    %39 = vector.shape_cast %38 : vector<1x128x8xbf16> to vector<128x8xbf16>
    %40 = vector.shape_cast %37 : vector<128x8xbf16> to vector<1x128x8xbf16>
    tpu.vector_store %arg17[%c0_18, %c0_19, %c0_20], %40 {strides = array<i32>} : memref<4x128x8xbf16, #tpu.memory_space<vmem>>, vector<1x128x8xbf16>,
    %41 = vector.extract_strided_slice %32 {offsets = [0, 64], sizes = [128, 8], strides = [1, 1]} : vector<128x96xbf16> to vector<128x8xbf16>
    %c0_21 = arith.constant 0 : index
    %c0_22 = arith.constant 0 : index
    %c0_23 = arith.constant 0 : index
    %42 = vector.load %arg18[%c0_21, %c0_22, %c0_23] : memref<4x128x8xbf16, #tpu.memory_space<vmem>>, vector<1x128x8xbf16>
    %43 = vector.shape_cast %42 : vector<1x128x8xbf16> to vector<128x8xbf16>
    %44 = vector.shape_cast %41 : vector<128x8xbf16> to vector<1x128x8xbf16>
    tpu.vector_store %arg18[%c0_21, %c0_22, %c0_23], %44 {strides = array<i32>} : memref<4x128x8xbf16, #tpu.memory_space<vmem>>, vector<1x128x8xbf16>,
    %45 = vector.extract_strided_slice %32 {offsets = [0, 8], sizes = [128, 8], strides = [1, 1]} : vector<128x96xbf16> to vector<128x8xbf16>
    %c1 = arith.constant 1 : index
    %c0_24 = arith.constant 0 : index
    %c0_25 = arith.constant 0 : index
    %46 = vector.load %arg16[%c1, %c0_24, %c0_25] : memref<4x128x8xbf16, #tpu.memory_space<vmem>>, vector<1x128x8xbf16>
    %47 = vector.shape_cast %46 : vector<1x128x8xbf16> to vector<128x8xbf16>
    %48 = vector.shape_cast %45 : vector<128x8xbf16> to vector<1x128x8xbf16>
    tpu.vector_store %arg16[%c1, %c0_24, %c0_25], %48 {strides = array<i32>} : memref<4x128x8xbf16, #tpu.memory_space<vmem>>, vector<1x128x8xbf16>,
    %49 = vector.extract_strided_slice %32 {offsets = [0, 40], sizes = [128, 8], strides = [1, 1]} : vector<128x96xbf16> to vector<128x8xbf16>
    %c1_26 = arith.constant 1 : index
    %c0_27 = arith.constant 0 : index
    %c0_28 = arith.constant 0 : index
    %50 = vector.load %arg17[%c1_26, %c0_27, %c0_28] : memref<4x128x8xbf16, #tpu.memory_space<vmem>>, vector<1x128x8xbf16>
    %51 = vector.shape_cast %50 : vector<1x128x8xbf16> to vector<128x8xbf16>
    %52 = vector.shape_cast %49 : vector<128x8xbf16> to vector<1x128x8xbf16>
    tpu.vector_store %arg17[%c1_26, %c0_27, %c0_28], %52 {strides = array<i32>} : memref<4x128x8xbf16, #tpu.memory_space<vmem>>, vector<1x128x8xbf16>,
    %53 = vector.extract_strided_slice %32 {offsets = [0, 72], sizes = [128, 8], strides = [1, 1]} : vector<128x96xbf16> to vector<128x8xbf16>
    %c1_29 = arith.constant 1 : index
    %c0_30 = arith.constant 0 : index
    %c0_31 = arith.constant 0 : index
    %54 = vector.load %arg18[%c1_29, %c0_30, %c0_31] : memref<4x128x8xbf16, #tpu.memory_space<vmem>>, vector<1x128x8xbf16>
    %55 = vector.shape_cast %54 : vector<1x128x8xbf16> to vector<128x8xbf16>
    %56 = vector.shape_cast %53 : vector<128x8xbf16> to vector<1x128x8xbf16>
    tpu.vector_store %arg18[%c1_29, %c0_30, %c0_31], %56 {strides = array<i32>} : memref<4x128x8xbf16, #tpu.memory_space<vmem>>, vector<1x128x8xbf16>,
    %57 = vector.extract_strided_slice %32 {offsets = [0, 16], sizes = [128, 8], strides = [1, 1]} : vector<128x96xbf16> to vector<128x8xbf16>
    %c2 = arith.constant 2 : index
    %c0_32 = arith.constant 0 : index
    %c0_33 = arith.constant 0 : index
    %58 = vector.load %arg16[%c2, %c0_32, %c0_33] : memref<4x128x8xbf16, #tpu.memory_space<vmem>>, vector<1x128x8xbf16>
    %59 = vector.shape_cast %58 : vector<1x128x8xbf16> to vector<128x8xbf16>
    %60 = vector.shape_cast %57 : vector<128x8xbf16> to vector<1x128x8xbf16>
    tpu.vector_store %arg16[%c2, %c0_32, %c0_33], %60 {strides = array<i32>} : memref<4x128x8xbf16, #tpu.memory_space<vmem>>, vector<1x128x8xbf16>,
    %61 = vector.extract_strided_slice %32 {offsets = [0, 48], sizes = [128, 8], strides = [1, 1]} : vector<128x96xbf16> to vector<128x8xbf16>
    %c2_34 = arith.constant 2 : index
    %c0_35 = arith.constant 0 : index
    %c0_36 = arith.constant 0 : index
    %62 = vector.load %arg17[%c2_34, %c0_35, %c0_36] : memref<4x128x8xbf16, #tpu.memory_space<vmem>>, vector<1x128x8xbf16>
    %63 = vector.shape_cast %62 : vector<1x128x8xbf16> to vector<128x8xbf16>
    %64 = vector.shape_cast %61 : vector<128x8xbf16> to vector<1x128x8xbf16>
    tpu.vector_store %arg17[%c2_34, %c0_35, %c0_36], %64 {strides = array<i32>} : memref<4x128x8xbf16, #tpu.memory_space<vmem>>, vector<1x128x8xbf16>,
    %65 = vector.extract_strided_slice %32 {offsets = [0, 80], sizes = [128, 8], strides = [1, 1]} : vector<128x96xbf16> to vector<128x8xbf16>
    %c2_37 = arith.constant 2 : index
    %c0_38 = arith.constant 0 : index
    %c0_39 = arith.constant 0 : index
    %66 = vector.load %arg18[%c2_37, %c0_38, %c0_39] : memref<4x128x8xbf16, #tpu.memory_space<vmem>>, vector<1x128x8xbf16>
    %67 = vector.shape_cast %66 : vector<1x128x8xbf16> to vector<128x8xbf16>
    %68 = vector.shape_cast %65 : vector<128x8xbf16> to vector<1x128x8xbf16>
    tpu.vector_store %arg18[%c2_37, %c0_38, %c0_39], %68 {strides = array<i32>} : memref<4x128x8xbf16, #tpu.memory_space<vmem>>, vector<1x128x8xbf16>,
    %69 = vector.extract_strided_slice %32 {offsets = [0, 24], sizes = [128, 8], strides = [1, 1]} : vector<128x96xbf16> to vector<128x8xbf16>
    %c3 = arith.constant 3 : index
    %c0_40 = arith.constant 0 : index
    %c0_41 = arith.constant 0 : index
    %70 = vector.load %arg16[%c3, %c0_40, %c0_41] : memref<4x128x8xbf16, #tpu.memory_space<vmem>>, vector<1x128x8xbf16>
    %71 = vector.shape_cast %70 : vector<1x128x8xbf16> to vector<128x8xbf16>
    %72 = vector.shape_cast %69 : vector<128x8xbf16> to vector<1x128x8xbf16>
    tpu.vector_store %arg16[%c3, %c0_40, %c0_41], %72 {strides = array<i32>} : memref<4x128x8xbf16, #tpu.memory_space<vmem>>, vector<1x128x8xbf16>,
    %73 = vector.extract_strided_slice %32 {offsets = [0, 56], sizes = [128, 8], strides = [1, 1]} : vector<128x96xbf16> to vector<128x8xbf16>
    %c3_42 = arith.constant 3 : index
    %c0_43 = arith.constant 0 : index
    %c0_44 = arith.constant 0 : index
    %74 = vector.load %arg17[%c3_42, %c0_43, %c0_44] : memref<4x128x8xbf16, #tpu.memory_space<vmem>>, vector<1x128x8xbf16>
    %75 = vector.shape_cast %74 : vector<1x128x8xbf16> to vector<128x8xbf16>
    %76 = vector.shape_cast %73 : vector<128x8xbf16> to vector<1x128x8xbf16>
    tpu.vector_store %arg17[%c3_42, %c0_43, %c0_44], %76 {strides = array<i32>} : memref<4x128x8xbf16, #tpu.memory_space<vmem>>, vector<1x128x8xbf16>,
    %77 = vector.extract_strided_slice %32 {offsets = [0, 88], sizes = [128, 8], strides = [1, 1]} : vector<128x96xbf16> to vector<128x8xbf16>
    %c3_45 = arith.constant 3 : index
    %c0_46 = arith.constant 0 : index
    %c0_47 = arith.constant 0 : index
    %78 = vector.load %arg18[%c3_45, %c0_46, %c0_47] : memref<4x128x8xbf16, #tpu.memory_space<vmem>>, vector<1x128x8xbf16>
    %79 = vector.shape_cast %78 : vector<1x128x8xbf16> to vector<128x8xbf16>
    %80 = vector.shape_cast %77 : vector<128x8xbf16> to vector<1x128x8xbf16>
    tpu.vector_store %arg18[%c3_45, %c0_46, %c0_47], %80 {strides = array<i32>} : memref<4x128x8xbf16, #tpu.memory_space<vmem>>, vector<1x128x8xbf16>,
    %c0_48 = arith.constant 0 : index
    %c0_49 = arith.constant 0 : index
    %c0_50 = arith.constant 0 : index
    %81 = vector.load %arg16[%c0_48, %c0_49, %c0_50] : memref<4x128x8xbf16, #tpu.memory_space<vmem>>, vector<4x128x8xbf16>
    %c0_51 = arith.constant 0 : index
    %c0_52 = arith.constant 0 : index
    %c0_53 = arith.constant 0 : index
    %82 = vector.load %arg17[%c0_51, %c0_52, %c0_53] : memref<4x128x8xbf16, #tpu.memory_space<vmem>>, vector<4x128x8xbf16>
    "tpu.trace_start"() <{level = 10 : i32, message = "hqd,hkd->hqk"}> : () -> ()
    %cst_54 = arith.constant dense<0.000000e+00> : vector<4x128x128xf32>
    %83 = tpu.matmul %81, %82, %cst_54 {dimension_numbers = #tpu.dot_dimension_numbers<[2], [2], [1], [1], [0, 0, 0, 1, 1, 1], [0], [0]>} : vector<4x128x8xbf16>, vector<4x128x8xbf16>, vector<4x128x128xf32> -> vector<4x128x128xf32>
    "tpu.trace_stop"() : () -> ()
    %c0_55 = arith.constant 0 : index
    %c0_56 = arith.constant 0 : index
    %84 = vector.load %arg2[%c0_55, %c0_56] : memref<128x128xf32, #tpu.memory_space<vmem>>, vector<128x128xf32>
    %85 = vector.shape_cast %84 : vector<128x128xf32> to vector<1x128x128xf32>
    %86 = vector.broadcast %85 : vector<1x128x128xf32> to vector<4x128x128xf32>
    %87 = arith.addf %83, %86 : vector<4x128x128xf32>
    %cst_57 = arith.constant dense<0xFF800000> : vector<4x128xf32>
    %88 = vector.multi_reduction <maximumf>, %87, %cst_57 [2] : vector<4x128x128xf32> to vector<4x128xf32>
    %89 = vector.shape_cast %88 : vector<4x128xf32> to vector<4x128x1xf32>
    %90 = vector.broadcast %89 : vector<4x128x1xf32> to vector<4x128x128xf32>
    %91 = arith.subf %87, %90 : vector<4x128x128xf32>
    %92 = math.exp %91 : vector<4x128x128xf32>
    %cst_58 = arith.constant dense<0.000000e+00> : vector<4x128xf32>
    %93 = vector.multi_reduction <add>, %92, %cst_58 [2] : vector<4x128x128xf32> to vector<4x128xf32>
    %94 = vector.shape_cast %93 : vector<4x128xf32> to vector<4x128x1xf32>
    %95 = arith.truncf %92 : vector<4x128x128xf32> to vector<4x128x128xbf16>
    %c0_59 = arith.constant 0 : index
    %c0_60 = arith.constant 0 : index
    %c0_61 = arith.constant 0 : index
    %96 = vector.load %arg18[%c0_59, %c0_60, %c0_61] : memref<4x128x8xbf16, #tpu.memory_space<vmem>>, vector<4x128x8xbf16>
    "tpu.trace_start"() <{level = 10 : i32, message = "hqk,hkd->hqd"}> : () -> ()
    %cst_62 = arith.constant dense<0.000000e+00> : vector<4x128x8xf32>
    %97 = tpu.matmul %95, %96, %cst_62 {dimension_numbers = #tpu.dot_dimension_numbers<[2], [1], [1], [2], [0, 0, 0, 1, 1, 2], [0], [0]>} : vector<4x128x128xbf16>, vector<4x128x8xbf16>, vector<4x128x8xf32> -> vector<4x128x8xf32>
    "tpu.trace_stop"() : () -> ()
    %98 = tpu.reciprocal %94 {approx = true} : vector<4x128x1xf32> -> vector<4x128x1xf32>
    %99 = vector.broadcast %98 : vector<4x128x1xf32> to vector<4x128x8xf32>
    %100 = arith.mulf %97, %99 : vector<4x128x8xf32>
    %101 = vector.extract_strided_slice %100 {offsets = [0, 0, 0], sizes = [1, 128, 8], strides = [1, 1, 1]} : vector<4x128x8xf32> to vector<1x128x8xf32>
    %102 = vector.shape_cast %101 : vector<1x128x8xf32> to vector<128x8xf32>
    %103 = arith.truncf %102 : vector<128x8xf32> to vector<128x8xbf16>
    %c0_63 = arith.constant 0 : index
    %c0_64 = arith.constant 0 : index
    %104 = vector.load %arg19[%c0_63, %c0_64] : memref<128x32xbf16, #tpu.memory_space<vmem>>, vector<128x8xbf16>
    tpu.vector_store %arg19[%c0_63, %c0_64], %103 {strides = array<i32>} : memref<128x32xbf16, #tpu.memory_space<vmem>>, vector<128x8xbf16>,
    %105 = vector.extract_strided_slice %100 {offsets = [1, 0, 0], sizes = [1, 128, 8], strides = [1, 1, 1]} : vector<4x128x8xf32> to vector<1x128x8xf32>
    %106 = vector.shape_cast %105 : vector<1x128x8xf32> to vector<128x8xf32>
    %107 = arith.truncf %106 : vector<128x8xf32> to vector<128x8xbf16>
    %c0_65 = arith.constant 0 : index
    %c8 = arith.constant 8 : index
    %108 = vector.load %arg19[%c0_65, %c8] : memref<128x32xbf16, #tpu.memory_space<vmem>>, vector<128x8xbf16>
    tpu.vector_store %arg19[%c0_65, %c8], %107 {strides = array<i32>} : memref<128x32xbf16, #tpu.memory_space<vmem>>, vector<128x8xbf16>,
    %109 = vector.extract_strided_slice %100 {offsets = [2, 0, 0], sizes = [1, 128, 8], strides = [1, 1, 1]} : vector<4x128x8xf32> to vector<1x128x8xf32>
    %110 = vector.shape_cast %109 : vector<1x128x8xf32> to vector<128x8xf32>
    %111 = arith.truncf %110 : vector<128x8xf32> to vector<128x8xbf16>
    %c0_66 = arith.constant 0 : index
    %c16 = arith.constant 16 : index
    %112 = vector.load %arg19[%c0_66, %c16] : memref<128x32xbf16, #tpu.memory_space<vmem>>, vector<128x8xbf16>
    tpu.vector_store %arg19[%c0_66, %c16], %111 {strides = array<i32>} : memref<128x32xbf16, #tpu.memory_space<vmem>>, vector<128x8xbf16>,
    %113 = vector.extract_strided_slice %100 {offsets = [3, 0, 0], sizes = [1, 128, 8], strides = [1, 1, 1]} : vector<4x128x8xf32> to vector<1x128x8xf32>
    %114 = vector.shape_cast %113 : vector<1x128x8xf32> to vector<128x8xf32>
    %115 = arith.truncf %114 : vector<128x8xf32> to vector<128x8xbf16>
    %c0_67 = arith.constant 0 : index
    %c24 = arith.constant 24 : index
    %116 = vector.load %arg19[%c0_67, %c24] : memref<128x32xbf16, #tpu.memory_space<vmem>>, vector<128x8xbf16>
    tpu.vector_store %arg19[%c0_67, %c24], %115 {strides = array<i32>} : memref<128x32xbf16, #tpu.memory_space<vmem>>, vector<128x8xbf16>,
    %c0_68 = arith.constant 0 : index
    %c0_69 = arith.constant 0 : index
    %117 = vector.load %arg19[%c0_68, %c0_69] : memref<128x32xbf16, #tpu.memory_space<vmem>>, vector<128x32xbf16>
    %c0_70 = arith.constant 0 : index
    %c0_71 = arith.constant 0 : index
    %118 = vector.load %arg7[%c0_70, %c0_71] : memref<32x32xbf16, #tpu.memory_space<vmem>>, vector<32x32xbf16>
    %cst_72 = arith.constant dense<0.000000e+00> : vector<128x32xf32>
    %119 = tpu.matmul %117, %118, %cst_72 {dimension_numbers = #tpu.dot_dimension_numbers<[1], [0], [0], [1], [0, 0, 1, 1], [], []>} : vector<128x32xbf16>, vector<32x32xbf16>, vector<128x32xf32> -> vector<128x32xf32>
    %c0_73 = arith.constant 0 : index
    %c0_74 = arith.constant 0 : index
    %120 = vector.load %arg8[%c0_73, %c0_74] : memref<1x32xf32, #tpu.memory_space<vmem>>, vector<1x32xf32>
    %121 = vector.broadcast %120 : vector<1x32xf32> to vector<128x32xf32>
    %122 = arith.addf %119, %121 : vector<128x32xf32>
    %123 = arith.addf %122, %1 : vector<128x32xf32>
    %cst_75 = arith.constant dense<0.000000e+00> : vector<128xf32>
    %124 = vector.multi_reduction <add>, %123, %cst_75 [1] : vector<128x32xf32> to vector<128xf32>
    %125 = vector.shape_cast %124 : vector<128xf32> to vector<128x1xf32>
    %cst_76 = arith.constant 3.200000e+01 : f32
    %126 = vector.broadcast %cst_76 : f32 to vector<128x1xf32>
    %127 = arith.divf %125, %126 : vector<128x1xf32>
    %128 = vector.broadcast %127 : vector<128x1xf32> to vector<128x32xf32>
    %129 = arith.subf %123, %128 : vector<128x32xf32>
    %130 = arith.mulf %129, %129 : vector<128x32xf32>
    %cst_77 = arith.constant dense<0.000000e+00> : vector<128xf32>
    %131 = vector.multi_reduction <add>, %130, %cst_77 [1] : vector<128x32xf32> to vector<128xf32>
    %132 = vector.shape_cast %131 : vector<128xf32> to vector<128x1xf32>
    %cst_78 = arith.constant 3.200000e+01 : f32
    %133 = vector.broadcast %cst_78 : f32 to vector<128x1xf32>
    %134 = arith.divf %132, %133 : vector<128x1xf32>
    %135 = vector.broadcast %127 : vector<128x1xf32> to vector<128x32xf32>
    %136 = arith.subf %123, %135 : vector<128x32xf32>
    %cst_79 = arith.constant 9.99999974E-6 : f32
    %137 = vector.broadcast %cst_79 : f32 to vector<128x1xf32>
    %138 = arith.addf %134, %137 : vector<128x1xf32>
    %139 = math.rsqrt %138 : vector<128x1xf32>
    %140 = vector.broadcast %139 : vector<128x1xf32> to vector<128x32xf32>
    %141 = arith.mulf %136, %140 : vector<128x32xf32>
    %c0_80 = arith.constant 0 : index
    %c0_81 = arith.constant 0 : index
    %142 = vector.load %arg9[%c0_80, %c0_81] : memref<1x32xf32, #tpu.memory_space<vmem>>, vector<1x32xf32>
    %143 = vector.broadcast %142 : vector<1x32xf32> to vector<128x32xf32>
    %144 = arith.mulf %141, %143 : vector<128x32xf32>
    %c0_82 = arith.constant 0 : index
    %c0_83 = arith.constant 0 : index
    %145 = vector.load %arg10[%c0_82, %c0_83] : memref<1x32xf32, #tpu.memory_space<vmem>>, vector<1x32xf32>
    %146 = vector.broadcast %145 : vector<1x32xf32> to vector<128x32xf32>
    %147 = arith.addf %144, %146 : vector<128x32xf32>
    %148 = arith.truncf %147 : vector<128x32xf32> to vector<128x32xbf16>
    %c0_84 = arith.constant 0 : index
    %c0_85 = arith.constant 0 : index
    %149 = vector.load %arg11[%c0_84, %c0_85] : memref<32x128xbf16, #tpu.memory_space<vmem>>, vector<32x128xbf16>
    %cst_86 = arith.constant dense<0.000000e+00> : vector<128x128xf32>
    %150 = tpu.matmul %148, %149, %cst_86 {dimension_numbers = #tpu.dot_dimension_numbers<[1], [0], [0], [1], [0, 0, 1, 1], [], []>} : vector<128x32xbf16>, vector<32x128xbf16>, vector<128x128xf32> -> vector<128x128xf32>
    %c0_87 = arith.constant 0 : index
    %c0_88 = arith.constant 0 : index
    %151 = vector.load %arg12[%c0_87, %c0_88] : memref<1x128xf32, #tpu.memory_space<vmem>>, vector<1x128xf32>
    %152 = vector.broadcast %151 : vector<1x128xf32> to vector<128x128xf32>
    %153 = arith.addf %150, %152 : vector<128x128xf32>
    %cst_89 = arith.constant 1.702000e+00 : f32
    %154 = vector.broadcast %cst_89 : f32 to vector<128x128xf32>
    %155 = arith.mulf %154, %153 : vector<128x128xf32>
    %156 = arith.negf %155 : vector<128x128xf32>
    %157 = math.exp %156 : vector<128x128xf32>
    %cst_90 = arith.constant 1.000000e+00 : f32
    %158 = vector.broadcast %cst_90 : f32 to vector<128x128xf32>
    %159 = arith.addf %158, %157 : vector<128x128xf32>
    %160 = arith.divf %158, %159 : vector<128x128xf32>
    %161 = arith.mulf %153, %160 : vector<128x128xf32>
    %162 = arith.truncf %161 : vector<128x128xf32> to vector<128x128xbf16>
    %c0_91 = arith.constant 0 : index
    %c0_92 = arith.constant 0 : index
    %163 = vector.load %arg13[%c0_91, %c0_92] : memref<128x32xbf16, #tpu.memory_space<vmem>>, vector<128x32xbf16>
    %cst_93 = arith.constant dense<0.000000e+00> : vector<128x32xf32>
    %164 = tpu.matmul %162, %163, %cst_93 {dimension_numbers = #tpu.dot_dimension_numbers<[1], [0], [0], [1], [0, 0, 1, 1], [], []>} : vector<128x128xbf16>, vector<128x32xbf16>, vector<128x32xf32> -> vector<128x32xf32>
    %c0_94 = arith.constant 0 : index
    %c0_95 = arith.constant 0 : index
    %165 = vector.load %arg14[%c0_94, %c0_95] : memref<1x32xf32, #tpu.memory_space<vmem>>, vector<1x32xf32>
    %166 = vector.broadcast %165 : vector<1x32xf32> to vector<128x32xf32>
    %167 = arith.addf %164, %166 : vector<128x32xf32>
    %168 = arith.addf %167, %123 : vector<128x32xf32>
    %c0_96 = arith.constant 0 : index
    %c0_97 = arith.constant 0 : index
    %c0_98 = arith.constant 0 : index
    %169 = vector.load %arg15[%c0_96, %c0_97, %c0_98] : memref<1x128x32xf32, #tpu.memory_space<vmem>>, vector<1x128x32xf32>
    %170 = vector.shape_cast %169 : vector<1x128x32xf32> to vector<128x32xf32>
    %171 = vector.shape_cast %168 : vector<128x32xf32> to vector<1x128x32xf32>
    tpu.vector_store %arg15[%c0_96, %c0_97, %c0_98], %171 {strides = array<i32>} : memref<1x128x32xf32, #tpu.memory_space<vmem>>, vector<1x128x32xf32>,
    return
  }
  func.func @transform_0(%arg0: i32) -> (i32, i32, i32) {
    %c0_i32 = arith.constant 0 : i32
    %c0_i32_0 = arith.constant 0 : i32
    %c0_i32_1 = arith.constant 0 : i32
    return %arg0, %c0_i32, %c0_i32_0 : i32, i32, i32
  }
  func.func @transform_1(%arg0: i32) -> (i32, i32) {
    %c0_i32 = arith.constant 0 : i32
    %c0_i32_0 = arith.constant 0 : i32
    %c0_i32_1 = arith.constant 0 : i32
    return %c0_i32, %c0_i32_0 : i32, i32
  }
  func.func @transform_2(%arg0: i32) -> (i32, i32) {
    %c0_i32 = arith.constant 0 : i32
    %c0_i32_0 = arith.constant 0 : i32
    %c0_i32_1 = arith.constant 0 : i32
    return %c0_i32, %c0_i32_0 : i32, i32
  }
  func.func @transform_3(%arg0: i32) -> (i32, i32) {
    %c0_i32 = arith.constant 0 : i32
    %c0_i32_0 = arith.constant 0 : i32
    %c0_i32_1 = arith.constant 0 : i32
    return %c0_i32, %c0_i32_0 : i32, i32
  }
  func.func @transform_4(%arg0: i32) -> (i32, i32) {
    %c0_i32 = arith.constant 0 : i32
    %c0_i32_0 = arith.constant 0 : i32
    %c0_i32_1 = arith.constant 0 : i32
    return %c0_i32, %c0_i32_0 : i32, i32
  }
  func.func @transform_5(%arg0: i32) -> (i32, i32) {
    %c0_i32 = arith.constant 0 : i32
    %c0_i32_0 = arith.constant 0 : i32
    %c0_i32_1 = arith.constant 0 : i32
    return %c0_i32, %c0_i32_0 : i32, i32
  }
  func.func @transform_6(%arg0: i32) -> (i32, i32) {
    %c0_i32 = arith.constant 0 : i32
    %c0_i32_0 = arith.constant 0 : i32
    %c0_i32_1 = arith.constant 0 : i32
    return %c0_i32, %c0_i32_0 : i32, i32
  }
  func.func @transform_7(%arg0: i32) -> (i32, i32) {
    %c0_i32 = arith.constant 0 : i32
    %c0_i32_0 = arith.constant 0 : i32
    %c0_i32_1 = arith.constant 0 : i32
    return %c0_i32, %c0_i32_0 : i32, i32
  }
  func.func @transform_8(%arg0: i32) -> (i32, i32) {
    %c0_i32 = arith.constant 0 : i32
    %c0_i32_0 = arith.constant 0 : i32
    %c0_i32_1 = arith.constant 0 : i32
    return %c0_i32, %c0_i32_0 : i32, i32
  }
  func.func @transform_9(%arg0: i32) -> (i32, i32) {
    %c0_i32 = arith.constant 0 : i32
    %c0_i32_0 = arith.constant 0 : i32
    %c0_i32_1 = arith.constant 0 : i32
    return %c0_i32, %c0_i32_0 : i32, i32
  }
  func.func @transform_10(%arg0: i32) -> (i32, i32) {
    %c0_i32 = arith.constant 0 : i32
    %c0_i32_0 = arith.constant 0 : i32
    %c0_i32_1 = arith.constant 0 : i32
    return %c0_i32, %c0_i32_0 : i32, i32
  }
  func.func @transform_11(%arg0: i32) -> (i32, i32) {
    %c0_i32 = arith.constant 0 : i32
    %c0_i32_0 = arith.constant 0 : i32
    %c0_i32_1 = arith.constant 0 : i32
    return %c0_i32, %c0_i32_0 : i32, i32
  }
  func.func @transform_12(%arg0: i32) -> (i32, i32) {
    %c0_i32 = arith.constant 0 : i32
    %c0_i32_0 = arith.constant 0 : i32
    %c0_i32_1 = arith.constant 0 : i32
    return %c0_i32, %c0_i32_0 : i32, i32
  }
  func.func @transform_13(%arg0: i32) -> (i32, i32) {
    %c0_i32 = arith.constant 0 : i32
    %c0_i32_0 = arith.constant 0 : i32
    %c0_i32_1 = arith.constant 0 : i32
    return %c0_i32, %c0_i32_0 : i32, i32
  }
  func.func @transform_14(%arg0: i32) -> (i32, i32, i32) {
    %c0_i32 = arith.constant 0 : i32
    %c0_i32_0 = arith.constant 0 : i32
    %c0_i32_1 = arith.constant 0 : i32
    return %arg0, %c0_i32, %c0_i32_0 : i32, i32, i32
  }
}

</mosaic_0001>

<llo_original>
// kernel: tpu_custom_call.1
$region0: #{tpu_custom_call.1}
  #allocation0 [shape = 'u32[]', space=smem, size = 0x4, offset = 0x4, fixed_abs, tag = 'smem constant byte address 0x4 - core index']
  #allocation1 [shape = 'u32[144,128]{1,0:T(1,128)}', space=vmem, size = 0x12000, scoped, tag = 'internal scratch']
  #allocation2 [shape = 'bf16[4,128,8]{2,1,0:T(16,128)(2,1)}', space=vmem, size = 0x20000, scoped, tag = 'scratch operand']
  #allocation3 [shape = 'bf16[4,128,8]{2,1,0:T(16,128)(2,1)}', space=vmem, size = 0x20000, scoped, tag = 'scratch operand']
  #allocation4 [shape = 'bf16[4,128,8]{2,1,0:T(16,128)(2,1)}', space=vmem, size = 0x20000, scoped, tag = 'scratch operand']
  #allocation5 [shape = 'bf16[128,32]{1,0:T(16,128)(2,1)}', space=vmem, size = 0x8000, scoped, tag = 'scratch operand']
  %s0 = inlined_call_operand.vmem [shape: f32[2,128,32], index: 0, kind: input, shape index: {}]
  %s1 = inlined_call_operand.vmem [shape: f32[128,128], index: 1, kind: input, shape index: {}]
  %s2 = inlined_call_operand.vmem [shape: f32[1,32], index: 2, kind: input, shape index: {}]
  %s3 = inlined_call_operand.vmem [shape: f32[1,32], index: 3, kind: input, shape index: {}]
  %s4 = inlined_call_operand.vmem [shape: bf16[32,96], index: 4, kind: input, shape index: {}]
  %s5 = inlined_call_operand.vmem [shape: f32[1,96], index: 5, kind: input, shape index: {}]
  %s6 = inlined_call_operand.vmem [shape: bf16[32,32], index: 6, kind: input, shape index: {}]
  %s7 = inlined_call_operand.vmem [shape: f32[1,32], index: 7, kind: input, shape index: {}]
  %s8 = inlined_call_operand.vmem [shape: f32[1,32], index: 8, kind: input, shape index: {}]
  %s9 = inlined_call_operand.vmem [shape: f32[1,32], index: 9, kind: input, shape index: {}]
  %s10 = inlined_call_operand.vmem [shape: bf16[32,128], index: 10, kind: input, shape index: {}]
  %s11 = inlined_call_operand.vmem [shape: f32[1,128], index: 11, kind: input, shape index: {}]
  %s12 = inlined_call_operand.vmem [shape: bf16[128,32], index: 12, kind: input, shape index: {}]
  %s13 = inlined_call_operand.vmem [shape: f32[1,32], index: 13, kind: input, shape index: {}]
  %s14 = inlined_call_operand.vmem [shape: f32[2,128,32], index: 14, kind: output, shape index: {}]
  %s15 = sld [smem:[#allocation0]]
  $region89: #{tpu_custom_call.1} parent=0
    _
  %s17 = ssub.s32 1, %s15
  %s18 = scalar_select 0, %s17, %s15
  loop: start=0, step=1, limit=4
  $region2: #{tpu_custom_call.1} parent=0 // loop_pre_header
    _
  $region3: #{tpu_custom_call.1} parent=0 // loop_header
    %s20 = sphi 0, %s24
    %p21 = scmp.ge.s32.totalorder %s20, 4
    %s30 = sphi 0, %s32
    %s33 = sphi 0, %s30
    %s34 = sphi 0, %s33
    %s50 = sphi 0, %s34
    %s54 = sphi 0, %s54
    %s56 = sphi 0, %s54
    %s57 = sphi 0, %s56
    %s71 = sphi 0, %s57
    %s75 = sphi 0, %s75
    %s77 = sphi 0, %s75
    %s78 = sphi 0, %s77
    %s92 = sphi 0, %s78
    %s96 = sphi 0, %s96
    %s98 = sphi 0, %s96
    %s99 = sphi 0, %s98
    %s113 = sphi 0, %s99
    %s117 = sphi 0, %s117
    %s119 = sphi 0, %s117
    %s120 = sphi 0, %s119
    %s134 = sphi 0, %s120
    %s138 = sphi 0, %s138
    %s140 = sphi 0, %s138
    %s141 = sphi 0, %s140
    %s155 = sphi 0, %s141
    %s159 = sphi 0, %s159
    %s161 = sphi 0, %s159
    %s162 = sphi 0, %s161
    %s176 = sphi 0, %s162
    %s180 = sphi 0, %s180
    %s182 = sphi 0, %s180
    %s183 = sphi 0, %s182
    %s197 = sphi 0, %s183
    %s201 = sphi 0, %s201
    %s203 = sphi 0, %s201
    %s204 = sphi 0, %s203
    %s218 = sphi 0, %s204
    %s222 = sphi 0, %s222
    %s224 = sphi 0, %s222
    %s225 = sphi 0, %s224
    %s239 = sphi 0, %s225
    %s243 = sphi 0, %s243
    %s245 = sphi 0, %s243
    %s246 = sphi 0, %s245
    %s260 = sphi 0, %s246
    %s264 = sphi 0, %s264
    %s266 = sphi 0, %s264
    %s267 = sphi 0, %s266
    %s281 = sphi 0, %s267
    %s285 = sphi 0, %s285
    %s287 = sphi 0, %s285
    %s288 = sphi 0, %s287
    %s302 = sphi 0, %s288
    %s306 = sphi 0, %s306
    %s308 = sphi 0, %s306
    %s309 = sphi 0, %s308
    %s323 = sphi 0, %s309
    %s329 = sphi 0, %s331
    %s332 = sphi 0, %s329
    %s333 = sphi 0, %s332
    %s349 = sphi 0, %s333
  $region4: #{tpu_custom_call.1} parent=0 // loop_header_branch
    %23 = sbr.rel (%p21) target = $region8
  $region5: #{tpu_custom_call.1} parent=0 // loop_body
    %s25 = ssub.s32 %s20, 1
    %s26 = ssub.s32 %s20, 2
    %s27 = sadd.s32 %s20, 1
    %s28 = ssub.s32 %s20, %s27
    %p29 = scmp.eq.s32.totalorder %s28, 0
    %s31 = sadd.s32 %s30, 1
    %s32 = scalar_select %p29, %s30, %s31
    %p35 = pneg %p29
    %p36 = scmp.eq.s32.totalorder %s20, 1
    %p37 = por %p35, %p36
    %p38 = scmp.ne.s32.totalorder %s30, %s33
    %p39 = scmp.eq.s32.totalorder %s20, 0
    %p40 = por %p38, %p39
    %p41 = scmp.ne.s32.totalorder %s30, %s33
    %p42 = scmp.eq.s32.totalorder %s25, 1
    %p43 = por %p41, %p42
    %p44 = scmp.ne.s32.totalorder %s33, %s34
    %p45 = scmp.eq.s32.totalorder %s25, 0
    %p46 = por %p44, %p45
    %p47 = scmp.ne.s32.totalorder %s33, %s34
    %p48 = scmp.eq.s32.totalorder %s26, 1
    %p49 = por %p47, %p48
    %p51 = scmp.ne.s32.totalorder %s34, %s50
    %p52 = scmp.eq.s32.totalorder %s26, 0
    %p53 = por %p51, %p52
    %s55 = sadd.s32 %s54, 1
    %p58 = scmp.eq.s32.totalorder %s20, 1
    %p59 = scmp.ne.s32.totalorder %s54, %s56
    %p60 = scmp.eq.s32.totalorder %s20, 0
    %p61 = por %p59, %p60
    %p62 = scmp.ne.s32.totalorder %s54, %s56
    %p63 = scmp.eq.s32.totalorder %s25, 1
    %p64 = por %p62, %p63
    %p65 = scmp.ne.s32.totalorder %s56, %s57
    %p66 = scmp.eq.s32.totalorder %s25, 0
    %p67 = por %p65, %p66
    %p68 = scmp.ne.s32.totalorder %s56, %s57
    %p69 = scmp.eq.s32.totalorder %s26, 1
    %p70 = por %p68, %p69
    %p72 = scmp.ne.s32.totalorder %s57, %s71
    %p73 = scmp.eq.s32.totalorder %s26, 0
    %p74 = por %p72, %p73
    %s76 = sadd.s32 %s75, 1
    %p79 = scmp.eq.s32.totalorder %s20, 1
    %p80 = scmp.ne.s32.totalorder %s75, %s77
    %p81 = scmp.eq.s32.totalorder %s20, 0
    %p82 = por %p80, %p81
    %p83 = scmp.ne.s32.totalorder %s75, %s77
    %p84 = scmp.eq.s32.totalorder %s25, 1
    %p85 = por %p83, %p84
    %p86 = scmp.ne.s32.totalorder %s77, %s78
    %p87 = scmp.eq.s32.totalorder %s25, 0
    %p88 = por %p86, %p87
    %p89 = scmp.ne.s32.totalorder %s77, %s78
    %p90 = scmp.eq.s32.totalorder %s26, 1
    %p91 = por %p89, %p90
    %p93 = scmp.ne.s32.totalorder %s78, %s92
    %p94 = scmp.eq.s32.totalorder %s26, 0
    %p95 = por %p93, %p94
    %s97 = sadd.s32 %s96, 1
    %p100 = scmp.eq.s32.totalorder %s20, 1
    %p101 = scmp.ne.s32.totalorder %s96, %s98
    %p102 = scmp.eq.s32.totalorder %s20, 0
    %p103 = por %p101, %p102
    %p104 = scmp.ne.s32.totalorder %s96, %s98
    %p105 = scmp.eq.s32.totalorder %s25, 1
    %p106 = por %p104, %p105
    %p107 = scmp.ne.s32.totalorder %s98, %s99
    %p108 = scmp.eq.s32.totalorder %s25, 0
    %p109 = por %p107, %p108
    %p110 = scmp.ne.s32.totalorder %s98, %s99
    %p111 = scmp.eq.s32.totalorder %s26, 1
    %p112 = por %p110, %p111
    %p114 = scmp.ne.s32.totalorder %s99, %s113
    %p115 = scmp.eq.s32.totalorder %s26, 0
    %p116 = por %p114, %p115
    %s118 = sadd.s32 %s117, 1
    %p121 = scmp.eq.s32.totalorder %s20, 1
    %p122 = scmp.ne.s32.totalorder %s117, %s119
    %p123 = scmp.eq.s32.totalorder %s20, 0
    %p124 = por %p122, %p123
    %p125 = scmp.ne.s32.totalorder %s117, %s119
    %p126 = scmp.eq.s32.totalorder %s25, 1
    %p127 = por %p125, %p126
    %p128 = scmp.ne.s32.totalorder %s119, %s120
    %p129 = scmp.eq.s32.totalorder %s25, 0
    %p130 = por %p128, %p129
    %p131 = scmp.ne.s32.totalorder %s119, %s120
    %p132 = scmp.eq.s32.totalorder %s26, 1
    %p133 = por %p131, %p132
    %p135 = scmp.ne.s32.totalorder %s120, %s134
    %p136 = scmp.eq.s32.totalorder %s26, 0
    %p137 = por %p135, %p136
    %s139 = sadd.s32 %s138, 1
    %p142 = scmp.eq.s32.totalorder %s20, 1
    %p143 = scmp.ne.s32.totalorder %s138, %s140
    %p144 = scmp.eq.s32.totalorder %s20, 0
    %p145 = por %p143, %p144
    %p146 = scmp.ne.s32.totalorder %s138, %s140
    %p147 = scmp.eq.s32.totalorder %s25, 1
    %p148 = por %p146, %p147
    %p149 = scmp.ne.s32.totalorder %s140, %s141
    %p150 = scmp.eq.s32.totalorder %s25, 0
    %p151 = por %p149, %p150
    %p152 = scmp.ne.s32.totalorder %s140, %s141
    %p153 = scmp.eq.s32.totalorder %s26, 1
    %p154 = por %p152, %p153
    %p156 = scmp.ne.s32.totalorder %s141, %s155
    %p157 = scmp.eq.s32.totalorder %s26, 0
    %p158 = por %p156, %p157
    %s160 = sadd.s32 %s159, 1
    %p163 = scmp.eq.s32.totalorder %s20, 1
    %p164 = scmp.ne.s32.totalorder %s159, %s161
    %p165 = scmp.eq.s32.totalorder %s20, 0
    %p166 = por %p164, %p165
    %p167 = scmp.ne.s32.totalorder %s159, %s161
    %p168 = scmp.eq.s32.totalorder %s25, 1
    %p169 = por %p167, %p168
    %p170 = scmp.ne.s32.totalorder %s161, %s162
    %p171 = scmp.eq.s32.totalorder %s25, 0
    %p172 = por %p170, %p171
    %p173 = scmp.ne.s32.totalorder %s161, %s162
    %p174 = scmp.eq.s32.totalorder %s26, 1
    %p175 = por %p173, %p174
    %p177 = scmp.ne.s32.totalorder %s162, %s176
    %p178 = scmp.eq.s32.totalorder %s26, 0
    %p179 = por %p177, %p178
    %s181 = sadd.s32 %s180, 1
    %p184 = scmp.eq.s32.totalorder %s20, 1
    %p185 = scmp.ne.s32.totalorder %s180, %s182
    %p186 = scmp.eq.s32.totalorder %s20, 0
    %p187 = por %p185, %p186
    %p188 = scmp.ne.s32.totalorder %s180, %s182
    %p189 = scmp.eq.s32.totalorder %s25, 1
    %p190 = por %p188, %p189
    %p191 = scmp.ne.s32.totalorder %s182, %s183
    %p192 = scmp.eq.s32.totalorder %s25, 0
    %p193 = por %p191, %p192
    %p194 = scmp.ne.s32.totalorder %s182, %s183
    %p195 = scmp.eq.s32.totalorder %s26, 1
    %p196 = por %p194, %p195
    %p198 = scmp.ne.s32.totalorder %s183, %s197
    %p199 = scmp.eq.s32.totalorder %s26, 0
    %p200 = por %p198, %p199
    %s202 = sadd.s32 %s201, 1
    %p205 = scmp.eq.s32.totalorder %s20, 1
    %p206 = scmp.ne.s32.totalorder %s201, %s203
    %p207 = scmp.eq.s32.totalorder %s20, 0
    %p208 = por %p206, %p207
    %p209 = scmp.ne.s32.totalorder %s201, %s203
    %p210 = scmp.eq.s32.totalorder %s25, 1
    %p211 = por %p209, %p210
    %p212 = scmp.ne.s32.totalorder %s203, %s204
    %p213 = scmp.eq.s32.totalorder %s25, 0
    %p214 = por %p212, %p213
    %p215 = scmp.ne.s32.totalorder %s203, %s204
    %p216 = scmp.eq.s32.totalorder %s26, 1
    %p217 = por %p215, %p216
    %p219 = scmp.ne.s32.totalorder %s204, %s218
    %p220 = scmp.eq.s32.totalorder %s26, 0
    %p221 = por %p219, %p220
    %s223 = sadd.s32 %s222, 1
    %p226 = scmp.eq.s32.totalorder %s20, 1
    %p227 = scmp.ne.s32.totalorder %s222, %s224
    %p228 = scmp.eq.s32.totalorder %s20, 0
    %p229 = por %p227, %p228
    %p230 = scmp.ne.s32.totalorder %s222, %s224
    %p231 = scmp.eq.s32.totalorder %s25, 1
    %p232 = por %p230, %p231
    %p233 = scmp.ne.s32.totalorder %s224, %s225
    %p234 = scmp.eq.s32.totalorder %s25, 0
    %p235 = por %p233, %p234
    %p236 = scmp.ne.s32.totalorder %s224, %s225
    %p237 = scmp.eq.s32.totalorder %s26, 1
    %p238 = por %p236, %p237
    %p240 = scmp.ne.s32.totalorder %s225, %s239
    %p241 = scmp.eq.s32.totalorder %s26, 0
    %p242 = por %p240, %p241
    %s244 = sadd.s32 %s243, 1
    %p247 = scmp.eq.s32.totalorder %s20, 1
    %p248 = scmp.ne.s32.totalorder %s243, %s245
    %p249 = scmp.eq.s32.totalorder %s20, 0
    %p250 = por %p248, %p249
    %p251 = scmp.ne.s32.totalorder %s243, %s245
    %p252 = scmp.eq.s32.totalorder %s25, 1
    %p253 = por %p251, %p252
    %p254 = scmp.ne.s32.totalorder %s245, %s246
    %p255 = scmp.eq.s32.totalorder %s25, 0
    %p256 = por %p254, %p255
    %p257 = scmp.ne.s32.totalorder %s245, %s246
    %p258 = scmp.eq.s32.totalorder %s26, 1
    %p259 = por %p257, %p258
    %p261 = scmp.ne.s32.totalorder %s246, %s260
    %p262 = scmp.eq.s32.totalorder %s26, 0
    %p263 = por %p261, %p262
    %s265 = sadd.s32 %s264, 1
    %p268 = scmp.eq.s32.totalorder %s20, 1
    %p269 = scmp.ne.s32.totalorder %s264, %s266
    %p270 = scmp.eq.s32.totalorder %s20, 0
    %p271 = por %p269, %p270
    %p272 = scmp.ne.s32.totalorder %s264, %s266
    %p273 = scmp.eq.s32.totalorder %s25, 1
    %p274 = por %p272, %p273
    %p275 = scmp.ne.s32.totalorder %s266, %s267
    %p276 = scmp.eq.s32.totalorder %s25, 0
    %p277 = por %p275, %p276
    %p278 = scmp.ne.s32.totalorder %s266, %s267
    %p279 = scmp.eq.s32.totalorder %s26, 1
    %p280 = por %p278, %p279
    %p282 = scmp.ne.s32.totalorder %s267, %s281
    %p283 = scmp.eq.s32.totalorder %s26, 0
    %p284 = por %p282, %p283
    %s286 = sadd.s32 %s285, 1
    %p289 = scmp.eq.s32.totalorder %s20, 1
    %p290 = scmp.ne.s32.totalorder %s285, %s287
    %p291 = scmp.eq.s32.totalorder %s20, 0
    %p292 = por %p290, %p291
    %p293 = scmp.ne.s32.totalorder %s285, %s287
    %p294 = scmp.eq.s32.totalorder %s25, 1
    %p295 = por %p293, %p294
    %p296 = scmp.ne.s32.totalorder %s287, %s288
    %p297 = scmp.eq.s32.totalorder %s25, 0
    %p298 = por %p296, %p297
    %p299 = scmp.ne.s32.totalorder %s287, %s288
    %p300 = scmp.eq.s32.totalorder %s26, 1
    %p301 = por %p299, %p300
    %p303 = scmp.ne.s32.totalorder %s288, %s302
    %p304 = scmp.eq.s32.totalorder %s26, 0
    %p305 = por %p303, %p304
    %s307 = sadd.s32 %s306, 1
    %p310 = scmp.eq.s32.totalorder %s20, 1
    %p311 = scmp.ne.s32.totalorder %s306, %s308
    %p312 = scmp.eq.s32.totalorder %s20, 0
    %p313 = por %p311, %p312
    %p314 = scmp.ne.s32.totalorder %s306, %s308
    %p315 = scmp.eq.s32.totalorder %s25, 1
    %p316 = por %p314, %p315
    %p317 = scmp.ne.s32.totalorder %s308, %s309
    %p318 = scmp.eq.s32.totalorder %s25, 0
    %p319 = por %p317, %p318
    %p320 = scmp.ne.s32.totalorder %s308, %s309
    %p321 = scmp.eq.s32.totalorder %s26, 1
    %p322 = por %p320, %p321
    %p324 = scmp.ne.s32.totalorder %s309, %s323
    %p325 = scmp.eq.s32.totalorder %s26, 0
    %p326 = por %p324, %p325
    %s327 = ssub.s32 %s20, %s27
    %p328 = scmp.eq.s32.totalorder %s327, 0
    %s330 = sadd.s32 %s329, 1
    %s331 = scalar_select %p328, %s329, %s330
    %p334 = pneg %p328
    %p335 = scmp.eq.s32.totalorder %s20, 1
    %p336 = por %p334, %p335
    %p337 = scmp.ne.s32.totalorder %s329, %s332
    %p338 = scmp.eq.s32.totalorder %s20, 0
    %p339 = por %p337, %p338
    %p340 = scmp.ne.s32.totalorder %s329, %s332
    %p341 = scmp.eq.s32.totalorder %s25, 1
    %p342 = por %p340, %p341
    %p343 = scmp.ne.s32.totalorder %s332, %s333
    %p344 = scmp.eq.s32.totalorder %s25, 0
    %p345 = por %p343, %p344
    %p346 = scmp.ne.s32.totalorder %s332, %s333
    %p347 = scmp.eq.s32.totalorder %s26, 1
    %p348 = por %p346, %p347
    %p350 = scmp.ne.s32.totalorder %s333, %s349
    %p351 = scmp.eq.s32.totalorder %s26, 0
    %p352 = por %p350, %p351
    %p353 = scmp.le.s32.totalorder 1, %s20
    %p354 = scmp.lt.s32.totalorder %s20, 3
    %p355 = pnand %p353, %p354
    %p356 = pneg %p355
    // Predicated region
    $region9: #{tpu_custom_call.1} parent=5 // pred_check
      _
    $region10: #{tpu_custom_call.1} parent=5 // pred_check_branch
      %358 = sbr.rel (%p355) target = $region12
    $region11: #{tpu_custom_call.1} parent=5 // pred_region
      %s359 = ssub.s32 %s20, 1
      // Predicated region
      $region13: #{tpu_custom_call.1} parent=11 // pred_check
        %p360 = pneg %p67
      $region14: #{tpu_custom_call.1} parent=11 // pred_check_branch
        %362 = sbr.rel (%p360) target = $region16
      $region15: #{tpu_custom_call.1} parent=11 // pred_region
        _
      $region16: #{tpu_custom_call.1} parent=11 // pred_fallthru
        _
      // Predicated region
      $region17: #{tpu_custom_call.1} parent=11 // pred_check
        %p363 = pneg %p88
      $region18: #{tpu_custom_call.1} parent=11 // pred_check_branch
        %365 = sbr.rel (%p363) target = $region20
      $region19: #{tpu_custom_call.1} parent=11 // pred_region
        _
      $region20: #{tpu_custom_call.1} parent=11 // pred_fallthru
        _
      // Predicated region
      $region21: #{tpu_custom_call.1} parent=11 // pred_check
        %p366 = pneg %p109
      $region22: #{tpu_custom_call.1} parent=11 // pred_check_branch
        %368 = sbr.rel (%p366) target = $region24
      $region23: #{tpu_custom_call.1} parent=11 // pred_region
        _
      $region24: #{tpu_custom_call.1} parent=11 // pred_fallthru
        _
      // Predicated region
      $region25: #{tpu_custom_call.1} parent=11 // pred_check
        %p369 = pneg %p130
      $region26: #{tpu_custom_call.1} parent=11 // pred_check_branch
        %371 = sbr.rel (%p369) target = $region28
      $region27: #{tpu_custom_call.1} parent=11 // pred_region
        _
      $region28: #{tpu_custom_call.1} parent=11 // pred_fallthru
        _
      // Predicated region
      $region29: #{tpu_custom_call.1} parent=11 // pred_check
        %p372 = pneg %p151
      $region30: #{tpu_custom_call.1} parent=11 // pred_check_branch
        %374 = sbr.rel (%p372) target = $region32
      $region31: #{tpu_custom_call.1} parent=11 // pred_region
        _
      $region32: #{tpu_custom_call.1} parent=11 // pred_fallthru
        _
      // Predicated region
      $region33: #{tpu_custom_call.1} parent=11 // pred_check
        %p375 = pneg %p172
      $region34: #{tpu_custom_call.1} parent=11 // pred_check_branch
        %377 = sbr.rel (%p375) target = $region36
      $region35: #{tpu_custom_call.1} parent=11 // pred_region
        _
      $region36: #{tpu_custom_call.1} parent=11 // pred_fallthru
        _
      // Predicated region
      $region37: #{tpu_custom_call.1} parent=11 // pred_check
        %p378 = pneg %p193
      $region38: #{tpu_custom_call.1} parent=11 // pred_check_branch
        %380 = sbr.rel (%p378) target = $region40
      $region39: #{tpu_custom_call.1} parent=11 // pred_region
        _
      $region40: #{tpu_custom_call.1} parent=11 // pred_fallthru
        _
      // Predicated region
      $region41: #{tpu_custom_call.1} parent=11 // pred_check
        %p381 = pneg %p214
      $region42: #{tpu_custom_call.1} parent=11 // pred_check_branch
        %383 = sbr.rel (%p381) target = $region44
      $region43: #{tpu_custom_call.1} parent=11 // pred_region
        _
      $region44: #{tpu_custom_call.1} parent=11 // pred_fallthru
        _
      // Predicated region
      $region45: #{tpu_custom_call.1} parent=11 // pred_check
        %p384 = pneg %p235
      $region46: #{tpu_custom_call.1} parent=11 // pred_check_branch
        %386 = sbr.rel (%p384) target = $region48
      $region47: #{tpu_custom_call.1} parent=11 // pred_region
        _
      $region48: #{tpu_custom_call.1} parent=11 // pred_fallthru
        _
      // Predicated region
      $region49: #{tpu_custom_call.1} parent=11 // pred_check
        %p387 = pneg %p256
      $region50: #{tpu_custom_call.1} parent=11 // pred_check_branch
        %389 = sbr.rel (%p387) target = $region52
      $region51: #{tpu_custom_call.1} parent=11 // pred_region
        _
      $region52: #{tpu_custom_call.1} parent=11 // pred_fallthru
        _
      // Predicated region
      $region53: #{tpu_custom_call.1} parent=11 // pred_check
        %p390 = pneg %p277
      $region54: #{tpu_custom_call.1} parent=11 // pred_check_branch
        %392 = sbr.rel (%p390) target = $region56
      $region55: #{tpu_custom_call.1} parent=11 // pred_region
        _
      $region56: #{tpu_custom_call.1} parent=11 // pred_fallthru
        _
      // Predicated region
      $region57: #{tpu_custom_call.1} parent=11 // pred_check
        %p393 = pneg %p298
      $region58: #{tpu_custom_call.1} parent=11 // pred_check_branch
        %395 = sbr.rel (%p393) target = $region60
      $region59: #{tpu_custom_call.1} parent=11 // pred_region
        _
      $region60: #{tpu_custom_call.1} parent=11 // pred_fallthru
        _
      // Predicated region
      $region61: #{tpu_custom_call.1} parent=11 // pred_check
        %p396 = pneg %p319
      $region62: #{tpu_custom_call.1} parent=11 // pred_check_branch
        %398 = sbr.rel (%p396) target = $region64
      $region63: #{tpu_custom_call.1} parent=11 // pred_region
        _
      $region64: #{tpu_custom_call.1} parent=11 // pred_fallthru
        _
    $region12: #{tpu_custom_call.1} parent=5 // pred_fallthru
      _
    %p399 = scmp.lt.s32.totalorder %s20, 2
    // Predicated region
    $region65: #{tpu_custom_call.1} parent=5 // pred_check
      %p400 = pneg %p399
    $region66: #{tpu_custom_call.1} parent=5 // pred_check_branch
      %402 = sbr.rel (%p400) target = $region68
    $region67: #{tpu_custom_call.1} parent=5 // pred_region
      // Predicated region
      $region69: #{tpu_custom_call.1} parent=67 // pred_check
        %p403 = pneg %p40
      $region70: #{tpu_custom_call.1} parent=67 // pred_check_branch
        %405 = sbr.rel (%p403) target = $region72
      $region71: #{tpu_custom_call.1} parent=67 // pred_region
        %p406 = scmp.lt.s32.totalorder %s20, 1
        %s407 = scalar_select %p406, %s20, 1
        %s408 = smul.addr %s407, 16
        %s409 = smul.addr %s408, 8
        %s410 = scalar_lea.vmem %s0, %s409
      $region72: #{tpu_custom_call.1} parent=67 // pred_fallthru
        _
    $region68: #{tpu_custom_call.1} parent=5 // pred_fallthru
      _
    %p411 = scmp.le.s32.totalorder 1, %s20
    %p412 = scmp.lt.s32.totalorder %s20, 3
    %p413 = pnand %p411, %p412
    %p414 = pneg %p413
    // Predicated region
    $region73: #{tpu_custom_call.1} parent=5 // pred_check
      _
    $region74: #{tpu_custom_call.1} parent=5 // pred_check_branch
      %416 = sbr.rel (%p413) target = $region76
    $region75: #{tpu_custom_call.1} parent=5 // pred_region
      %s417 = ssub.s32 %s20, 1
      %p418 = scmp.lt.s32.totalorder %s25, 1
      %s419 = scalar_select %p418, %s25, 1
      %s420 = smul.addr %s419, 16
      %s421 = smul.addr %s420, 8
      %s422 = scalar_lea.vmem %s0, %s421
      %p423 = pneg %p46
      %p424 = pneg %p43
      %p425 = pneg %p67
      %p426 = pneg %p64
      %p427 = pneg %p88
      %p428 = pneg %p85
      %p429 = pneg %p109
      %p430 = pneg %p106
      %p431 = pneg %p130
      %p432 = pneg %p127
      %p433 = pneg %p151
      %p434 = pneg %p148
      %p435 = pneg %p172
      %p436 = pneg %p169
      %p437 = pneg %p193
      %p438 = pneg %p190
      %p439 = pneg %p214
      %p440 = pneg %p211
      %p441 = pneg %p235
      %p442 = pneg %p232
      %p443 = pneg %p256
      %p444 = pneg %p253
      %p445 = pneg %p277
      %p446 = pneg %p274
      %p447 = pneg %p298
      %p448 = pneg %p295
      %p449 = pneg %p319
      %p450 = pneg %p316
      %p451 = pneg %p345
      %p452 = pneg %p342
      %p453 = scmp.lt.s32.totalorder %s25, 1
      %s454 = scalar_select %p453, %s25, 1
      %s455 = smul.addr %s454, 16
      %s456 = smul.addr %s455, 8
      %s457 = scalar_lea.vmem %s14, %s456
      %p458 = scmp.lt.s32.totalorder %s25, 1
      %s459 = scalar_select %p458, %s25, 1
      %s460 = smul.addr %s459, 16
      %s461 = smul.addr %s460, 8
      %s462 = scalar_lea.vmem %s0, %s461
      %p463 = scmp.lt.s32.totalorder %s25, 1
      %s464 = scalar_select %p463, %s25, 1
      %s465 = smul.addr %s464, 16
      %s466 = smul.addr %s465, 8
      %s467 = scalar_lea.vmem %s14, %s466
      %v469 = vld [vmem:[%s462] sm:$0xff]
      %v470 = vld [vmem:[%s462 + $0x8] sm:$0xff]
      %v471 = vld [vmem:[%s462 + $0x10] sm:$0xff]
      %v472 = vld [vmem:[%s462 + $0x18] sm:$0xff]
      %v473 = vld [vmem:[%s462 + $0x20] sm:$0xff]
      %v474 = vld [vmem:[%s462 + $0x28] sm:$0xff]
      %v475 = vld [vmem:[%s462 + $0x30] sm:$0xff]
      %v476 = vld [vmem:[%s462 + $0x38] sm:$0xff]
      %v477 = vld [vmem:[%s462 + $0x40] sm:$0xff]
      %v478 = vld [vmem:[%s462 + $0x48] sm:$0xff]
      %v479 = vld [vmem:[%s462 + $0x50] sm:$0xff]
      %v480 = vld [vmem:[%s462 + $0x58] sm:$0xff]
      %v481 = vld [vmem:[%s462 + $0x60] sm:$0xff]
      %v482 = vld [vmem:[%s462 + $0x68] sm:$0xff]
      %v483 = vld [vmem:[%s462 + $0x70] sm:$0xff]
      %v484 = vld [vmem:[%s462 + $0x78] sm:$0xff]
      %vm485 = vcmask 261120
      %v486 = vsel %vm485, %v469, 0.0
      %487 = vadd.xlane.f32.xlu0 %v486
      %v488 = vpop.xlane.xlu0 %487
      %v489 = vsel %vm485, %v470, 0.0
      %490 = vadd.xlane.f32.xlu0 %v489
      %v491 = vpop.xlane.xlu0 %490
      %v492 = vsel %vm485, %v471, 0.0
      %493 = vadd.xlane.f32.xlu0 %v492
      %v494 = vpop.xlane.xlu0 %493
      %v495 = vsel %vm485, %v472, 0.0
      %496 = vadd.xlane.f32.xlu0 %v495
      %v497 = vpop.xlane.xlu0 %496
      %v498 = vsel %vm485, %v473, 0.0
      %499 = vadd.xlane.f32.xlu0 %v498
      %v500 = vpop.xlane.xlu0 %499
      %v501 = vsel %vm485, %v474, 0.0
      %502 = vadd.xlane.f32.xlu0 %v501
      %v503 = vpop.xlane.xlu0 %502
      %v504 = vsel %vm485, %v475, 0.0
      %505 = vadd.xlane.f32.xlu0 %v504
      %v506 = vpop.xlane.xlu0 %505
      %v507 = vsel %vm485, %v476, 0.0
      %508 = vadd.xlane.f32.xlu0 %v507
      %v509 = vpop.xlane.xlu0 %508
      %v510 = vsel %vm485, %v477, 0.0
      %511 = vadd.xlane.f32.xlu0 %v510
      %v512 = vpop.xlane.xlu0 %511
      %v513 = vsel %vm485, %v478, 0.0
      %514 = vadd.xlane.f32.xlu0 %v513
      %v515 = vpop.xlane.xlu0 %514
      %v516 = vsel %vm485, %v479, 0.0
      %517 = vadd.xlane.f32.xlu0 %v516
      %v518 = vpop.xlane.xlu0 %517
      %v519 = vsel %vm485, %v480, 0.0
      %520 = vadd.xlane.f32.xlu0 %v519
      %v521 = vpop.xlane.xlu0 %520
      %v522 = vsel %vm485, %v481, 0.0
      %523 = vadd.xlane.f32.xlu0 %v522
      %v524 = vpop.xlane.xlu0 %523
      %v525 = vsel %vm485, %v482, 0.0
      %526 = vadd.xlane.f32.xlu0 %v525
      %v527 = vpop.xlane.xlu0 %526
      %v528 = vsel %vm485, %v483, 0.0
      %529 = vadd.xlane.f32.xlu0 %v528
      %v530 = vpop.xlane.xlu0 %529
      %v531 = vsel %vm485, %v484, 0.0
      %532 = vadd.xlane.f32.xlu0 %v531
      %v533 = vpop.xlane.xlu0 %532
      %v534 = vrcp.pop 32.0
      %v535 = vmul.f32 %v488, %v534
      %v536 = vmul.f32 %v491, %v534
      %v537 = vmul.f32 %v494, %v534
      %v538 = vmul.f32 %v497, %v534
      %v539 = vmul.f32 %v500, %v534
      %v540 = vmul.f32 %v503, %v534
      %v541 = vmul.f32 %v506, %v534
      %v542 = vmul.f32 %v509, %v534
      %v543 = vmul.f32 %v512, %v534
      %v544 = vmul.f32 %v515, %v534
      %v545 = vmul.f32 %v518, %v534
      %v546 = vmul.f32 %v521, %v534
      %v547 = vmul.f32 %v524, %v534
      %v548 = vmul.f32 %v527, %v534
      %v549 = vmul.f32 %v530, %v534
      %v550 = vmul.f32 %v533, %v534
      %v551 = vsub.f32 %v469, %v535
      %v552 = vsub.f32 %v470, %v536
      %v553 = vsub.f32 %v471, %v537
      %v554 = vsub.f32 %v472, %v538
      %v555 = vsub.f32 %v473, %v539
      %v556 = vsub.f32 %v474, %v540
      %v557 = vsub.f32 %v475, %v541
      %v558 = vsub.f32 %v476, %v542
      %v559 = vsub.f32 %v477, %v543
      %v560 = vsub.f32 %v478, %v544
      %v561 = vsub.f32 %v479, %v545
      %v562 = vsub.f32 %v480, %v546
      %v563 = vsub.f32 %v481, %v547
      %v564 = vsub.f32 %v482, %v548
      %v565 = vsub.f32 %v483, %v549
      %v566 = vsub.f32 %v484, %v550
      %v567 = vmul.f32 %v551, %v551
      %v568 = vmul.f32 %v552, %v552
      %v569 = vmul.f32 %v553, %v553
      %v570 = vmul.f32 %v554, %v554
      %v571 = vmul.f32 %v555, %v555
      %v572 = vmul.f32 %v556, %v556
      %v573 = vmul.f32 %v557, %v557
      %v574 = vmul.f32 %v558, %v558
      %v575 = vmul.f32 %v559, %v559
      %v576 = vmul.f32 %v560, %v560
      %v577 = vmul.f32 %v561, %v561
      %v578 = vmul.f32 %v562, %v562
      %v579 = vmul.f32 %v563, %v563
      %v580 = vmul.f32 %v564, %v564
      %v581 = vmul.f32 %v565, %v565
      %v582 = vmul.f32 %v566, %v566
      %v583 = vsel %vm485, %v567, 0.0
      %584 = vadd.xlane.f32.xlu0 %v583
      %v585 = vpop.xlane.xlu0 %584
      %v586 = vsel %vm485, %v568, 0.0
      %587 = vadd.xlane.f32.xlu0 %v586
      %v588 = vpop.xlane.xlu0 %587
      %v589 = vsel %vm485, %v569, 0.0
      %590 = vadd.xlane.f32.xlu0 %v589
      %v591 = vpop.xlane.xlu0 %590
      %v592 = vsel %vm485, %v570, 0.0
      %593 = vadd.xlane.f32.xlu0 %v592
      %v594 = vpop.xlane.xlu0 %593
      %v595 = vsel %vm485, %v571, 0.0
      %596 = vadd.xlane.f32.xlu0 %v595
      %v597 = vpop.xlane.xlu0 %596
      %v598 = vsel %vm485, %v572, 0.0
      %599 = vadd.xlane.f32.xlu0 %v598
      %v600 = vpop.xlane.xlu0 %599
      %v601 = vsel %vm485, %v573, 0.0
      %602 = vadd.xlane.f32.xlu0 %v601
      %v603 = vpop.xlane.xlu0 %602
      %v604 = vsel %vm485, %v574, 0.0
      %605 = vadd.xlane.f32.xlu0 %v604
      %v606 = vpop.xlane.xlu0 %605
      %v607 = vsel %vm485, %v575, 0.0
      %608 = vadd.xlane.f32.xlu0 %v607
      %v609 = vpop.xlane.xlu0 %608
      %v610 = vsel %vm485, %v576, 0.0
      %611 = vadd.xlane.f32.xlu0 %v610
      %v612 = vpop.xlane.xlu0 %611
      %v613 = vsel %vm485, %v577, 0.0
      %614 = vadd.xlane.f32.xlu0 %v613
      %v615 = vpop.xlane.xlu0 %614
      %v616 = vsel %vm485, %v578, 0.0
      %617 = vadd.xlane.f32.xlu0 %v616
      %v618 = vpop.xlane.xlu0 %617
      %v619 = vsel %vm485, %v579, 0.0
      %620 = vadd.xlane.f32.xlu0 %v619
      %v621 = vpop.xlane.xlu0 %620
      %v622 = vsel %vm485, %v580, 0.0
      %623 = vadd.xlane.f32.xlu0 %v622
      %v624 = vpop.xlane.xlu0 %623
      %v625 = vsel %vm485, %v581, 0.0
      %626 = vadd.xlane.f32.xlu0 %v625
      %v627 = vpop.xlane.xlu0 %626
      %v628 = vsel %vm485, %v582, 0.0
      %629 = vadd.xlane.f32.xlu0 %v628
      %v630 = vpop.xlane.xlu0 %629
      %v631 = vmul.f32 %v585, %v534
      %v632 = vmul.f32 %v588, %v534
      %v633 = vmul.f32 %v591, %v534
      %v634 = vmul.f32 %v594, %v534
      %v635 = vmul.f32 %v597, %v534
      %v636 = vmul.f32 %v600, %v534
      %v637 = vmul.f32 %v603, %v534
      %v638 = vmul.f32 %v606, %v534
      %v639 = vmul.f32 %v609, %v534
      %v640 = vmul.f32 %v612, %v534
      %v641 = vmul.f32 %v615, %v534
      %v642 = vmul.f32 %v618, %v534
      %v643 = vmul.f32 %v621, %v534
      %v644 = vmul.f32 %v624, %v534
      %v645 = vmul.f32 %v627, %v534
      %v646 = vmul.f32 %v630, %v534
      %v647 = vadd.f32 %v631, 1e-05
      %v648 = vadd.f32 %v632, 1e-05
      %v649 = vadd.f32 %v633, 1e-05
      %v650 = vadd.f32 %v634, 1e-05
      %v651 = vadd.f32 %v635, 1e-05
      %v652 = vadd.f32 %v636, 1e-05
      %v653 = vadd.f32 %v637, 1e-05
      %v654 = vadd.f32 %v638, 1e-05
      %v655 = vadd.f32 %v639, 1e-05
      %v656 = vadd.f32 %v640, 1e-05
      %v657 = vadd.f32 %v641, 1e-05
      %v658 = vadd.f32 %v642, 1e-05
      %v659 = vadd.f32 %v643, 1e-05
      %v660 = vadd.f32 %v644, 1e-05
      %v661 = vadd.f32 %v645, 1e-05
      %v662 = vadd.f32 %v646, 1e-05
      %v663 = vrsqrt.pop %v647
      %v664 = vrsqrt.pop %v648
      %v665 = vrsqrt.pop %v649
      %v666 = vrsqrt.pop %v650
      %v667 = vrsqrt.pop %v651
      %v668 = vrsqrt.pop %v652
      %v669 = vrsqrt.pop %v653
      %v670 = vrsqrt.pop %v654
      %v671 = vrsqrt.pop %v655
      %v672 = vrsqrt.pop %v656
      %v673 = vrsqrt.pop %v657
      %v674 = vrsqrt.pop %v658
      %v675 = vrsqrt.pop %v659
      %v676 = vrsqrt.pop %v660
      %v677 = vrsqrt.pop %v661
      %v678 = vrsqrt.pop %v662
      %v679 = vmul.f32 %v551, %v663
      %v680 = vmul.f32 %v552, %v664
      %v681 = vmul.f32 %v553, %v665
      %v682 = vmul.f32 %v554, %v666
      %v683 = vmul.f32 %v555, %v667
      %v684 = vmul.f32 %v556, %v668
      %v685 = vmul.f32 %v557, %v669
      %v686 = vmul.f32 %v558, %v670
      %v687 = vmul.f32 %v559, %v671
      %v688 = vmul.f32 %v560, %v672
      %v689 = vmul.f32 %v561, %v673
      %v690 = vmul.f32 %v562, %v674
      %v691 = vmul.f32 %v563, %v675
      %v692 = vmul.f32 %v564, %v676
      %v693 = vmul.f32 %v565, %v677
      %v694 = vmul.f32 %v566, %v678
      %v695 = vld [vmem:[%s2] sm:$0x1]
      %v697 = vlaneseq
      %v698 = vshrl.u32 %v697, 7
      %v699 = vsub.s32 0, %v698
      %v700 = vrot.slane %v695, %v699
      %v702 = vmul.f32 %v679, %v700
      %v703 = vmul.f32 %v680, %v700
      %v704 = vmul.f32 %v681, %v700
      %v705 = vmul.f32 %v682, %v700
      %v706 = vmul.f32 %v683, %v700
      %v707 = vmul.f32 %v684, %v700
      %v708 = vmul.f32 %v685, %v700
      %v709 = vmul.f32 %v686, %v700
      %v710 = vmul.f32 %v687, %v700
      %v711 = vmul.f32 %v688, %v700
      %v712 = vmul.f32 %v689, %v700
      %v713 = vmul.f32 %v690, %v700
      %v714 = vmul.f32 %v691, %v700
      %v715 = vmul.f32 %v692, %v700
      %v716 = vmul.f32 %v693, %v700
      %v717 = vmul.f32 %v694, %v700
      %v718 = vld [vmem:[%s3] sm:$0x1]
      %v720 = vlaneseq
      %v721 = vshrl.u32 %v720, 7
      %v722 = vsub.s32 0, %v721
      %v723 = vrot.slane %v718, %v722
      %v725 = vadd.f32 %v702, %v723
      %v726 = vadd.f32 %v703, %v723
      %v727 = vadd.f32 %v704, %v723
      %v728 = vadd.f32 %v705, %v723
      %v729 = vadd.f32 %v706, %v723
      %v730 = vadd.f32 %v707, %v723
      %v731 = vadd.f32 %v708, %v723
      %v732 = vadd.f32 %v709, %v723
      %v733 = vadd.f32 %v710, %v723
      %v734 = vadd.f32 %v711, %v723
      %v735 = vadd.f32 %v712, %v723
      %v736 = vadd.f32 %v713, %v723
      %v737 = vadd.f32 %v714, %v723
      %v738 = vadd.f32 %v715, %v723
      %v739 = vadd.f32 %v716, %v723
      %v740 = vadd.f32 %v717, %v723
      %v741 = vpack.c.bf16 %v726, %v725
      %v742 = vpack.c.bf16 %v728, %v727
      %v743 = vpack.c.bf16 %v730, %v729
      %v744 = vpack.c.bf16 %v732, %v731
      %v745 = vpack.c.bf16 %v734, %v733
      %v746 = vpack.c.bf16 %v736, %v735
      %v747 = vpack.c.bf16 %v738, %v737
      %v748 = vpack.c.bf16 %v740, %v739
      %v749 = vld [vmem:[%s4] sm:$0xf]
      %v750 = vld [vmem:[%s4 + $0x4] sm:$0xf]
      %v751 = vld [vmem:[%s4 + $0x8] sm:$0xf]
      %v752 = vld [vmem:[%s4 + $0xc] sm:$0xf]
      %v753 = vld [vmem:[%s5] sm:$0x1]
      %v755 = vlaneseq
      %v756 = vshrl.u32 %v755, 7
      %v757 = vsub.s32 0, %v756
      %v758 = vrot.slane %v753, %v757
      %v764 = vunpack.c.l.b16 %v749
      %v765 = vunpack.c.l.b16 %v750
      %v766 = vunpack.c.l.b16 %v751
      %v767 = vunpack.c.l.b16 %v752
      %v768 = vpack.c.b16 %v765, %v764
      %v769 = vpack.c.b16 %v767, %v766
      %v773 = vsel %vm485, %v741, 0
      %v776 = vsel %vm485, %v742, 0
      %v779 = vsel %vm485, %v743, 0
      %v782 = vsel %vm485, %v744, 0
      %v785 = vsel %vm485, %v745, 0
      %v788 = vsel %vm485, %v746, 0
      %v791 = vsel %vm485, %v747, 0
      %v794 = vsel %vm485, %v748, 0
      %796 = vmatprep.subr.bf16.mxu0 0
      %797 = vmatpush1.bf16.msra.mxu0 %v768
      %798 = vmatprep.subr.bf16.mxu0 0
      %799 = vmatpush1.bf16.msra.mxu0 %v769
      %800 = vmatprep.subr.bf16.mxu0 0
      %801 = vmatpush1.bf16.msra.mxu0 0
      %802 = vmatprep.subr.bf16.mxu0 0
      %803 = vmatpush1.bf16.msra.mxu0 0
      %804 = vmatprep.subr.bf16.mxu0 0
      %805 = vmatpush1.bf16.msra.mxu0 0
      %806 = vmatprep.subr.bf16.mxu0 0
      %807 = vmatpush1.bf16.msra.mxu0 0
      %808 = vmatprep.subr.bf16.mxu0 0
      %809 = vmatpush1.bf16.msra.mxu0 0
      %810 = vmatprep.subr.bf16.mxu0 0
      %811 = vmatpush1.bf16.msra.mxu0 0
      %812 = vmatprep.subr.bf16.mxu0 0
      %813 = vmatpush1.bf16.msra.mxu0 0
      %814 = vmatprep.subr.bf16.mxu0 0
      %815 = vmatpush1.bf16.msra.mxu0 0
      %816 = vmatprep.subr.bf16.mxu0 0
      %817 = vmatpush1.bf16.msra.mxu0 0
      %818 = vmatprep.subr.bf16.mxu0 0
      %819 = vmatpush1.bf16.msra.mxu0 0
      %820 = vmatprep.subr.bf16.mxu0 0
      %821 = vmatpush1.bf16.msra.mxu0 0
      %822 = vmatprep.subr.bf16.mxu0 0
      %823 = vmatpush1.bf16.msra.mxu0 0
      %824 = vmatprep.subr.bf16.mxu0 0
      %825 = vmatpush1.bf16.msra.mxu0 0
      %826 = vmatprep.subr.bf16.mxu0 0
      %827 = vmatpush1.bf16.msra.mxu0 0
      %828 = vmatprep.mubr.bf16.mxu0 0
      %829 = vmatmul.mubr.bf16.gmra.mrb[0].mxu0 %v773
      %v830 = vpop.f32.mrb[0].mxu0
      %v831 = vadd.f32 %v758, %v830
      %v832 = vpop.f32.mrb[0].mxu0
      %v833 = vpop.f32.mrb[0].mxu0
      %v834 = vadd.f32 %v758, %v833
      %v835 = vpop.f32.mrb[0].mxu0
      %836 = vmatprep.mubr.bf16.mxu0 0
      %837 = vmatmul.mubr.bf16.gmra.mrb[0].mxu0 %v776
      %v838 = vpop.f32.mrb[0].mxu0
      %v839 = vadd.f32 %v758, %v838
      %v840 = vpop.f32.mrb[0].mxu0
      %v841 = vpop.f32.mrb[0].mxu0
      %v842 = vadd.f32 %v758, %v841
      %v843 = vpop.f32.mrb[0].mxu0
      %844 = vmatprep.mubr.bf16.mxu0 0
      %845 = vmatmul.mubr.bf16.gmra.mrb[0].mxu0 %v779
      %v846 = vpop.f32.mrb[0].mxu0
      %v847 = vadd.f32 %v758, %v846
      %v848 = vpop.f32.mrb[0].mxu0
      %v849 = vpop.f32.mrb[0].mxu0
      %v850 = vadd.f32 %v758, %v849
      %v851 = vpop.f32.mrb[0].mxu0
      %852 = vmatprep.mubr.bf16.mxu0 0
      %853 = vmatmul.mubr.bf16.gmra.mrb[0].mxu0 %v782
      %v854 = vpop.f32.mrb[0].mxu0
      %v855 = vadd.f32 %v758, %v854
      %v856 = vpop.f32.mrb[0].mxu0
      %v857 = vpop.f32.mrb[0].mxu0
      %v858 = vadd.f32 %v758, %v857
      %v859 = vpop.f32.mrb[0].mxu0
      %860 = vmatprep.mubr.bf16.mxu0 0
      %861 = vmatmul.mubr.bf16.gmra.mrb[0].mxu0 %v785
      %v862 = vpop.f32.mrb[0].mxu0
      %v863 = vadd.f32 %v758, %v862
      %v864 = vpop.f32.mrb[0].mxu0
      %v865 = vpop.f32.mrb[0].mxu0
      %v866 = vadd.f32 %v758, %v865
      %v867 = vpop.f32.mrb[0].mxu0
      %868 = vmatprep.mubr.bf16.mxu0 0
      %869 = vmatmul.mubr.bf16.gmra.mrb[0].mxu0 %v788
      %v870 = vpop.f32.mrb[0].mxu0
      %v871 = vadd.f32 %v758, %v870
      %v872 = vpop.f32.mrb[0].mxu0
      %v873 = vpop.f32.mrb[0].mxu0
      %v874 = vadd.f32 %v758, %v873
      %v875 = vpop.f32.mrb[0].mxu0
      %876 = vmatprep.mubr.bf16.mxu0 0
      %877 = vmatmul.mubr.bf16.gmra.mrb[0].mxu0 %v791
      %v878 = vpop.f32.mrb[0].mxu0
      %v879 = vadd.f32 %v758, %v878
      %v880 = vpop.f32.mrb[0].mxu0
      %v881 = vpop.f32.mrb[0].mxu0
      %v882 = vadd.f32 %v758, %v881
      %v883 = vpop.f32.mrb[0].mxu0
      %884 = vmatprep.mubr.bf16.mxu0 0
      %885 = vmatmul.mubr.bf16.gmra.mrb[0].mxu0 %v794
      %v886 = vpop.f32.mrb[0].mxu0
      %v887 = vadd.f32 %v758, %v886
      %v888 = vpop.f32.mrb[0].mxu0
      %v889 = vpop.f32.mrb[0].mxu0
      %v890 = vadd.f32 %v758, %v889
      %v891 = vpop.f32.mrb[0].mxu0
      %892 = vdwg.mxu0
      %v893 = vpack.c.bf16 %v834, %v831
      %v894 = vpack.c.bf16 %v842, %v839
      %v895 = vpack.c.bf16 %v850, %v847
      %v896 = vpack.c.bf16 %v858, %v855
      %v897 = vpack.c.bf16 %v866, %v863
      %v898 = vpack.c.bf16 %v874, %v871
      %v899 = vpack.c.bf16 %v882, %v879
      %v900 = vpack.c.bf16 %v890, %v887
      %vm901 = vcmask 64512
      %902 = vst.msk [vmem:[#allocation2] sm:$0xff] %vm901, %v893
      %903 = vst.msk [vmem:[#allocation2 + $0x8] sm:$0xff] %vm901, %v894
      %904 = vst.msk [vmem:[#allocation2 + $0x10] sm:$0xff] %vm901, %v895
      %905 = vst.msk [vmem:[#allocation2 + $0x18] sm:$0xff] %vm901, %v896
      %906 = vst.msk [vmem:[#allocation2 + $0x20] sm:$0xff] %vm901, %v897
      %907 = vst.msk [vmem:[#allocation2 + $0x28] sm:$0xff] %vm901, %v898
      %908 = vst.msk [vmem:[#allocation2 + $0x30] sm:$0xff] %vm901, %v899
      %909 = vst.msk [vmem:[#allocation2 + $0x38] sm:$0xff] %vm901, %v900
      %918 = vrot.lane.b32.xlu0 %v893, 96
      %v919 = vpop.permute.xlu0 %918
      %920 = vrot.lane.b32.xlu0 %v894, 96
      %v921 = vpop.permute.xlu0 %920
      %922 = vrot.lane.b32.xlu0 %v895, 96
      %v923 = vpop.permute.xlu0 %922
      %924 = vrot.lane.b32.xlu0 %v896, 96
      %v925 = vpop.permute.xlu0 %924
      %926 = vrot.lane.b32.xlu0 %v897, 96
      %v927 = vpop.permute.xlu0 %926
      %928 = vrot.lane.b32.xlu0 %v898, 96
      %v929 = vpop.permute.xlu0 %928
      %930 = vrot.lane.b32.xlu0 %v899, 96
      %v931 = vpop.permute.xlu0 %930
      %932 = vrot.lane.b32.xlu0 %v900, 96
      %v933 = vpop.permute.xlu0 %932
      %942 = vst.msk [vmem:[#allocation3] sm:$0xff] %vm901, %v919
      %943 = vst.msk [vmem:[#allocation3 + $0x8] sm:$0xff] %vm901, %v921
      %944 = vst.msk [vmem:[#allocation3 + $0x10] sm:$0xff] %vm901, %v923
      %945 = vst.msk [vmem:[#allocation3 + $0x18] sm:$0xff] %vm901, %v925
      %946 = vst.msk [vmem:[#allocation3 + $0x20] sm:$0xff] %vm901, %v927
      %947 = vst.msk [vmem:[#allocation3 + $0x28] sm:$0xff] %vm901, %v929
      %948 = vst.msk [vmem:[#allocation3 + $0x30] sm:$0xff] %vm901, %v931
      %949 = vst.msk [vmem:[#allocation3 + $0x38] sm:$0xff] %vm901, %v933
      %950 = vrot.lane.b32.xlu0 %v893, 64
      %v951 = vpop.permute.xlu0 %950
      %952 = vrot.lane.b32.xlu0 %v894, 64
      %v953 = vpop.permute.xlu0 %952
      %954 = vrot.lane.b32.xlu0 %v895, 64
      %v955 = vpop.permute.xlu0 %954
      %956 = vrot.lane.b32.xlu0 %v896, 64
      %v957 = vpop.permute.xlu0 %956
      %958 = vrot.lane.b32.xlu0 %v897, 64
      %v959 = vpop.permute.xlu0 %958
      %960 = vrot.lane.b32.xlu0 %v898, 64
      %v961 = vpop.permute.xlu0 %960
      %962 = vrot.lane.b32.xlu0 %v899, 64
      %v963 = vpop.permute.xlu0 %962
      %964 = vrot.lane.b32.xlu0 %v900, 64
      %v965 = vpop.permute.xlu0 %964
      %974 = vst.msk [vmem:[#allocation4] sm:$0xff] %vm901, %v951
      %975 = vst.msk [vmem:[#allocation4 + $0x8] sm:$0xff] %vm901, %v953
      %976 = vst.msk [vmem:[#allocation4 + $0x10] sm:$0xff] %vm901, %v955
      %977 = vst.msk [vmem:[#allocation4 + $0x18] sm:$0xff] %vm901, %v957
      %978 = vst.msk [vmem:[#allocation4 + $0x20] sm:$0xff] %vm901, %v959
      %979 = vst.msk [vmem:[#allocation4 + $0x28] sm:$0xff] %vm901, %v961
      %980 = vst.msk [vmem:[#allocation4 + $0x30] sm:$0xff] %vm901, %v963
      %981 = vst.msk [vmem:[#allocation4 + $0x38] sm:$0xff] %vm901, %v965
      %982 = vrot.lane.b32.xlu0 %v893, 120
      %v983 = vpop.permute.xlu0 %982
      %984 = vrot.lane.b32.xlu0 %v894, 120
      %v985 = vpop.permute.xlu0 %984
      %986 = vrot.lane.b32.xlu0 %v895, 120
      %v987 = vpop.permute.xlu0 %986
      %988 = vrot.lane.b32.xlu0 %v896, 120
      %v989 = vpop.permute.xlu0 %988
      %990 = vrot.lane.b32.xlu0 %v897, 120
      %v991 = vpop.permute.xlu0 %990
      %992 = vrot.lane.b32.xlu0 %v898, 120
      %v993 = vpop.permute.xlu0 %992
      %994 = vrot.lane.b32.xlu0 %v899, 120
      %v995 = vpop.permute.xlu0 %994
      %996 = vrot.lane.b32.xlu0 %v900, 120
      %v997 = vpop.permute.xlu0 %996
      %s1006 = scalar_lea.vmem [#allocation2], 64
      %1007 = vst.msk [vmem:[%s1006] sm:$0xff] %vm901, %v983
      %1008 = vst.msk [vmem:[%s1006 + $0x8] sm:$0xff] %vm901, %v985
      %1009 = vst.msk [vmem:[%s1006 + $0x10] sm:$0xff] %vm901, %v987
      %1010 = vst.msk [vmem:[%s1006 + $0x18] sm:$0xff] %vm901, %v989
      %1011 = vst.msk [vmem:[%s1006 + $0x20] sm:$0xff] %vm901, %v991
      %1012 = vst.msk [vmem:[%s1006 + $0x28] sm:$0xff] %vm901, %v993
      %1013 = vst.msk [vmem:[%s1006 + $0x30] sm:$0xff] %vm901, %v995
      %1014 = vst.msk [vmem:[%s1006 + $0x38] sm:$0xff] %vm901, %v997
      %1015 = vrot.lane.b32.xlu0 %v893, 88
      %v1016 = vpop.permute.xlu0 %1015
      %1017 = vrot.lane.b32.xlu0 %v894, 88
      %v1018 = vpop.permute.xlu0 %1017
      %1019 = vrot.lane.b32.xlu0 %v895, 88
      %v1020 = vpop.permute.xlu0 %1019
      %1021 = vrot.lane.b32.xlu0 %v896, 88
      %v1022 = vpop.permute.xlu0 %1021
      %1023 = vrot.lane.b32.xlu0 %v897, 88
      %v1024 = vpop.permute.xlu0 %1023
      %1025 = vrot.lane.b32.xlu0 %v898, 88
      %v1026 = vpop.permute.xlu0 %1025
      %1027 = vrot.lane.b32.xlu0 %v899, 88
      %v1028 = vpop.permute.xlu0 %1027
      %1029 = vrot.lane.b32.xlu0 %v900, 88
      %v1030 = vpop.permute.xlu0 %1029
      %s1039 = scalar_lea.vmem [#allocation3], 64
      %1040 = vst.msk [vmem:[%s1039] sm:$0xff] %vm901, %v1016
      %1041 = vst.msk [vmem:[%s1039 + $0x8] sm:$0xff] %vm901, %v1018
      %1042 = vst.msk [vmem:[%s1039 + $0x10] sm:$0xff] %vm901, %v1020
      %1043 = vst.msk [vmem:[%s1039 + $0x18] sm:$0xff] %vm901, %v1022
      %1044 = vst.msk [vmem:[%s1039 + $0x20] sm:$0xff] %vm901, %v1024
      %1045 = vst.msk [vmem:[%s1039 + $0x28] sm:$0xff] %vm901, %v1026
      %1046 = vst.msk [vmem:[%s1039 + $0x30] sm:$0xff] %vm901, %v1028
      %1047 = vst.msk [vmem:[%s1039 + $0x38] sm:$0xff] %vm901, %v1030
      %1048 = vrot.lane.b32.xlu0 %v893, 56
      %v1049 = vpop.permute.xlu0 %1048
      %1050 = vrot.lane.b32.xlu0 %v894, 56
      %v1051 = vpop.permute.xlu0 %1050
      %1052 = vrot.lane.b32.xlu0 %v895, 56
      %v1053 = vpop.permute.xlu0 %1052
      %1054 = vrot.lane.b32.xlu0 %v896, 56
      %v1055 = vpop.permute.xlu0 %1054
      %1056 = vrot.lane.b32.xlu0 %v897, 56
      %v1057 = vpop.permute.xlu0 %1056
      %1058 = vrot.lane.b32.xlu0 %v898, 56
      %v1059 = vpop.permute.xlu0 %1058
      %1060 = vrot.lane.b32.xlu0 %v899, 56
      %v1061 = vpop.permute.xlu0 %1060
      %1062 = vrot.lane.b32.xlu0 %v900, 56
      %v1063 = vpop.permute.xlu0 %1062
      %s1072 = scalar_lea.vmem [#allocation4], 64
      %1073 = vst.msk [vmem:[%s1072] sm:$0xff] %vm901, %v1049
      %1074 = vst.msk [vmem:[%s1072 + $0x8] sm:$0xff] %vm901, %v1051
      %1075 = vst.msk [vmem:[%s1072 + $0x10] sm:$0xff] %vm901, %v1053
      %1076 = vst.msk [vmem:[%s1072 + $0x18] sm:$0xff] %vm901, %v1055
      %1077 = vst.msk [vmem:[%s1072 + $0x20] sm:$0xff] %vm901, %v1057
      %1078 = vst.msk [vmem:[%s1072 + $0x28] sm:$0xff] %vm901, %v1059
      %1079 = vst.msk [vmem:[%s1072 + $0x30] sm:$0xff] %vm901, %v1061
      %1080 = vst.msk [vmem:[%s1072 + $0x38] sm:$0xff] %vm901, %v1063
      %1081 = vrot.lane.b32.xlu0 %v893, 112
      %v1082 = vpop.permute.xlu0 %1081
      %1083 = vrot.lane.b32.xlu0 %v894, 112
      %v1084 = vpop.permute.xlu0 %1083
      %1085 = vrot.lane.b32.xlu0 %v895, 112
      %v1086 = vpop.permute.xlu0 %1085
      %1087 = vrot.lane.b32.xlu0 %v896, 112
      %v1088 = vpop.permute.xlu0 %1087
      %1089 = vrot.lane.b32.xlu0 %v897, 112
      %v1090 = vpop.permute.xlu0 %1089
      %1091 = vrot.lane.b32.xlu0 %v898, 112
      %v1092 = vpop.permute.xlu0 %1091
      %1093 = vrot.lane.b32.xlu0 %v899, 112
      %v1094 = vpop.permute.xlu0 %1093
      %1095 = vrot.lane.b32.xlu0 %v900, 112
      %v1096 = vpop.permute.xlu0 %1095
      %s1105 = scalar_lea.vmem [#allocation2], 128
      %1106 = vst.msk [vmem:[%s1105] sm:$0xff] %vm901, %v1082
      %1107 = vst.msk [vmem:[%s1105 + $0x8] sm:$0xff] %vm901, %v1084
      %1108 = vst.msk [vmem:[%s1105 + $0x10] sm:$0xff] %vm901, %v1086
      %1109 = vst.msk [vmem:[%s1105 + $0x18] sm:$0xff] %vm901, %v1088
      %1110 = vst.msk [vmem:[%s1105 + $0x20] sm:$0xff] %vm901, %v1090
      %1111 = vst.msk [vmem:[%s1105 + $0x28] sm:$0xff] %vm901, %v1092
      %1112 = vst.msk [vmem:[%s1105 + $0x30] sm:$0xff] %vm901, %v1094
      %1113 = vst.msk [vmem:[%s1105 + $0x38] sm:$0xff] %vm901, %v1096
      %1114 = vrot.lane.b32.xlu0 %v893, 80
      %v1115 = vpop.permute.xlu0 %1114
      %1116 = vrot.lane.b32.xlu0 %v894, 80
      %v1117 = vpop.permute.xlu0 %1116
      %1118 = vrot.lane.b32.xlu0 %v895, 80
      %v1119 = vpop.permute.xlu0 %1118
      %1120 = vrot.lane.b32.xlu0 %v896, 80
      %v1121 = vpop.permute.xlu0 %1120
      %1122 = vrot.lane.b32.xlu0 %v897, 80
      %v1123 = vpop.permute.xlu0 %1122
      %1124 = vrot.lane.b32.xlu0 %v898, 80
      %v1125 = vpop.permute.xlu0 %1124
      %1126 = vrot.lane.b32.xlu0 %v899, 80
      %v1127 = vpop.permute.xlu0 %1126
      %1128 = vrot.lane.b32.xlu0 %v900, 80
      %v1129 = vpop.permute.xlu0 %1128
      %s1138 = scalar_lea.vmem [#allocation3], 128
      %1139 = vst.msk [vmem:[%s1138] sm:$0xff] %vm901, %v1115
      %1140 = vst.msk [vmem:[%s1138 + $0x8] sm:$0xff] %vm901, %v1117
      %1141 = vst.msk [vmem:[%s1138 + $0x10] sm:$0xff] %vm901, %v1119
      %1142 = vst.msk [vmem:[%s1138 + $0x18] sm:$0xff] %vm901, %v1121
      %1143 = vst.msk [vmem:[%s1138 + $0x20] sm:$0xff] %vm901, %v1123
      %1144 = vst.msk [vmem:[%s1138 + $0x28] sm:$0xff] %vm901, %v1125
      %1145 = vst.msk [vmem:[%s1138 + $0x30] sm:$0xff] %vm901, %v1127
      %1146 = vst.msk [vmem:[%s1138 + $0x38] sm:$0xff] %vm901, %v1129
      %1147 = vrot.lane.b32.xlu0 %v893, 48
      %v1148 = vpop.permute.xlu0 %1147
      %1149 = vrot.lane.b32.xlu0 %v894, 48
      %v1150 = vpop.permute.xlu0 %1149
      %1151 = vrot.lane.b32.xlu0 %v895, 48
      %v1152 = vpop.permute.xlu0 %1151
      %1153 = vrot.lane.b32.xlu0 %v896, 48
      %v1154 = vpop.permute.xlu0 %1153
      %1155 = vrot.lane.b32.xlu0 %v897, 48
      %v1156 = vpop.permute.xlu0 %1155
      %1157 = vrot.lane.b32.xlu0 %v898, 48
      %v1158 = vpop.permute.xlu0 %1157
      %1159 = vrot.lane.b32.xlu0 %v899, 48
      %v1160 = vpop.permute.xlu0 %1159
      %1161 = vrot.lane.b32.xlu0 %v900, 48
      %v1162 = vpop.permute.xlu0 %1161
      %s1171 = scalar_lea.vmem [#allocation4], 128
      %1172 = vst.msk [vmem:[%s1171] sm:$0xff] %vm901, %v1148
      %1173 = vst.msk [vmem:[%s1171 + $0x8] sm:$0xff] %vm901, %v1150
      %1174 = vst.msk [vmem:[%s1171 + $0x10] sm:$0xff] %vm901, %v1152
      %1175 = vst.msk [vmem:[%s1171 + $0x18] sm:$0xff] %vm901, %v1154
      %1176 = vst.msk [vmem:[%s1171 + $0x20] sm:$0xff] %vm901, %v1156
      %1177 = vst.msk [vmem:[%s1171 + $0x28] sm:$0xff] %vm901, %v1158
      %1178 = vst.msk [vmem:[%s1171 + $0x30] sm:$0xff] %vm901, %v1160
      %1179 = vst.msk [vmem:[%s1171 + $0x38] sm:$0xff] %vm901, %v1162
      %1180 = vrot.lane.b32.xlu0 %v893, 104
      %v1181 = vpop.permute.xlu0 %1180
      %1182 = vrot.lane.b32.xlu0 %v894, 104
      %v1183 = vpop.permute.xlu0 %1182
      %1184 = vrot.lane.b32.xlu0 %v895, 104
      %v1185 = vpop.permute.xlu0 %1184
      %1186 = vrot.lane.b32.xlu0 %v896, 104
      %v1187 = vpop.permute.xlu0 %1186
      %1188 = vrot.lane.b32.xlu0 %v897, 104
      %v1189 = vpop.permute.xlu0 %1188
      %1190 = vrot.lane.b32.xlu0 %v898, 104
      %v1191 = vpop.permute.xlu0 %1190
      %1192 = vrot.lane.b32.xlu0 %v899, 104
      %v1193 = vpop.permute.xlu0 %1192
      %1194 = vrot.lane.b32.xlu0 %v900, 104
      %v1195 = vpop.permute.xlu0 %1194
      %s1204 = scalar_lea.vmem [#allocation2], 192
      %1205 = vst.msk [vmem:[%s1204] sm:$0xff] %vm901, %v1181
      %1206 = vst.msk [vmem:[%s1204 + $0x8] sm:$0xff] %vm901, %v1183
      %1207 = vst.msk [vmem:[%s1204 + $0x10] sm:$0xff] %vm901, %v1185
      %1208 = vst.msk [vmem:[%s1204 + $0x18] sm:$0xff] %vm901, %v1187
      %1209 = vst.msk [vmem:[%s1204 + $0x20] sm:$0xff] %vm901, %v1189
      %1210 = vst.msk [vmem:[%s1204 + $0x28] sm:$0xff] %vm901, %v1191
      %1211 = vst.msk [vmem:[%s1204 + $0x30] sm:$0xff] %vm901, %v1193
      %1212 = vst.msk [vmem:[%s1204 + $0x38] sm:$0xff] %vm901, %v1195
      %1213 = vrot.lane.b32.xlu0 %v893, 72
      %v1214 = vpop.permute.xlu0 %1213
      %1215 = vrot.lane.b32.xlu0 %v894, 72
      %v1216 = vpop.permute.xlu0 %1215
      %1217 = vrot.lane.b32.xlu0 %v895, 72
      %v1218 = vpop.permute.xlu0 %1217
      %1219 = vrot.lane.b32.xlu0 %v896, 72
      %v1220 = vpop.permute.xlu0 %1219
      %1221 = vrot.lane.b32.xlu0 %v897, 72
      %v1222 = vpop.permute.xlu0 %1221
      %1223 = vrot.lane.b32.xlu0 %v898, 72
      %v1224 = vpop.permute.xlu0 %1223
      %1225 = vrot.lane.b32.xlu0 %v899, 72
      %v1226 = vpop.permute.xlu0 %1225
      %1227 = vrot.lane.b32.xlu0 %v900, 72
      %v1228 = vpop.permute.xlu0 %1227
      %s1237 = scalar_lea.vmem [#allocation3], 192
      %1238 = vst.msk [vmem:[%s1237] sm:$0xff] %vm901, %v1214
      %1239 = vst.msk [vmem:[%s1237 + $0x8] sm:$0xff] %vm901, %v1216
      %1240 = vst.msk [vmem:[%s1237 + $0x10] sm:$0xff] %vm901, %v1218
      %1241 = vst.msk [vmem:[%s1237 + $0x18] sm:$0xff] %vm901, %v1220
      %1242 = vst.msk [vmem:[%s1237 + $0x20] sm:$0xff] %vm901, %v1222
      %1243 = vst.msk [vmem:[%s1237 + $0x28] sm:$0xff] %vm901, %v1224
      %1244 = vst.msk [vmem:[%s1237 + $0x30] sm:$0xff] %vm901, %v1226
      %1245 = vst.msk [vmem:[%s1237 + $0x38] sm:$0xff] %vm901, %v1228
      %1246 = vrot.lane.b32.xlu0 %v893, 40
      %v1247 = vpop.permute.xlu0 %1246
      %1248 = vrot.lane.b32.xlu0 %v894, 40
      %v1249 = vpop.permute.xlu0 %1248
      %1250 = vrot.lane.b32.xlu0 %v895, 40
      %v1251 = vpop.permute.xlu0 %1250
      %1252 = vrot.lane.b32.xlu0 %v896, 40
      %v1253 = vpop.permute.xlu0 %1252
      %1254 = vrot.lane.b32.xlu0 %v897, 40
      %v1255 = vpop.permute.xlu0 %1254
      %1256 = vrot.lane.b32.xlu0 %v898, 40
      %v1257 = vpop.permute.xlu0 %1256
      %1258 = vrot.lane.b32.xlu0 %v899, 40
      %v1259 = vpop.permute.xlu0 %1258
      %1260 = vrot.lane.b32.xlu0 %v900, 40
      %v1261 = vpop.permute.xlu0 %1260
      %s1270 = scalar_lea.vmem [#allocation4], 192
      %1271 = vst.msk [vmem:[%s1270] sm:$0xff] %vm901, %v1247
      %1272 = vst.msk [vmem:[%s1270 + $0x8] sm:$0xff] %vm901, %v1249
      %1273 = vst.msk [vmem:[%s1270 + $0x10] sm:$0xff] %vm901, %v1251
      %1274 = vst.msk [vmem:[%s1270 + $0x18] sm:$0xff] %vm901, %v1253
      %1275 = vst.msk [vmem:[%s1270 + $0x20] sm:$0xff] %vm901, %v1255
      %1276 = vst.msk [vmem:[%s1270 + $0x28] sm:$0xff] %vm901, %v1257
      %1277 = vst.msk [vmem:[%s1270 + $0x30] sm:$0xff] %vm901, %v1259
      %1278 = vst.msk [vmem:[%s1270 + $0x38] sm:$0xff] %vm901, %v1261
      %v1279 = vld [vmem:[#allocation2] sm:$0xff]
      %v1280 = vld [vmem:[#allocation2 + $0x8] sm:$0xff]
      %v1281 = vld [vmem:[#allocation2 + $0x10] sm:$0xff]
      %v1282 = vld [vmem:[#allocation2 + $0x18] sm:$0xff]
      %v1283 = vld [vmem:[#allocation2 + $0x20] sm:$0xff]
      %v1284 = vld [vmem:[#allocation2 + $0x28] sm:$0xff]
      %v1285 = vld [vmem:[#allocation2 + $0x30] sm:$0xff]
      %v1286 = vld [vmem:[#allocation2 + $0x38] sm:$0xff]
      %v1287 = vld [vmem:[#allocation2 + $0x40] sm:$0xff]
      %v1288 = vld [vmem:[#allocation2 + $0x48] sm:$0xff]
      %v1289 = vld [vmem:[#allocation2 + $0x50] sm:$0xff]
      %v1290 = vld [vmem:[#allocation2 + $0x58] sm:$0xff]
      %v1291 = vld [vmem:[#allocation2 + $0x60] sm:$0xff]
      %v1292 = vld [vmem:[#allocation2 + $0x68] sm:$0xff]
      %v1293 = vld [vmem:[#allocation2 + $0x70] sm:$0xff]
      %v1294 = vld [vmem:[#allocation2 + $0x78] sm:$0xff]
      %v1295 = vld [vmem:[#allocation2 + $0x80] sm:$0xff]
      %v1296 = vld [vmem:[#allocation2 + $0x88] sm:$0xff]
      %v1297 = vld [vmem:[#allocation2 + $0x90] sm:$0xff]
      %v1298 = vld [vmem:[#allocation2 + $0x98] sm:$0xff]
      %v1299 = vld [vmem:[#allocation2 + $0xa0] sm:$0xff]
      %v1300 = vld [vmem:[#allocation2 + $0xa8] sm:$0xff]
      %v1301 = vld [vmem:[#allocation2 + $0xb0] sm:$0xff]
      %v1302 = vld [vmem:[#allocation2 + $0xb8] sm:$0xff]
      %v1303 = vld [vmem:[#allocation2 + $0xc0] sm:$0xff]
      %v1304 = vld [vmem:[#allocation2 + $0xc8] sm:$0xff]
      %v1305 = vld [vmem:[#allocation2 + $0xd0] sm:$0xff]
      %v1306 = vld [vmem:[#allocation2 + $0xd8] sm:$0xff]
      %v1307 = vld [vmem:[#allocation2 + $0xe0] sm:$0xff]
      %v1308 = vld [vmem:[#allocation2 + $0xe8] sm:$0xff]
      %v1309 = vld [vmem:[#allocation2 + $0xf0] sm:$0xff]
      %v1310 = vld [vmem:[#allocation2 + $0xf8] sm:$0xff]
      %v1311 = vld [vmem:[#allocation3] sm:$0xff]
      %v1312 = vld [vmem:[#allocation3 + $0x8] sm:$0xff]
      %v1313 = vld [vmem:[#allocation3 + $0x10] sm:$0xff]
      %v1314 = vld [vmem:[#allocation3 + $0x18] sm:$0xff]
      %v1315 = vld [vmem:[#allocation3 + $0x20] sm:$0xff]
      %v1316 = vld [vmem:[#allocation3 + $0x28] sm:$0xff]
      %v1317 = vld [vmem:[#allocation3 + $0x30] sm:$0xff]
      %v1318 = vld [vmem:[#allocation3 + $0x38] sm:$0xff]
      %v1319 = vld [vmem:[#allocation3 + $0x40] sm:$0xff]
      %v1320 = vld [vmem:[#allocation3 + $0x48] sm:$0xff]
      %v1321 = vld [vmem:[#allocation3 + $0x50] sm:$0xff]
      %v1322 = vld [vmem:[#allocation3 + $0x58] sm:$0xff]
      %v1323 = vld [vmem:[#allocation3 + $0x60] sm:$0xff]
      %v1324 = vld [vmem:[#allocation3 + $0x68] sm:$0xff]
      %v1325 = vld [vmem:[#allocation3 + $0x70] sm:$0xff]
      %v1326 = vld [vmem:[#allocation3 + $0x78] sm:$0xff]
      %v1327 = vld [vmem:[#allocation3 + $0x80] sm:$0xff]
      %v1328 = vld [vmem:[#allocation3 + $0x88] sm:$0xff]
      %v1329 = vld [vmem:[#allocation3 + $0x90] sm:$0xff]
      %v1330 = vld [vmem:[#allocation3 + $0x98] sm:$0xff]
      %v1331 = vld [vmem:[#allocation3 + $0xa0] sm:$0xff]
      %v1332 = vld [vmem:[#allocation3 + $0xa8] sm:$0xff]
      %v1333 = vld [vmem:[#allocation3 + $0xb0] sm:$0xff]
      %v1334 = vld [vmem:[#allocation3 + $0xb8] sm:$0xff]
      %v1335 = vld [vmem:[#allocation3 + $0xc0] sm:$0xff]
      %v1336 = vld [vmem:[#allocation3 + $0xc8] sm:$0xff]
      %v1337 = vld [vmem:[#allocation3 + $0xd0] sm:$0xff]
      %v1338 = vld [vmem:[#allocation3 + $0xd8] sm:$0xff]
      %v1339 = vld [vmem:[#allocation3 + $0xe0] sm:$0xff]
      %v1340 = vld [vmem:[#allocation3 + $0xe8] sm:$0xff]
      %v1341 = vld [vmem:[#allocation3 + $0xf0] sm:$0xff]
      %v1342 = vld [vmem:[#allocation3 + $0xf8] sm:$0xff]
      %v1343 = vld [vmem:[%s1] sm:$0xff]
      %v1344 = vld [vmem:[%s1 + $0x8] sm:$0xff]
      %v1345 = vld [vmem:[%s1 + $0x10] sm:$0xff]
      %v1346 = vld [vmem:[%s1 + $0x18] sm:$0xff]
      %v1347 = vld [vmem:[%s1 + $0x20] sm:$0xff]
      %v1348 = vld [vmem:[%s1 + $0x28] sm:$0xff]
      %v1349 = vld [vmem:[%s1 + $0x30] sm:$0xff]
      %v1350 = vld [vmem:[%s1 + $0x38] sm:$0xff]
      %v1351 = vld [vmem:[%s1 + $0x40] sm:$0xff]
      %v1352 = vld [vmem:[%s1 + $0x48] sm:$0xff]
      %v1353 = vld [vmem:[%s1 + $0x50] sm:$0xff]
      %v1354 = vld [vmem:[%s1 + $0x58] sm:$0xff]
      %v1355 = vld [vmem:[%s1 + $0x60] sm:$0xff]
      %v1356 = vld [vmem:[%s1 + $0x68] sm:$0xff]
      %v1357 = vld [vmem:[%s1 + $0x70] sm:$0xff]
      %v1358 = vld [vmem:[%s1 + $0x78] sm:$0xff]
      %v1360 = vsel %vm901, %v1279, 0
      %v1363 = vsel %vm901, %v1280, 0
      %v1366 = vsel %vm901, %v1281, 0
      %v1369 = vsel %vm901, %v1282, 0
      %v1372 = vsel %vm901, %v1283, 0
      %v1375 = vsel %vm901, %v1284, 0
      %v1378 = vsel %vm901, %v1285, 0
      %v1381 = vsel %vm901, %v1286, 0
      %v1384 = vsel %vm901, %v1311, 0
      %v1387 = vsel %vm901, %v1312, 0
      %v1390 = vsel %vm901, %v1313, 0
      %v1393 = vsel %vm901, %v1314, 0
      %v1396 = vsel %vm901, %v1315, 0
      %v1399 = vsel %vm901, %v1316, 0
      %v1402 = vsel %vm901, %v1317, 0
      %v1405 = vsel %vm901, %v1318, 0
      %1407 = vmatprep.subr.bf16.mxu0 0
      %1408 = vmatpush1.bf16.xpose.msra.mxu0 %v1384
      %1409 = vmatprep.subr.bf16.mxu0 0
      %1410 = vmatpush1.bf16.xpose.msra.mxu0 %v1387
      %1411 = vmatprep.subr.bf16.mxu0 0
      %1412 = vmatpush1.bf16.xpose.msra.mxu0 %v1390
      %1413 = vmatprep.subr.bf16.mxu0 0
      %1414 = vmatpush1.bf16.xpose.msra.mxu0 %v1393
      %1415 = vmatprep.subr.bf16.mxu0 0
      %1416 = vmatpush1.bf16.xpose.msra.mxu0 %v1396
      %1417 = vmatprep.subr.bf16.mxu0 0
      %1418 = vmatpush1.bf16.xpose.msra.mxu0 %v1399
      %1419 = vmatprep.subr.bf16.mxu0 0
      %1420 = vmatpush1.bf16.xpose.msra.mxu0 %v1402
      %1421 = vmatprep.subr.bf16.mxu0 0
      %1422 = vmatpush1.bf16.xpose.msra.mxu0 %v1405
      %1423 = vmatprep.subr.bf16.mxu0 0
      %1424 = vmatpush1.bf16.xpose.msra.mxu0 0
      %1425 = vmatprep.subr.bf16.mxu0 0
      %1426 = vmatpush1.bf16.xpose.msra.mxu0 0
      %1427 = vmatprep.subr.bf16.mxu0 0
      %1428 = vmatpush1.bf16.xpose.msra.mxu0 0
      %1429 = vmatprep.subr.bf16.mxu0 0
      %1430 = vmatpush1.bf16.xpose.msra.mxu0 0
      %1431 = vmatprep.subr.bf16.mxu0 0
      %1432 = vmatpush1.bf16.xpose.msra.mxu0 0
      %1433 = vmatprep.subr.bf16.mxu0 0
      %1434 = vmatpush1.bf16.xpose.msra.mxu0 0
      %1435 = vmatprep.subr.bf16.mxu0 0
      %1436 = vmatpush1.bf16.xpose.msra.mxu0 0
      %1437 = vmatprep.subr.bf16.mxu0 0
      %1438 = vmatpush1.bf16.xpose.msra.mxu0 0
      %1439 = vmatprep.mubr.bf16.mxu0 0
      %1440 = vmatmul.mubr.bf16.gmra.mrb[0].mxu0 %v1360
      %v1441 = vpop.f32.mrb[0].mxu0
      %v1442 = vadd.f32 %v1343, %v1441
      %v1443 = vpop.f32.mrb[0].mxu0
      %v1444 = vpop.f32.mrb[0].mxu0
      %v1445 = vadd.f32 %v1344, %v1444
      %v1446 = vpop.f32.mrb[0].mxu0
      %1447 = vmatprep.mubr.bf16.mxu0 0
      %1448 = vmatmul.mubr.bf16.gmra.mrb[0].mxu0 %v1363
      %v1449 = vpop.f32.mrb[0].mxu0
      %v1450 = vadd.f32 %v1345, %v1449
      %v1451 = vpop.f32.mrb[0].mxu0
      %v1452 = vpop.f32.mrb[0].mxu0
      %v1453 = vadd.f32 %v1346, %v1452
      %v1454 = vpop.f32.mrb[0].mxu0
      %1455 = vmatprep.mubr.bf16.mxu0 0
      %1456 = vmatmul.mubr.bf16.gmra.mrb[0].mxu0 %v1366
      %v1457 = vpop.f32.mrb[0].mxu0
      %v1458 = vadd.f32 %v1347, %v1457
      %v1459 = vpop.f32.mrb[0].mxu0
      %v1460 = vpop.f32.mrb[0].mxu0
      %v1461 = vadd.f32 %v1348, %v1460
      %v1462 = vpop.f32.mrb[0].mxu0
      %1463 = vmatprep.mubr.bf16.mxu0 0
      %1464 = vmatmul.mubr.bf16.gmra.mrb[0].mxu0 %v1369
      %v1465 = vpop.f32.mrb[0].mxu0
      %v1466 = vadd.f32 %v1349, %v1465
      %v1467 = vpop.f32.mrb[0].mxu0
      %v1468 = vpop.f32.mrb[0].mxu0
      %v1469 = vadd.f32 %v1350, %v1468
      %v1470 = vpop.f32.mrb[0].mxu0
      %1471 = vmatprep.mubr.bf16.mxu0 0
      %1472 = vmatmul.mubr.bf16.gmra.mrb[0].mxu0 %v1372
      %v1473 = vpop.f32.mrb[0].mxu0
      %v1474 = vadd.f32 %v1351, %v1473
      %v1475 = vpop.f32.mrb[0].mxu0
      %v1476 = vpop.f32.mrb[0].mxu0
      %v1477 = vadd.f32 %v1352, %v1476
      %v1478 = vpop.f32.mrb[0].mxu0
      %1479 = vmatprep.mubr.bf16.mxu0 0
      %1480 = vmatmul.mubr.bf16.gmra.mrb[0].mxu0 %v1375
      %v1481 = vpop.f32.mrb[0].mxu0
      %v1482 = vadd.f32 %v1353, %v1481
      %v1483 = vpop.f32.mrb[0].mxu0
      %v1484 = vpop.f32.mrb[0].mxu0
      %v1485 = vadd.f32 %v1354, %v1484
      %v1486 = vpop.f32.mrb[0].mxu0
      %1487 = vmatprep.mubr.bf16.mxu0 0
      %1488 = vmatmul.mubr.bf16.gmra.mrb[0].mxu0 %v1378
      %v1489 = vpop.f32.mrb[0].mxu0
      %v1490 = vadd.f32 %v1355, %v1489
      %v1491 = vpop.f32.mrb[0].mxu0
      %v1492 = vpop.f32.mrb[0].mxu0
      %v1493 = vadd.f32 %v1356, %v1492
      %v1494 = vpop.f32.mrb[0].mxu0
      %1495 = vmatprep.mubr.bf16.mxu0 0
      %1496 = vmatmul.mubr.bf16.gmra.mrb[0].mxu0 %v1381
      %v1497 = vpop.f32.mrb[0].mxu0
      %v1498 = vadd.f32 %v1357, %v1497
      %v1499 = vpop.f32.mrb[0].mxu0
      %v1500 = vpop.f32.mrb[0].mxu0
      %v1501 = vadd.f32 %v1358, %v1500
      %v1502 = vpop.f32.mrb[0].mxu0
      %1503 = vdwg.mxu0
      %v1505 = vsel %vm901, %v1287, 0
      %v1508 = vsel %vm901, %v1288, 0
      %v1511 = vsel %vm901, %v1289, 0
      %v1514 = vsel %vm901, %v1290, 0
      %v1517 = vsel %vm901, %v1291, 0
      %v1520 = vsel %vm901, %v1292, 0
      %v1523 = vsel %vm901, %v1293, 0
      %v1526 = vsel %vm901, %v1294, 0
      %v1529 = vsel %vm901, %v1319, 0
      %v1532 = vsel %vm901, %v1320, 0
      %v1535 = vsel %vm901, %v1321, 0
      %v1538 = vsel %vm901, %v1322, 0
      %v1541 = vsel %vm901, %v1323, 0
      %v1544 = vsel %vm901, %v1324, 0
      %v1547 = vsel %vm901, %v1325, 0
      %v1550 = vsel %vm901, %v1326, 0
      %1552 = vmatprep.subr.bf16.mxu0 0
      %1553 = vmatpush1.bf16.xpose.msra.mxu0 %v1529
      %1554 = vmatprep.subr.bf16.mxu0 0
      %1555 = vmatpush1.bf16.xpose.msra.mxu0 %v1532
      %1556 = vmatprep.subr.bf16.mxu0 0
      %1557 = vmatpush1.bf16.xpose.msra.mxu0 %v1535
      %1558 = vmatprep.subr.bf16.mxu0 0
      %1559 = vmatpush1.bf16.xpose.msra.mxu0 %v1538
      %1560 = vmatprep.subr.bf16.mxu0 0
      %1561 = vmatpush1.bf16.xpose.msra.mxu0 %v1541
      %1562 = vmatprep.subr.bf16.mxu0 0
      %1563 = vmatpush1.bf16.xpose.msra.mxu0 %v1544
      %1564 = vmatprep.subr.bf16.mxu0 0
      %1565 = vmatpush1.bf16.xpose.msra.mxu0 %v1547
      %1566 = vmatprep.subr.bf16.mxu0 0
      %1567 = vmatpush1.bf16.xpose.msra.mxu0 %v1550
      %1568 = vmatprep.subr.bf16.mxu0 0
      %1569 = vmatpush1.bf16.xpose.msra.mxu0 0
      %1570 = vmatprep.subr.bf16.mxu0 0
      %1571 = vmatpush1.bf16.xpose.msra.mxu0 0
      %1572 = vmatprep.subr.bf16.mxu0 0
      %1573 = vmatpush1.bf16.xpose.msra.mxu0 0
      %1574 = vmatprep.subr.bf16.mxu0 0
      %1575 = vmatpush1.bf16.xpose.msra.mxu0 0
      %1576 = vmatprep.subr.bf16.mxu0 0
      %1577 = vmatpush1.bf16.xpose.msra.mxu0 0
      %1578 = vmatprep.subr.bf16.mxu0 0
      %1579 = vmatpush1.bf16.xpose.msra.mxu0 0
      %1580 = vmatprep.subr.bf16.mxu0 0
      %1581 = vmatpush1.bf16.xpose.msra.mxu0 0
      %1582 = vmatprep.subr.bf16.mxu0 0
      %1583 = vmatpush1.bf16.xpose.msra.mxu0 0
      %1584 = vmatprep.mubr.bf16.mxu0 0
      %1585 = vmatmul.mubr.bf16.gmra.mrb[0].mxu0 %v1505
      %v1586 = vpop.f32.mrb[0].mxu0
      %v1587 = vadd.f32 %v1343, %v1586
      %v1588 = vpop.f32.mrb[0].mxu0
      %v1589 = vpop.f32.mrb[0].mxu0
      %v1590 = vadd.f32 %v1344, %v1589
      %v1591 = vpop.f32.mrb[0].mxu0
      %1592 = vmatprep.mubr.bf16.mxu0 0
      %1593 = vmatmul.mubr.bf16.gmra.mrb[0].mxu0 %v1508
      %v1594 = vpop.f32.mrb[0].mxu0
      %v1595 = vadd.f32 %v1345, %v1594
      %v1596 = vpop.f32.mrb[0].mxu0
      %v1597 = vpop.f32.mrb[0].mxu0
      %v1598 = vadd.f32 %v1346, %v1597
      %v1599 = vpop.f32.mrb[0].mxu0
      %1600 = vmatprep.mubr.bf16.mxu0 0
      %1601 = vmatmul.mubr.bf16.gmra.mrb[0].mxu0 %v1511
      %v1602 = vpop.f32.mrb[0].mxu0
      %v1603 = vadd.f32 %v1347, %v1602
      %v1604 = vpop.f32.mrb[0].mxu0
      %v1605 = vpop.f32.mrb[0].mxu0
      %v1606 = vadd.f32 %v1348, %v1605
      %v1607 = vpop.f32.mrb[0].mxu0
      %1608 = vmatprep.mubr.bf16.mxu0 0
      %1609 = vmatmul.mubr.bf16.gmra.mrb[0].mxu0 %v1514
      %v1610 = vpop.f32.mrb[0].mxu0
      %v1611 = vadd.f32 %v1349, %v1610
      %v1612 = vpop.f32.mrb[0].mxu0
      %v1613 = vpop.f32.mrb[0].mxu0
      %v1614 = vadd.f32 %v1350, %v1613
      %v1615 = vpop.f32.mrb[0].mxu0
      %1616 = vmatprep.mubr.bf16.mxu0 0
      %1617 = vmatmul.mubr.bf16.gmra.mrb[0].mxu0 %v1517
      %v1618 = vpop.f32.mrb[0].mxu0
      %v1619 = vadd.f32 %v1351, %v1618
      %v1620 = vpop.f32.mrb[0].mxu0
      %v1621 = vpop.f32.mrb[0].mxu0
      %v1622 = vadd.f32 %v1352, %v1621
      %v1623 = vpop.f32.mrb[0].mxu0
      %1624 = vmatprep.mubr.bf16.mxu0 0
      %1625 = vmatmul.mubr.bf16.gmra.mrb[0].mxu0 %v1520
      %v1626 = vpop.f32.mrb[0].mxu0
      %v1627 = vadd.f32 %v1353, %v1626
      %v1628 = vpop.f32.mrb[0].mxu0
      %v1629 = vpop.f32.mrb[0].mxu0
      %v1630 = vadd.f32 %v1354, %v1629
      %v1631 = vpop.f32.mrb[0].mxu0
      %1632 = vmatprep.mubr.bf16.mxu0 0
      %1633 = vmatmul.mubr.bf16.gmra.mrb[0].mxu0 %v1523
      %v1634 = vpop.f32.mrb[0].mxu0
      %v1635 = vadd.f32 %v1355, %v1634
      %v1636 = vpop.f32.mrb[0].mxu0
      %v1637 = vpop.f32.mrb[0].mxu0
      %v1638 = vadd.f32 %v1356, %v1637
      %v1639 = vpop.f32.mrb[0].mxu0
      %1640 = vmatprep.mubr.bf16.mxu0 0
      %1641 = vmatmul.mubr.bf16.gmra.mrb[0].mxu0 %v1526
      %v1642 = vpop.f32.mrb[0].mxu0
      %v1643 = vadd.f32 %v1357, %v1642
      %v1644 = vpop.f32.mrb[0].mxu0
      %v1645 = vpop.f32.mrb[0].mxu0
      %v1646 = vadd.f32 %v1358, %v1645
      %v1647 = vpop.f32.mrb[0].mxu0
      %1648 = vdwg.mxu0
      %v1650 = vsel %vm901, %v1295, 0
      %v1653 = vsel %vm901, %v1296, 0
      %v1656 = vsel %vm901, %v1297, 0
      %v1659 = vsel %vm901, %v1298, 0
      %v1662 = vsel %vm901, %v1299, 0
      %v1665 = vsel %vm901, %v1300, 0
      %v1668 = vsel %vm901, %v1301, 0
      %v1671 = vsel %vm901, %v1302, 0
      %v1674 = vsel %vm901, %v1327, 0
      %v1677 = vsel %vm901, %v1328, 0
      %v1680 = vsel %vm901, %v1329, 0
      %v1683 = vsel %vm901, %v1330, 0
      %v1686 = vsel %vm901, %v1331, 0
      %v1689 = vsel %vm901, %v1332, 0
      %v1692 = vsel %vm901, %v1333, 0
      %v1695 = vsel %vm901, %v1334, 0
      %1697 = vmatprep.subr.bf16.mxu0 0
      %1698 = vmatpush1.bf16.xpose.msra.mxu0 %v1674
      %1699 = vmatprep.subr.bf16.mxu0 0
      %1700 = vmatpush1.bf16.xpose.msra.mxu0 %v1677
      %1701 = vmatprep.subr.bf16.mxu0 0
      %1702 = vmatpush1.bf16.xpose.msra.mxu0 %v1680
      %1703 = vmatprep.subr.bf16.mxu0 0
      %1704 = vmatpush1.bf16.xpose.msra.mxu0 %v1683
      %1705 = vmatprep.subr.bf16.mxu0 0
      %1706 = vmatpush1.bf16.xpose.msra.mxu0 %v1686
      %1707 = vmatprep.subr.bf16.mxu0 0
      %1708 = vmatpush1.bf16.xpose.msra.mxu0 %v1689
      %1709 = vmatprep.subr.bf16.mxu0 0
      %1710 = vmatpush1.bf16.xpose.msra.mxu0 %v1692
      %1711 = vmatprep.subr.bf16.mxu0 0
      %1712 = vmatpush1.bf16.xpose.msra.mxu0 %v1695
      %1713 = vmatprep.subr.bf16.mxu0 0
      %1714 = vmatpush1.bf16.xpose.msra.mxu0 0
      %1715 = vmatprep.subr.bf16.mxu0 0
      %1716 = vmatpush1.bf16.xpose.msra.mxu0 0
      %1717 = vmatprep.subr.bf16.mxu0 0
      %1718 = vmatpush1.bf16.xpose.msra.mxu0 0
      %1719 = vmatprep.subr.bf16.mxu0 0
      %1720 = vmatpush1.bf16.xpose.msra.mxu0 0
      %1721 = vmatprep.subr.bf16.mxu0 0
      %1722 = vmatpush1.bf16.xpose.msra.mxu0 0
      %1723 = vmatprep.subr.bf16.mxu0 0
      %1724 = vmatpush1.bf16.xpose.msra.mxu0 0
      %1725 = vmatprep.subr.bf16.mxu0 0
      %1726 = vmatpush1.bf16.xpose.msra.mxu0 0
      %1727 = vmatprep.subr.bf16.mxu0 0
      %1728 = vmatpush1.bf16.xpose.msra.mxu0 0
      %1729 = vmatprep.mubr.bf16.mxu0 0
      %1730 = vmatmul.mubr.bf16.gmra.mrb[0].mxu0 %v1650
      %v1731 = vpop.f32.mrb[0].mxu0
      %v1732 = vadd.f32 %v1343, %v1731
      %v1733 = vpop.f32.mrb[0].mxu0
      %v1734 = vpop.f32.mrb[0].mxu0
      %v1735 = vadd.f32 %v1344, %v1734
      %v1736 = vpop.f32.mrb[0].mxu0
      %1737 = vmatprep.mubr.bf16.mxu0 0
      %1738 = vmatmul.mubr.bf16.gmra.mrb[0].mxu0 %v1653
      %v1739 = vpop.f32.mrb[0].mxu0
      %v1740 = vadd.f32 %v1345, %v1739
      %v1741 = vpop.f32.mrb[0].mxu0
      %v1742 = vpop.f32.mrb[0].mxu0
      %v1743 = vadd.f32 %v1346, %v1742
      %v1744 = vpop.f32.mrb[0].mxu0
      %1745 = vmatprep.mubr.bf16.mxu0 0
      %1746 = vmatmul.mubr.bf16.gmra.mrb[0].mxu0 %v1656
      %v1747 = vpop.f32.mrb[0].mxu0
      %v1748 = vadd.f32 %v1347, %v1747
      %v1749 = vpop.f32.mrb[0].mxu0
      %v1750 = vpop.f32.mrb[0].mxu0
      %v1751 = vadd.f32 %v1348, %v1750
      %v1752 = vpop.f32.mrb[0].mxu0
      %1753 = vmatprep.mubr.bf16.mxu0 0
      %1754 = vmatmul.mubr.bf16.gmra.mrb[0].mxu0 %v1659
      %v1755 = vpop.f32.mrb[0].mxu0
      %v1756 = vadd.f32 %v1349, %v1755
      %v1757 = vpop.f32.mrb[0].mxu0
      %v1758 = vpop.f32.mrb[0].mxu0
      %v1759 = vadd.f32 %v1350, %v1758
      %v1760 = vpop.f32.mrb[0].mxu0
      %1761 = vmatprep.mubr.bf16.mxu0 0
      %1762 = vmatmul.mubr.bf16.gmra.mrb[0].mxu0 %v1662
      %v1763 = vpop.f32.mrb[0].mxu0
      %v1764 = vadd.f32 %v1351, %v1763
      %v1765 = vpop.f32.mrb[0].mxu0
      %v1766 = vpop.f32.mrb[0].mxu0
      %v1767 = vadd.f32 %v1352, %v1766
      %v1768 = vpop.f32.mrb[0].mxu0
      %1769 = vmatprep.mubr.bf16.mxu0 0
      %1770 = vmatmul.mubr.bf16.gmra.mrb[0].mxu0 %v1665
      %v1771 = vpop.f32.mrb[0].mxu0
      %v1772 = vadd.f32 %v1353, %v1771
      %v1773 = vpop.f32.mrb[0].mxu0
      %v1774 = vpop.f32.mrb[0].mxu0
      %v1775 = vadd.f32 %v1354, %v1774
      %v1776 = vpop.f32.mrb[0].mxu0
      %1777 = vmatprep.mubr.bf16.mxu0 0
      %1778 = vmatmul.mubr.bf16.gmra.mrb[0].mxu0 %v1668
      %v1779 = vpop.f32.mrb[0].mxu0
      %v1780 = vadd.f32 %v1355, %v1779
      %v1781 = vpop.f32.mrb[0].mxu0
      %v1782 = vpop.f32.mrb[0].mxu0
      %v1783 = vadd.f32 %v1356, %v1782
      %v1784 = vpop.f32.mrb[0].mxu0
      %1785 = vmatprep.mubr.bf16.mxu0 0
      %1786 = vmatmul.mubr.bf16.gmra.mrb[0].mxu0 %v1671
      %v1787 = vpop.f32.mrb[0].mxu0
      %v1788 = vadd.f32 %v1357, %v1787
      %v1789 = vpop.f32.mrb[0].mxu0
      %v1790 = vpop.f32.mrb[0].mxu0
      %v1791 = vadd.f32 %v1358, %v1790
      %v1792 = vpop.f32.mrb[0].mxu0
      %1793 = vdwg.mxu0
      %v1795 = vsel %vm901, %v1303, 0
      %v1798 = vsel %vm901, %v1304, 0
      %v1801 = vsel %vm901, %v1305, 0
      %v1804 = vsel %vm901, %v1306, 0
      %v1807 = vsel %vm901, %v1307, 0
      %v1810 = vsel %vm901, %v1308, 0
      %v1813 = vsel %vm901, %v1309, 0
      %v1816 = vsel %vm901, %v1310, 0
      %v1819 = vsel %vm901, %v1335, 0
      %v1822 = vsel %vm901, %v1336, 0
      %v1825 = vsel %vm901, %v1337, 0
      %v1828 = vsel %vm901, %v1338, 0
      %v1831 = vsel %vm901, %v1339, 0
      %v1834 = vsel %vm901, %v1340, 0
      %v1837 = vsel %vm901, %v1341, 0
      %v1840 = vsel %vm901, %v1342, 0
      %1842 = vmatprep.subr.bf16.mxu0 0
      %1843 = vmatpush1.bf16.xpose.msra.mxu0 %v1819
      %1844 = vmatprep.subr.bf16.mxu0 0
      %1845 = vmatpush1.bf16.xpose.msra.mxu0 %v1822
      %1846 = vmatprep.subr.bf16.mxu0 0
      %1847 = vmatpush1.bf16.xpose.msra.mxu0 %v1825
      %1848 = vmatprep.subr.bf16.mxu0 0
      %1849 = vmatpush1.bf16.xpose.msra.mxu0 %v1828
      %1850 = vmatprep.subr.bf16.mxu0 0
      %1851 = vmatpush1.bf16.xpose.msra.mxu0 %v1831
      %1852 = vmatprep.subr.bf16.mxu0 0
      %1853 = vmatpush1.bf16.xpose.msra.mxu0 %v1834
      %1854 = vmatprep.subr.bf16.mxu0 0
      %1855 = vmatpush1.bf16.xpose.msra.mxu0 %v1837
      %1856 = vmatprep.subr.bf16.mxu0 0
      %1857 = vmatpush1.bf16.xpose.msra.mxu0 %v1840
      %1858 = vmatprep.subr.bf16.mxu0 0
      %1859 = vmatpush1.bf16.xpose.msra.mxu0 0
      %1860 = vmatprep.subr.bf16.mxu0 0
      %1861 = vmatpush1.bf16.xpose.msra.mxu0 0
      %1862 = vmatprep.subr.bf16.mxu0 0
      %1863 = vmatpush1.bf16.xpose.msra.mxu0 0
      %1864 = vmatprep.subr.bf16.mxu0 0
      %1865 = vmatpush1.bf16.xpose.msra.mxu0 0
      %1866 = vmatprep.subr.bf16.mxu0 0
      %1867 = vmatpush1.bf16.xpose.msra.mxu0 0
      %1868 = vmatprep.subr.bf16.mxu0 0
      %1869 = vmatpush1.bf16.xpose.msra.mxu0 0
      %1870 = vmatprep.subr.bf16.mxu0 0
      %1871 = vmatpush1.bf16.xpose.msra.mxu0 0
      %1872 = vmatprep.subr.bf16.mxu0 0
      %1873 = vmatpush1.bf16.xpose.msra.mxu0 0
      %1874 = vmatprep.mubr.bf16.mxu0 0
      %1875 = vmatmul.mubr.bf16.gmra.mrb[0].mxu0 %v1795
      %v1876 = vpop.f32.mrb[0].mxu0
      %v1877 = vadd.f32 %v1343, %v1876
      %v1878 = vpop.f32.mrb[0].mxu0
      %v1879 = vpop.f32.mrb[0].mxu0
      %v1880 = vadd.f32 %v1344, %v1879
      %v1881 = vpop.f32.mrb[0].mxu0
      %1882 = vmatprep.mubr.bf16.mxu0 0
      %1883 = vmatmul.mubr.bf16.gmra.mrb[0].mxu0 %v1798
      %v1884 = vpop.f32.mrb[0].mxu0
      %v1885 = vadd.f32 %v1345, %v1884
      %v1886 = vpop.f32.mrb[0].mxu0
      %v1887 = vpop.f32.mrb[0].mxu0
      %v1888 = vadd.f32 %v1346, %v1887
      %v1889 = vpop.f32.mrb[0].mxu0
      %1890 = vmatprep.mubr.bf16.mxu0 0
      %1891 = vmatmul.mubr.bf16.gmra.mrb[0].mxu0 %v1801
      %v1892 = vpop.f32.mrb[0].mxu0
      %v1893 = vadd.f32 %v1347, %v1892
      %v1894 = vpop.f32.mrb[0].mxu0
      %v1895 = vpop.f32.mrb[0].mxu0
      %v1896 = vadd.f32 %v1348, %v1895
      %v1897 = vpop.f32.mrb[0].mxu0
      %1898 = vmatprep.mubr.bf16.mxu0 0
      %1899 = vmatmul.mubr.bf16.gmra.mrb[0].mxu0 %v1804
      %v1900 = vpop.f32.mrb[0].mxu0
      %v1901 = vadd.f32 %v1349, %v1900
      %v1902 = vpop.f32.mrb[0].mxu0
      %v1903 = vpop.f32.mrb[0].mxu0
      %v1904 = vadd.f32 %v1350, %v1903
      %v1905 = vpop.f32.mrb[0].mxu0
      %1906 = vmatprep.mubr.bf16.mxu0 0
      %1907 = vmatmul.mubr.bf16.gmra.mrb[0].mxu0 %v1807
      %v1908 = vpop.f32.mrb[0].mxu0
      %v1909 = vadd.f32 %v1351, %v1908
      %v1910 = vpop.f32.mrb[0].mxu0
      %v1911 = vpop.f32.mrb[0].mxu0
      %v1912 = vadd.f32 %v1352, %v1911
      %v1913 = vpop.f32.mrb[0].mxu0
      %1914 = vmatprep.mubr.bf16.mxu0 0
      %1915 = vmatmul.mubr.bf16.gmra.mrb[0].mxu0 %v1810
      %v1916 = vpop.f32.mrb[0].mxu0
      %v1917 = vadd.f32 %v1353, %v1916
      %v1918 = vpop.f32.mrb[0].mxu0
      %v1919 = vpop.f32.mrb[0].mxu0
      %v1920 = vadd.f32 %v1354, %v1919
      %v1921 = vpop.f32.mrb[0].mxu0
      %1922 = vmatprep.mubr.bf16.mxu0 0
      %1923 = vmatmul.mubr.bf16.gmra.mrb[0].mxu0 %v1813
      %v1924 = vpop.f32.mrb[0].mxu0
      %v1925 = vadd.f32 %v1355, %v1924
      %v1926 = vpop.f32.mrb[0].mxu0
      %v1927 = vpop.f32.mrb[0].mxu0
      %v1928 = vadd.f32 %v1356, %v1927
      %v1929 = vpop.f32.mrb[0].mxu0
      %1930 = vmatprep.mubr.bf16.mxu0 0
      %1931 = vmatmul.mubr.bf16.gmra.mrb[0].mxu0 %v1816
      %v1932 = vpop.f32.mrb[0].mxu0
      %v1933 = vadd.f32 %v1357, %v1932
      %v1934 = vpop.f32.mrb[0].mxu0
      %v1935 = vpop.f32.mrb[0].mxu0
      %v1936 = vadd.f32 %v1358, %v1935
      %v1937 = vpop.f32.mrb[0].mxu0
      %1938 = vdwg.mxu0
      %1939 = vmax.xlane.f32.xlu0 %v1442
      %v1940 = vpop.xlane.xlu0 %1939
      %1941 = vmax.xlane.f32.xlu0 %v1445
      %v1942 = vpop.xlane.xlu0 %1941
      %1943 = vmax.xlane.f32.xlu0 %v1450
      %v1944 = vpop.xlane.xlu0 %1943
      %1945 = vmax.xlane.f32.xlu0 %v1453
      %v1946 = vpop.xlane.xlu0 %1945
      %1947 = vmax.xlane.f32.xlu0 %v1458
      %v1948 = vpop.xlane.xlu0 %1947
      %1949 = vmax.xlane.f32.xlu0 %v1461
      %v1950 = vpop.xlane.xlu0 %1949
      %1951 = vmax.xlane.f32.xlu0 %v1466
      %v1952 = vpop.xlane.xlu0 %1951
      %1953 = vmax.xlane.f32.xlu0 %v1469
      %v1954 = vpop.xlane.xlu0 %1953
      %1955 = vmax.xlane.f32.xlu0 %v1474
      %v1956 = vpop.xlane.xlu0 %1955
      %1957 = vmax.xlane.f32.xlu0 %v1477
      %v1958 = vpop.xlane.xlu0 %1957
      %1959 = vmax.xlane.f32.xlu0 %v1482
      %v1960 = vpop.xlane.xlu0 %1959
      %1961 = vmax.xlane.f32.xlu0 %v1485
      %v1962 = vpop.xlane.xlu0 %1961
      %1963 = vmax.xlane.f32.xlu0 %v1490
      %v1964 = vpop.xlane.xlu0 %1963
      %1965 = vmax.xlane.f32.xlu0 %v1493
      %v1966 = vpop.xlane.xlu0 %1965
      %1967 = vmax.xlane.f32.xlu0 %v1498
      %v1968 = vpop.xlane.xlu0 %1967
      %1969 = vmax.xlane.f32.xlu0 %v1501
      %v1970 = vpop.xlane.xlu0 %1969
      %1971 = vmax.xlane.f32.xlu0 %v1587
      %v1972 = vpop.xlane.xlu0 %1971
      %1973 = vmax.xlane.f32.xlu0 %v1590
      %v1974 = vpop.xlane.xlu0 %1973
      %1975 = vmax.xlane.f32.xlu0 %v1595
      %v1976 = vpop.xlane.xlu0 %1975
      %1977 = vmax.xlane.f32.xlu0 %v1598
      %v1978 = vpop.xlane.xlu0 %1977
      %1979 = vmax.xlane.f32.xlu0 %v1603
      %v1980 = vpop.xlane.xlu0 %1979
      %1981 = vmax.xlane.f32.xlu0 %v1606
      %v1982 = vpop.xlane.xlu0 %1981
      %1983 = vmax.xlane.f32.xlu0 %v1611
      %v1984 = vpop.xlane.xlu0 %1983
      %1985 = vmax.xlane.f32.xlu0 %v1614
      %v1986 = vpop.xlane.xlu0 %1985
      %1987 = vmax.xlane.f32.xlu0 %v1619
      %v1988 = vpop.xlane.xlu0 %1987
      %1989 = vmax.xlane.f32.xlu0 %v1622
      %v1990 = vpop.xlane.xlu0 %1989
      %1991 = vmax.xlane.f32.xlu0 %v1627
      %v1992 = vpop.xlane.xlu0 %1991
      %1993 = vmax.xlane.f32.xlu0 %v1630
      %v1994 = vpop.xlane.xlu0 %1993
      %1995 = vmax.xlane.f32.xlu0 %v1635
      %v1996 = vpop.xlane.xlu0 %1995
      %1997 = vmax.xlane.f32.xlu0 %v1638
      %v1998 = vpop.xlane.xlu0 %1997
      %1999 = vmax.xlane.f32.xlu0 %v1643
      %v2000 = vpop.xlane.xlu0 %1999
      %2001 = vmax.xlane.f32.xlu0 %v1646
      %v2002 = vpop.xlane.xlu0 %2001
      %2003 = vmax.xlane.f32.xlu0 %v1732
      %v2004 = vpop.xlane.xlu0 %2003
      %2005 = vmax.xlane.f32.xlu0 %v1735
      %v2006 = vpop.xlane.xlu0 %2005
      %2007 = vmax.xlane.f32.xlu0 %v1740
      %v2008 = vpop.xlane.xlu0 %2007
      %2009 = vmax.xlane.f32.xlu0 %v1743
      %v2010 = vpop.xlane.xlu0 %2009
      %2011 = vmax.xlane.f32.xlu0 %v1748
      %v2012 = vpop.xlane.xlu0 %2011
      %2013 = vmax.xlane.f32.xlu0 %v1751
      %v2014 = vpop.xlane.xlu0 %2013
      %2015 = vmax.xlane.f32.xlu0 %v1756
      %v2016 = vpop.xlane.xlu0 %2015
      %2017 = vmax.xlane.f32.xlu0 %v1759
      %v2018 = vpop.xlane.xlu0 %2017
      %2019 = vmax.xlane.f32.xlu0 %v1764
      %v2020 = vpop.xlane.xlu0 %2019
      %2021 = vmax.xlane.f32.xlu0 %v1767
      %v2022 = vpop.xlane.xlu0 %2021
      %2023 = vmax.xlane.f32.xlu0 %v1772
      %v2024 = vpop.xlane.xlu0 %2023
      %2025 = vmax.xlane.f32.xlu0 %v1775
      %v2026 = vpop.xlane.xlu0 %2025
      %2027 = vmax.xlane.f32.xlu0 %v1780
      %v2028 = vpop.xlane.xlu0 %2027
      %2029 = vmax.xlane.f32.xlu0 %v1783
      %v2030 = vpop.xlane.xlu0 %2029
      %2031 = vmax.xlane.f32.xlu0 %v1788
      %v2032 = vpop.xlane.xlu0 %2031
      %2033 = vmax.xlane.f32.xlu0 %v1791
      %v2034 = vpop.xlane.xlu0 %2033
      %2035 = vmax.xlane.f32.xlu0 %v1877
      %v2036 = vpop.xlane.xlu0 %2035
      %2037 = vmax.xlane.f32.xlu0 %v1880
      %v2038 = vpop.xlane.xlu0 %2037
      %2039 = vmax.xlane.f32.xlu0 %v1885
      %v2040 = vpop.xlane.xlu0 %2039
      %2041 = vmax.xlane.f32.xlu0 %v1888
      %v2042 = vpop.xlane.xlu0 %2041
      %2043 = vmax.xlane.f32.xlu0 %v1893
      %v2044 = vpop.xlane.xlu0 %2043
      %2045 = vmax.xlane.f32.xlu0 %v1896
      %v2046 = vpop.xlane.xlu0 %2045
      %2047 = vmax.xlane.f32.xlu0 %v1901
      %v2048 = vpop.xlane.xlu0 %2047
      %2049 = vmax.xlane.f32.xlu0 %v1904
      %v2050 = vpop.xlane.xlu0 %2049
      %2051 = vmax.xlane.f32.xlu0 %v1909
      %v2052 = vpop.xlane.xlu0 %2051
      %2053 = vmax.xlane.f32.xlu0 %v1912
      %v2054 = vpop.xlane.xlu0 %2053
      %2055 = vmax.xlane.f32.xlu0 %v1917
      %v2056 = vpop.xlane.xlu0 %2055
      %2057 = vmax.xlane.f32.xlu0 %v1920
      %v2058 = vpop.xlane.xlu0 %2057
      %2059 = vmax.xlane.f32.xlu0 %v1925
      %v2060 = vpop.xlane.xlu0 %2059
      %2061 = vmax.xlane.f32.xlu0 %v1928
      %v2062 = vpop.xlane.xlu0 %2061
      %2063 = vmax.xlane.f32.xlu0 %v1933
      %v2064 = vpop.xlane.xlu0 %2063
      %2065 = vmax.xlane.f32.xlu0 %v1936
      %v2066 = vpop.xlane.xlu0 %2065
      %v2067 = vsub.f32 %v1442, %v1940
      %v2068 = vsub.f32 %v1445, %v1942
      %v2069 = vsub.f32 %v1450, %v1944
      %v2070 = vsub.f32 %v1453, %v1946
      %v2071 = vsub.f32 %v1458, %v1948
      %v2072 = vsub.f32 %v1461, %v1950
      %v2073 = vsub.f32 %v1466, %v1952
      %v2074 = vsub.f32 %v1469, %v1954
      %v2075 = vsub.f32 %v1474, %v1956
      %v2076 = vsub.f32 %v1477, %v1958
      %v2077 = vsub.f32 %v1482, %v1960
      %v2078 = vsub.f32 %v1485, %v1962
      %v2079 = vsub.f32 %v1490, %v1964
      %v2080 = vsub.f32 %v1493, %v1966
      %v2081 = vsub.f32 %v1498, %v1968
      %v2082 = vsub.f32 %v1501, %v1970
      %v2083 = vsub.f32 %v1587, %v1972
      %v2084 = vsub.f32 %v1590, %v1974
      %v2085 = vsub.f32 %v1595, %v1976
      %v2086 = vsub.f32 %v1598, %v1978
      %v2087 = vsub.f32 %v1603, %v1980
      %v2088 = vsub.f32 %v1606, %v1982
      %v2089 = vsub.f32 %v1611, %v1984
      %v2090 = vsub.f32 %v1614, %v1986
      %v2091 = vsub.f32 %v1619, %v1988
      %v2092 = vsub.f32 %v1622, %v1990
      %v2093 = vsub.f32 %v1627, %v1992
      %v2094 = vsub.f32 %v1630, %v1994
      %v2095 = vsub.f32 %v1635, %v1996
      %v2096 = vsub.f32 %v1638, %v1998
      %v2097 = vsub.f32 %v1643, %v2000
      %v2098 = vsub.f32 %v1646, %v2002
      %v2099 = vsub.f32 %v1732, %v2004
      %v2100 = vsub.f32 %v1735, %v2006
      %v2101 = vsub.f32 %v1740, %v2008
      %v2102 = vsub.f32 %v1743, %v2010
      %v2103 = vsub.f32 %v1748, %v2012
      %v2104 = vsub.f32 %v1751, %v2014
      %v2105 = vsub.f32 %v1756, %v2016
      %v2106 = vsub.f32 %v1759, %v2018
      %v2107 = vsub.f32 %v1764, %v2020
      %v2108 = vsub.f32 %v1767, %v2022
      %v2109 = vsub.f32 %v1772, %v2024
      %v2110 = vsub.f32 %v1775, %v2026
      %v2111 = vsub.f32 %v1780, %v2028
      %v2112 = vsub.f32 %v1783, %v2030
      %v2113 = vsub.f32 %v1788, %v2032
      %v2114 = vsub.f32 %v1791, %v2034
      %v2115 = vsub.f32 %v1877, %v2036
      %v2116 = vsub.f32 %v1880, %v2038
      %v2117 = vsub.f32 %v1885, %v2040
      %v2118 = vsub.f32 %v1888, %v2042
      %v2119 = vsub.f32 %v1893, %v2044
      %v2120 = vsub.f32 %v1896, %v2046
      %v2121 = vsub.f32 %v1901, %v2048
      %v2122 = vsub.f32 %v1904, %v2050
      %v2123 = vsub.f32 %v1909, %v2052
      %v2124 = vsub.f32 %v1912, %v2054
      %v2125 = vsub.f32 %v1917, %v2056
      %v2126 = vsub.f32 %v1920, %v2058
      %v2127 = vsub.f32 %v1925, %v2060
      %v2128 = vsub.f32 %v1928, %v2062
      %v2129 = vsub.f32 %v1933, %v2064
      %v2130 = vsub.f32 %v1936, %v2066
      %v2131 = vmul.f32 %v2067, 1.442695
      %v2132 = vpow.pop %v2131
      %v2133 = vmul.f32 %v2068, 1.442695
      %v2134 = vpow.pop %v2133
      %v2135 = vmul.f32 %v2069, 1.442695
      %v2136 = vpow.pop %v2135
      %v2137 = vmul.f32 %v2070, 1.442695
      %v2138 = vpow.pop %v2137
      %v2139 = vmul.f32 %v2071, 1.442695
      %v2140 = vpow.pop %v2139
      %v2141 = vmul.f32 %v2072, 1.442695
      %v2142 = vpow.pop %v2141
      %v2143 = vmul.f32 %v2073, 1.442695
      %v2144 = vpow.pop %v2143
      %v2145 = vmul.f32 %v2074, 1.442695
      %v2146 = vpow.pop %v2145
      %v2147 = vmul.f32 %v2075, 1.442695
      %v2148 = vpow.pop %v2147
      %v2149 = vmul.f32 %v2076, 1.442695
      %v2150 = vpow.pop %v2149
      %v2151 = vmul.f32 %v2077, 1.442695
      %v2152 = vpow.pop %v2151
      %v2153 = vmul.f32 %v2078, 1.442695
      %v2154 = vpow.pop %v2153
      %v2155 = vmul.f32 %v2079, 1.442695
      %v2156 = vpow.pop %v2155
      %v2157 = vmul.f32 %v2080, 1.442695
      %v2158 = vpow.pop %v2157
      %v2159 = vmul.f32 %v2081, 1.442695
      %v2160 = vpow.pop %v2159
      %v2161 = vmul.f32 %v2082, 1.442695
      %v2162 = vpow.pop %v2161
      %v2163 = vmul.f32 %v2083, 1.442695
      %v2164 = vpow.pop %v2163
      %v2165 = vmul.f32 %v2084, 1.442695
      %v2166 = vpow.pop %v2165
      %v2167 = vmul.f32 %v2085, 1.442695
      %v2168 = vpow.pop %v2167
      %v2169 = vmul.f32 %v2086, 1.442695
      %v2170 = vpow.pop %v2169
      %v2171 = vmul.f32 %v2087, 1.442695
      %v2172 = vpow.pop %v2171
      %v2173 = vmul.f32 %v2088, 1.442695
      %v2174 = vpow.pop %v2173
      %v2175 = vmul.f32 %v2089, 1.442695
      %v2176 = vpow.pop %v2175
      %v2177 = vmul.f32 %v2090, 1.442695
      %v2178 = vpow.pop %v2177
      %v2179 = vmul.f32 %v2091, 1.442695
      %v2180 = vpow.pop %v2179
      %v2181 = vmul.f32 %v2092, 1.442695
      %v2182 = vpow.pop %v2181
      %v2183 = vmul.f32 %v2093, 1.442695
      %v2184 = vpow.pop %v2183
      %v2185 = vmul.f32 %v2094, 1.442695
      %v2186 = vpow.pop %v2185
      %v2187 = vmul.f32 %v2095, 1.442695
      %v2188 = vpow.pop %v2187
      %v2189 = vmul.f32 %v2096, 1.442695
      %v2190 = vpow.pop %v2189
      %v2191 = vmul.f32 %v2097, 1.442695
      %v2192 = vpow.pop %v2191
      %v2193 = vmul.f32 %v2098, 1.442695
      %v2194 = vpow.pop %v2193
      %v2195 = vmul.f32 %v2099, 1.442695
      %v2196 = vpow.pop %v2195
      %v2197 = vmul.f32 %v2100, 1.442695
      %v2198 = vpow.pop %v2197
      %v2199 = vmul.f32 %v2101, 1.442695
      %v2200 = vpow.pop %v2199
      %v2201 = vmul.f32 %v2102, 1.442695
      %v2202 = vpow.pop %v2201
      %v2203 = vmul.f32 %v2103, 1.442695
      %v2204 = vpow.pop %v2203
      %v2205 = vmul.f32 %v2104, 1.442695
      %v2206 = vpow.pop %v2205
      %v2207 = vmul.f32 %v2105, 1.442695
      %v2208 = vpow.pop %v2207
      %v2209 = vmul.f32 %v2106, 1.442695
      %v2210 = vpow.pop %v2209
      %v2211 = vmul.f32 %v2107, 1.442695
      %v2212 = vpow.pop %v2211
      %v2213 = vmul.f32 %v2108, 1.442695
      %v2214 = vpow.pop %v2213
      %v2215 = vmul.f32 %v2109, 1.442695
      %v2216 = vpow.pop %v2215
      %v2217 = vmul.f32 %v2110, 1.442695
      %v2218 = vpow.pop %v2217
      %v2219 = vmul.f32 %v2111, 1.442695
      %v2220 = vpow.pop %v2219
      %v2221 = vmul.f32 %v2112, 1.442695
      %v2222 = vpow.pop %v2221
      %v2223 = vmul.f32 %v2113, 1.442695
      %v2224 = vpow.pop %v2223
      %v2225 = vmul.f32 %v2114, 1.442695
      %v2226 = vpow.pop %v2225
      %v2227 = vmul.f32 %v2115, 1.442695
      %v2228 = vpow.pop %v2227
      %v2229 = vmul.f32 %v2116, 1.442695
      %v2230 = vpow.pop %v2229
      %v2231 = vmul.f32 %v2117, 1.442695
      %v2232 = vpow.pop %v2231
      %v2233 = vmul.f32 %v2118, 1.442695
      %v2234 = vpow.pop %v2233
      %v2235 = vmul.f32 %v2119, 1.442695
      %v2236 = vpow.pop %v2235
      %v2237 = vmul.f32 %v2120, 1.442695
      %v2238 = vpow.pop %v2237
      %v2239 = vmul.f32 %v2121, 1.442695
      %v2240 = vpow.pop %v2239
      %v2241 = vmul.f32 %v2122, 1.442695
      %v2242 = vpow.pop %v2241
      %v2243 = vmul.f32 %v2123, 1.442695
      %v2244 = vpow.pop %v2243
      %v2245 = vmul.f32 %v2124, 1.442695
      %v2246 = vpow.pop %v2245
      %v2247 = vmul.f32 %v2125, 1.442695
      %v2248 = vpow.pop %v2247
      %v2249 = vmul.f32 %v2126, 1.442695
      %v2250 = vpow.pop %v2249
      %v2251 = vmul.f32 %v2127, 1.442695
      %v2252 = vpow.pop %v2251
      %v2253 = vmul.f32 %v2128, 1.442695
      %v2254 = vpow.pop %v2253
      %v2255 = vmul.f32 %v2129, 1.442695
      %v2256 = vpow.pop %v2255
      %v2257 = vmul.f32 %v2130, 1.442695
      %v2258 = vpow.pop %v2257
      %2259 = vadd.xlane.f32.xlu0 %v2132
      %v2260 = vpop.xlane.xlu0 %2259
      %2261 = vadd.xlane.f32.xlu0 %v2134
      %v2262 = vpop.xlane.xlu0 %2261
      %2263 = vadd.xlane.f32.xlu0 %v2136
      %v2264 = vpop.xlane.xlu0 %2263
      %2265 = vadd.xlane.f32.xlu0 %v2138
      %v2266 = vpop.xlane.xlu0 %2265
      %2267 = vadd.xlane.f32.xlu0 %v2140
      %v2268 = vpop.xlane.xlu0 %2267
      %2269 = vadd.xlane.f32.xlu0 %v2142
      %v2270 = vpop.xlane.xlu0 %2269
      %2271 = vadd.xlane.f32.xlu0 %v2144
      %v2272 = vpop.xlane.xlu0 %2271
      %2273 = vadd.xlane.f32.xlu0 %v2146
      %v2274 = vpop.xlane.xlu0 %2273
      %2275 = vadd.xlane.f32.xlu0 %v2148
      %v2276 = vpop.xlane.xlu0 %2275
      %2277 = vadd.xlane.f32.xlu0 %v2150
      %v2278 = vpop.xlane.xlu0 %2277
      %2279 = vadd.xlane.f32.xlu0 %v2152
      %v2280 = vpop.xlane.xlu0 %2279
      %2281 = vadd.xlane.f32.xlu0 %v2154
      %v2282 = vpop.xlane.xlu0 %2281
      %2283 = vadd.xlane.f32.xlu0 %v2156
      %v2284 = vpop.xlane.xlu0 %2283
      %2285 = vadd.xlane.f32.xlu0 %v2158
      %v2286 = vpop.xlane.xlu0 %2285
      %2287 = vadd.xlane.f32.xlu0 %v2160
      %v2288 = vpop.xlane.xlu0 %2287
      %2289 = vadd.xlane.f32.xlu0 %v2162
      %v2290 = vpop.xlane.xlu0 %2289
      %2291 = vadd.xlane.f32.xlu0 %v2164
      %v2292 = vpop.xlane.xlu0 %2291
      %2293 = vadd.xlane.f32.xlu0 %v2166
      %v2294 = vpop.xlane.xlu0 %2293
      %2295 = vadd.xlane.f32.xlu0 %v2168
      %v2296 = vpop.xlane.xlu0 %2295
      %2297 = vadd.xlane.f32.xlu0 %v2170
      %v2298 = vpop.xlane.xlu0 %2297
      %2299 = vadd.xlane.f32.xlu0 %v2172
      %v2300 = vpop.xlane.xlu0 %2299
      %2301 = vadd.xlane.f32.xlu0 %v2174
      %v2302 = vpop.xlane.xlu0 %2301
      %2303 = vadd.xlane.f32.xlu0 %v2176
      %v2304 = vpop.xlane.xlu0 %2303
      %2305 = vadd.xlane.f32.xlu0 %v2178
      %v2306 = vpop.xlane.xlu0 %2305
      %2307 = vadd.xlane.f32.xlu0 %v2180
      %v2308 = vpop.xlane.xlu0 %2307
      %2309 = vadd.xlane.f32.xlu0 %v2182
      %v2310 = vpop.xlane.xlu0 %2309
      %2311 = vadd.xlane.f32.xlu0 %v2184
      %v2312 = vpop.xlane.xlu0 %2311
      %2313 = vadd.xlane.f32.xlu0 %v2186
      %v2314 = vpop.xlane.xlu0 %2313
      %2315 = vadd.xlane.f32.xlu0 %v2188
      %v2316 = vpop.xlane.xlu0 %2315
      %2317 = vadd.xlane.f32.xlu0 %v2190
      %v2318 = vpop.xlane.xlu0 %2317
      %2319 = vadd.xlane.f32.xlu0 %v2192
      %v2320 = vpop.xlane.xlu0 %2319
      %2321 = vadd.xlane.f32.xlu0 %v2194
      %v2322 = vpop.xlane.xlu0 %2321
      %2323 = vadd.xlane.f32.xlu0 %v2196
      %v2324 = vpop.xlane.xlu0 %2323
      %2325 = vadd.xlane.f32.xlu0 %v2198
      %v2326 = vpop.xlane.xlu0 %2325
      %2327 = vadd.xlane.f32.xlu0 %v2200
      %v2328 = vpop.xlane.xlu0 %2327
      %2329 = vadd.xlane.f32.xlu0 %v2202
      %v2330 = vpop.xlane.xlu0 %2329
      %2331 = vadd.xlane.f32.xlu0 %v2204
      %v2332 = vpop.xlane.xlu0 %2331
      %2333 = vadd.xlane.f32.xlu0 %v2206
      %v2334 = vpop.xlane.xlu0 %2333
      %2335 = vadd.xlane.f32.xlu0 %v2208
      %v2336 = vpop.xlane.xlu0 %2335
      %2337 = vadd.xlane.f32.xlu0 %v2210
      %v2338 = vpop.xlane.xlu0 %2337
      %2339 = vadd.xlane.f32.xlu0 %v2212
      %v2340 = vpop.xlane.xlu0 %2339
      %2341 = vadd.xlane.f32.xlu0 %v2214
      %v2342 = vpop.xlane.xlu0 %2341
      %2343 = vadd.xlane.f32.xlu0 %v2216
      %v2344 = vpop.xlane.xlu0 %2343
      %2345 = vadd.xlane.f32.xlu0 %v2218
      %v2346 = vpop.xlane.xlu0 %2345
      %2347 = vadd.xlane.f32.xlu0 %v2220
      %v2348 = vpop.xlane.xlu0 %2347
      %2349 = vadd.xlane.f32.xlu0 %v2222
      %v2350 = vpop.xlane.xlu0 %2349
      %2351 = vadd.xlane.f32.xlu0 %v2224
      %v2352 = vpop.xlane.xlu0 %2351
      %2353 = vadd.xlane.f32.xlu0 %v2226
      %v2354 = vpop.xlane.xlu0 %2353
      %2355 = vadd.xlane.f32.xlu0 %v2228
      %v2356 = vpop.xlane.xlu0 %2355
      %2357 = vadd.xlane.f32.xlu0 %v2230
      %v2358 = vpop.xlane.xlu0 %2357
      %2359 = vadd.xlane.f32.xlu0 %v2232
      %v2360 = vpop.xlane.xlu0 %2359
      %2361 = vadd.xlane.f32.xlu0 %v2234
      %v2362 = vpop.xlane.xlu0 %2361
      %2363 = vadd.xlane.f32.xlu0 %v2236
      %v2364 = vpop.xlane.xlu0 %2363
      %2365 = vadd.xlane.f32.xlu0 %v2238
      %v2366 = vpop.xlane.xlu0 %2365
      %2367 = vadd.xlane.f32.xlu0 %v2240
      %v2368 = vpop.xlane.xlu0 %2367
      %2369 = vadd.xlane.f32.xlu0 %v2242
      %v2370 = vpop.xlane.xlu0 %2369
      %2371 = vadd.xlane.f32.xlu0 %v2244
      %v2372 = vpop.xlane.xlu0 %2371
      %2373 = vadd.xlane.f32.xlu0 %v2246
      %v2374 = vpop.xlane.xlu0 %2373
      %2375 = vadd.xlane.f32.xlu0 %v2248
      %v2376 = vpop.xlane.xlu0 %2375
      %2377 = vadd.xlane.f32.xlu0 %v2250
      %v2378 = vpop.xlane.xlu0 %2377
      %2379 = vadd.xlane.f32.xlu0 %v2252
      %v2380 = vpop.xlane.xlu0 %2379
      %2381 = vadd.xlane.f32.xlu0 %v2254
      %v2382 = vpop.xlane.xlu0 %2381
      %2383 = vadd.xlane.f32.xlu0 %v2256
      %v2384 = vpop.xlane.xlu0 %2383
      %2385 = vadd.xlane.f32.xlu0 %v2258
      %v2386 = vpop.xlane.xlu0 %2385
      %v2387 = vpack.c.bf16 %v2134, %v2132
      %v2388 = vpack.c.bf16 %v2138, %v2136
      %v2389 = vpack.c.bf16 %v2142, %v2140
      %v2390 = vpack.c.bf16 %v2146, %v2144
      %v2391 = vpack.c.bf16 %v2150, %v2148
      %v2392 = vpack.c.bf16 %v2154, %v2152
      %v2393 = vpack.c.bf16 %v2158, %v2156
      %v2394 = vpack.c.bf16 %v2162, %v2160
      %v2395 = vpack.c.bf16 %v2166, %v2164
      %v2396 = vpack.c.bf16 %v2170, %v2168
      %v2397 = vpack.c.bf16 %v2174, %v2172
      %v2398 = vpack.c.bf16 %v2178, %v2176
      %v2399 = vpack.c.bf16 %v2182, %v2180
      %v2400 = vpack.c.bf16 %v2186, %v2184
      %v2401 = vpack.c.bf16 %v2190, %v2188
      %v2402 = vpack.c.bf16 %v2194, %v2192
      %v2403 = vpack.c.bf16 %v2198, %v2196
      %v2404 = vpack.c.bf16 %v2202, %v2200
      %v2405 = vpack.c.bf16 %v2206, %v2204
      %v2406 = vpack.c.bf16 %v2210, %v2208
      %v2407 = vpack.c.bf16 %v2214, %v2212
      %v2408 = vpack.c.bf16 %v2218, %v2216
      %v2409 = vpack.c.bf16 %v2222, %v2220
      %v2410 = vpack.c.bf16 %v2226, %v2224
      %v2411 = vpack.c.bf16 %v2230, %v2228
      %v2412 = vpack.c.bf16 %v2234, %v2232
      %v2413 = vpack.c.bf16 %v2238, %v2236
      %v2414 = vpack.c.bf16 %v2242, %v2240
      %v2415 = vpack.c.bf16 %v2246, %v2244
      %v2416 = vpack.c.bf16 %v2250, %v2248
      %v2417 = vpack.c.bf16 %v2254, %v2252
      %v2418 = vpack.c.bf16 %v2258, %v2256
      %v2419 = vld [vmem:[#allocation4] sm:$0xff]
      %v2420 = vld [vmem:[#allocation4 + $0x8] sm:$0xff]
      %v2421 = vld [vmem:[#allocation4 + $0x10] sm:$0xff]
      %v2422 = vld [vmem:[#allocation4 + $0x18] sm:$0xff]
      %v2423 = vld [vmem:[#allocation4 + $0x20] sm:$0xff]
      %v2424 = vld [vmem:[#allocation4 + $0x28] sm:$0xff]
      %v2425 = vld [vmem:[#allocation4 + $0x30] sm:$0xff]
      %v2426 = vld [vmem:[#allocation4 + $0x38] sm:$0xff]
      %v2427 = vld [vmem:[#allocation4 + $0x40] sm:$0xff]
      %v2428 = vld [vmem:[#allocation4 + $0x48] sm:$0xff]
      %v2429 = vld [vmem:[#allocation4 + $0x50] sm:$0xff]
      %v2430 = vld [vmem:[#allocation4 + $0x58] sm:$0xff]
      %v2431 = vld [vmem:[#allocation4 + $0x60] sm:$0xff]
      %v2432 = vld [vmem:[#allocation4 + $0x68] sm:$0xff]
      %v2433 = vld [vmem:[#allocation4 + $0x70] sm:$0xff]
      %v2434 = vld [vmem:[#allocation4 + $0x78] sm:$0xff]
      %v2435 = vld [vmem:[#allocation4 + $0x80] sm:$0xff]
      %v2436 = vld [vmem:[#allocation4 + $0x88] sm:$0xff]
      %v2437 = vld [vmem:[#allocation4 + $0x90] sm:$0xff]
      %v2438 = vld [vmem:[#allocation4 + $0x98] sm:$0xff]
      %v2439 = vld [vmem:[#allocation4 + $0xa0] sm:$0xff]
      %v2440 = vld [vmem:[#allocation4 + $0xa8] sm:$0xff]
      %v2441 = vld [vmem:[#allocation4 + $0xb0] sm:$0xff]
      %v2442 = vld [vmem:[#allocation4 + $0xb8] sm:$0xff]
      %v2443 = vld [vmem:[#allocation4 + $0xc0] sm:$0xff]
      %v2444 = vld [vmem:[#allocation4 + $0xc8] sm:$0xff]
      %v2445 = vld [vmem:[#allocation4 + $0xd0] sm:$0xff]
      %v2446 = vld [vmem:[#allocation4 + $0xd8] sm:$0xff]
      %v2447 = vld [vmem:[#allocation4 + $0xe0] sm:$0xff]
      %v2448 = vld [vmem:[#allocation4 + $0xe8] sm:$0xff]
      %v2449 = vld [vmem:[#allocation4 + $0xf0] sm:$0xff]
      %v2450 = vld [vmem:[#allocation4 + $0xf8] sm:$0xff]
      %2451 = vmatprep.subr.bf16.mxu0 0
      %2452 = vmatpush1.bf16.msra.mxu0 %v2419
      %2453 = vmatprep.subr.bf16.mxu0 0
      %2454 = vmatpush1.bf16.msra.mxu0 %v2420
      %2455 = vmatprep.subr.bf16.mxu0 0
      %2456 = vmatpush1.bf16.msra.mxu0 %v2421
      %2457 = vmatprep.subr.bf16.mxu0 0
      %2458 = vmatpush1.bf16.msra.mxu0 %v2422
      %2459 = vmatprep.subr.bf16.mxu0 0
      %2460 = vmatpush1.bf16.msra.mxu0 %v2423
      %2461 = vmatprep.subr.bf16.mxu0 0
      %2462 = vmatpush1.bf16.msra.mxu0 %v2424
      %2463 = vmatprep.subr.bf16.mxu0 0
      %2464 = vmatpush1.bf16.msra.mxu0 %v2425
      %2465 = vmatprep.subr.bf16.mxu0 0
      %2466 = vmatpush1.bf16.msra.mxu0 %v2426
      %2467 = vmatprep.subr.bf16.mxu0 0
      %2468 = vmatpush1.bf16.msra.mxu0 0
      %2469 = vmatprep.subr.bf16.mxu0 0
      %2470 = vmatpush1.bf16.msra.mxu0 0
      %2471 = vmatprep.subr.bf16.mxu0 0
      %2472 = vmatpush1.bf16.msra.mxu0 0
      %2473 = vmatprep.subr.bf16.mxu0 0
      %2474 = vmatpush1.bf16.msra.mxu0 0
      %2475 = vmatprep.subr.bf16.mxu0 0
      %2476 = vmatpush1.bf16.msra.mxu0 0
      %2477 = vmatprep.subr.bf16.mxu0 0
      %2478 = vmatpush1.bf16.msra.mxu0 0
      %2479 = vmatprep.subr.bf16.mxu0 0
      %2480 = vmatpush1.bf16.msra.mxu0 0
      %2481 = vmatprep.subr.bf16.mxu0 0
      %2482 = vmatpush1.bf16.msra.mxu0 0
      %2483 = vmatprep.mubr.bf16.mxu0 0
      %2484 = vmatmul.mubr.bf16.gmra.mrb[0].mxu0 %v2387
      %v2485 = vpop.f32.mrb[0].mxu0
      %v2486 = vadd.f32 0.0, %v2485
      %v2487 = vpop.f32.mrb[0].mxu0
      %v2488 = vpop.f32.mrb[0].mxu0
      %v2489 = vadd.f32 0.0, %v2488
      %v2490 = vpop.f32.mrb[0].mxu0
      %2491 = vmatprep.mubr.bf16.mxu0 0
      %2492 = vmatmul.mubr.bf16.gmra.mrb[0].mxu0 %v2388
      %v2493 = vpop.f32.mrb[0].mxu0
      %v2494 = vadd.f32 0.0, %v2493
      %v2495 = vpop.f32.mrb[0].mxu0
      %v2496 = vpop.f32.mrb[0].mxu0
      %v2497 = vadd.f32 0.0, %v2496
      %v2498 = vpop.f32.mrb[0].mxu0
      %2499 = vmatprep.mubr.bf16.mxu0 0
      %2500 = vmatmul.mubr.bf16.gmra.mrb[0].mxu0 %v2389
      %v2501 = vpop.f32.mrb[0].mxu0
      %v2502 = vadd.f32 0.0, %v2501
      %v2503 = vpop.f32.mrb[0].mxu0
      %v2504 = vpop.f32.mrb[0].mxu0
      %v2505 = vadd.f32 0.0, %v2504
      %v2506 = vpop.f32.mrb[0].mxu0
      %2507 = vmatprep.mubr.bf16.mxu0 0
      %2508 = vmatmul.mubr.bf16.gmra.mrb[0].mxu0 %v2390
      %v2509 = vpop.f32.mrb[0].mxu0
      %v2510 = vadd.f32 0.0, %v2509
      %v2511 = vpop.f32.mrb[0].mxu0
      %v2512 = vpop.f32.mrb[0].mxu0
      %v2513 = vadd.f32 0.0, %v2512
      %v2514 = vpop.f32.mrb[0].mxu0
      %2515 = vmatprep.mubr.bf16.mxu0 0
      %2516 = vmatmul.mubr.bf16.gmra.mrb[0].mxu0 %v2391
      %v2517 = vpop.f32.mrb[0].mxu0
      %v2518 = vadd.f32 0.0, %v2517
      %v2519 = vpop.f32.mrb[0].mxu0
      %v2520 = vpop.f32.mrb[0].mxu0
      %v2521 = vadd.f32 0.0, %v2520
      %v2522 = vpop.f32.mrb[0].mxu0
      %2523 = vmatprep.mubr.bf16.mxu0 0
      %2524 = vmatmul.mubr.bf16.gmra.mrb[0].mxu0 %v2392
      %v2525 = vpop.f32.mrb[0].mxu0
      %v2526 = vadd.f32 0.0, %v2525
      %v2527 = vpop.f32.mrb[0].mxu0
      %v2528 = vpop.f32.mrb[0].mxu0
      %v2529 = vadd.f32 0.0, %v2528
      %v2530 = vpop.f32.mrb[0].mxu0
      %2531 = vmatprep.mubr.bf16.mxu0 0
      %2532 = vmatmul.mubr.bf16.gmra.mrb[0].mxu0 %v2393
      %v2533 = vpop.f32.mrb[0].mxu0
      %v2534 = vadd.f32 0.0, %v2533
      %v2535 = vpop.f32.mrb[0].mxu0
      %v2536 = vpop.f32.mrb[0].mxu0
      %v2537 = vadd.f32 0.0, %v2536
      %v2538 = vpop.f32.mrb[0].mxu0
      %2539 = vmatprep.mubr.bf16.mxu0 0
      %2540 = vmatmul.mubr.bf16.gmra.mrb[0].mxu0 %v2394
      %v2541 = vpop.f32.mrb[0].mxu0
      %v2542 = vadd.f32 0.0, %v2541
      %v2543 = vpop.f32.mrb[0].mxu0
      %v2544 = vpop.f32.mrb[0].mxu0
      %v2545 = vadd.f32 0.0, %v2544
      %v2546 = vpop.f32.mrb[0].mxu0
      %2547 = vdwg.mxu0
      %2548 = vmatprep.subr.bf16.mxu0 0
      %2549 = vmatpush1.bf16.msra.mxu0 %v2427
      %2550 = vmatprep.subr.bf16.mxu0 0
      %2551 = vmatpush1.bf16.msra.mxu0 %v2428
      %2552 = vmatprep.subr.bf16.mxu0 0
      %2553 = vmatpush1.bf16.msra.mxu0 %v2429
      %2554 = vmatprep.subr.bf16.mxu0 0
      %2555 = vmatpush1.bf16.msra.mxu0 %v2430
      %2556 = vmatprep.subr.bf16.mxu0 0
      %2557 = vmatpush1.bf16.msra.mxu0 %v2431
      %2558 = vmatprep.subr.bf16.mxu0 0
      %2559 = vmatpush1.bf16.msra.mxu0 %v2432
      %2560 = vmatprep.subr.bf16.mxu0 0
      %2561 = vmatpush1.bf16.msra.mxu0 %v2433
      %2562 = vmatprep.subr.bf16.mxu0 0
      %2563 = vmatpush1.bf16.msra.mxu0 %v2434
      %2564 = vmatprep.subr.bf16.mxu0 0
      %2565 = vmatpush1.bf16.msra.mxu0 0
      %2566 = vmatprep.subr.bf16.mxu0 0
      %2567 = vmatpush1.bf16.msra.mxu0 0
      %2568 = vmatprep.subr.bf16.mxu0 0
      %2569 = vmatpush1.bf16.msra.mxu0 0
      %2570 = vmatprep.subr.bf16.mxu0 0
      %2571 = vmatpush1.bf16.msra.mxu0 0
      %2572 = vmatprep.subr.bf16.mxu0 0
      %2573 = vmatpush1.bf16.msra.mxu0 0
      %2574 = vmatprep.subr.bf16.mxu0 0
      %2575 = vmatpush1.bf16.msra.mxu0 0
      %2576 = vmatprep.subr.bf16.mxu0 0
      %2577 = vmatpush1.bf16.msra.mxu0 0
      %2578 = vmatprep.subr.bf16.mxu0 0
      %2579 = vmatpush1.bf16.msra.mxu0 0
      %2580 = vmatprep.mubr.bf16.mxu0 0
      %2581 = vmatmul.mubr.bf16.gmra.mrb[0].mxu0 %v2395
      %v2582 = vpop.f32.mrb[0].mxu0
      %v2583 = vadd.f32 0.0, %v2582
      %v2584 = vpop.f32.mrb[0].mxu0
      %v2585 = vpop.f32.mrb[0].mxu0
      %v2586 = vadd.f32 0.0, %v2585
      %v2587 = vpop.f32.mrb[0].mxu0
      %2588 = vmatprep.mubr.bf16.mxu0 0
      %2589 = vmatmul.mubr.bf16.gmra.mrb[0].mxu0 %v2396
      %v2590 = vpop.f32.mrb[0].mxu0
      %v2591 = vadd.f32 0.0, %v2590
      %v2592 = vpop.f32.mrb[0].mxu0
      %v2593 = vpop.f32.mrb[0].mxu0
      %v2594 = vadd.f32 0.0, %v2593
      %v2595 = vpop.f32.mrb[0].mxu0
      %2596 = vmatprep.mubr.bf16.mxu0 0
      %2597 = vmatmul.mubr.bf16.gmra.mrb[0].mxu0 %v2397
      %v2598 = vpop.f32.mrb[0].mxu0
      %v2599 = vadd.f32 0.0, %v2598
      %v2600 = vpop.f32.mrb[0].mxu0
      %v2601 = vpop.f32.mrb[0].mxu0
      %v2602 = vadd.f32 0.0, %v2601
      %v2603 = vpop.f32.mrb[0].mxu0
      %2604 = vmatprep.mubr.bf16.mxu0 0
      %2605 = vmatmul.mubr.bf16.gmra.mrb[0].mxu0 %v2398
      %v2606 = vpop.f32.mrb[0].mxu0
      %v2607 = vadd.f32 0.0, %v2606
      %v2608 = vpop.f32.mrb[0].mxu0
      %v2609 = vpop.f32.mrb[0].mxu0
      %v2610 = vadd.f32 0.0, %v2609
      %v2611 = vpop.f32.mrb[0].mxu0
      %2612 = vmatprep.mubr.bf16.mxu0 0
      %2613 = vmatmul.mubr.bf16.gmra.mrb[0].mxu0 %v2399
      %v2614 = vpop.f32.mrb[0].mxu0
      %v2615 = vadd.f32 0.0, %v2614
      %v2616 = vpop.f32.mrb[0].mxu0
      %v2617 = vpop.f32.mrb[0].mxu0
      %v2618 = vadd.f32 0.0, %v2617
      %v2619 = vpop.f32.mrb[0].mxu0
      %2620 = vmatprep.mubr.bf16.mxu0 0
      %2621 = vmatmul.mubr.bf16.gmra.mrb[0].mxu0 %v2400
      %v2622 = vpop.f32.mrb[0].mxu0
      %v2623 = vadd.f32 0.0, %v2622
      %v2624 = vpop.f32.mrb[0].mxu0
      %v2625 = vpop.f32.mrb[0].mxu0
      %v2626 = vadd.f32 0.0, %v2625
      %v2627 = vpop.f32.mrb[0].mxu0
      %2628 = vmatprep.mubr.bf16.mxu0 0
      %2629 = vmatmul.mubr.bf16.gmra.mrb[0].mxu0 %v2401
      %v2630 = vpop.f32.mrb[0].mxu0
      %v2631 = vadd.f32 0.0, %v2630
      %v2632 = vpop.f32.mrb[0].mxu0
      %v2633 = vpop.f32.mrb[0].mxu0
      %v2634 = vadd.f32 0.0, %v2633
      %v2635 = vpop.f32.mrb[0].mxu0
      %2636 = vmatprep.mubr.bf16.mxu0 0
      %2637 = vmatmul.mubr.bf16.gmra.mrb[0].mxu0 %v2402
      %v2638 = vpop.f32.mrb[0].mxu0
      %v2639 = vadd.f32 0.0, %v2638
      %v2640 = vpop.f32.mrb[0].mxu0
      %v2641 = vpop.f32.mrb[0].mxu0
      %v2642 = vadd.f32 0.0, %v2641
      %v2643 = vpop.f32.mrb[0].mxu0
      %2644 = vdwg.mxu0
      %2645 = vmatprep.subr.bf16.mxu0 0
      %2646 = vmatpush1.bf16.msra.mxu0 %v2435
      %2647 = vmatprep.subr.bf16.mxu0 0
      %2648 = vmatpush1.bf16.msra.mxu0 %v2436
      %2649 = vmatprep.subr.bf16.mxu0 0
      %2650 = vmatpush1.bf16.msra.mxu0 %v2437
      %2651 = vmatprep.subr.bf16.mxu0 0
      %2652 = vmatpush1.bf16.msra.mxu0 %v2438
      %2653 = vmatprep.subr.bf16.mxu0 0
      %2654 = vmatpush1.bf16.msra.mxu0 %v2439
      %2655 = vmatprep.subr.bf16.mxu0 0
      %2656 = vmatpush1.bf16.msra.mxu0 %v2440
      %2657 = vmatprep.subr.bf16.mxu0 0
      %2658 = vmatpush1.bf16.msra.mxu0 %v2441
      %2659 = vmatprep.subr.bf16.mxu0 0
      %2660 = vmatpush1.bf16.msra.mxu0 %v2442
      %2661 = vmatprep.subr.bf16.mxu0 0
      %2662 = vmatpush1.bf16.msra.mxu0 0
      %2663 = vmatprep.subr.bf16.mxu0 0
      %2664 = vmatpush1.bf16.msra.mxu0 0
      %2665 = vmatprep.subr.bf16.mxu0 0
      %2666 = vmatpush1.bf16.msra.mxu0 0
      %2667 = vmatprep.subr.bf16.mxu0 0
      %2668 = vmatpush1.bf16.msra.mxu0 0
      %2669 = vmatprep.subr.bf16.mxu0 0
      %2670 = vmatpush1.bf16.msra.mxu0 0
      %2671 = vmatprep.subr.bf16.mxu0 0
      %2672 = vmatpush1.bf16.msra.mxu0 0
      %2673 = vmatprep.subr.bf16.mxu0 0
      %2674 = vmatpush1.bf16.msra.mxu0 0
      %2675 = vmatprep.subr.bf16.mxu0 0
      %2676 = vmatpush1.bf16.msra.mxu0 0
      %2677 = vmatprep.mubr.bf16.mxu0 0
      %2678 = vmatmul.mubr.bf16.gmra.mrb[0].mxu0 %v2403
      %v2679 = vpop.f32.mrb[0].mxu0
      %v2680 = vadd.f32 0.0, %v2679
      %v2681 = vpop.f32.mrb[0].mxu0
      %v2682 = vpop.f32.mrb[0].mxu0
      %v2683 = vadd.f32 0.0, %v2682
      %v2684 = vpop.f32.mrb[0].mxu0
      %2685 = vmatprep.mubr.bf16.mxu0 0
      %2686 = vmatmul.mubr.bf16.gmra.mrb[0].mxu0 %v2404
      %v2687 = vpop.f32.mrb[0].mxu0
      %v2688 = vadd.f32 0.0, %v2687
      %v2689 = vpop.f32.mrb[0].mxu0
      %v2690 = vpop.f32.mrb[0].mxu0
      %v2691 = vadd.f32 0.0, %v2690
      %v2692 = vpop.f32.mrb[0].mxu0
      %2693 = vmatprep.mubr.bf16.mxu0 0
      %2694 = vmatmul.mubr.bf16.gmra.mrb[0].mxu0 %v2405
      %v2695 = vpop.f32.mrb[0].mxu0
      %v2696 = vadd.f32 0.0, %v2695
      %v2697 = vpop.f32.mrb[0].mxu0
      %v2698 = vpop.f32.mrb[0].mxu0
      %v2699 = vadd.f32 0.0, %v2698
      %v2700 = vpop.f32.mrb[0].mxu0
      %2701 = vmatprep.mubr.bf16.mxu0 0
      %2702 = vmatmul.mubr.bf16.gmra.mrb[0].mxu0 %v2406
      %v2703 = vpop.f32.mrb[0].mxu0
      %v2704 = vadd.f32 0.0, %v2703
      %v2705 = vpop.f32.mrb[0].mxu0
      %v2706 = vpop.f32.mrb[0].mxu0
      %v2707 = vadd.f32 0.0, %v2706
      %v2708 = vpop.f32.mrb[0].mxu0
      %2709 = vmatprep.mubr.bf16.mxu0 0
      %2710 = vmatmul.mubr.bf16.gmra.mrb[0].mxu0 %v2407
      %v2711 = vpop.f32.mrb[0].mxu0
      %v2712 = vadd.f32 0.0, %v2711
      %v2713 = vpop.f32.mrb[0].mxu0
      %v2714 = vpop.f32.mrb[0].mxu0
      %v2715 = vadd.f32 0.0, %v2714
      %v2716 = vpop.f32.mrb[0].mxu0
      %2717 = vmatprep.mubr.bf16.mxu0 0
      %2718 = vmatmul.mubr.bf16.gmra.mrb[0].mxu0 %v2408
      %v2719 = vpop.f32.mrb[0].mxu0
      %v2720 = vadd.f32 0.0, %v2719
      %v2721 = vpop.f32.mrb[0].mxu0
      %v2722 = vpop.f32.mrb[0].mxu0
      %v2723 = vadd.f32 0.0, %v2722
      %v2724 = vpop.f32.mrb[0].mxu0
      %2725 = vmatprep.mubr.bf16.mxu0 0
      %2726 = vmatmul.mubr.bf16.gmra.mrb[0].mxu0 %v2409
      %v2727 = vpop.f32.mrb[0].mxu0
      %v2728 = vadd.f32 0.0, %v2727
      %v2729 = vpop.f32.mrb[0].mxu0
      %v2730 = vpop.f32.mrb[0].mxu0
      %v2731 = vadd.f32 0.0, %v2730
      %v2732 = vpop.f32.mrb[0].mxu0
      %2733 = vmatprep.mubr.bf16.mxu0 0
      %2734 = vmatmul.mubr.bf16.gmra.mrb[0].mxu0 %v2410
      %v2735 = vpop.f32.mrb[0].mxu0
      %v2736 = vadd.f32 0.0, %v2735
      %v2737 = vpop.f32.mrb[0].mxu0
      %v2738 = vpop.f32.mrb[0].mxu0
      %v2739 = vadd.f32 0.0, %v2738
      %v2740 = vpop.f32.mrb[0].mxu0
      %2741 = vdwg.mxu0
      %2742 = vmatprep.subr.bf16.mxu0 0
      %2743 = vmatpush1.bf16.msra.mxu0 %v2443
      %2744 = vmatprep.subr.bf16.mxu0 0
      %2745 = vmatpush1.bf16.msra.mxu0 %v2444
      %2746 = vmatprep.subr.bf16.mxu0 0
      %2747 = vmatpush1.bf16.msra.mxu0 %v2445
      %2748 = vmatprep.subr.bf16.mxu0 0
      %2749 = vmatpush1.bf16.msra.mxu0 %v2446
      %2750 = vmatprep.subr.bf16.mxu0 0
      %2751 = vmatpush1.bf16.msra.mxu0 %v2447
      %2752 = vmatprep.subr.bf16.mxu0 0
      %2753 = vmatpush1.bf16.msra.mxu0 %v2448
      %2754 = vmatprep.subr.bf16.mxu0 0
      %2755 = vmatpush1.bf16.msra.mxu0 %v2449
      %2756 = vmatprep.subr.bf16.mxu0 0
      %2757 = vmatpush1.bf16.msra.mxu0 %v2450
      %2758 = vmatprep.subr.bf16.mxu0 0
      %2759 = vmatpush1.bf16.msra.mxu0 0
      %2760 = vmatprep.subr.bf16.mxu0 0
      %2761 = vmatpush1.bf16.msra.mxu0 0
      %2762 = vmatprep.subr.bf16.mxu0 0
      %2763 = vmatpush1.bf16.msra.mxu0 0
      %2764 = vmatprep.subr.bf16.mxu0 0
      %2765 = vmatpush1.bf16.msra.mxu0 0
      %2766 = vmatprep.subr.bf16.mxu0 0
      %2767 = vmatpush1.bf16.msra.mxu0 0
      %2768 = vmatprep.subr.bf16.mxu0 0
      %2769 = vmatpush1.bf16.msra.mxu0 0
      %2770 = vmatprep.subr.bf16.mxu0 0
      %2771 = vmatpush1.bf16.msra.mxu0 0
      %2772 = vmatprep.subr.bf16.mxu0 0
      %2773 = vmatpush1.bf16.msra.mxu0 0
      %2774 = vmatprep.mubr.bf16.mxu0 0
      %2775 = vmatmul.mubr.bf16.gmra.mrb[0].mxu0 %v2411
      %v2776 = vpop.f32.mrb[0].mxu0
      %v2777 = vadd.f32 0.0, %v2776
      %v2778 = vpop.f32.mrb[0].mxu0
      %v2779 = vpop.f32.mrb[0].mxu0
      %v2780 = vadd.f32 0.0, %v2779
      %v2781 = vpop.f32.mrb[0].mxu0
      %2782 = vmatprep.mubr.bf16.mxu0 0
      %2783 = vmatmul.mubr.bf16.gmra.mrb[0].mxu0 %v2412
      %v2784 = vpop.f32.mrb[0].mxu0
      %v2785 = vadd.f32 0.0, %v2784
      %v2786 = vpop.f32.mrb[0].mxu0
      %v2787 = vpop.f32.mrb[0].mxu0
      %v2788 = vadd.f32 0.0, %v2787
      %v2789 = vpop.f32.mrb[0].mxu0
      %2790 = vmatprep.mubr.bf16.mxu0 0
      %2791 = vmatmul.mubr.bf16.gmra.mrb[0].mxu0 %v2413
      %v2792 = vpop.f32.mrb[0].mxu0
      %v2793 = vadd.f32 0.0, %v2792
      %v2794 = vpop.f32.mrb[0].mxu0
      %v2795 = vpop.f32.mrb[0].mxu0
      %v2796 = vadd.f32 0.0, %v2795
      %v2797 = vpop.f32.mrb[0].mxu0
      %2798 = vmatprep.mubr.bf16.mxu0 0
      %2799 = vmatmul.mubr.bf16.gmra.mrb[0].mxu0 %v2414
      %v2800 = vpop.f32.mrb[0].mxu0
      %v2801 = vadd.f32 0.0, %v2800
      %v2802 = vpop.f32.mrb[0].mxu0
      %v2803 = vpop.f32.mrb[0].mxu0
      %v2804 = vadd.f32 0.0, %v2803
      %v2805 = vpop.f32.mrb[0].mxu0
      %2806 = vmatprep.mubr.bf16.mxu0 0
      %2807 = vmatmul.mubr.bf16.gmra.mrb[0].mxu0 %v2415
      %v2808 = vpop.f32.mrb[0].mxu0
      %v2809 = vadd.f32 0.0, %v2808
      %v2810 = vpop.f32.mrb[0].mxu0
      %v2811 = vpop.f32.mrb[0].mxu0
      %v2812 = vadd.f32 0.0, %v2811
      %v2813 = vpop.f32.mrb[0].mxu0
      %2814 = vmatprep.mubr.bf16.mxu0 0
      %2815 = vmatmul.mubr.bf16.gmra.mrb[0].mxu0 %v2416
      %v2816 = vpop.f32.mrb[0].mxu0
      %v2817 = vadd.f32 0.0, %v2816
      %v2818 = vpop.f32.mrb[0].mxu0
      %v2819 = vpop.f32.mrb[0].mxu0
      %v2820 = vadd.f32 0.0, %v2819
      %v2821 = vpop.f32.mrb[0].mxu0
      %2822 = vmatprep.mubr.bf16.mxu0 0
      %2823 = vmatmul.mubr.bf16.gmra.mrb[0].mxu0 %v2417
      %v2824 = vpop.f32.mrb[0].mxu0
      %v2825 = vadd.f32 0.0, %v2824
      %v2826 = vpop.f32.mrb[0].mxu0
      %v2827 = vpop.f32.mrb[0].mxu0
      %v2828 = vadd.f32 0.0, %v2827
      %v2829 = vpop.f32.mrb[0].mxu0
      %2830 = vmatprep.mubr.bf16.mxu0 0
      %2831 = vmatmul.mubr.bf16.gmra.mrb[0].mxu0 %v2418
      %v2832 = vpop.f32.mrb[0].mxu0
      %v2833 = vadd.f32 0.0, %v2832
      %v2834 = vpop.f32.mrb[0].mxu0
      %v2835 = vpop.f32.mrb[0].mxu0
      %v2836 = vadd.f32 0.0, %v2835
      %v2837 = vpop.f32.mrb[0].mxu0
      %2838 = vdwg.mxu0
      %v2839 = vrcp.pop %v2260
      %v2840 = vrcp.pop %v2262
      %v2841 = vrcp.pop %v2264
      %v2842 = vrcp.pop %v2266
      %v2843 = vrcp.pop %v2268
      %v2844 = vrcp.pop %v2270
      %v2845 = vrcp.pop %v2272
      %v2846 = vrcp.pop %v2274
      %v2847 = vrcp.pop %v2276
      %v2848 = vrcp.pop %v2278
      %v2849 = vrcp.pop %v2280
      %v2850 = vrcp.pop %v2282
      %v2851 = vrcp.pop %v2284
      %v2852 = vrcp.pop %v2286
      %v2853 = vrcp.pop %v2288
      %v2854 = vrcp.pop %v2290
      %v2855 = vrcp.pop %v2292
      %v2856 = vrcp.pop %v2294
      %v2857 = vrcp.pop %v2296
      %v2858 = vrcp.pop %v2298
      %v2859 = vrcp.pop %v2300
      %v2860 = vrcp.pop %v2302
      %v2861 = vrcp.pop %v2304
      %v2862 = vrcp.pop %v2306
      %v2863 = vrcp.pop %v2308
      %v2864 = vrcp.pop %v2310
      %v2865 = vrcp.pop %v2312
      %v2866 = vrcp.pop %v2314
      %v2867 = vrcp.pop %v2316
      %v2868 = vrcp.pop %v2318
      %v2869 = vrcp.pop %v2320
      %v2870 = vrcp.pop %v2322
      %v2871 = vrcp.pop %v2324
      %v2872 = vrcp.pop %v2326
      %v2873 = vrcp.pop %v2328
      %v2874 = vrcp.pop %v2330
      %v2875 = vrcp.pop %v2332
      %v2876 = vrcp.pop %v2334
      %v2877 = vrcp.pop %v2336
      %v2878 = vrcp.pop %v2338
      %v2879 = vrcp.pop %v2340
      %v2880 = vrcp.pop %v2342
      %v2881 = vrcp.pop %v2344
      %v2882 = vrcp.pop %v2346
      %v2883 = vrcp.pop %v2348
      %v2884 = vrcp.pop %v2350
      %v2885 = vrcp.pop %v2352
      %v2886 = vrcp.pop %v2354
      %v2887 = vrcp.pop %v2356
      %v2888 = vrcp.pop %v2358
      %v2889 = vrcp.pop %v2360
      %v2890 = vrcp.pop %v2362
      %v2891 = vrcp.pop %v2364
      %v2892 = vrcp.pop %v2366
      %v2893 = vrcp.pop %v2368
      %v2894 = vrcp.pop %v2370
      %v2895 = vrcp.pop %v2372
      %v2896 = vrcp.pop %v2374
      %v2897 = vrcp.pop %v2376
      %v2898 = vrcp.pop %v2378
      %v2899 = vrcp.pop %v2380
      %v2900 = vrcp.pop %v2382
      %v2901 = vrcp.pop %v2384
      %v2902 = vrcp.pop %v2386
      %v2903 = vmul.f32 %v2486, %v2839
      %v2904 = vmul.f32 %v2489, %v2840
      %v2905 = vmul.f32 %v2494, %v2841
      %v2906 = vmul.f32 %v2497, %v2842
      %v2907 = vmul.f32 %v2502, %v2843
      %v2908 = vmul.f32 %v2505, %v2844
      %v2909 = vmul.f32 %v2510, %v2845
      %v2910 = vmul.f32 %v2513, %v2846
      %v2911 = vmul.f32 %v2518, %v2847
      %v2912 = vmul.f32 %v2521, %v2848
      %v2913 = vmul.f32 %v2526, %v2849
      %v2914 = vmul.f32 %v2529, %v2850
      %v2915 = vmul.f32 %v2534, %v2851
      %v2916 = vmul.f32 %v2537, %v2852
      %v2917 = vmul.f32 %v2542, %v2853
      %v2918 = vmul.f32 %v2545, %v2854
      %v2919 = vmul.f32 %v2583, %v2855
      %v2920 = vmul.f32 %v2586, %v2856
      %v2921 = vmul.f32 %v2591, %v2857
      %v2922 = vmul.f32 %v2594, %v2858
      %v2923 = vmul.f32 %v2599, %v2859
      %v2924 = vmul.f32 %v2602, %v2860
      %v2925 = vmul.f32 %v2607, %v2861
      %v2926 = vmul.f32 %v2610, %v2862
      %v2927 = vmul.f32 %v2615, %v2863
      %v2928 = vmul.f32 %v2618, %v2864
      %v2929 = vmul.f32 %v2623, %v2865
      %v2930 = vmul.f32 %v2626, %v2866
      %v2931 = vmul.f32 %v2631, %v2867
      %v2932 = vmul.f32 %v2634, %v2868
      %v2933 = vmul.f32 %v2639, %v2869
      %v2934 = vmul.f32 %v2642, %v2870
      %v2935 = vmul.f32 %v2680, %v2871
      %v2936 = vmul.f32 %v2683, %v2872
      %v2937 = vmul.f32 %v2688, %v2873
      %v2938 = vmul.f32 %v2691, %v2874
      %v2939 = vmul.f32 %v2696, %v2875
      %v2940 = vmul.f32 %v2699, %v2876
      %v2941 = vmul.f32 %v2704, %v2877
      %v2942 = vmul.f32 %v2707, %v2878
      %v2943 = vmul.f32 %v2712, %v2879
      %v2944 = vmul.f32 %v2715, %v2880
      %v2945 = vmul.f32 %v2720, %v2881
      %v2946 = vmul.f32 %v2723, %v2882
      %v2947 = vmul.f32 %v2728, %v2883
      %v2948 = vmul.f32 %v2731, %v2884
      %v2949 = vmul.f32 %v2736, %v2885
      %v2950 = vmul.f32 %v2739, %v2886
      %v2951 = vmul.f32 %v2777, %v2887
      %v2952 = vmul.f32 %v2780, %v2888
      %v2953 = vmul.f32 %v2785, %v2889
      %v2954 = vmul.f32 %v2788, %v2890
      %v2955 = vmul.f32 %v2793, %v2891
      %v2956 = vmul.f32 %v2796, %v2892
      %v2957 = vmul.f32 %v2801, %v2893
      %v2958 = vmul.f32 %v2804, %v2894
      %v2959 = vmul.f32 %v2809, %v2895
      %v2960 = vmul.f32 %v2812, %v2896
      %v2961 = vmul.f32 %v2817, %v2897
      %v2962 = vmul.f32 %v2820, %v2898
      %v2963 = vmul.f32 %v2825, %v2899
      %v2964 = vmul.f32 %v2828, %v2900
      %v2965 = vmul.f32 %v2833, %v2901
      %v2966 = vmul.f32 %v2836, %v2902
      %v2967 = vpack.c.bf16 %v2904, %v2903
      %v2968 = vpack.c.bf16 %v2906, %v2905
      %v2969 = vpack.c.bf16 %v2908, %v2907
      %v2970 = vpack.c.bf16 %v2910, %v2909
      %v2971 = vpack.c.bf16 %v2912, %v2911
      %v2972 = vpack.c.bf16 %v2914, %v2913
      %v2973 = vpack.c.bf16 %v2916, %v2915
      %v2974 = vpack.c.bf16 %v2918, %v2917
      %2975 = vst.msk [vmem:[#allocation5] sm:$0xff] %vm901, %v2967
      %2976 = vst.msk [vmem:[#allocation5 + $0x8] sm:$0xff] %vm901, %v2968
      %2977 = vst.msk [vmem:[#allocation5 + $0x10] sm:$0xff] %vm901, %v2969
      %2978 = vst.msk [vmem:[#allocation5 + $0x18] sm:$0xff] %vm901, %v2970
      %2979 = vst.msk [vmem:[#allocation5 + $0x20] sm:$0xff] %vm901, %v2971
      %2980 = vst.msk [vmem:[#allocation5 + $0x28] sm:$0xff] %vm901, %v2972
      %2981 = vst.msk [vmem:[#allocation5 + $0x30] sm:$0xff] %vm901, %v2973
      %2982 = vst.msk [vmem:[#allocation5 + $0x38] sm:$0xff] %vm901, %v2974
      %v2983 = vpack.c.bf16 %v2920, %v2919
      %v2984 = vpack.c.bf16 %v2922, %v2921
      %v2985 = vpack.c.bf16 %v2924, %v2923
      %v2986 = vpack.c.bf16 %v2926, %v2925
      %v2987 = vpack.c.bf16 %v2928, %v2927
      %v2988 = vpack.c.bf16 %v2930, %v2929
      %v2989 = vpack.c.bf16 %v2932, %v2931
      %v2990 = vpack.c.bf16 %v2934, %v2933
      %2999 = vrot.lane.b32.xlu0 %v2983, 8
      %v3000 = vpop.permute.xlu0 %2999
      %3001 = vrot.lane.b32.xlu0 %v2984, 8
      %v3002 = vpop.permute.xlu0 %3001
      %3003 = vrot.lane.b32.xlu0 %v2985, 8
      %v3004 = vpop.permute.xlu0 %3003
      %3005 = vrot.lane.b32.xlu0 %v2986, 8
      %v3006 = vpop.permute.xlu0 %3005
      %3007 = vrot.lane.b32.xlu0 %v2987, 8
      %v3008 = vpop.permute.xlu0 %3007
      %3009 = vrot.lane.b32.xlu0 %v2988, 8
      %v3010 = vpop.permute.xlu0 %3009
      %3011 = vrot.lane.b32.xlu0 %v2989, 8
      %v3012 = vpop.permute.xlu0 %3011
      %3013 = vrot.lane.b32.xlu0 %v2990, 8
      %v3014 = vpop.permute.xlu0 %3013
      %vm3023 = vcmask 130112
      %3024 = vst.msk [vmem:[#allocation5] sm:$0xff] %vm3023, %v3000
      %3025 = vst.msk [vmem:[#allocation5 + $0x8] sm:$0xff] %vm3023, %v3002
      %3026 = vst.msk [vmem:[#allocation5 + $0x10] sm:$0xff] %vm3023, %v3004
      %3027 = vst.msk [vmem:[#allocation5 + $0x18] sm:$0xff] %vm3023, %v3006
      %3028 = vst.msk [vmem:[#allocation5 + $0x20] sm:$0xff] %vm3023, %v3008
      %3029 = vst.msk [vmem:[#allocation5 + $0x28] sm:$0xff] %vm3023, %v3010
      %3030 = vst.msk [vmem:[#allocation5 + $0x30] sm:$0xff] %vm3023, %v3012
      %3031 = vst.msk [vmem:[#allocation5 + $0x38] sm:$0xff] %vm3023, %v3014
      %v3032 = vpack.c.bf16 %v2936, %v2935
      %v3033 = vpack.c.bf16 %v2938, %v2937
      %v3034 = vpack.c.bf16 %v2940, %v2939
      %v3035 = vpack.c.bf16 %v2942, %v2941
      %v3036 = vpack.c.bf16 %v2944, %v2943
      %v3037 = vpack.c.bf16 %v2946, %v2945
      %v3038 = vpack.c.bf16 %v2948, %v2947
      %v3039 = vpack.c.bf16 %v2950, %v2949
      %3048 = vrot.lane.b32.xlu0 %v3032, 16
      %v3049 = vpop.permute.xlu0 %3048
      %3050 = vrot.lane.b32.xlu0 %v3033, 16
      %v3051 = vpop.permute.xlu0 %3050
      %3052 = vrot.lane.b32.xlu0 %v3034, 16
      %v3053 = vpop.permute.xlu0 %3052
      %3054 = vrot.lane.b32.xlu0 %v3035, 16
      %v3055 = vpop.permute.xlu0 %3054
      %3056 = vrot.lane.b32.xlu0 %v3036, 16
      %v3057 = vpop.permute.xlu0 %3056
      %3058 = vrot.lane.b32.xlu0 %v3037, 16
      %v3059 = vpop.permute.xlu0 %3058
      %3060 = vrot.lane.b32.xlu0 %v3038, 16
      %v3061 = vpop.permute.xlu0 %3060
      %3062 = vrot.lane.b32.xlu0 %v3039, 16
      %v3063 = vpop.permute.xlu0 %3062
      %vm3072 = vcmask 195712
      %3073 = vst.msk [vmem:[#allocation5] sm:$0xff] %vm3072, %v3049
      %3074 = vst.msk [vmem:[#allocation5 + $0x8] sm:$0xff] %vm3072, %v3051
      %3075 = vst.msk [vmem:[#allocation5 + $0x10] sm:$0xff] %vm3072, %v3053
      %3076 = vst.msk [vmem:[#allocation5 + $0x18] sm:$0xff] %vm3072, %v3055
      %3077 = vst.msk [vmem:[#allocation5 + $0x20] sm:$0xff] %vm3072, %v3057
      %3078 = vst.msk [vmem:[#allocation5 + $0x28] sm:$0xff] %vm3072, %v3059
      %3079 = vst.msk [vmem:[#allocation5 + $0x30] sm:$0xff] %vm3072, %v3061
      %3080 = vst.msk [vmem:[#allocation5 + $0x38] sm:$0xff] %vm3072, %v3063
      %v3081 = vpack.c.bf16 %v2952, %v2951
      %v3082 = vpack.c.bf16 %v2954, %v2953
      %v3083 = vpack.c.bf16 %v2956, %v2955
      %v3084 = vpack.c.bf16 %v2958, %v2957
      %v3085 = vpack.c.bf16 %v2960, %v2959
      %v3086 = vpack.c.bf16 %v2962, %v2961
      %v3087 = vpack.c.bf16 %v2964, %v2963
      %v3088 = vpack.c.bf16 %v2966, %v2965
      %3097 = vrot.lane.b32.xlu0 %v3081, 24
      %v3098 = vpop.permute.xlu0 %3097
      %3099 = vrot.lane.b32.xlu0 %v3082, 24
      %v3100 = vpop.permute.xlu0 %3099
      %3101 = vrot.lane.b32.xlu0 %v3083, 24
      %v3102 = vpop.permute.xlu0 %3101
      %3103 = vrot.lane.b32.xlu0 %v3084, 24
      %v3104 = vpop.permute.xlu0 %3103
      %3105 = vrot.lane.b32.xlu0 %v3085, 24
      %v3106 = vpop.permute.xlu0 %3105
      %3107 = vrot.lane.b32.xlu0 %v3086, 24
      %v3108 = vpop.permute.xlu0 %3107
      %3109 = vrot.lane.b32.xlu0 %v3087, 24
      %v3110 = vpop.permute.xlu0 %3109
      %3111 = vrot.lane.b32.xlu0 %v3088, 24
      %v3112 = vpop.permute.xlu0 %3111
      %vm3121 = vcmask 261312
      %3122 = vst.msk [vmem:[#allocation5] sm:$0xff] %vm3121, %v3098
      %3123 = vst.msk [vmem:[#allocation5 + $0x8] sm:$0xff] %vm3121, %v3100
      %3124 = vst.msk [vmem:[#allocation5 + $0x10] sm:$0xff] %vm3121, %v3102
      %3125 = vst.msk [vmem:[#allocation5 + $0x18] sm:$0xff] %vm3121, %v3104
      %3126 = vst.msk [vmem:[#allocation5 + $0x20] sm:$0xff] %vm3121, %v3106
      %3127 = vst.msk [vmem:[#allocation5 + $0x28] sm:$0xff] %vm3121, %v3108
      %3128 = vst.msk [vmem:[#allocation5 + $0x30] sm:$0xff] %vm3121, %v3110
      %3129 = vst.msk [vmem:[#allocation5 + $0x38] sm:$0xff] %vm3121, %v3112
      %v3130 = vld [vmem:[#allocation5] sm:$0xff]
      %v3131 = vld [vmem:[#allocation5 + $0x8] sm:$0xff]
      %v3132 = vld [vmem:[#allocation5 + $0x10] sm:$0xff]
      %v3133 = vld [vmem:[#allocation5 + $0x18] sm:$0xff]
      %v3134 = vld [vmem:[#allocation5 + $0x20] sm:$0xff]
      %v3135 = vld [vmem:[#allocation5 + $0x28] sm:$0xff]
      %v3136 = vld [vmem:[#allocation5 + $0x30] sm:$0xff]
      %v3137 = vld [vmem:[#allocation5 + $0x38] sm:$0xff]
      %v3138 = vld [vmem:[%s6] sm:$0xf]
      %v3139 = vld [vmem:[%s6 + $0x4] sm:$0xf]
      %v3140 = vld [vmem:[%s6 + $0x8] sm:$0xf]
      %v3141 = vld [vmem:[%s6 + $0xc] sm:$0xf]
      %v3142 = vld [vmem:[%s7] sm:$0x1]
      %v3144 = vlaneseq
      %v3145 = vshrl.u32 %v3144, 7
      %v3146 = vsub.s32 0, %v3145
      %v3147 = vrot.slane %v3142, %v3146
      %v3153 = vunpack.c.l.b16 %v3138
      %v3154 = vunpack.c.l.b16 %v3139
      %v3155 = vunpack.c.l.b16 %v3140
      %v3156 = vunpack.c.l.b16 %v3141
      %v3157 = vpack.c.b16 %v3154, %v3153
      %v3158 = vpack.c.b16 %v3156, %v3155
      %v3162 = vsel %vm485, %v3130, 0
      %v3165 = vsel %vm485, %v3131, 0
      %v3168 = vsel %vm485, %v3132, 0
      %v3171 = vsel %vm485, %v3133, 0
      %v3174 = vsel %vm485, %v3134, 0
      %v3177 = vsel %vm485, %v3135, 0
      %v3180 = vsel %vm485, %v3136, 0
      %v3183 = vsel %vm485, %v3137, 0
      %3185 = vmatprep.subr.bf16.mxu0 0
      %3186 = vmatpush1.bf16.msra.mxu0 %v3157
      %3187 = vmatprep.subr.bf16.mxu0 0
      %3188 = vmatpush1.bf16.msra.mxu0 %v3158
      %3189 = vmatprep.subr.bf16.mxu0 0
      %3190 = vmatpush1.bf16.msra.mxu0 0
      %3191 = vmatprep.subr.bf16.mxu0 0
      %3192 = vmatpush1.bf16.msra.mxu0 0
      %3193 = vmatprep.subr.bf16.mxu0 0
      %3194 = vmatpush1.bf16.msra.mxu0 0
      %3195 = vmatprep.subr.bf16.mxu0 0
      %3196 = vmatpush1.bf16.msra.mxu0 0
      %3197 = vmatprep.subr.bf16.mxu0 0
      %3198 = vmatpush1.bf16.msra.mxu0 0
      %3199 = vmatprep.subr.bf16.mxu0 0
      %3200 = vmatpush1.bf16.msra.mxu0 0
      %3201 = vmatprep.subr.bf16.mxu0 0
      %3202 = vmatpush1.bf16.msra.mxu0 0
      %3203 = vmatprep.subr.bf16.mxu0 0
      %3204 = vmatpush1.bf16.msra.mxu0 0
      %3205 = vmatprep.subr.bf16.mxu0 0
      %3206 = vmatpush1.bf16.msra.mxu0 0
      %3207 = vmatprep.subr.bf16.mxu0 0
      %3208 = vmatpush1.bf16.msra.mxu0 0
      %3209 = vmatprep.subr.bf16.mxu0 0
      %3210 = vmatpush1.bf16.msra.mxu0 0
      %3211 = vmatprep.subr.bf16.mxu0 0
      %3212 = vmatpush1.bf16.msra.mxu0 0
      %3213 = vmatprep.subr.bf16.mxu0 0
      %3214 = vmatpush1.bf16.msra.mxu0 0
      %3215 = vmatprep.subr.bf16.mxu0 0
      %3216 = vmatpush1.bf16.msra.mxu0 0
      %3217 = vmatprep.mubr.bf16.mxu0 0
      %3218 = vmatmul.mubr.bf16.gmra.mrb[0].mxu0 %v3162
      %v3219 = vpop.f32.mrb[0].mxu0
      %v3220 = vadd.f32 %v3147, %v3219
      %v3221 = vpop.f32.mrb[0].mxu0
      %v3222 = vpop.f32.mrb[0].mxu0
      %v3223 = vadd.f32 %v3147, %v3222
      %v3224 = vpop.f32.mrb[0].mxu0
      %3225 = vmatprep.mubr.bf16.mxu0 0
      %3226 = vmatmul.mubr.bf16.gmra.mrb[0].mxu0 %v3165
      %v3227 = vpop.f32.mrb[0].mxu0
      %v3228 = vadd.f32 %v3147, %v3227
      %v3229 = vpop.f32.mrb[0].mxu0
      %v3230 = vpop.f32.mrb[0].mxu0
      %v3231 = vadd.f32 %v3147, %v3230
      %v3232 = vpop.f32.mrb[0].mxu0
      %3233 = vmatprep.mubr.bf16.mxu0 0
      %3234 = vmatmul.mubr.bf16.gmra.mrb[0].mxu0 %v3168
      %v3235 = vpop.f32.mrb[0].mxu0
      %v3236 = vadd.f32 %v3147, %v3235
      %v3237 = vpop.f32.mrb[0].mxu0
      %v3238 = vpop.f32.mrb[0].mxu0
      %v3239 = vadd.f32 %v3147, %v3238
      %v3240 = vpop.f32.mrb[0].mxu0
      %3241 = vmatprep.mubr.bf16.mxu0 0
      %3242 = vmatmul.mubr.bf16.gmra.mrb[0].mxu0 %v3171
      %v3243 = vpop.f32.mrb[0].mxu0
      %v3244 = vadd.f32 %v3147, %v3243
      %v3245 = vpop.f32.mrb[0].mxu0
      %v3246 = vpop.f32.mrb[0].mxu0
      %v3247 = vadd.f32 %v3147, %v3246
      %v3248 = vpop.f32.mrb[0].mxu0
      %3249 = vmatprep.mubr.bf16.mxu0 0
      %3250 = vmatmul.mubr.bf16.gmra.mrb[0].mxu0 %v3174
      %v3251 = vpop.f32.mrb[0].mxu0
      %v3252 = vadd.f32 %v3147, %v3251
      %v3253 = vpop.f32.mrb[0].mxu0
      %v3254 = vpop.f32.mrb[0].mxu0
      %v3255 = vadd.f32 %v3147, %v3254
      %v3256 = vpop.f32.mrb[0].mxu0
      %3257 = vmatprep.mubr.bf16.mxu0 0
      %3258 = vmatmul.mubr.bf16.gmra.mrb[0].mxu0 %v3177
      %v3259 = vpop.f32.mrb[0].mxu0
      %v3260 = vadd.f32 %v3147, %v3259
      %v3261 = vpop.f32.mrb[0].mxu0
      %v3262 = vpop.f32.mrb[0].mxu0
      %v3263 = vadd.f32 %v3147, %v3262
      %v3264 = vpop.f32.mrb[0].mxu0
      %3265 = vmatprep.mubr.bf16.mxu0 0
      %3266 = vmatmul.mubr.bf16.gmra.mrb[0].mxu0 %v3180
      %v3267 = vpop.f32.mrb[0].mxu0
      %v3268 = vadd.f32 %v3147, %v3267
      %v3269 = vpop.f32.mrb[0].mxu0
      %v3270 = vpop.f32.mrb[0].mxu0
      %v3271 = vadd.f32 %v3147, %v3270
      %v3272 = vpop.f32.mrb[0].mxu0
      %3273 = vmatprep.mubr.bf16.mxu0 0
      %3274 = vmatmul.mubr.bf16.gmra.mrb[0].mxu0 %v3183
      %v3275 = vpop.f32.mrb[0].mxu0
      %v3276 = vadd.f32 %v3147, %v3275
      %v3277 = vpop.f32.mrb[0].mxu0
      %v3278 = vpop.f32.mrb[0].mxu0
      %v3279 = vadd.f32 %v3147, %v3278
      %v3280 = vpop.f32.mrb[0].mxu0
      %3281 = vdwg.mxu0
      %v3282 = vadd.f32 %v3220, %v469
      %v3283 = vadd.f32 %v3223, %v470
      %v3284 = vadd.f32 %v3228, %v471
      %v3285 = vadd.f32 %v3231, %v472
      %v3286 = vadd.f32 %v3236, %v473
      %v3287 = vadd.f32 %v3239, %v474
      %v3288 = vadd.f32 %v3244, %v475
      %v3289 = vadd.f32 %v3247, %v476
      %v3290 = vadd.f32 %v3252, %v477
      %v3291 = vadd.f32 %v3255, %v478
      %v3292 = vadd.f32 %v3260, %v479
      %v3293 = vadd.f32 %v3263, %v480
      %v3294 = vadd.f32 %v3268, %v481
      %v3295 = vadd.f32 %v3271, %v482
      %v3296 = vadd.f32 %v3276, %v483
      %v3297 = vadd.f32 %v3279, %v484
      %v3298 = vsel %vm485, %v3282, 0.0
      %3299 = vadd.xlane.f32.xlu0 %v3298
      %v3300 = vpop.xlane.xlu0 %3299
      %v3301 = vsel %vm485, %v3283, 0.0
      %3302 = vadd.xlane.f32.xlu0 %v3301
      %v3303 = vpop.xlane.xlu0 %3302
      %v3304 = vsel %vm485, %v3284, 0.0
      %3305 = vadd.xlane.f32.xlu0 %v3304
      %v3306 = vpop.xlane.xlu0 %3305
      %v3307 = vsel %vm485, %v3285, 0.0
      %3308 = vadd.xlane.f32.xlu0 %v3307
      %v3309 = vpop.xlane.xlu0 %3308
      %v3310 = vsel %vm485, %v3286, 0.0
      %3311 = vadd.xlane.f32.xlu0 %v3310
      %v3312 = vpop.xlane.xlu0 %3311
      %v3313 = vsel %vm485, %v3287, 0.0
      %3314 = vadd.xlane.f32.xlu0 %v3313
      %v3315 = vpop.xlane.xlu0 %3314
      %v3316 = vsel %vm485, %v3288, 0.0
      %3317 = vadd.xlane.f32.xlu0 %v3316
      %v3318 = vpop.xlane.xlu0 %3317
      %v3319 = vsel %vm485, %v3289, 0.0
      %3320 = vadd.xlane.f32.xlu0 %v3319
      %v3321 = vpop.xlane.xlu0 %3320
      %v3322 = vsel %vm485, %v3290, 0.0
      %3323 = vadd.xlane.f32.xlu0 %v3322
      %v3324 = vpop.xlane.xlu0 %3323
      %v3325 = vsel %vm485, %v3291, 0.0
      %3326 = vadd.xlane.f32.xlu0 %v3325
      %v3327 = vpop.xlane.xlu0 %3326
      %v3328 = vsel %vm485, %v3292, 0.0
      %3329 = vadd.xlane.f32.xlu0 %v3328
      %v3330 = vpop.xlane.xlu0 %3329
      %v3331 = vsel %vm485, %v3293, 0.0
      %3332 = vadd.xlane.f32.xlu0 %v3331
      %v3333 = vpop.xlane.xlu0 %3332
      %v3334 = vsel %vm485, %v3294, 0.0
      %3335 = vadd.xlane.f32.xlu0 %v3334
      %v3336 = vpop.xlane.xlu0 %3335
      %v3337 = vsel %vm485, %v3295, 0.0
      %3338 = vadd.xlane.f32.xlu0 %v3337
      %v3339 = vpop.xlane.xlu0 %3338
      %v3340 = vsel %vm485, %v3296, 0.0
      %3341 = vadd.xlane.f32.xlu0 %v3340
      %v3342 = vpop.xlane.xlu0 %3341
      %v3343 = vsel %vm485, %v3297, 0.0
      %3344 = vadd.xlane.f32.xlu0 %v3343
      %v3345 = vpop.xlane.xlu0 %3344
      %v3346 = vmul.f32 %v3300, %v534
      %v3347 = vmul.f32 %v3303, %v534
      %v3348 = vmul.f32 %v3306, %v534
      %v3349 = vmul.f32 %v3309, %v534
      %v3350 = vmul.f32 %v3312, %v534
      %v3351 = vmul.f32 %v3315, %v534
      %v3352 = vmul.f32 %v3318, %v534
      %v3353 = vmul.f32 %v3321, %v534
      %v3354 = vmul.f32 %v3324, %v534
      %v3355 = vmul.f32 %v3327, %v534
      %v3356 = vmul.f32 %v3330, %v534
      %v3357 = vmul.f32 %v3333, %v534
      %v3358 = vmul.f32 %v3336, %v534
      %v3359 = vmul.f32 %v3339, %v534
      %v3360 = vmul.f32 %v3342, %v534
      %v3361 = vmul.f32 %v3345, %v534
      %v3362 = vsub.f32 %v3282, %v3346
      %v3363 = vsub.f32 %v3283, %v3347
      %v3364 = vsub.f32 %v3284, %v3348
      %v3365 = vsub.f32 %v3285, %v3349
      %v3366 = vsub.f32 %v3286, %v3350
      %v3367 = vsub.f32 %v3287, %v3351
      %v3368 = vsub.f32 %v3288, %v3352
      %v3369 = vsub.f32 %v3289, %v3353
      %v3370 = vsub.f32 %v3290, %v3354
      %v3371 = vsub.f32 %v3291, %v3355
      %v3372 = vsub.f32 %v3292, %v3356
      %v3373 = vsub.f32 %v3293, %v3357
      %v3374 = vsub.f32 %v3294, %v3358
      %v3375 = vsub.f32 %v3295, %v3359
      %v3376 = vsub.f32 %v3296, %v3360
      %v3377 = vsub.f32 %v3297, %v3361
      %v3378 = vmul.f32 %v3362, %v3362
      %v3379 = vmul.f32 %v3363, %v3363
      %v3380 = vmul.f32 %v3364, %v3364
      %v3381 = vmul.f32 %v3365, %v3365
      %v3382 = vmul.f32 %v3366, %v3366
      %v3383 = vmul.f32 %v3367, %v3367
      %v3384 = vmul.f32 %v3368, %v3368
      %v3385 = vmul.f32 %v3369, %v3369
      %v3386 = vmul.f32 %v3370, %v3370
      %v3387 = vmul.f32 %v3371, %v3371
      %v3388 = vmul.f32 %v3372, %v3372
      %v3389 = vmul.f32 %v3373, %v3373
      %v3390 = vmul.f32 %v3374, %v3374
      %v3391 = vmul.f32 %v3375, %v3375
      %v3392 = vmul.f32 %v3376, %v3376
      %v3393 = vmul.f32 %v3377, %v3377
      %v3394 = vsel %vm485, %v3378, 0.0
      %3395 = vadd.xlane.f32.xlu0 %v3394
      %v3396 = vpop.xlane.xlu0 %3395
      %v3397 = vsel %vm485, %v3379, 0.0
      %3398 = vadd.xlane.f32.xlu0 %v3397
      %v3399 = vpop.xlane.xlu0 %3398
      %v3400 = vsel %vm485, %v3380, 0.0
      %3401 = vadd.xlane.f32.xlu0 %v3400
      %v3402 = vpop.xlane.xlu0 %3401
      %v3403 = vsel %vm485, %v3381, 0.0
      %3404 = vadd.xlane.f32.xlu0 %v3403
      %v3405 = vpop.xlane.xlu0 %3404
      %v3406 = vsel %vm485, %v3382, 0.0
      %3407 = vadd.xlane.f32.xlu0 %v3406
      %v3408 = vpop.xlane.xlu0 %3407
      %v3409 = vsel %vm485, %v3383, 0.0
      %3410 = vadd.xlane.f32.xlu0 %v3409
      %v3411 = vpop.xlane.xlu0 %3410
      %v3412 = vsel %vm485, %v3384, 0.0
      %3413 = vadd.xlane.f32.xlu0 %v3412
      %v3414 = vpop.xlane.xlu0 %3413
      %v3415 = vsel %vm485, %v3385, 0.0
      %3416 = vadd.xlane.f32.xlu0 %v3415
      %v3417 = vpop.xlane.xlu0 %3416
      %v3418 = vsel %vm485, %v3386, 0.0
      %3419 = vadd.xlane.f32.xlu0 %v3418
      %v3420 = vpop.xlane.xlu0 %3419
      %v3421 = vsel %vm485, %v3387, 0.0
      %3422 = vadd.xlane.f32.xlu0 %v3421
      %v3423 = vpop.xlane.xlu0 %3422
      %v3424 = vsel %vm485, %v3388, 0.0
      %3425 = vadd.xlane.f32.xlu0 %v3424
      %v3426 = vpop.xlane.xlu0 %3425
      %v3427 = vsel %vm485, %v3389, 0.0
      %3428 = vadd.xlane.f32.xlu0 %v3427
      %v3429 = vpop.xlane.xlu0 %3428
      %v3430 = vsel %vm485, %v3390, 0.0
      %3431 = vadd.xlane.f32.xlu0 %v3430
      %v3432 = vpop.xlane.xlu0 %3431
      %v3433 = vsel %vm485, %v3391, 0.0
      %3434 = vadd.xlane.f32.xlu0 %v3433
      %v3435 = vpop.xlane.xlu0 %3434
      %v3436 = vsel %vm485, %v3392, 0.0
      %3437 = vadd.xlane.f32.xlu0 %v3436
      %v3438 = vpop.xlane.xlu0 %3437
      %v3439 = vsel %vm485, %v3393, 0.0
      %3440 = vadd.xlane.f32.xlu0 %v3439
      %v3441 = vpop.xlane.xlu0 %3440
      %v3442 = vmul.f32 %v3396, %v534
      %v3443 = vmul.f32 %v3399, %v534
      %v3444 = vmul.f32 %v3402, %v534
      %v3445 = vmul.f32 %v3405, %v534
      %v3446 = vmul.f32 %v3408, %v534
      %v3447 = vmul.f32 %v3411, %v534
      %v3448 = vmul.f32 %v3414, %v534
      %v3449 = vmul.f32 %v3417, %v534
      %v3450 = vmul.f32 %v3420, %v534
      %v3451 = vmul.f32 %v3423, %v534
      %v3452 = vmul.f32 %v3426, %v534
      %v3453 = vmul.f32 %v3429, %v534
      %v3454 = vmul.f32 %v3432, %v534
      %v3455 = vmul.f32 %v3435, %v534
      %v3456 = vmul.f32 %v3438, %v534
      %v3457 = vmul.f32 %v3441, %v534
      %v3458 = vadd.f32 %v3442, 1e-05
      %v3459 = vadd.f32 %v3443, 1e-05
      %v3460 = vadd.f32 %v3444, 1e-05
      %v3461 = vadd.f32 %v3445, 1e-05
      %v3462 = vadd.f32 %v3446, 1e-05
      %v3463 = vadd.f32 %v3447, 1e-05
      %v3464 = vadd.f32 %v3448, 1e-05
      %v3465 = vadd.f32 %v3449, 1e-05
      %v3466 = vadd.f32 %v3450, 1e-05
      %v3467 = vadd.f32 %v3451, 1e-05
      %v3468 = vadd.f32 %v3452, 1e-05
      %v3469 = vadd.f32 %v3453, 1e-05
      %v3470 = vadd.f32 %v3454, 1e-05
      %v3471 = vadd.f32 %v3455, 1e-05
      %v3472 = vadd.f32 %v3456, 1e-05
      %v3473 = vadd.f32 %v3457, 1e-05
      %v3474 = vrsqrt.pop %v3458
      %v3475 = vrsqrt.pop %v3459
      %v3476 = vrsqrt.pop %v3460
      %v3477 = vrsqrt.pop %v3461
      %v3478 = vrsqrt.pop %v3462
      %v3479 = vrsqrt.pop %v3463
      %v3480 = vrsqrt.pop %v3464
      %v3481 = vrsqrt.pop %v3465
      %v3482 = vrsqrt.pop %v3466
      %v3483 = vrsqrt.pop %v3467
      %v3484 = vrsqrt.pop %v3468
      %v3485 = vrsqrt.pop %v3469
      %v3486 = vrsqrt.pop %v3470
      %v3487 = vrsqrt.pop %v3471
      %v3488 = vrsqrt.pop %v3472
      %v3489 = vrsqrt.pop %v3473
      %v3490 = vmul.f32 %v3362, %v3474
      %v3491 = vmul.f32 %v3363, %v3475
      %v3492 = vmul.f32 %v3364, %v3476
      %v3493 = vmul.f32 %v3365, %v3477
      %v3494 = vmul.f32 %v3366, %v3478
      %v3495 = vmul.f32 %v3367, %v3479
      %v3496 = vmul.f32 %v3368, %v3480
      %v3497 = vmul.f32 %v3369, %v3481
      %v3498 = vmul.f32 %v3370, %v3482
      %v3499 = vmul.f32 %v3371, %v3483
      %v3500 = vmul.f32 %v3372, %v3484
      %v3501 = vmul.f32 %v3373, %v3485
      %v3502 = vmul.f32 %v3374, %v3486
      %v3503 = vmul.f32 %v3375, %v3487
      %v3504 = vmul.f32 %v3376, %v3488
      %v3505 = vmul.f32 %v3377, %v3489
      %v3506 = vld [vmem:[%s8] sm:$0x1]
      %v3508 = vlaneseq
      %v3509 = vshrl.u32 %v3508, 7
      %v3510 = vsub.s32 0, %v3509
      %v3511 = vrot.slane %v3506, %v3510
      %v3513 = vmul.f32 %v3490, %v3511
      %v3514 = vmul.f32 %v3491, %v3511
      %v3515 = vmul.f32 %v3492, %v3511
      %v3516 = vmul.f32 %v3493, %v3511
      %v3517 = vmul.f32 %v3494, %v3511
      %v3518 = vmul.f32 %v3495, %v3511
      %v3519 = vmul.f32 %v3496, %v3511
      %v3520 = vmul.f32 %v3497, %v3511
      %v3521 = vmul.f32 %v3498, %v3511
      %v3522 = vmul.f32 %v3499, %v3511
      %v3523 = vmul.f32 %v3500, %v3511
      %v3524 = vmul.f32 %v3501, %v3511
      %v3525 = vmul.f32 %v3502, %v3511
      %v3526 = vmul.f32 %v3503, %v3511
      %v3527 = vmul.f32 %v3504, %v3511
      %v3528 = vmul.f32 %v3505, %v3511
      %v3529 = vld [vmem:[%s9] sm:$0x1]
      %v3531 = vlaneseq
      %v3532 = vshrl.u32 %v3531, 7
      %v3533 = vsub.s32 0, %v3532
      %v3534 = vrot.slane %v3529, %v3533
      %v3536 = vadd.f32 %v3513, %v3534
      %v3537 = vadd.f32 %v3514, %v3534
      %v3538 = vadd.f32 %v3515, %v3534
      %v3539 = vadd.f32 %v3516, %v3534
      %v3540 = vadd.f32 %v3517, %v3534
      %v3541 = vadd.f32 %v3518, %v3534
      %v3542 = vadd.f32 %v3519, %v3534
      %v3543 = vadd.f32 %v3520, %v3534
      %v3544 = vadd.f32 %v3521, %v3534
      %v3545 = vadd.f32 %v3522, %v3534
      %v3546 = vadd.f32 %v3523, %v3534
      %v3547 = vadd.f32 %v3524, %v3534
      %v3548 = vadd.f32 %v3525, %v3534
      %v3549 = vadd.f32 %v3526, %v3534
      %v3550 = vadd.f32 %v3527, %v3534
      %v3551 = vadd.f32 %v3528, %v3534
      %v3552 = vpack.c.bf16 %v3537, %v3536
      %v3553 = vpack.c.bf16 %v3539, %v3538
      %v3554 = vpack.c.bf16 %v3541, %v3540
      %v3555 = vpack.c.bf16 %v3543, %v3542
      %v3556 = vpack.c.bf16 %v3545, %v3544
      %v3557 = vpack.c.bf16 %v3547, %v3546
      %v3558 = vpack.c.bf16 %v3549, %v3548
      %v3559 = vpack.c.bf16 %v3551, %v3550
      %v3560 = vld [vmem:[%s10] sm:$0xf]
      %v3561 = vld [vmem:[%s10 + $0x4] sm:$0xf]
      %v3562 = vld [vmem:[%s10 + $0x8] sm:$0xf]
      %v3563 = vld [vmem:[%s10 + $0xc] sm:$0xf]
      %v3564 = vld [vmem:[%s11] sm:$0x1]
      %v3566 = vlaneseq
      %v3567 = vshrl.u32 %v3566, 7
      %v3568 = vsub.s32 0, %v3567
      %v3569 = vrot.slane %v3564, %v3568
      %v3575 = vunpack.c.l.b16 %v3560
      %v3576 = vunpack.c.l.b16 %v3561
      %v3577 = vunpack.c.l.b16 %v3562
      %v3578 = vunpack.c.l.b16 %v3563
      %v3579 = vpack.c.b16 %v3576, %v3575
      %v3580 = vpack.c.b16 %v3578, %v3577
      %v3584 = vsel %vm485, %v3552, 0
      %v3587 = vsel %vm485, %v3553, 0
      %v3590 = vsel %vm485, %v3554, 0
      %v3593 = vsel %vm485, %v3555, 0
      %v3596 = vsel %vm485, %v3556, 0
      %v3599 = vsel %vm485, %v3557, 0
      %v3602 = vsel %vm485, %v3558, 0
      %v3605 = vsel %vm485, %v3559, 0
      %3607 = vmatprep.subr.bf16.mxu0 0
      %3608 = vmatpush1.bf16.msra.mxu0 %v3579
      %3609 = vmatprep.subr.bf16.mxu0 0
      %3610 = vmatpush1.bf16.msra.mxu0 %v3580
      %3611 = vmatprep.subr.bf16.mxu0 0
      %3612 = vmatpush1.bf16.msra.mxu0 0
      %3613 = vmatprep.subr.bf16.mxu0 0
      %3614 = vmatpush1.bf16.msra.mxu0 0
      %3615 = vmatprep.subr.bf16.mxu0 0
      %3616 = vmatpush1.bf16.msra.mxu0 0
      %3617 = vmatprep.subr.bf16.mxu0 0
      %3618 = vmatpush1.bf16.msra.mxu0 0
      %3619 = vmatprep.subr.bf16.mxu0 0
      %3620 = vmatpush1.bf16.msra.mxu0 0
      %3621 = vmatprep.subr.bf16.mxu0 0
      %3622 = vmatpush1.bf16.msra.mxu0 0
      %3623 = vmatprep.subr.bf16.mxu0 0
      %3624 = vmatpush1.bf16.msra.mxu0 0
      %3625 = vmatprep.subr.bf16.mxu0 0
      %3626 = vmatpush1.bf16.msra.mxu0 0
      %3627 = vmatprep.subr.bf16.mxu0 0
      %3628 = vmatpush1.bf16.msra.mxu0 0
      %3629 = vmatprep.subr.bf16.mxu0 0
      %3630 = vmatpush1.bf16.msra.mxu0 0
      %3631 = vmatprep.subr.bf16.mxu0 0
      %3632 = vmatpush1.bf16.msra.mxu0 0
      %3633 = vmatprep.subr.bf16.mxu0 0
      %3634 = vmatpush1.bf16.msra.mxu0 0
      %3635 = vmatprep.subr.bf16.mxu0 0
      %3636 = vmatpush1.bf16.msra.mxu0 0
      %3637 = vmatprep.subr.bf16.mxu0 0
      %3638 = vmatpush1.bf16.msra.mxu0 0
      %3639 = vmatprep.mubr.bf16.mxu0 0
      %3640 = vmatmul.mubr.bf16.gmra.mrb[0].mxu0 %v3584
      %v3641 = vpop.f32.mrb[0].mxu0
      %v3642 = vadd.f32 %v3569, %v3641
      %v3643 = vpop.f32.mrb[0].mxu0
      %v3644 = vpop.f32.mrb[0].mxu0
      %v3645 = vadd.f32 %v3569, %v3644
      %v3646 = vpop.f32.mrb[0].mxu0
      %3647 = vmatprep.mubr.bf16.mxu0 0
      %3648 = vmatmul.mubr.bf16.gmra.mrb[0].mxu0 %v3587
      %v3649 = vpop.f32.mrb[0].mxu0
      %v3650 = vadd.f32 %v3569, %v3649
      %v3651 = vpop.f32.mrb[0].mxu0
      %v3652 = vpop.f32.mrb[0].mxu0
      %v3653 = vadd.f32 %v3569, %v3652
      %v3654 = vpop.f32.mrb[0].mxu0
      %3655 = vmatprep.mubr.bf16.mxu0 0
      %3656 = vmatmul.mubr.bf16.gmra.mrb[0].mxu0 %v3590
      %v3657 = vpop.f32.mrb[0].mxu0
      %v3658 = vadd.f32 %v3569, %v3657
      %v3659 = vpop.f32.mrb[0].mxu0
      %v3660 = vpop.f32.mrb[0].mxu0
      %v3661 = vadd.f32 %v3569, %v3660
      %v3662 = vpop.f32.mrb[0].mxu0
      %3663 = vmatprep.mubr.bf16.mxu0 0
      %3664 = vmatmul.mubr.bf16.gmra.mrb[0].mxu0 %v3593
      %v3665 = vpop.f32.mrb[0].mxu0
      %v3666 = vadd.f32 %v3569, %v3665
      %v3667 = vpop.f32.mrb[0].mxu0
      %v3668 = vpop.f32.mrb[0].mxu0
      %v3669 = vadd.f32 %v3569, %v3668
      %v3670 = vpop.f32.mrb[0].mxu0
      %3671 = vmatprep.mubr.bf16.mxu0 0
      %3672 = vmatmul.mubr.bf16.gmra.mrb[0].mxu0 %v3596
      %v3673 = vpop.f32.mrb[0].mxu0
      %v3674 = vadd.f32 %v3569, %v3673
      %v3675 = vpop.f32.mrb[0].mxu0
      %v3676 = vpop.f32.mrb[0].mxu0
      %v3677 = vadd.f32 %v3569, %v3676
      %v3678 = vpop.f32.mrb[0].mxu0
      %3679 = vmatprep.mubr.bf16.mxu0 0
      %3680 = vmatmul.mubr.bf16.gmra.mrb[0].mxu0 %v3599
      %v3681 = vpop.f32.mrb[0].mxu0
      %v3682 = vadd.f32 %v3569, %v3681
      %v3683 = vpop.f32.mrb[0].mxu0
      %v3684 = vpop.f32.mrb[0].mxu0
      %v3685 = vadd.f32 %v3569, %v3684
      %v3686 = vpop.f32.mrb[0].mxu0
      %3687 = vmatprep.mubr.bf16.mxu0 0
      %3688 = vmatmul.mubr.bf16.gmra.mrb[0].mxu0 %v3602
      %v3689 = vpop.f32.mrb[0].mxu0
      %v3690 = vadd.f32 %v3569, %v3689
      %v3691 = vpop.f32.mrb[0].mxu0
      %v3692 = vpop.f32.mrb[0].mxu0
      %v3693 = vadd.f32 %v3569, %v3692
      %v3694 = vpop.f32.mrb[0].mxu0
      %3695 = vmatprep.mubr.bf16.mxu0 0
      %3696 = vmatmul.mubr.bf16.gmra.mrb[0].mxu0 %v3605
      %v3697 = vpop.f32.mrb[0].mxu0
      %v3698 = vadd.f32 %v3569, %v3697
      %v3699 = vpop.f32.mrb[0].mxu0
      %v3700 = vpop.f32.mrb[0].mxu0
      %v3701 = vadd.f32 %v3569, %v3700
      %v3702 = vpop.f32.mrb[0].mxu0
      %3703 = vdwg.mxu0
      %v3704 = vmul.f32 %v3642, 1.702
      %v3705 = vmul.f32 %v3645, 1.702
      %v3706 = vmul.f32 %v3650, 1.702
      %v3707 = vmul.f32 %v3653, 1.702
      %v3708 = vmul.f32 %v3658, 1.702
      %v3709 = vmul.f32 %v3661, 1.702
      %v3710 = vmul.f32 %v3666, 1.702
      %v3711 = vmul.f32 %v3669, 1.702
      %v3712 = vmul.f32 %v3674, 1.702
      %v3713 = vmul.f32 %v3677, 1.702
      %v3714 = vmul.f32 %v3682, 1.702
      %v3715 = vmul.f32 %v3685, 1.702
      %v3716 = vmul.f32 %v3690, 1.702
      %v3717 = vmul.f32 %v3693, 1.702
      %v3718 = vmul.f32 %v3698, 1.702
      %v3719 = vmul.f32 %v3701, 1.702
      %v3720 = vxor.u32 %v3704, 2147483648
      %v3721 = vxor.u32 %v3705, 2147483648
      %v3722 = vxor.u32 %v3706, 2147483648
      %v3723 = vxor.u32 %v3707, 2147483648
      %v3724 = vxor.u32 %v3708, 2147483648
      %v3725 = vxor.u32 %v3709, 2147483648
      %v3726 = vxor.u32 %v3710, 2147483648
      %v3727 = vxor.u32 %v3711, 2147483648
      %v3728 = vxor.u32 %v3712, 2147483648
      %v3729 = vxor.u32 %v3713, 2147483648
      %v3730 = vxor.u32 %v3714, 2147483648
      %v3731 = vxor.u32 %v3715, 2147483648
      %v3732 = vxor.u32 %v3716, 2147483648
      %v3733 = vxor.u32 %v3717, 2147483648
      %v3734 = vxor.u32 %v3718, 2147483648
      %v3735 = vxor.u32 %v3719, 2147483648
      %v3736 = vmul.f32 %v3720, 1.442695
      %v3737 = vpow.pop %v3736
      %v3738 = vmul.f32 %v3721, 1.442695
      %v3739 = vpow.pop %v3738
      %v3740 = vmul.f32 %v3722, 1.442695
      %v3741 = vpow.pop %v3740
      %v3742 = vmul.f32 %v3723, 1.442695
      %v3743 = vpow.pop %v3742
      %v3744 = vmul.f32 %v3724, 1.442695
      %v3745 = vpow.pop %v3744
      %v3746 = vmul.f32 %v3725, 1.442695
      %v3747 = vpow.pop %v3746
      %v3748 = vmul.f32 %v3726, 1.442695
      %v3749 = vpow.pop %v3748
      %v3750 = vmul.f32 %v3727, 1.442695
      %v3751 = vpow.pop %v3750
      %v3752 = vmul.f32 %v3728, 1.442695
      %v3753 = vpow.pop %v3752
      %v3754 = vmul.f32 %v3729, 1.442695
      %v3755 = vpow.pop %v3754
      %v3756 = vmul.f32 %v3730, 1.442695
      %v3757 = vpow.pop %v3756
      %v3758 = vmul.f32 %v3731, 1.442695
      %v3759 = vpow.pop %v3758
      %v3760 = vmul.f32 %v3732, 1.442695
      %v3761 = vpow.pop %v3760
      %v3762 = vmul.f32 %v3733, 1.442695
      %v3763 = vpow.pop %v3762
      %v3764 = vmul.f32 %v3734, 1.442695
      %v3765 = vpow.pop %v3764
      %v3766 = vmul.f32 %v3735, 1.442695
      %v3767 = vpow.pop %v3766
      %v3768 = vadd.f32 %v3737, 1.0
      %v3769 = vadd.f32 %v3739, 1.0
      %v3770 = vadd.f32 %v3741, 1.0
      %v3771 = vadd.f32 %v3743, 1.0
      %v3772 = vadd.f32 %v3745, 1.0
      %v3773 = vadd.f32 %v3747, 1.0
      %v3774 = vadd.f32 %v3749, 1.0
      %v3775 = vadd.f32 %v3751, 1.0
      %v3776 = vadd.f32 %v3753, 1.0
      %v3777 = vadd.f32 %v3755, 1.0
      %v3778 = vadd.f32 %v3757, 1.0
      %v3779 = vadd.f32 %v3759, 1.0
      %v3780 = vadd.f32 %v3761, 1.0
      %v3781 = vadd.f32 %v3763, 1.0
      %v3782 = vadd.f32 %v3765, 1.0
      %v3783 = vadd.f32 %v3767, 1.0
      %v3784 = vrcp.pop %v3768
      %v3785 = vmul.f32 1.0, %v3784
      %v3786 = vrcp.pop %v3769
      %v3787 = vmul.f32 1.0, %v3786
      %v3788 = vrcp.pop %v3770
      %v3789 = vmul.f32 1.0, %v3788
      %v3790 = vrcp.pop %v3771
      %v3791 = vmul.f32 1.0, %v3790
      %v3792 = vrcp.pop %v3772
      %v3793 = vmul.f32 1.0, %v3792
      %v3794 = vrcp.pop %v3773
      %v3795 = vmul.f32 1.0, %v3794
      %v3796 = vrcp.pop %v3774
      %v3797 = vmul.f32 1.0, %v3796
      %v3798 = vrcp.pop %v3775
      %v3799 = vmul.f32 1.0, %v3798
      %v3800 = vrcp.pop %v3776
      %v3801 = vmul.f32 1.0, %v3800
      %v3802 = vrcp.pop %v3777
      %v3803 = vmul.f32 1.0, %v3802
      %v3804 = vrcp.pop %v3778
      %v3805 = vmul.f32 1.0, %v3804
      %v3806 = vrcp.pop %v3779
      %v3807 = vmul.f32 1.0, %v3806
      %v3808 = vrcp.pop %v3780
      %v3809 = vmul.f32 1.0, %v3808
      %v3810 = vrcp.pop %v3781
      %v3811 = vmul.f32 1.0, %v3810
      %v3812 = vrcp.pop %v3782
      %v3813 = vmul.f32 1.0, %v3812
      %v3814 = vrcp.pop %v3783
      %v3815 = vmul.f32 1.0, %v3814
      %v3816 = vmul.f32 %v3642, %v3785
      %v3817 = vmul.f32 %v3645, %v3787
      %v3818 = vmul.f32 %v3650, %v3789
      %v3819 = vmul.f32 %v3653, %v3791
      %v3820 = vmul.f32 %v3658, %v3793
      %v3821 = vmul.f32 %v3661, %v3795
      %v3822 = vmul.f32 %v3666, %v3797
      %v3823 = vmul.f32 %v3669, %v3799
      %v3824 = vmul.f32 %v3674, %v3801
      %v3825 = vmul.f32 %v3677, %v3803
      %v3826 = vmul.f32 %v3682, %v3805
      %v3827 = vmul.f32 %v3685, %v3807
      %v3828 = vmul.f32 %v3690, %v3809
      %v3829 = vmul.f32 %v3693, %v3811
      %v3830 = vmul.f32 %v3698, %v3813
      %v3831 = vmul.f32 %v3701, %v3815
      %v3832 = vpack.c.bf16 %v3817, %v3816
      %v3833 = vpack.c.bf16 %v3819, %v3818
      %v3834 = vpack.c.bf16 %v3821, %v3820
      %v3835 = vpack.c.bf16 %v3823, %v3822
      %v3836 = vpack.c.bf16 %v3825, %v3824
      %v3837 = vpack.c.bf16 %v3827, %v3826
      %v3838 = vpack.c.bf16 %v3829, %v3828
      %v3839 = vpack.c.bf16 %v3831, %v3830
      %v3840 = vld [vmem:[%s12] sm:$0xf]
      %v3841 = vld [vmem:[%s12 + $0x4] sm:$0xf]
      %v3842 = vld [vmem:[%s12 + $0x8] sm:$0xf]
      %v3843 = vld [vmem:[%s12 + $0xc] sm:$0xf]
      %v3844 = vld [vmem:[%s12 + $0x10] sm:$0xf]
      %v3845 = vld [vmem:[%s12 + $0x14] sm:$0xf]
      %v3846 = vld [vmem:[%s12 + $0x18] sm:$0xf]
      %v3847 = vld [vmem:[%s12 + $0x1c] sm:$0xf]
      %v3848 = vld [vmem:[%s12 + $0x20] sm:$0xf]
      %v3849 = vld [vmem:[%s12 + $0x24] sm:$0xf]
      %v3850 = vld [vmem:[%s12 + $0x28] sm:$0xf]
      %v3851 = vld [vmem:[%s12 + $0x2c] sm:$0xf]
      %v3852 = vld [vmem:[%s12 + $0x30] sm:$0xf]
      %v3853 = vld [vmem:[%s12 + $0x34] sm:$0xf]
      %v3854 = vld [vmem:[%s12 + $0x38] sm:$0xf]
      %v3855 = vld [vmem:[%s12 + $0x3c] sm:$0xf]
      %v3856 = vld [vmem:[%s13] sm:$0x1]
      %v3858 = vlaneseq
      %v3859 = vshrl.u32 %v3858, 7
      %v3860 = vsub.s32 0, %v3859
      %v3861 = vrot.slane %v3856, %v3860
      %v3879 = vunpack.c.l.b16 %v3840
      %v3880 = vunpack.c.l.b16 %v3841
      %v3881 = vunpack.c.l.b16 %v3842
      %v3882 = vunpack.c.l.b16 %v3843
      %v3883 = vunpack.c.l.b16 %v3844
      %v3884 = vunpack.c.l.b16 %v3845
      %v3885 = vunpack.c.l.b16 %v3846
      %v3886 = vunpack.c.l.b16 %v3847
      %v3887 = vunpack.c.l.b16 %v3848
      %v3888 = vunpack.c.l.b16 %v3849
      %v3889 = vunpack.c.l.b16 %v3850
      %v3890 = vunpack.c.l.b16 %v3851
      %v3891 = vunpack.c.l.b16 %v3852
      %v3892 = vunpack.c.l.b16 %v3853
      %v3893 = vunpack.c.l.b16 %v3854
      %v3894 = vunpack.c.l.b16 %v3855
      %v3895 = vpack.c.b16 %v3880, %v3879
      %v3896 = vpack.c.b16 %v3882, %v3881
      %v3897 = vpack.c.b16 %v3884, %v3883
      %v3898 = vpack.c.b16 %v3886, %v3885
      %v3899 = vpack.c.b16 %v3888, %v3887
      %v3900 = vpack.c.b16 %v3890, %v3889
      %v3901 = vpack.c.b16 %v3892, %v3891
      %v3902 = vpack.c.b16 %v3894, %v3893
      %3911 = vmatprep.subr.bf16.mxu0 0
      %3912 = vmatpush1.bf16.msra.mxu0 %v3895
      %3913 = vmatprep.subr.bf16.mxu0 0
      %3914 = vmatpush1.bf16.msra.mxu0 %v3896
      %3915 = vmatprep.subr.bf16.mxu0 0
      %3916 = vmatpush1.bf16.msra.mxu0 %v3897
      %3917 = vmatprep.subr.bf16.mxu0 0
      %3918 = vmatpush1.bf16.msra.mxu0 %v3898
      %3919 = vmatprep.subr.bf16.mxu0 0
      %3920 = vmatpush1.bf16.msra.mxu0 %v3899
      %3921 = vmatprep.subr.bf16.mxu0 0
      %3922 = vmatpush1.bf16.msra.mxu0 %v3900
      %3923 = vmatprep.subr.bf16.mxu0 0
      %3924 = vmatpush1.bf16.msra.mxu0 %v3901
      %3925 = vmatprep.subr.bf16.mxu0 0
      %3926 = vmatpush1.bf16.msra.mxu0 %v3902
      %3927 = vmatprep.subr.bf16.mxu0 0
      %3928 = vmatpush1.bf16.msra.mxu0 0
      %3929 = vmatprep.subr.bf16.mxu0 0
      %3930 = vmatpush1.bf16.msra.mxu0 0
      %3931 = vmatprep.subr.bf16.mxu0 0
      %3932 = vmatpush1.bf16.msra.mxu0 0
      %3933 = vmatprep.subr.bf16.mxu0 0
      %3934 = vmatpush1.bf16.msra.mxu0 0
      %3935 = vmatprep.subr.bf16.mxu0 0
      %3936 = vmatpush1.bf16.msra.mxu0 0
      %3937 = vmatprep.subr.bf16.mxu0 0
      %3938 = vmatpush1.bf16.msra.mxu0 0
      %3939 = vmatprep.subr.bf16.mxu0 0
      %3940 = vmatpush1.bf16.msra.mxu0 0
      %3941 = vmatprep.subr.bf16.mxu0 0
      %3942 = vmatpush1.bf16.msra.mxu0 0
      %3943 = vmatprep.mubr.bf16.mxu0 0
      %3944 = vmatmul.mubr.bf16.gmra.mrb[0].mxu0 %v3832
      %v3945 = vpop.f32.mrb[0].mxu0
      %v3946 = vadd.f32 %v3861, %v3945
      %v3947 = vpop.f32.mrb[0].mxu0
      %v3948 = vpop.f32.mrb[0].mxu0
      %v3949 = vadd.f32 %v3861, %v3948
      %v3950 = vpop.f32.mrb[0].mxu0
      %3951 = vmatprep.mubr.bf16.mxu0 0
      %3952 = vmatmul.mubr.bf16.gmra.mrb[0].mxu0 %v3833
      %v3953 = vpop.f32.mrb[0].mxu0
      %v3954 = vadd.f32 %v3861, %v3953
      %v3955 = vpop.f32.mrb[0].mxu0
      %v3956 = vpop.f32.mrb[0].mxu0
      %v3957 = vadd.f32 %v3861, %v3956
      %v3958 = vpop.f32.mrb[0].mxu0
      %3959 = vmatprep.mubr.bf16.mxu0 0
      %3960 = vmatmul.mubr.bf16.gmra.mrb[0].mxu0 %v3834
      %v3961 = vpop.f32.mrb[0].mxu0
      %v3962 = vadd.f32 %v3861, %v3961
      %v3963 = vpop.f32.mrb[0].mxu0
      %v3964 = vpop.f32.mrb[0].mxu0
      %v3965 = vadd.f32 %v3861, %v3964
      %v3966 = vpop.f32.mrb[0].mxu0
      %3967 = vmatprep.mubr.bf16.mxu0 0
      %3968 = vmatmul.mubr.bf16.gmra.mrb[0].mxu0 %v3835
      %v3969 = vpop.f32.mrb[0].mxu0
      %v3970 = vadd.f32 %v3861, %v3969
      %v3971 = vpop.f32.mrb[0].mxu0
      %v3972 = vpop.f32.mrb[0].mxu0
      %v3973 = vadd.f32 %v3861, %v3972
      %v3974 = vpop.f32.mrb[0].mxu0
      %3975 = vmatprep.mubr.bf16.mxu0 0
      %3976 = vmatmul.mubr.bf16.gmra.mrb[0].mxu0 %v3836
      %v3977 = vpop.f32.mrb[0].mxu0
      %v3978 = vadd.f32 %v3861, %v3977
      %v3979 = vpop.f32.mrb[0].mxu0
      %v3980 = vpop.f32.mrb[0].mxu0
      %v3981 = vadd.f32 %v3861, %v3980
      %v3982 = vpop.f32.mrb[0].mxu0
      %3983 = vmatprep.mubr.bf16.mxu0 0
      %3984 = vmatmul.mubr.bf16.gmra.mrb[0].mxu0 %v3837
      %v3985 = vpop.f32.mrb[0].mxu0
      %v3986 = vadd.f32 %v3861, %v3985
      %v3987 = vpop.f32.mrb[0].mxu0
      %v3988 = vpop.f32.mrb[0].mxu0
      %v3989 = vadd.f32 %v3861, %v3988
      %v3990 = vpop.f32.mrb[0].mxu0
      %3991 = vmatprep.mubr.bf16.mxu0 0
      %3992 = vmatmul.mubr.bf16.gmra.mrb[0].mxu0 %v3838
      %v3993 = vpop.f32.mrb[0].mxu0
      %v3994 = vadd.f32 %v3861, %v3993
      %v3995 = vpop.f32.mrb[0].mxu0
      %v3996 = vpop.f32.mrb[0].mxu0
      %v3997 = vadd.f32 %v3861, %v3996
      %v3998 = vpop.f32.mrb[0].mxu0
      %3999 = vmatprep.mubr.bf16.mxu0 0
      %4000 = vmatmul.mubr.bf16.gmra.mrb[0].mxu0 %v3839
      %v4001 = vpop.f32.mrb[0].mxu0
      %v4002 = vadd.f32 %v3861, %v4001
      %v4003 = vpop.f32.mrb[0].mxu0
      %v4004 = vpop.f32.mrb[0].mxu0
      %v4005 = vadd.f32 %v3861, %v4004
      %v4006 = vpop.f32.mrb[0].mxu0
      %4007 = vdwg.mxu0
      %v4008 = vadd.f32 %v3946, %v3282
      %v4009 = vadd.f32 %v3949, %v3283
      %v4010 = vadd.f32 %v3954, %v3284
      %v4011 = vadd.f32 %v3957, %v3285
      %v4012 = vadd.f32 %v3962, %v3286
      %v4013 = vadd.f32 %v3965, %v3287
      %v4014 = vadd.f32 %v3970, %v3288
      %v4015 = vadd.f32 %v3973, %v3289
      %v4016 = vadd.f32 %v3978, %v3290
      %v4017 = vadd.f32 %v3981, %v3291
      %v4018 = vadd.f32 %v3986, %v3292
      %v4019 = vadd.f32 %v3989, %v3293
      %v4020 = vadd.f32 %v3994, %v3294
      %v4021 = vadd.f32 %v3997, %v3295
      %v4022 = vadd.f32 %v4002, %v3296
      %v4023 = vadd.f32 %v4005, %v3297
      %4024 = vst.msk [vmem:[%s467] sm:$0xff] %vm485, %v4008
      %4025 = vst.msk [vmem:[%s467 + $0x8] sm:$0xff] %vm485, %v4009
      %4026 = vst.msk [vmem:[%s467 + $0x10] sm:$0xff] %vm485, %v4010
      %4027 = vst.msk [vmem:[%s467 + $0x18] sm:$0xff] %vm485, %v4011
      %4028 = vst.msk [vmem:[%s467 + $0x20] sm:$0xff] %vm485, %v4012
      %4029 = vst.msk [vmem:[%s467 + $0x28] sm:$0xff] %vm485, %v4013
      %4030 = vst.msk [vmem:[%s467 + $0x30] sm:$0xff] %vm485, %v4014
      %4031 = vst.msk [vmem:[%s467 + $0x38] sm:$0xff] %vm485, %v4015
      %4032 = vst.msk [vmem:[%s467 + $0x40] sm:$0xff] %vm485, %v4016
      %4033 = vst.msk [vmem:[%s467 + $0x48] sm:$0xff] %vm485, %v4017
      %4034 = vst.msk [vmem:[%s467 + $0x50] sm:$0xff] %vm485, %v4018
      %4035 = vst.msk [vmem:[%s467 + $0x58] sm:$0xff] %vm485, %v4019
      %4036 = vst.msk [vmem:[%s467 + $0x60] sm:$0xff] %vm485, %v4020
      %4037 = vst.msk [vmem:[%s467 + $0x68] sm:$0xff] %vm485, %v4021
      %4038 = vst.msk [vmem:[%s467 + $0x70] sm:$0xff] %vm485, %v4022
      %4039 = vst.msk [vmem:[%s467 + $0x78] sm:$0xff] %vm485, %v4023
      %p4040 = scmp.lt.s32.totalorder %s25, 1
      %s4041 = scalar_select %p4040, %s25, 1
      %s4042 = smul.addr %s4041, 16
      %s4043 = smul.addr %s4042, 8
      %s4044 = scalar_lea.vmem %s14, %s4043
      // Predicated region
      $region77: #{tpu_custom_call.1} parent=75 // pred_check
        %p4045 = pneg %p342
      $region78: #{tpu_custom_call.1} parent=75 // pred_check_branch
        %4047 = sbr.rel (%p4045) target = $region80
      $region79: #{tpu_custom_call.1} parent=75 // pred_region
        _
      $region80: #{tpu_custom_call.1} parent=75 // pred_fallthru
        _
    $region76: #{tpu_custom_call.1} parent=5 // pred_fallthru
      _
    %p4048 = scmp.le.s32.totalorder 2, %s20
    // Predicated region
    $region81: #{tpu_custom_call.1} parent=5 // pred_check
      %p4049 = pneg %p4048
    $region82: #{tpu_custom_call.1} parent=5 // pred_check_branch
      %4051 = sbr.rel (%p4049) target = $region84
    $region83: #{tpu_custom_call.1} parent=5 // pred_region
      %s4052 = ssub.s32 %s20, 2
      // Predicated region
      $region85: #{tpu_custom_call.1} parent=83 // pred_check
        %p4053 = pneg %p348
      $region86: #{tpu_custom_call.1} parent=83 // pred_check_branch
        %4055 = sbr.rel (%p4053) target = $region88
      $region87: #{tpu_custom_call.1} parent=83 // pred_region
        %p4056 = scmp.lt.s32.totalorder %s26, 1
        %s4057 = scalar_select %p4056, %s26, 1
        %s4058 = smul.addr %s4057, 16
        %s4059 = smul.addr %s4058, 8
        %s4060 = scalar_lea.vmem %s14, %s4059
      $region88: #{tpu_custom_call.1} parent=83 // pred_fallthru
        _
    $region84: #{tpu_custom_call.1} parent=5 // pred_fallthru
      _
  $region6: #{tpu_custom_call.1} parent=0 // loop_footer
    %s24 = sadd.s32 1, %s20
  $region7: #{tpu_custom_call.1} parent=0 // loop_footer_branch
    %19 = sbr.rel target = $region3
  $region8: #{tpu_custom_call.1} parent=0 // loop_exit
    _

// kernel: tpu_custom_call.1
$region0: #{tpu_custom_call.1}
  #allocation0 [shape = 'u32[]', space=smem, size = 0x4, offset = 0x4, fixed_abs, tag = 'smem constant byte address 0x4 - core index']
  #allocation1 [shape = 'u32[144,128]{1,0:T(1,128)}', space=vmem, size = 0x12000, scoped, tag = 'internal scratch']
  #allocation2 [shape = 'bf16[4,128,8]{2,1,0:T(16,128)(2,1)}', space=vmem, size = 0x20000, scoped, tag = 'scratch operand']
  #allocation3 [shape = 'bf16[4,128,8]{2,1,0:T(16,128)(2,1)}', space=vmem, size = 0x20000, scoped, tag = 'scratch operand']
  #allocation4 [shape = 'bf16[4,128,8]{2,1,0:T(16,128)(2,1)}', space=vmem, size = 0x20000, scoped, tag = 'scratch operand']
  #allocation5 [shape = 'bf16[128,32]{1,0:T(16,128)(2,1)}', space=vmem, size = 0x8000, scoped, tag = 'scratch operand']
  %s0 = inlined_call_operand.vmem [shape: f32[2,128,32], index: 0, kind: input, shape index: {}]
  %s1 = inlined_call_operand.vmem [shape: f32[128,128], index: 1, kind: input, shape index: {}]
  %s2 = inlined_call_operand.vmem [shape: f32[1,32], index: 2, kind: input, shape index: {}]
  %s3 = inlined_call_operand.vmem [shape: f32[1,32], index: 3, kind: input, shape index: {}]
  %s4 = inlined_call_operand.vmem [shape: bf16[32,96], index: 4, kind: input, shape index: {}]
  %s5 = inlined_call_operand.vmem [shape: f32[1,96], index: 5, kind: input, shape index: {}]
  %s6 = inlined_call_operand.vmem [shape: bf16[32,32], index: 6, kind: input, shape index: {}]
  %s7 = inlined_call_operand.vmem [shape: f32[1,32], index: 7, kind: input, shape index: {}]
  %s8 = inlined_call_operand.vmem [shape: f32[1,32], index: 8, kind: input, shape index: {}]
  %s9 = inlined_call_operand.vmem [shape: f32[1,32], index: 9, kind: input, shape index: {}]
  %s10 = inlined_call_operand.vmem [shape: bf16[32,128], index: 10, kind: input, shape index: {}]
  %s11 = inlined_call_operand.vmem [shape: f32[1,128], index: 11, kind: input, shape index: {}]
  %s12 = inlined_call_operand.vmem [shape: bf16[128,32], index: 12, kind: input, shape index: {}]
  %s13 = inlined_call_operand.vmem [shape: f32[1,32], index: 13, kind: input, shape index: {}]
  %s14 = inlined_call_operand.vmem [shape: f32[2,128,32], index: 14, kind: output, shape index: {}]
  %s15 = sld [smem:[#allocation0]]
  $region89: #{tpu_custom_call.1} parent=0
    _
  %s17 = ssub.s32 1, %s15
  %s18 = scalar_select 0, %s17, %s15
  loop: start=0, step=1, limit=4
  $region2: #{tpu_custom_call.1} parent=0 // loop_pre_header
    _
  $region3: #{tpu_custom_call.1} parent=0 // loop_header
    %s20 = sphi 0, %s24
    %p21 = scmp.ge.s32.totalorder %s20, 4
    %s30 = sphi 0, %s32
    %s33 = sphi 0, %s30
    %s34 = sphi 0, %s33
    %s50 = sphi 0, %s34
    %s54 = sphi 0, %s54
    %s56 = sphi 0, %s54
    %s57 = sphi 0, %s56
    %s71 = sphi 0, %s57
    %s75 = sphi 0, %s75
    %s77 = sphi 0, %s75
    %s78 = sphi 0, %s77
    %s92 = sphi 0, %s78
    %s96 = sphi 0, %s96
    %s98 = sphi 0, %s96
    %s99 = sphi 0, %s98
    %s113 = sphi 0, %s99
    %s117 = sphi 0, %s117
    %s119 = sphi 0, %s117
    %s120 = sphi 0, %s119
    %s134 = sphi 0, %s120
    %s138 = sphi 0, %s138
    %s140 = sphi 0, %s138
    %s141 = sphi 0, %s140
    %s155 = sphi 0, %s141
    %s159 = sphi 0, %s159
    %s161 = sphi 0, %s159
    %s162 = sphi 0, %s161
    %s176 = sphi 0, %s162
    %s180 = sphi 0, %s180
    %s182 = sphi 0, %s180
    %s183 = sphi 0, %s182
    %s197 = sphi 0, %s183
    %s201 = sphi 0, %s201
    %s203 = sphi 0, %s201
    %s204 = sphi 0, %s203
    %s218 = sphi 0, %s204
    %s222 = sphi 0, %s222
    %s224 = sphi 0, %s222
    %s225 = sphi 0, %s224
    %s239 = sphi 0, %s225
    %s243 = sphi 0, %s243
    %s245 = sphi 0, %s243
    %s246 = sphi 0, %s245
    %s260 = sphi 0, %s246
    %s264 = sphi 0, %s264
    %s266 = sphi 0, %s264
    %s267 = sphi 0, %s266
    %s281 = sphi 0, %s267
    %s285 = sphi 0, %s285
    %s287 = sphi 0, %s285
    %s288 = sphi 0, %s287
    %s302 = sphi 0, %s288
    %s306 = sphi 0, %s306
    %s308 = sphi 0, %s306
    %s309 = sphi 0, %s308
    %s323 = sphi 0, %s309
    %s329 = sphi 0, %s331
    %s332 = sphi 0, %s329
    %s333 = sphi 0, %s332
    %s349 = sphi 0, %s333
  $region4: #{tpu_custom_call.1} parent=0 // loop_header_branch
    %23 = sbr.rel (%p21) target = $region8
  $region5: #{tpu_custom_call.1} parent=0 // loop_body
    %s25 = ssub.s32 %s20, 1
    %s26 = ssub.s32 %s20, 2
    %s27 = sadd.s32 %s20, 1
    %s28 = ssub.s32 %s20, %s27
    %p29 = scmp.eq.s32.totalorder %s28, 0
    %s31 = sadd.s32 %s30, 1
    %s32 = scalar_select %p29, %s30, %s31
    %p35 = pneg %p29
    %p36 = scmp.eq.s32.totalorder %s20, 1
    %p37 = por %p35, %p36
    %p38 = scmp.ne.s32.totalorder %s30, %s33
    %p39 = scmp.eq.s32.totalorder %s20, 0
    %p40 = por %p38, %p39
    %p41 = scmp.ne.s32.totalorder %s30, %s33
    %p42 = scmp.eq.s32.totalorder %s25, 1
    %p43 = por %p41, %p42
    %p44 = scmp.ne.s32.totalorder %s33, %s34
    %p45 = scmp.eq.s32.totalorder %s25, 0
    %p46 = por %p44, %p45
    %p47 = scmp.ne.s32.totalorder %s33, %s34
    %p48 = scmp.eq.s32.totalorder %s26, 1
    %p49 = por %p47, %p48
    %p51 = scmp.ne.s32.totalorder %s34, %s50
    %p52 = scmp.eq.s32.totalorder %s26, 0
    %p53 = por %p51, %p52
    %s55 = sadd.s32 %s54, 1
    %p58 = scmp.eq.s32.totalorder %s20, 1
    %p59 = scmp.ne.s32.totalorder %s54, %s56
    %p60 = scmp.eq.s32.totalorder %s20, 0
    %p61 = por %p59, %p60
    %p62 = scmp.ne.s32.totalorder %s54, %s56
    %p63 = scmp.eq.s32.totalorder %s25, 1
    %p64 = por %p62, %p63
    %p65 = scmp.ne.s32.totalorder %s56, %s57
    %p66 = scmp.eq.s32.totalorder %s25, 0
    %p67 = por %p65, %p66
    %p68 = scmp.ne.s32.totalorder %s56, %s57
    %p69 = scmp.eq.s32.totalorder %s26, 1
    %p70 = por %p68, %p69
    %p72 = scmp.ne.s32.totalorder %s57, %s71
    %p73 = scmp.eq.s32.totalorder %s26, 0
    %p74 = por %p72, %p73
    %s76 = sadd.s32 %s75, 1
    %p79 = scmp.eq.s32.totalorder %s20, 1
    %p80 = scmp.ne.s32.totalorder %s75, %s77
    %p81 = scmp.eq.s32.totalorder %s20, 0
    %p82 = por %p80, %p81
    %p83 = scmp.ne.s32.totalorder %s75, %s77
    %p84 = scmp.eq.s32.totalorder %s25, 1
    %p85 = por %p83, %p84
    %p86 = scmp.ne.s32.totalorder %s77, %s78
    %p87 = scmp.eq.s32.totalorder %s25, 0
    %p88 = por %p86, %p87
    %p89 = scmp.ne.s32.totalorder %s77, %s78
    %p90 = scmp.eq.s32.totalorder %s26, 1
    %p91 = por %p89, %p90
    %p93 = scmp.ne.s32.totalorder %s78, %s92
    %p94 = scmp.eq.s32.totalorder %s26, 0
    %p95 = por %p93, %p94
    %s97 = sadd.s32 %s96, 1
    %p100 = scmp.eq.s32.totalorder %s20, 1
    %p101 = scmp.ne.s32.totalorder %s96, %s98
    %p102 = scmp.eq.s32.totalorder %s20, 0
    %p103 = por %p101, %p102
    %p104 = scmp.ne.s32.totalorder %s96, %s98
    %p105 = scmp.eq.s32.totalorder %s25, 1
    %p106 = por %p104, %p105
    %p107 = scmp.ne.s32.totalorder %s98, %s99
    %p108 = scmp.eq.s32.totalorder %s25, 0
    %p109 = por %p107, %p108
    %p110 = scmp.ne.s32.totalorder %s98, %s99
    %p111 = scmp.eq.s32.totalorder %s26, 1
    %p112 = por %p110, %p111
    %p114 = scmp.ne.s32.totalorder %s99, %s113
    %p115 = scmp.eq.s32.totalorder %s26, 0
    %p116 = por %p114, %p115
    %s118 = sadd.s32 %s117, 1
    %p121 = scmp.eq.s32.totalorder %s20, 1
    %p122 = scmp.ne.s32.totalorder %s117, %s119
    %p123 = scmp.eq.s32.totalorder %s20, 0
    %p124 = por %p122, %p123
    %p125 = scmp.ne.s32.totalorder %s117, %s119
    %p126 = scmp.eq.s32.totalorder %s25, 1
    %p127 = por %p125, %p126
    %p128 = scmp.ne.s32.totalorder %s119, %s120
    %p129 = scmp.eq.s32.totalorder %s25, 0
    %p130 = por %p128, %p129
    %p131 = scmp.ne.s32.totalorder %s119, %s120
    %p132 = scmp.eq.s32.totalorder %s26, 1
    %p133 = por %p131, %p132
    %p135 = scmp.ne.s32.totalorder %s120, %s134
    %p136 = scmp.eq.s32.totalorder %s26, 0
    %p137 = por %p135, %p136
    %s139 = sadd.s32 %s138, 1
    %p142 = scmp.eq.s32.totalorder %s20, 1
    %p143 = scmp.ne.s32.totalorder %s138, %s140
    %p144 = scmp.eq.s32.totalorder %s20, 0
    %p145 = por %p143, %p144
    %p146 = scmp.ne.s32.totalorder %s138, %s140
    %p147 = scmp.eq.s32.totalorder %s25, 1
    %p148 = por %p146, %p147
    %p149 = scmp.ne.s32.totalorder %s140, %s141
    %p150 = scmp.eq.s32.totalorder %s25, 0
    %p151 = por %p149, %p150
    %p152 = scmp.ne.s32.totalorder %s140, %s141
    %p153 = scmp.eq.s32.totalorder %s26, 1
    %p154 = por %p152, %p153
    %p156 = scmp.ne.s32.totalorder %s141, %s155
    %p157 = scmp.eq.s32.totalorder %s26, 0
    %p158 = por %p156, %p157
    %s160 = sadd.s32 %s159, 1
    %p163 = scmp.eq.s32.totalorder %s20, 1
    %p164 = scmp.ne.s32.totalorder %s159, %s161
    %p165 = scmp.eq.s32.totalorder %s20, 0
    %p166 = por %p164, %p165
    %p167 = scmp.ne.s32.totalorder %s159, %s161
    %p168 = scmp.eq.s32.totalorder %s25, 1
    %p169 = por %p167, %p168
    %p170 = scmp.ne.s32.totalorder %s161, %s162
    %p171 = scmp.eq.s32.totalorder %s25, 0
    %p172 = por %p170, %p171
    %p173 = scmp.ne.s32.totalorder %s161, %s162
    %p174 = scmp.eq.s32.totalorder %s26, 1
    %p175 = por %p173, %p174
    %p177 = scmp.ne.s32.totalorder %s162, %s176
    %p178 = scmp.eq.s32.totalorder %s26, 0
    %p179 = por %p177, %p178
    %s181 = sadd.s32 %s180, 1
    %p184 = scmp.eq.s32.totalorder %s20, 1
    %p185 = scmp.ne.s32.totalorder %s180, %s182
    %p186 = scmp.eq.s32.totalorder %s20, 0
    %p187 = por %p185, %p186
    %p188 = scmp.ne.s32.totalorder %s180, %s182
    %p189 = scmp.eq.s32.totalorder %s25, 1
    %p190 = por %p188, %p189
    %p191 = scmp.ne.s32.totalorder %s182, %s183
    %p192 = scmp.eq.s32.totalorder %s25, 0
    %p193 = por %p191, %p192
    %p194 = scmp.ne.s32.totalorder %s182, %s183
    %p195 = scmp.eq.s32.totalorder %s26, 1
    %p196 = por %p194, %p195
    %p198 = scmp.ne.s32.totalorder %s183, %s197
    %p199 = scmp.eq.s32.totalorder %s26, 0
    %p200 = por %p198, %p199
    %s202 = sadd.s32 %s201, 1
    %p205 = scmp.eq.s32.totalorder %s20, 1
    %p206 = scmp.ne.s32.totalorder %s201, %s203
    %p207 = scmp.eq.s32.totalorder %s20, 0
    %p208 = por %p206, %p207
    %p209 = scmp.ne.s32.totalorder %s201, %s203
    %p210 = scmp.eq.s32.totalorder %s25, 1
    %p211 = por %p209, %p210
    %p212 = scmp.ne.s32.totalorder %s203, %s204
    %p213 = scmp.eq.s32.totalorder %s25, 0
    %p214 = por %p212, %p213
    %p215 = scmp.ne.s32.totalorder %s203, %s204
    %p216 = scmp.eq.s32.totalorder %s26, 1
    %p217 = por %p215, %p216
    %p219 = scmp.ne.s32.totalorder %s204, %s218
    %p220 = scmp.eq.s32.totalorder %s26, 0
    %p221 = por %p219, %p220
    %s223 = sadd.s32 %s222, 1
    %p226 = scmp.eq.s32.totalorder %s20, 1
    %p227 = scmp.ne.s32.totalorder %s222, %s224
    %p228 = scmp.eq.s32.totalorder %s20, 0
    %p229 = por %p227, %p228
    %p230 = scmp.ne.s32.totalorder %s222, %s224
    %p231 = scmp.eq.s32.totalorder %s25, 1
    %p232 = por %p230, %p231
    %p233 = scmp.ne.s32.totalorder %s224, %s225
    %p234 = scmp.eq.s32.totalorder %s25, 0
    %p235 = por %p233, %p234
    %p236 = scmp.ne.s32.totalorder %s224, %s225
    %p237 = scmp.eq.s32.totalorder %s26, 1
    %p238 = por %p236, %p237
    %p240 = scmp.ne.s32.totalorder %s225, %s239
    %p241 = scmp.eq.s32.totalorder %s26, 0
    %p242 = por %p240, %p241
    %s244 = sadd.s32 %s243, 1
    %p247 = scmp.eq.s32.totalorder %s20, 1
    %p248 = scmp.ne.s32.totalorder %s243, %s245
    %p249 = scmp.eq.s32.totalorder %s20, 0
    %p250 = por %p248, %p249
    %p251 = scmp.ne.s32.totalorder %s243, %s245
    %p252 = scmp.eq.s32.totalorder %s25, 1
    %p253 = por %p251, %p252
    %p254 = scmp.ne.s32.totalorder %s245, %s246
    %p255 = scmp.eq.s32.totalorder %s25, 0
    %p256 = por %p254, %p255
    %p257 = scmp.ne.s32.totalorder %s245, %s246
    %p258 = scmp.eq.s32.totalorder %s26, 1
    %p259 = por %p257, %p258
    %p261 = scmp.ne.s32.totalorder %s246, %s260
    %p262 = scmp.eq.s32.totalorder %s26, 0
    %p263 = por %p261, %p262
    %s265 = sadd.s32 %s264, 1
    %p268 = scmp.eq.s32.totalorder %s20, 1
    %p269 = scmp.ne.s32.totalorder %s264, %s266
    %p270 = scmp.eq.s32.totalorder %s20, 0
    %p271 = por %p269, %p270
    %p272 = scmp.ne.s32.totalorder %s264, %s266
    %p273 = scmp.eq.s32.totalorder %s25, 1
    %p274 = por %p272, %p273
    %p275 = scmp.ne.s32.totalorder %s266, %s267
    %p276 = scmp.eq.s32.totalorder %s25, 0
    %p277 = por %p275, %p276
    %p278 = scmp.ne.s32.totalorder %s266, %s267
    %p279 = scmp.eq.s32.totalorder %s26, 1
    %p280 = por %p278, %p279
    %p282 = scmp.ne.s32.totalorder %s267, %s281
    %p283 = scmp.eq.s32.totalorder %s26, 0
    %p284 = por %p282, %p283
    %s286 = sadd.s32 %s285, 1
    %p289 = scmp.eq.s32.totalorder %s20, 1
    %p290 = scmp.ne.s32.totalorder %s285, %s287
    %p291 = scmp.eq.s32.totalorder %s20, 0
    %p292 = por %p290, %p291
    %p293 = scmp.ne.s32.totalorder %s285, %s287
    %p294 = scmp.eq.s32.totalorder %s25, 1
    %p295 = por %p293, %p294
    %p296 = scmp.ne.s32.totalorder %s287, %s288
    %p297 = scmp.eq.s32.totalorder %s25, 0
    %p298 = por %p296, %p297
    %p299 = scmp.ne.s32.totalorder %s287, %s288
    %p300 = scmp.eq.s32.totalorder %s26, 1
    %p301 = por %p299, %p300
    %p303 = scmp.ne.s32.totalorder %s288, %s302
    %p304 = scmp.eq.s32.totalorder %s26, 0
    %p305 = por %p303, %p304
    %s307 = sadd.s32 %s306, 1
    %p310 = scmp.eq.s32.totalorder %s20, 1
    %p311 = scmp.ne.s32.totalorder %s306, %s308
    %p312 = scmp.eq.s32.totalorder %s20, 0
    %p313 = por %p311, %p312
    %p314 = scmp.ne.s32.totalorder %s306, %s308
    %p315 = scmp.eq.s32.totalorder %s25, 1
    %p316 = por %p314, %p315
    %p317 = scmp.ne.s32.totalorder %s308, %s309
    %p318 = scmp.eq.s32.totalorder %s25, 0
    %p319 = por %p317, %p318
    %p320 = scmp.ne.s32.totalorder %s308, %s309
    %p321 = scmp.eq.s32.totalorder %s26, 1
    %p322 = por %p320, %p321
    %p324 = scmp.ne.s32.totalorder %s309, %s323
    %p325 = scmp.eq.s32.totalorder %s26, 0
    %p326 = por %p324, %p325
    %s327 = ssub.s32 %s20, %s27
    %p328 = scmp.eq.s32.totalorder %s327, 0
    %s330 = sadd.s32 %s329, 1
    %s331 = scalar_select %p328, %s329, %s330
    %p334 = pneg %p328
    %p335 = scmp.eq.s32.totalorder %s20, 1
    %p336 = por %p334, %p335
    %p337 = scmp.ne.s32.totalorder %s329, %s332
    %p338 = scmp.eq.s32.totalorder %s20, 0
    %p339 = por %p337, %p338
    %p340 = scmp.ne.s32.totalorder %s329, %s332
    %p341 = scmp.eq.s32.totalorder %s25, 1
    %p342 = por %p340, %p341
    %p343 = scmp.ne.s32.totalorder %s332, %s333
    %p344 = scmp.eq.s32.totalorder %s25, 0
    %p345 = por %p343, %p344
    %p346 = scmp.ne.s32.totalorder %s332, %s333
    %p347 = scmp.eq.s32.totalorder %s26, 1
    %p348 = por %p346, %p347
    %p350 = scmp.ne.s32.totalorder %s333, %s349
    %p351 = scmp.eq.s32.totalorder %s26, 0
    %p352 = por %p350, %p351
    %p353 = scmp.le.s32.totalorder 1, %s20
    %p354 = scmp.lt.s32.totalorder %s20, 3
    %p355 = pnand %p353, %p354
    %p356 = pneg %p355
    // Predicated region
    $region9: #{tpu_custom_call.1} parent=5 // pred_check
      _
    $region10: #{tpu_custom_call.1} parent=5 // pred_check_branch
      %358 = sbr.rel (%p355) target = $region12
    $region11: #{tpu_custom_call.1} parent=5 // pred_region
      %s359 = ssub.s32 %s20, 1
      // Predicated region
      $region13: #{tpu_custom_call.1} parent=11 // pred_check
        %p360 = pneg %p67
      $region14: #{tpu_custom_call.1} parent=11 // pred_check_branch
        %362 = sbr.rel (%p360) target = $region16
      $region15: #{tpu_custom_call.1} parent=11 // pred_region
        _
      $region16: #{tpu_custom_call.1} parent=11 // pred_fallthru
        _
      // Predicated region
      $region17: #{tpu_custom_call.1} parent=11 // pred_check
        %p363 = pneg %p88
      $region18: #{tpu_custom_call.1} parent=11 // pred_check_branch
        %365 = sbr.rel (%p363) target = $region20
      $region19: #{tpu_custom_call.1} parent=11 // pred_region
        _
      $region20: #{tpu_custom_call.1} parent=11 // pred_fallthru
        _
      // Predicated region
      $region21: #{tpu_custom_call.1} parent=11 // pred_check
        %p366 = pneg %p109
      $region22: #{tpu_custom_call.1} parent=11 // pred_check_branch
        %368 = sbr.rel (%p366) target = $region24
      $region23: #{tpu_custom_call.1} parent=11 // pred_region
        _
      $region24: #{tpu_custom_call.1} parent=11 // pred_fallthru
        _
      // Predicated region
      $region25: #{tpu_custom_call.1} parent=11 // pred_check
        %p369 = pneg %p130
      $region26: #{tpu_custom_call.1} parent=11 // pred_check_branch
        %371 = sbr.rel (%p369) target = $region28
      $region27: #{tpu_custom_call.1} parent=11 // pred_region
        _
      $region28: #{tpu_custom_call.1} parent=11 // pred_fallthru
        _
      // Predicated region
      $region29: #{tpu_custom_call.1} parent=11 // pred_check
        %p372 = pneg %p151
      $region30: #{tpu_custom_call.1} parent=11 // pred_check_branch
        %374 = sbr.rel (%p372) target = $region32
      $region31: #{tpu_custom_call.1} parent=11 // pred_region
        _
      $region32: #{tpu_custom_call.1} parent=11 // pred_fallthru
        _
      // Predicated region
      $region33: #{tpu_custom_call.1} parent=11 // pred_check
        %p375 = pneg %p172
      $region34: #{tpu_custom_call.1} parent=11 // pred_check_branch
        %377 = sbr.rel (%p375) target = $region36
      $region35: #{tpu_custom_call.1} parent=11 // pred_region
        _
      $region36: #{tpu_custom_call.1} parent=11 // pred_fallthru
        _
      // Predicated region
      $region37: #{tpu_custom_call.1} parent=11 // pred_check
        %p378 = pneg %p193
      $region38: #{tpu_custom_call.1} parent=11 // pred_check_branch
        %380 = sbr.rel (%p378) target = $region40
      $region39: #{tpu_custom_call.1} parent=11 // pred_region
        _
      $region40: #{tpu_custom_call.1} parent=11 // pred_fallthru
        _
      // Predicated region
      $region41: #{tpu_custom_call.1} parent=11 // pred_check
        %p381 = pneg %p214
      $region42: #{tpu_custom_call.1} parent=11 // pred_check_branch
        %383 = sbr.rel (%p381) target = $region44
      $region43: #{tpu_custom_call.1} parent=11 // pred_region
        _
      $region44: #{tpu_custom_call.1} parent=11 // pred_fallthru
        _
      // Predicated region
      $region45: #{tpu_custom_call.1} parent=11 // pred_check
        %p384 = pneg %p235
      $region46: #{tpu_custom_call.1} parent=11 // pred_check_branch
        %386 = sbr.rel (%p384) target = $region48
      $region47: #{tpu_custom_call.1} parent=11 // pred_region
        _
      $region48: #{tpu_custom_call.1} parent=11 // pred_fallthru
        _
      // Predicated region
      $region49: #{tpu_custom_call.1} parent=11 // pred_check
        %p387 = pneg %p256
      $region50: #{tpu_custom_call.1} parent=11 // pred_check_branch
        %389 = sbr.rel (%p387) target = $region52
      $region51: #{tpu_custom_call.1} parent=11 // pred_region
        _
      $region52: #{tpu_custom_call.1} parent=11 // pred_fallthru
        _
      // Predicated region
      $region53: #{tpu_custom_call.1} parent=11 // pred_check
        %p390 = pneg %p277
      $region54: #{tpu_custom_call.1} parent=11 // pred_check_branch
        %392 = sbr.rel (%p390) target = $region56
      $region55: #{tpu_custom_call.1} parent=11 // pred_region
        _
      $region56: #{tpu_custom_call.1} parent=11 // pred_fallthru
        _
      // Predicated region
      $region57: #{tpu_custom_call.1} parent=11 // pred_check
        %p393 = pneg %p298
      $region58: #{tpu_custom_call.1} parent=11 // pred_check_branch
        %395 = sbr.rel (%p393) target = $region60
      $region59: #{tpu_custom_call.1} parent=11 // pred_region
        _
      $region60: #{tpu_custom_call.1} parent=11 // pred_fallthru
        _
      // Predicated region
      $region61: #{tpu_custom_call.1} parent=11 // pred_check
        %p396 = pneg %p319
      $region62: #{tpu_custom_call.1} parent=11 // pred_check_branch
        %398 = sbr.rel (%p396) target = $region64
      $region63: #{tpu_custom_call.1} parent=11 // pred_region
        _
      $region64: #{tpu_custom_call.1} parent=11 // pred_fallthru
        _
    $region12: #{tpu_custom_call.1} parent=5 // pred_fallthru
      _
    %p399 = scmp.lt.s32.totalorder %s20, 2
    // Predicated region
    $region65: #{tpu_custom_call.1} parent=5 // pred_check
      %p400 = pneg %p399
    $region66: #{tpu_custom_call.1} parent=5 // pred_check_branch
      %402 = sbr.rel (%p400) target = $region68
    $region67: #{tpu_custom_call.1} parent=5 // pred_region
      // Predicated region
      $region69: #{tpu_custom_call.1} parent=67 // pred_check
        %p403 = pneg %p40
      $region70: #{tpu_custom_call.1} parent=67 // pred_check_branch
        %405 = sbr.rel (%p403) target = $region72
      $region71: #{tpu_custom_call.1} parent=67 // pred_region
        %p406 = scmp.lt.s32.totalorder %s20, 1
        %s407 = scalar_select %p406, %s20, 1
        %s408 = smul.addr %s407, 16
        %s409 = smul.addr %s408, 8
        %s410 = scalar_lea.vmem %s0, %s409
      $region72: #{tpu_custom_call.1} parent=67 // pred_fallthru
        _
    $region68: #{tpu_custom_call.1} parent=5 // pred_fallthru
      _
    %p411 = scmp.le.s32.totalorder 1, %s20
    %p412 = scmp.lt.s32.totalorder %s20, 3
    %p413 = pnand %p411, %p412
    %p414 = pneg %p413
    // Predicated region
    $region73: #{tpu_custom_call.1} parent=5 // pred_check
      _
    $region74: #{tpu_custom_call.1} parent=5 // pred_check_branch
      %416 = sbr.rel (%p413) target = $region76
    $region75: #{tpu_custom_call.1} parent=5 // pred_region
      %s417 = ssub.s32 %s20, 1
      %p418 = scmp.lt.s32.totalorder %s25, 1
      %s419 = scalar_select %p418, %s25, 1
      %s420 = smul.addr %s419, 16
      %s421 = smul.addr %s420, 8
      %s422 = scalar_lea.vmem %s0, %s421
      %p423 = pneg %p46
      %p424 = pneg %p43
      %p425 = pneg %p67
      %p426 = pneg %p64
      %p427 = pneg %p88
      %p428 = pneg %p85
      %p429 = pneg %p109
      %p430 = pneg %p106
      %p431 = pneg %p130
      %p432 = pneg %p127
      %p433 = pneg %p151
      %p434 = pneg %p148
      %p435 = pneg %p172
      %p436 = pneg %p169
      %p437 = pneg %p193
      %p438 = pneg %p190
      %p439 = pneg %p214
      %p440 = pneg %p211
      %p441 = pneg %p235
      %p442 = pneg %p232
      %p443 = pneg %p256
      %p444 = pneg %p253
      %p445 = pneg %p277
      %p446 = pneg %p274
      %p447 = pneg %p298
      %p448 = pneg %p295
      %p449 = pneg %p319
      %p450 = pneg %p316
      %p451 = pneg %p345
      %p452 = pneg %p342
      %p453 = scmp.lt.s32.totalorder %s25, 1
      %s454 = scalar_select %p453, %s25, 1
      %s455 = smul.addr %s454, 16
      %s456 = smul.addr %s455, 8
      %s457 = scalar_lea.vmem %s14, %s456
      %p458 = scmp.lt.s32.totalorder %s25, 1
      %s459 = scalar_select %p458, %s25, 1
      %s460 = smul.addr %s459, 16
      %s461 = smul.addr %s460, 8
      %s462 = scalar_lea.vmem %s0, %s461
      %p463 = scmp.lt.s32.totalorder %s25, 1
      %s464 = scalar_select %p463, %s25, 1
      %s465 = smul.addr %s464, 16
      %s466 = smul.addr %s465, 8
      %s467 = scalar_lea.vmem %s14, %s466
      %v469 = vld [vmem:[%s462] sm:$0xff]
      %v470 = vld [vmem:[%s462 + $0x8] sm:$0xff]
      %v471 = vld [vmem:[%s462 + $0x10] sm:$0xff]
      %v472 = vld [vmem:[%s462 + $0x18] sm:$0xff]
      %v473 = vld [vmem:[%s462 + $0x20] sm:$0xff]
      %v474 = vld [vmem:[%s462 + $0x28] sm:$0xff]
      %v475 = vld [vmem:[%s462 + $0x30] sm:$0xff]
      %v476 = vld [vmem:[%s462 + $0x38] sm:$0xff]
      %v477 = vld [vmem:[%s462 + $0x40] sm:$0xff]
      %v478 = vld [vmem:[%s462 + $0x48] sm:$0xff]
      %v479 = vld [vmem:[%s462 + $0x50] sm:$0xff]
      %v480 = vld [vmem:[%s462 + $0x58] sm:$0xff]
      %v481 = vld [vmem:[%s462 + $0x60] sm:$0xff]
      %v482 = vld [vmem:[%s462 + $0x68] sm:$0xff]
      %v483 = vld [vmem:[%s462 + $0x70] sm:$0xff]
      %v484 = vld [vmem:[%s462 + $0x78] sm:$0xff]
      %vm485 = vcmask 261120
      %v486 = vsel %vm485, %v469, 0.0
      %487 = vadd.xlane.f32.xlu0 %v486
      %v488 = vpop.xlane.xlu0 %487
      %v489 = vsel %vm485, %v470, 0.0
      %490 = vadd.xlane.f32.xlu0 %v489
      %v491 = vpop.xlane.xlu0 %490
      %v492 = vsel %vm485, %v471, 0.0
      %493 = vadd.xlane.f32.xlu0 %v492
      %v494 = vpop.xlane.xlu0 %493
      %v495 = vsel %vm485, %v472, 0.0
      %496 = vadd.xlane.f32.xlu0 %v495
      %v497 = vpop.xlane.xlu0 %496
      %v498 = vsel %vm485, %v473, 0.0
      %499 = vadd.xlane.f32.xlu0 %v498
      %v500 = vpop.xlane.xlu0 %499
      %v501 = vsel %vm485, %v474, 0.0
      %502 = vadd.xlane.f32.xlu0 %v501
      %v503 = vpop.xlane.xlu0 %502
      %v504 = vsel %vm485, %v475, 0.0
      %505 = vadd.xlane.f32.xlu0 %v504
      %v506 = vpop.xlane.xlu0 %505
      %v507 = vsel %vm485, %v476, 0.0
      %508 = vadd.xlane.f32.xlu0 %v507
      %v509 = vpop.xlane.xlu0 %508
      %v510 = vsel %vm485, %v477, 0.0
      %511 = vadd.xlane.f32.xlu0 %v510
      %v512 = vpop.xlane.xlu0 %511
      %v513 = vsel %vm485, %v478, 0.0
      %514 = vadd.xlane.f32.xlu0 %v513
      %v515 = vpop.xlane.xlu0 %514
      %v516 = vsel %vm485, %v479, 0.0
      %517 = vadd.xlane.f32.xlu0 %v516
      %v518 = vpop.xlane.xlu0 %517
      %v519 = vsel %vm485, %v480, 0.0
      %520 = vadd.xlane.f32.xlu0 %v519
      %v521 = vpop.xlane.xlu0 %520
      %v522 = vsel %vm485, %v481, 0.0
      %523 = vadd.xlane.f32.xlu0 %v522
      %v524 = vpop.xlane.xlu0 %523
      %v525 = vsel %vm485, %v482, 0.0
      %526 = vadd.xlane.f32.xlu0 %v525
      %v527 = vpop.xlane.xlu0 %526
      %v528 = vsel %vm485, %v483, 0.0
      %529 = vadd.xlane.f32.xlu0 %v528
      %v530 = vpop.xlane.xlu0 %529
      %v531 = vsel %vm485, %v484, 0.0
      %532 = vadd.xlane.f32.xlu0 %v531
      %v533 = vpop.xlane.xlu0 %532
      %v534 = vrcp.pop 32.0
      %v535 = vmul.f32 %v488, %v534
      %v536 = vmul.f32 %v491, %v534
      %v537 = vmul.f32 %v494, %v534
      %v538 = vmul.f32 %v497, %v534
      %v539 = vmul.f32 %v500, %v534
      %v540 = vmul.f32 %v503, %v534
      %v541 = vmul.f32 %v506, %v534
      %v542 = vmul.f32 %v509, %v534
      %v543 = vmul.f32 %v512, %v534
      %v544 = vmul.f32 %v515, %v534
      %v545 = vmul.f32 %v518, %v534
      %v546 = vmul.f32 %v521, %v534
      %v547 = vmul.f32 %v524, %v534
      %v548 = vmul.f32 %v527, %v534
      %v549 = vmul.f32 %v530, %v534
      %v550 = vmul.f32 %v533, %v534
      %v551 = vsub.f32 %v469, %v535
      %v552 = vsub.f32 %v470, %v536
      %v553 = vsub.f32 %v471, %v537
      %v554 = vsub.f32 %v472, %v538
      %v555 = vsub.f32 %v473, %v539
      %v556 = vsub.f32 %v474, %v540
      %v557 = vsub.f32 %v475, %v541
      %v558 = vsub.f32 %v476, %v542
      %v559 = vsub.f32 %v477, %v543
      %v560 = vsub.f32 %v478, %v544
      %v561 = vsub.f32 %v479, %v545
      %v562 = vsub.f32 %v480, %v546
      %v563 = vsub.f32 %v481, %v547
      %v564 = vsub.f32 %v482, %v548
      %v565 = vsub.f32 %v483, %v549
      %v566 = vsub.f32 %v484, %v550
      %v567 = vmul.f32 %v551, %v551
      %v568 = vmul.f32 %v552, %v552
      %v569 = vmul.f32 %v553, %v553
      %v570 = vmul.f32 %v554, %v554
      %v571 = vmul.f32 %v555, %v555
      %v572 = vmul.f32 %v556, %v556
      %v573 = vmul.f32 %v557, %v557
      %v574 = vmul.f32 %v558, %v558
      %v575 = vmul.f32 %v559, %v559
      %v576 = vmul.f32 %v560, %v560
      %v577 = vmul.f32 %v561, %v561
      %v578 = vmul.f32 %v562, %v562
      %v579 = vmul.f32 %v563, %v563
      %v580 = vmul.f32 %v564, %v564
      %v581 = vmul.f32 %v565, %v565
      %v582 = vmul.f32 %v566, %v566
      %v583 = vsel %vm485, %v567, 0.0
      %584 = vadd.xlane.f32.xlu0 %v583
      %v585 = vpop.xlane.xlu0 %584
      %v586 = vsel %vm485, %v568, 0.0
      %587 = vadd.xlane.f32.xlu0 %v586
      %v588 = vpop.xlane.xlu0 %587
      %v589 = vsel %vm485, %v569, 0.0
      %590 = vadd.xlane.f32.xlu0 %v589
      %v591 = vpop.xlane.xlu0 %590
      %v592 = vsel %vm485, %v570, 0.0
      %593 = vadd.xlane.f32.xlu0 %v592
      %v594 = vpop.xlane.xlu0 %593
      %v595 = vsel %vm485, %v571, 0.0
      %596 = vadd.xlane.f32.xlu0 %v595
      %v597 = vpop.xlane.xlu0 %596
      %v598 = vsel %vm485, %v572, 0.0
      %599 = vadd.xlane.f32.xlu0 %v598
      %v600 = vpop.xlane.xlu0 %599
      %v601 = vsel %vm485, %v573, 0.0
      %602 = vadd.xlane.f32.xlu0 %v601
      %v603 = vpop.xlane.xlu0 %602
      %v604 = vsel %vm485, %v574, 0.0
      %605 = vadd.xlane.f32.xlu0 %v604
      %v606 = vpop.xlane.xlu0 %605
      %v607 = vsel %vm485, %v575, 0.0
      %608 = vadd.xlane.f32.xlu0 %v607
      %v609 = vpop.xlane.xlu0 %608
      %v610 = vsel %vm485, %v576, 0.0
      %611 = vadd.xlane.f32.xlu0 %v610
      %v612 = vpop.xlane.xlu0 %611
      %v613 = vsel %vm485, %v577, 0.0
      %614 = vadd.xlane.f32.xlu0 %v613
      %v615 = vpop.xlane.xlu0 %614
      %v616 = vsel %vm485, %v578, 0.0
      %617 = vadd.xlane.f32.xlu0 %v616
      %v618 = vpop.xlane.xlu0 %617
      %v619 = vsel %vm485, %v579, 0.0
      %620 = vadd.xlane.f32.xlu0 %v619
      %v621 = vpop.xlane.xlu0 %620
      %v622 = vsel %vm485, %v580, 0.0
      %623 = vadd.xlane.f32.xlu0 %v622
      %v624 = vpop.xlane.xlu0 %623
      %v625 = vsel %vm485, %v581, 0.0
      %626 = vadd.xlane.f32.xlu0 %v625
      %v627 = vpop.xlane.xlu0 %626
      %v628 = vsel %vm485, %v582, 0.0
      %629 = vadd.xlane.f32.xlu0 %v628
      %v630 = vpop.xlane.xlu0 %629
      %v631 = vmul.f32 %v585, %v534
      %v632 = vmul.f32 %v588, %v534
      %v633 = vmul.f32 %v591, %v534
      %v634 = vmul.f32 %v594, %v534
      %v635 = vmul.f32 %v597, %v534
      %v636 = vmul.f32 %v600, %v534
      %v637 = vmul.f32 %v603, %v534
      %v638 = vmul.f32 %v606, %v534
      %v639 = vmul.f32 %v609, %v534
      %v640 = vmul.f32 %v612, %v534
      %v641 = vmul.f32 %v615, %v534
      %v642 = vmul.f32 %v618, %v534
      %v643 = vmul.f32 %v621, %v534
      %v644 = vmul.f32 %v624, %v534
      %v645 = vmul.f32 %v627, %v534
      %v646 = vmul.f32 %v630, %v534
      %v647 = vadd.f32 %v631, 1e-05
      %v648 = vadd.f32 %v632, 1e-05
      %v649 = vadd.f32 %v633, 1e-05
      %v650 = vadd.f32 %v634, 1e-05
      %v651 = vadd.f32 %v635, 1e-05
      %v652 = vadd.f32 %v636, 1e-05
      %v653 = vadd.f32 %v637, 1e-05
      %v654 = vadd.f32 %v638, 1e-05
      %v655 = vadd.f32 %v639, 1e-05
      %v656 = vadd.f32 %v640, 1e-05
      %v657 = vadd.f32 %v641, 1e-05
      %v658 = vadd.f32 %v642, 1e-05
      %v659 = vadd.f32 %v643, 1e-05
      %v660 = vadd.f32 %v644, 1e-05
      %v661 = vadd.f32 %v645, 1e-05
      %v662 = vadd.f32 %v646, 1e-05
      %v663 = vrsqrt.pop %v647
      %v664 = vrsqrt.pop %v648
      %v665 = vrsqrt.pop %v649
      %v666 = vrsqrt.pop %v650
      %v667 = vrsqrt.pop %v651
      %v668 = vrsqrt.pop %v652
      %v669 = vrsqrt.pop %v653
      %v670 = vrsqrt.pop %v654
      %v671 = vrsqrt.pop %v655
      %v672 = vrsqrt.pop %v656
      %v673 = vrsqrt.pop %v657
      %v674 = vrsqrt.pop %v658
      %v675 = vrsqrt.pop %v659
      %v676 = vrsqrt.pop %v660
      %v677 = vrsqrt.pop %v661
      %v678 = vrsqrt.pop %v662
      %v679 = vmul.f32 %v551, %v663
      %v680 = vmul.f32 %v552, %v664
      %v681 = vmul.f32 %v553, %v665
      %v682 = vmul.f32 %v554, %v666
      %v683 = vmul.f32 %v555, %v667
      %v684 = vmul.f32 %v556, %v668
      %v685 = vmul.f32 %v557, %v669
      %v686 = vmul.f32 %v558, %v670
      %v687 = vmul.f32 %v559, %v671
      %v688 = vmul.f32 %v560, %v672
      %v689 = vmul.f32 %v561, %v673
      %v690 = vmul.f32 %v562, %v674
      %v691 = vmul.f32 %v563, %v675
      %v692 = vmul.f32 %v564, %v676
      %v693 = vmul.f32 %v565, %v677
      %v694 = vmul.f32 %v566, %v678
      %v695 = vld [vmem:[%s2] sm:$0x1]
      %v697 = vlaneseq
      %v698 = vshrl.u32 %v697, 7
      %v699 = vsub.s32 0, %v698
      %v700 = vrot.slane %v695, %v699
      %v702 = vmul.f32 %v679, %v700
      %v703 = vmul.f32 %v680, %v700
      %v704 = vmul.f32 %v681, %v700
      %v705 = vmul.f32 %v682, %v700
      %v706 = vmul.f32 %v683, %v700
      %v707 = vmul.f32 %v684, %v700
      %v708 = vmul.f32 %v685, %v700
      %v709 = vmul.f32 %v686, %v700
      %v710 = vmul.f32 %v687, %v700
      %v711 = vmul.f32 %v688, %v700
      %v712 = vmul.f32 %v689, %v700
      %v713 = vmul.f32 %v690, %v700
      %v714 = vmul.f32 %v691, %v700
      %v715 = vmul.f32 %v692, %v700
      %v716 = vmul.f32 %v693, %v700
      %v717 = vmul.f32 %v694, %v700
      %v718 = vld [vmem:[%s3] sm:$0x1]
      %v720 = vlaneseq
      %v721 = vshrl.u32 %v720, 7
      %v722 = vsub.s32 0, %v721
      %v723 = vrot.slane %v718, %v722
      %v725 = vadd.f32 %v702, %v723
      %v726 = vadd.f32 %v703, %v723
      %v727 = vadd.f32 %v704, %v723
      %v728 = vadd.f32 %v705, %v723
      %v729 = vadd.f32 %v706, %v723
      %v730 = vadd.f32 %v707, %v723
      %v731 = vadd.f32 %v708, %v723
      %v732 = vadd.f32 %v709, %v723
      %v733 = vadd.f32 %v710, %v723
      %v734 = vadd.f32 %v711, %v723
      %v735 = vadd.f32 %v712, %v723
      %v736 = vadd.f32 %v713, %v723
      %v737 = vadd.f32 %v714, %v723
      %v738 = vadd.f32 %v715, %v723
      %v739 = vadd.f32 %v716, %v723
      %v740 = vadd.f32 %v717, %v723
      %v741 = vpack.c.bf16 %v726, %v725
      %v742 = vpack.c.bf16 %v728, %v727
      %v743 = vpack.c.bf16 %v730, %v729
      %v744 = vpack.c.bf16 %v732, %v731
      %v745 = vpack.c.bf16 %v734, %v733
      %v746 = vpack.c.bf16 %v736, %v735
      %v747 = vpack.c.bf16 %v738, %v737
      %v748 = vpack.c.bf16 %v740, %v739
      %v749 = vld [vmem:[%s4] sm:$0xf]
      %v750 = vld [vmem:[%s4 + $0x4] sm:$0xf]
      %v751 = vld [vmem:[%s4 + $0x8] sm:$0xf]
      %v752 = vld [vmem:[%s4 + $0xc] sm:$0xf]
      %v753 = vld [vmem:[%s5] sm:$0x1]
      %v755 = vlaneseq
      %v756 = vshrl.u32 %v755, 7
      %v757 = vsub.s32 0, %v756
      %v758 = vrot.slane %v753, %v757
      %v764 = vunpack.c.l.b16 %v749
      %v765 = vunpack.c.l.b16 %v750
      %v766 = vunpack.c.l.b16 %v751
      %v767 = vunpack.c.l.b16 %v752
      %v768 = vpack.c.b16 %v765, %v764
      %v769 = vpack.c.b16 %v767, %v766
      %v773 = vsel %vm485, %v741, 0
      %v776 = vsel %vm485, %v742, 0
      %v779 = vsel %vm485, %v743, 0
      %v782 = vsel %vm485, %v744, 0
      %v785 = vsel %vm485, %v745, 0
      %v788 = vsel %vm485, %v746, 0
      %v791 = vsel %vm485, %v747, 0
      %v794 = vsel %vm485, %v748, 0
      %796 = vmatprep.subr.bf16.mxu0 0
      %797 = vmatpush1.bf16.msra.mxu0 %v768
      %798 = vmatprep.subr.bf16.mxu0 0
      %799 = vmatpush1.bf16.msra.mxu0 %v769
      %800 = vmatprep.subr.bf16.mxu0 0
      %801 = vmatpush1.bf16.msra.mxu0 0
      %802 = vmatprep.subr.bf16.mxu0 0
      %803 = vmatpush1.bf16.msra.mxu0 0
      %804 = vmatprep.subr.bf16.mxu0 0
      %805 = vmatpush1.bf16.msra.mxu0 0
      %806 = vmatprep.subr.bf16.mxu0 0
      %807 = vmatpush1.bf16.msra.mxu0 0
      %808 = vmatprep.subr.bf16.mxu0 0
      %809 = vmatpush1.bf16.msra.mxu0 0
      %810 = vmatprep.subr.bf16.mxu0 0
      %811 = vmatpush1.bf16.msra.mxu0 0
      %812 = vmatprep.subr.bf16.mxu0 0
      %813 = vmatpush1.bf16.msra.mxu0 0
      %814 = vmatprep.subr.bf16.mxu0 0
      %815 = vmatpush1.bf16.msra.mxu0 0
      %816 = vmatprep.subr.bf16.mxu0 0
      %817 = vmatpush1.bf16.msra.mxu0 0
      %818 = vmatprep.subr.bf16.mxu0 0
      %819 = vmatpush1.bf16.msra.mxu0 0
      %820 = vmatprep.subr.bf16.mxu0 0
      %821 = vmatpush1.bf16.msra.mxu0 0
      %822 = vmatprep.subr.bf16.mxu0 0
      %823 = vmatpush1.bf16.msra.mxu0 0
      %824 = vmatprep.subr.bf16.mxu0 0
      %825 = vmatpush1.bf16.msra.mxu0 0
      %826 = vmatprep.subr.bf16.mxu0 0
      %827 = vmatpush1.bf16.msra.mxu0 0
      %828 = vmatprep.mubr.bf16.mxu0 0
      %829 = vmatmul.mubr.bf16.gmra.mrb[0].mxu0 %v773
      %v830 = vpop.f32.mrb[0].mxu0
      %v831 = vadd.f32 %v758, %v830
      %v832 = vpop.f32.mrb[0].mxu0
      %v833 = vpop.f32.mrb[0].mxu0
      %v834 = vadd.f32 %v758, %v833
      %v835 = vpop.f32.mrb[0].mxu0
      %836 = vmatprep.mubr.bf16.mxu0 0
      %837 = vmatmul.mubr.bf16.gmra.mrb[0].mxu0 %v776
      %v838 = vpop.f32.mrb[0].mxu0
      %v839 = vadd.f32 %v758, %v838
      %v840 = vpop.f32.mrb[0].mxu0
      %v841 = vpop.f32.mrb[0].mxu0
      %v842 = vadd.f32 %v758, %v841
      %v843 = vpop.f32.mrb[0].mxu0
      %844 = vmatprep.mubr.bf16.mxu0 0
      %845 = vmatmul.mubr.bf16.gmra.mrb[0].mxu0 %v779
      %v846 = vpop.f32.mrb[0].mxu0
      %v847 = vadd.f32 %v758, %v846
      %v848 = vpop.f32.mrb[0].mxu0
      %v849 = vpop.f32.mrb[0].mxu0
      %v850 = vadd.f32 %v758, %v849
      %v851 = vpop.f32.mrb[0].mxu0
      %852 = vmatprep.mubr.bf16.mxu0 0
      %853 = vmatmul.mubr.bf16.gmra.mrb[0].mxu0 %v782
      %v854 = vpop.f32.mrb[0].mxu0
      %v855 = vadd.f32 %v758, %v854
      %v856 = vpop.f32.mrb[0].mxu0
      %v857 = vpop.f32.mrb[0].mxu0
      %v858 = vadd.f32 %v758, %v857
      %v859 = vpop.f32.mrb[0].mxu0
      %860 = vmatprep.mubr.bf16.mxu0 0
      %861 = vmatmul.mubr.bf16.gmra.mrb[0].mxu0 %v785
      %v862 = vpop.f32.mrb[0].mxu0
      %v863 = vadd.f32 %v758, %v862
      %v864 = vpop.f32.mrb[0].mxu0
      %v865 = vpop.f32.mrb[0].mxu0
      %v866 = vadd.f32 %v758, %v865
      %v867 = vpop.f32.mrb[0].mxu0
      %868 = vmatprep.mubr.bf16.mxu0 0
      %869 = vmatmul.mubr.bf16.gmra.mrb[0].mxu0 %v788
      %v870 = vpop.f32.mrb[0].mxu0
      %v871 = vadd.f32 %v758, %v870
      %v872 = vpop.f32.mrb[0].mxu0
      %v873 = vpop.f32.mrb[0].mxu0
      %v874 = vadd.f32 %v758, %v873
      %v875 = vpop.f32.mrb[0].mxu0
      %876 = vmatprep.mubr.bf16.mxu0 0
      %877 = vmatmul.mubr.bf16.gmra.mrb[0].mxu0 %v791
      %v878 = vpop.f32.mrb[0].mxu0
      %v879 = vadd.f32 %v758, %v878
      %v880 = vpop.f32.mrb[0].mxu0
      %v881 = vpop.f32.mrb[0].mxu0
      %v882 = vadd.f32 %v758, %v881
      %v883 = vpop.f32.mrb[0].mxu0
      %884 = vmatprep.mubr.bf16.mxu0 0
      %885 = vmatmul.mubr.bf16.gmra.mrb[0].mxu0 %v794
      %v886 = vpop.f32.mrb[0].mxu0
      %v887 = vadd.f32 %v758, %v886
      %v888 = vpop.f32.mrb[0].mxu0
      %v889 = vpop.f32.mrb[0].mxu0
      %v890 = vadd.f32 %v758, %v889
      %v891 = vpop.f32.mrb[0].mxu0
      %892 = vdwg.mxu0
      %v893 = vpack.c.bf16 %v834, %v831
      %v894 = vpack.c.bf16 %v842, %v839
      %v895 = vpack.c.bf16 %v850, %v847
      %v896 = vpack.c.bf16 %v858, %v855
      %v897 = vpack.c.bf16 %v866, %v863
      %v898 = vpack.c.bf16 %v874, %v871
      %v899 = vpack.c.bf16 %v882, %v879
      %v900 = vpack.c.bf16 %v890, %v887
      %vm901 = vcmask 64512
      %902 = vst.msk [vmem:[#allocation2] sm:$0xff] %vm901, %v893
      %903 = vst.msk [vmem:[#allocation2 + $0x8] sm:$0xff] %vm901, %v894
      %904 = vst.msk [vmem:[#allocation2 + $0x10] sm:$0xff] %vm901, %v895
      %905 = vst.msk [vmem:[#allocation2 + $0x18] sm:$0xff] %vm901, %v896
      %906 = vst.msk [vmem:[#allocation2 + $0x20] sm:$0xff] %vm901, %v897
      %907 = vst.msk [vmem:[#allocation2 + $0x28] sm:$0xff] %vm901, %v898
      %908 = vst.msk [vmem:[#allocation2 + $0x30] sm:$0xff] %vm901, %v899
      %909 = vst.msk [vmem:[#allocation2 + $0x38] sm:$0xff] %vm901, %v900
      %918 = vrot.lane.b32.xlu0 %v893, 96
      %v919 = vpop.permute.xlu0 %918
      %920 = vrot.lane.b32.xlu0 %v894, 96
      %v921 = vpop.permute.xlu0 %920
      %922 = vrot.lane.b32.xlu0 %v895, 96
      %v923 = vpop.permute.xlu0 %922
      %924 = vrot.lane.b32.xlu0 %v896, 96
      %v925 = vpop.permute.xlu0 %924
      %926 = vrot.lane.b32.xlu0 %v897, 96
      %v927 = vpop.permute.xlu0 %926
      %928 = vrot.lane.b32.xlu0 %v898, 96
      %v929 = vpop.permute.xlu0 %928
      %930 = vrot.lane.b32.xlu0 %v899, 96
      %v931 = vpop.permute.xlu0 %930
      %932 = vrot.lane.b32.xlu0 %v900, 96
      %v933 = vpop.permute.xlu0 %932
      %942 = vst.msk [vmem:[#allocation3] sm:$0xff] %vm901, %v919
      %943 = vst.msk [vmem:[#allocation3 + $0x8] sm:$0xff] %vm901, %v921
      %944 = vst.msk [vmem:[#allocation3 + $0x10] sm:$0xff] %vm901, %v923
      %945 = vst.msk [vmem:[#allocation3 + $0x18] sm:$0xff] %vm901, %v925
      %946 = vst.msk [vmem:[#allocation3 + $0x20] sm:$0xff] %vm901, %v927
      %947 = vst.msk [vmem:[#allocation3 + $0x28] sm:$0xff] %vm901, %v929
      %948 = vst.msk [vmem:[#allocation3 + $0x30] sm:$0xff] %vm901, %v931
      %949 = vst.msk [vmem:[#allocation3 + $0x38] sm:$0xff] %vm901, %v933
      %950 = vrot.lane.b32.xlu0 %v893, 64
      %v951 = vpop.permute.xlu0 %950
      %952 = vrot.lane.b32.xlu0 %v894, 64
      %v953 = vpop.permute.xlu0 %952
      %954 = vrot.lane.b32.xlu0 %v895, 64
      %v955 = vpop.permute.xlu0 %954
      %956 = vrot.lane.b32.xlu0 %v896, 64
      %v957 = vpop.permute.xlu0 %956
      %958 = vrot.lane.b32.xlu0 %v897, 64
      %v959 = vpop.permute.xlu0 %958
      %960 = vrot.lane.b32.xlu0 %v898, 64
      %v961 = vpop.permute.xlu0 %960
      %962 = vrot.lane.b32.xlu0 %v899, 64
      %v963 = vpop.permute.xlu0 %962
      %964 = vrot.lane.b32.xlu0 %v900, 64
      %v965 = vpop.permute.xlu0 %964
      %974 = vst.msk [vmem:[#allocation4] sm:$0xff] %vm901, %v951
      %975 = vst.msk [vmem:[#allocation4 + $0x8] sm:$0xff] %vm901, %v953
      %976 = vst.msk [vmem:[#allocation4 + $0x10] sm:$0xff] %vm901, %v955
      %977 = vst.msk [vmem:[#allocation4 + $0x18] sm:$0xff] %vm901, %v957
      %978 = vst.msk [vmem:[#allocation4 + $0x20] sm:$0xff] %vm901, %v959
      %979 = vst.msk [vmem:[#allocation4 + $0x28] sm:$0xff] %vm901, %v961
      %980 = vst.msk [vmem:[#allocation4 + $0x30] sm:$0xff] %vm901, %v963
      %981 = vst.msk [vmem:[#allocation4 + $0x38] sm:$0xff] %vm901, %v965
      %982 = vrot.lane.b32.xlu0 %v893, 120
      %v983 = vpop.permute.xlu0 %982
      %984 = vrot.lane.b32.xlu0 %v894, 120
      %v985 = vpop.permute.xlu0 %984
      %986 = vrot.lane.b32.xlu0 %v895, 120
      %v987 = vpop.permute.xlu0 %986
      %988 = vrot.lane.b32.xlu0 %v896, 120
      %v989 = vpop.permute.xlu0 %988
      %990 = vrot.lane.b32.xlu0 %v897, 120
      %v991 = vpop.permute.xlu0 %990
      %992 = vrot.lane.b32.xlu0 %v898, 120
      %v993 = vpop.permute.xlu0 %992
      %994 = vrot.lane.b32.xlu0 %v899, 120
      %v995 = vpop.permute.xlu0 %994
      %996 = vrot.lane.b32.xlu0 %v900, 120
      %v997 = vpop.permute.xlu0 %996
      %s1006 = scalar_lea.vmem [#allocation2], 64
      %1007 = vst.msk [vmem:[%s1006] sm:$0xff] %vm901, %v983
      %1008 = vst.msk [vmem:[%s1006 + $0x8] sm:$0xff] %vm901, %v985
      %1009 = vst.msk [vmem:[%s1006 + $0x10] sm:$0xff] %vm901, %v987
      %1010 = vst.msk [vmem:[%s1006 + $0x18] sm:$0xff] %vm901, %v989
      %1011 = vst.msk [vmem:[%s1006 + $0x20] sm:$0xff] %vm901, %v991
      %1012 = vst.msk [vmem:[%s1006 + $0x28] sm:$0xff] %vm901, %v993
      %1013 = vst.msk [vmem:[%s1006 + $0x30] sm:$0xff] %vm901, %v995
      %1014 = vst.msk [vmem:[%s1006 + $0x38] sm:$0xff] %vm901, %v997
      %1015 = vrot.lane.b32.xlu0 %v893, 88
      %v1016 = vpop.permute.xlu0 %1015
      %1017 = vrot.lane.b32.xlu0 %v894, 88
      %v1018 = vpop.permute.xlu0 %1017
      %1019 = vrot.lane.b32.xlu0 %v895, 88
      %v1020 = vpop.permute.xlu0 %1019
      %1021 = vrot.lane.b32.xlu0 %v896, 88
      %v1022 = vpop.permute.xlu0 %1021
      %1023 = vrot.lane.b32.xlu0 %v897, 88
      %v1024 = vpop.permute.xlu0 %1023
      %1025 = vrot.lane.b32.xlu0 %v898, 88
      %v1026 = vpop.permute.xlu0 %1025
      %1027 = vrot.lane.b32.xlu0 %v899, 88
      %v1028 = vpop.permute.xlu0 %1027
      %1029 = vrot.lane.b32.xlu0 %v900, 88
      %v1030 = vpop.permute.xlu0 %1029
      %s1039 = scalar_lea.vmem [#allocation3], 64
      %1040 = vst.msk [vmem:[%s1039] sm:$0xff] %vm901, %v1016
      %1041 = vst.msk [vmem:[%s1039 + $0x8] sm:$0xff] %vm901, %v1018
      %1042 = vst.msk [vmem:[%s1039 + $0x10] sm:$0xff] %vm901, %v1020
      %1043 = vst.msk [vmem:[%s1039 + $0x18] sm:$0xff] %vm901, %v1022
      %1044 = vst.msk [vmem:[%s1039 + $0x20] sm:$0xff] %vm901, %v1024
      %1045 = vst.msk [vmem:[%s1039 + $0x28] sm:$0xff] %vm901, %v1026
      %1046 = vst.msk [vmem:[%s1039 + $0x30] sm:$0xff] %vm901, %v1028
      %1047 = vst.msk [vmem:[%s1039 + $0x38] sm:$0xff] %vm901, %v1030
      %1048 = vrot.lane.b32.xlu0 %v893, 56
      %v1049 = vpop.permute.xlu0 %1048
      %1050 = vrot.lane.b32.xlu0 %v894, 56
      %v1051 = vpop.permute.xlu0 %1050
      %1052 = vrot.lane.b32.xlu0 %v895, 56
      %v1053 = vpop.permute.xlu0 %1052
      %1054 = vrot.lane.b32.xlu0 %v896, 56
      %v1055 = vpop.permute.xlu0 %1054
      %1056 = vrot.lane.b32.xlu0 %v897, 56
      %v1057 = vpop.permute.xlu0 %1056
      %1058 = vrot.lane.b32.xlu0 %v898, 56
      %v1059 = vpop.permute.xlu0 %1058
      %1060 = vrot.lane.b32.xlu0 %v899, 56
      %v1061 = vpop.permute.xlu0 %1060
      %1062 = vrot.lane.b32.xlu0 %v900, 56
      %v1063 = vpop.permute.xlu0 %1062
      %s1072 = scalar_lea.vmem [#allocation4], 64
      %1073 = vst.msk [vmem:[%s1072] sm:$0xff] %vm901, %v1049
      %1074 = vst.msk [vmem:[%s1072 + $0x8] sm:$0xff] %vm901, %v1051
      %1075 = vst.msk [vmem:[%s1072 + $0x10] sm:$0xff] %vm901, %v1053
      %1076 = vst.msk [vmem:[%s1072 + $0x18] sm:$0xff] %vm901, %v1055
      %1077 = vst.msk [vmem:[%s1072 + $0x20] sm:$0xff] %vm901, %v1057
      %1078 = vst.msk [vmem:[%s1072 + $0x28] sm:$0xff] %vm901, %v1059
      %1079 = vst.msk [vmem:[%s1072 + $0x30] sm:$0xff] %vm901, %v1061
      %1080 = vst.msk [vmem:[%s1072 + $0x38] sm:$0xff] %vm901, %v1063
      %1081 = vrot.lane.b32.xlu0 %v893, 112
      %v1082 = vpop.permute.xlu0 %1081
      %1083 = vrot.lane.b32.xlu0 %v894, 112
      %v1084 = vpop.permute.xlu0 %1083
      %1085 = vrot.lane.b32.xlu0 %v895, 112
      %v1086 = vpop.permute.xlu0 %1085
      %1087 = vrot.lane.b32.xlu0 %v896, 112
      %v1088 = vpop.permute.xlu0 %1087
      %1089 = vrot.lane.b32.xlu0 %v897, 112
      %v1090 = vpop.permute.xlu0 %1089
      %1091 = vrot.lane.b32.xlu0 %v898, 112
      %v1092 = vpop.permute.xlu0 %1091
      %1093 = vrot.lane.b32.xlu0 %v899, 112
      %v1094 = vpop.permute.xlu0 %1093
      %1095 = vrot.lane.b32.xlu0 %v900, 112
      %v1096 = vpop.permute.xlu0 %1095
      %s1105 = scalar_lea.vmem [#allocation2], 128
      %1106 = vst.msk [vmem:[%s1105] sm:$0xff] %vm901, %v1082
      %1107 = vst.msk [vmem:[%s1105 + $0x8] sm:$0xff] %vm901, %v1084
      %1108 = vst.msk [vmem:[%s1105 + $0x10] sm:$0xff] %vm901, %v1086
      %1109 = vst.msk [vmem:[%s1105 + $0x18] sm:$0xff] %vm901, %v1088
      %1110 = vst.msk [vmem:[%s1105 + $0x20] sm:$0xff] %vm901, %v1090
      %1111 = vst.msk [vmem:[%s1105 + $0x28] sm:$0xff] %vm901, %v1092
      %1112 = vst.msk [vmem:[%s1105 + $0x30] sm:$0xff] %vm901, %v1094
      %1113 = vst.msk [vmem:[%s1105 + $0x38] sm:$0xff] %vm901, %v1096
      %1114 = vrot.lane.b32.xlu0 %v893, 80
      %v1115 = vpop.permute.xlu0 %1114
      %1116 = vrot.lane.b32.xlu0 %v894, 80
      %v1117 = vpop.permute.xlu0 %1116
      %1118 = vrot.lane.b32.xlu0 %v895, 80
      %v1119 = vpop.permute.xlu0 %1118
      %1120 = vrot.lane.b32.xlu0 %v896, 80
      %v1121 = vpop.permute.xlu0 %1120
      %1122 = vrot.lane.b32.xlu0 %v897, 80
      %v1123 = vpop.permute.xlu0 %1122
      %1124 = vrot.lane.b32.xlu0 %v898, 80
      %v1125 = vpop.permute.xlu0 %1124
      %1126 = vrot.lane.b32.xlu0 %v899, 80
      %v1127 = vpop.permute.xlu0 %1126
      %1128 = vrot.lane.b32.xlu0 %v900, 80
      %v1129 = vpop.permute.xlu0 %1128
      %s1138 = scalar_lea.vmem [#allocation3], 128
      %1139 = vst.msk [vmem:[%s1138] sm:$0xff] %vm901, %v1115
      %1140 = vst.msk [vmem:[%s1138 + $0x8] sm:$0xff] %vm901, %v1117
      %1141 = vst.msk [vmem:[%s1138 + $0x10] sm:$0xff] %vm901, %v1119
      %1142 = vst.msk [vmem:[%s1138 + $0x18] sm:$0xff] %vm901, %v1121
      %1143 = vst.msk [vmem:[%s1138 + $0x20] sm:$0xff] %vm901, %v1123
      %1144 = vst.msk [vmem:[%s1138 + $0x28] sm:$0xff] %vm901, %v1125
      %1145 = vst.msk [vmem:[%s1138 + $0x30] sm:$0xff] %vm901, %v1127
      %1146 = vst.msk [vmem:[%s1138 + $0x38] sm:$0xff] %vm901, %v1129
      %1147 = vrot.lane.b32.xlu0 %v893, 48
      %v1148 = vpop.permute.xlu0 %1147
      %1149 = vrot.lane.b32.xlu0 %v894, 48
      %v1150 = vpop.permute.xlu0 %1149
      %1151 = vrot.lane.b32.xlu0 %v895, 48
      %v1152 = vpop.permute.xlu0 %1151
      %1153 = vrot.lane.b32.xlu0 %v896, 48
      %v1154 = vpop.permute.xlu0 %1153
      %1155 = vrot.lane.b32.xlu0 %v897, 48
      %v1156 = vpop.permute.xlu0 %1155
      %1157 = vrot.lane.b32.xlu0 %v898, 48
      %v1158 = vpop.permute.xlu0 %1157
      %1159 = vrot.lane.b32.xlu0 %v899, 48
      %v1160 = vpop.permute.xlu0 %1159
      %1161 = vrot.lane.b32.xlu0 %v900, 48
      %v1162 = vpop.permute.xlu0 %1161
      %s1171 = scalar_lea.vmem [#allocation4], 128
      %1172 = vst.msk [vmem:[%s1171] sm:$0xff] %vm901, %v1148
      %1173 = vst.msk [vmem:[%s1171 + $0x8] sm:$0xff] %vm901, %v1150
      %1174 = vst.msk [vmem:[%s1171 + $0x10] sm:$0xff] %vm901, %v1152
      %1175 = vst.msk [vmem:[%s1171 + $0x18] sm:$0xff] %vm901, %v1154
      %1176 = vst.msk [vmem:[%s1171 + $0x20] sm:$0xff] %vm901, %v1156
      %1177 = vst.msk [vmem:[%s1171 + $0x28] sm:$0xff] %vm901, %v1158
      %1178 = vst.msk [vmem:[%s1171 + $0x30] sm:$0xff] %vm901, %v1160
      %1179 = vst.msk [vmem:[%s1171 + $0x38] sm:$0xff] %vm901, %v1162
      %1180 = vrot.lane.b32.xlu0 %v893, 104
      %v1181 = vpop.permute.xlu0 %1180
      %1182 = vrot.lane.b32.xlu0 %v894, 104
      %v1183 = vpop.permute.xlu0 %1182
      %1184 = vrot.lane.b32.xlu0 %v895, 104
      %v1185 = vpop.permute.xlu0 %1184
      %1186 = vrot.lane.b32.xlu0 %v896, 104
      %v1187 = vpop.permute.xlu0 %1186
      %1188 = vrot.lane.b32.xlu0 %v897, 104
      %v1189 = vpop.permute.xlu0 %1188
      %1190 = vrot.lane.b32.xlu0 %v898, 104
      %v1191 = vpop.permute.xlu0 %1190
      %1192 = vrot.lane.b32.xlu0 %v899, 104
      %v1193 = vpop.permute.xlu0 %1192
      %1194 = vrot.lane.b32.xlu0 %v900, 104
      %v1195 = vpop.permute.xlu0 %1194
      %s1204 = scalar_lea.vmem [#allocation2], 192
      %1205 = vst.msk [vmem:[%s1204] sm:$0xff] %vm901, %v1181
      %1206 = vst.msk [vmem:[%s1204 + $0x8] sm:$0xff] %vm901, %v1183
      %1207 = vst.msk [vmem:[%s1204 + $0x10] sm:$0xff] %vm901, %v1185
      %1208 = vst.msk [vmem:[%s1204 + $0x18] sm:$0xff] %vm901, %v1187
      %1209 = vst.msk [vmem:[%s1204 + $0x20] sm:$0xff] %vm901, %v1189
      %1210 = vst.msk [vmem:[%s1204 + $0x28] sm:$0xff] %vm901, %v1191
      %1211 = vst.msk [vmem:[%s1204 + $0x30] sm:$0xff] %vm901, %v1193
      %1212 = vst.msk [vmem:[%s1204 + $0x38] sm:$0xff] %vm901, %v1195
      %1213 = vrot.lane.b32.xlu0 %v893, 72
      %v1214 = vpop.permute.xlu0 %1213
      %1215 = vrot.lane.b32.xlu0 %v894, 72
      %v1216 = vpop.permute.xlu0 %1215
      %1217 = vrot.lane.b32.xlu0 %v895, 72
      %v1218 = vpop.permute.xlu0 %1217
      %1219 = vrot.lane.b32.xlu0 %v896, 72
      %v1220 = vpop.permute.xlu0 %1219
      %1221 = vrot.lane.b32.xlu0 %v897, 72
      %v1222 = vpop.permute.xlu0 %1221
      %1223 = vrot.lane.b32.xlu0 %v898, 72
      %v1224 = vpop.permute.xlu0 %1223
      %1225 = vrot.lane.b32.xlu0 %v899, 72
      %v1226 = vpop.permute.xlu0 %1225
      %1227 = vrot.lane.b32.xlu0 %v900, 72
      %v1228 = vpop.permute.xlu0 %1227
      %s1237 = scalar_lea.vmem [#allocation3], 192
      %1238 = vst.msk [vmem:[%s1237] sm:$0xff] %vm901, %v1214
      %1239 = vst.msk [vmem:[%s1237 + $0x8] sm:$0xff] %vm901, %v1216
      %1240 = vst.msk [vmem:[%s1237 + $0x10] sm:$0xff] %vm901, %v1218
      %1241 = vst.msk [vmem:[%s1237 + $0x18] sm:$0xff] %vm901, %v1220
      %1242 = vst.msk [vmem:[%s1237 + $0x20] sm:$0xff] %vm901, %v1222
      %1243 = vst.msk [vmem:[%s1237 + $0x28] sm:$0xff] %vm901, %v1224
      %1244 = vst.msk [vmem:[%s1237 + $0x30] sm:$0xff] %vm901, %v1226
      %1245 = vst.msk [vmem:[%s1237 + $0x38] sm:$0xff] %vm901, %v1228
      %1246 = vrot.lane.b32.xlu0 %v893, 40
      %v1247 = vpop.permute.xlu0 %1246
      %1248 = vrot.lane.b32.xlu0 %v894, 40
      %v1249 = vpop.permute.xlu0 %1248
      %1250 = vrot.lane.b32.xlu0 %v895, 40
      %v1251 = vpop.permute.xlu0 %1250
      %1252 = vrot.lane.b32.xlu0 %v896, 40
      %v1253 = vpop.permute.xlu0 %1252
      %1254 = vrot.lane.b32.xlu0 %v897, 40
      %v1255 = vpop.permute.xlu0 %1254
      %1256 = vrot.lane.b32.xlu0 %v898, 40
      %v1257 = vpop.permute.xlu0 %1256
      %1258 = vrot.lane.b32.xlu0 %v899, 40
      %v1259 = vpop.permute.xlu0 %1258
      %1260 = vrot.lane.b32.xlu0 %v900, 40
      %v1261 = vpop.permute.xlu0 %1260
      %s1270 = scalar_lea.vmem [#allocation4], 192
      %1271 = vst.msk [vmem:[%s1270] sm:$0xff] %vm901, %v1247
      %1272 = vst.msk [vmem:[%s1270 + $0x8] sm:$0xff] %vm901, %v1249
      %1273 = vst.msk [vmem:[%s1270 + $0x10] sm:$0xff] %vm901, %v1251
      %1274 = vst.msk [vmem:[%s1270 + $0x18] sm:$0xff] %vm901, %v1253
      %1275 = vst.msk [vmem:[%s1270 + $0x20] sm:$0xff] %vm901, %v1255
      %1276 = vst.msk [vmem:[%s1270 + $0x28] sm:$0xff] %vm901, %v1257
      %1277 = vst.msk [vmem:[%s1270 + $0x30] sm:$0xff] %vm901, %v1259
      %1278 = vst.msk [vmem:[%s1270 + $0x38] sm:$0xff] %vm901, %v1261
      %v1279 = vld [vmem:[#allocation2] sm:$0xff]
      %v1280 = vld [vmem:[#allocation2 + $0x8] sm:$0xff]
      %v1281 = vld [vmem:[#allocation2 + $0x10] sm:$0xff]
      %v1282 = vld [vmem:[#allocation2 + $0x18] sm:$0xff]
      %v1283 = vld [vmem:[#allocation2 + $0x20] sm:$0xff]
      %v1284 = vld [vmem:[#allocation2 + $0x28] sm:$0xff]
      %v1285 = vld [vmem:[#allocation2 + $0x30] sm:$0xff]
      %v1286 = vld [vmem:[#allocation2 + $0x38] sm:$0xff]
      %v1287 = vld [vmem:[#allocation2 + $0x40] sm:$0xff]
      %v1288 = vld [vmem:[#allocation2 + $0x48] sm:$0xff]
      %v1289 = vld [vmem:[#allocation2 + $0x50] sm:$0xff]
      %v1290 = vld [vmem:[#allocation2 + $0x58] sm:$0xff]
      %v1291 = vld [vmem:[#allocation2 + $0x60] sm:$0xff]
      %v1292 = vld [vmem:[#allocation2 + $0x68] sm:$0xff]
      %v1293 = vld [vmem:[#allocation2 + $0x70] sm:$0xff]
      %v1294 = vld [vmem:[#allocation2 + $0x78] sm:$0xff]
      %v1295 = vld [vmem:[#allocation2 + $0x80] sm:$0xff]
      %v1296 = vld [vmem:[#allocation2 + $0x88] sm:$0xff]
      %v1297 = vld [vmem:[#allocation2 + $0x90] sm:$0xff]
      %v1298 = vld [vmem:[#allocation2 + $0x98] sm:$0xff]
      %v1299 = vld [vmem:[#allocation2 + $0xa0] sm:$0xff]
      %v1300 = vld [vmem:[#allocation2 + $0xa8] sm:$0xff]
      %v1301 = vld [vmem:[#allocation2 + $0xb0] sm:$0xff]
      %v1302 = vld [vmem:[#allocation2 + $0xb8] sm:$0xff]
      %v1303 = vld [vmem:[#allocation2 + $0xc0] sm:$0xff]
      %v1304 = vld [vmem:[#allocation2 + $0xc8] sm:$0xff]
      %v1305 = vld [vmem:[#allocation2 + $0xd0] sm:$0xff]
      %v1306 = vld [vmem:[#allocation2 + $0xd8] sm:$0xff]
      %v1307 = vld [vmem:[#allocation2 + $0xe0] sm:$0xff]
      %v1308 = vld [vmem:[#allocation2 + $0xe8] sm:$0xff]
      %v1309 = vld [vmem:[#allocation2 + $0xf0] sm:$0xff]
      %v1310 = vld [vmem:[#allocation2 + $0xf8] sm:$0xff]
      %v1311 = vld [vmem:[#allocation3] sm:$0xff]
      %v1312 = vld [vmem:[#allocation3 + $0x8] sm:$0xff]
      %v1313 = vld [vmem:[#allocation3 + $0x10] sm:$0xff]
      %v1314 = vld [vmem:[#allocation3 + $0x18] sm:$0xff]
      %v1315 = vld [vmem:[#allocation3 + $0x20] sm:$0xff]
      %v1316 = vld [vmem:[#allocation3 + $0x28] sm:$0xff]
      %v1317 = vld [vmem:[#allocation3 + $0x30] sm:$0xff]
      %v1318 = vld [vmem:[#allocation3 + $0x38] sm:$0xff]
      %v1319 = vld [vmem:[#allocation3 + $0x40] sm:$0xff]
      %v1320 = vld [vmem:[#allocation3 + $0x48] sm:$0xff]
      %v1321 = vld [vmem:[#allocation3 + $0x50] sm:$0xff]
      %v1322 = vld [vmem:[#allocation3 + $0x58] sm:$0xff]
      %v1323 = vld [vmem:[#allocation3 + $0x60] sm:$0xff]
      %v1324 = vld [vmem:[#allocation3 + $0x68] sm:$0xff]
      %v1325 = vld [vmem:[#allocation3 + $0x70] sm:$0xff]
      %v1326 = vld [vmem:[#allocation3 + $0x78] sm:$0xff]
      %v1327 = vld [vmem:[#allocation3 + $0x80] sm:$0xff]
      %v1328 = vld [vmem:[#allocation3 + $0x88] sm:$0xff]
      %v1329 = vld [vmem:[#allocation3 + $0x90] sm:$0xff]
      %v1330 = vld [vmem:[#allocation3 + $0x98] sm:$0xff]
      %v1331 = vld [vmem:[#allocation3 + $0xa0] sm:$0xff]
      %v1332 = vld [vmem:[#allocation3 + $0xa8] sm:$0xff]
      %v1333 = vld [vmem:[#allocation3 + $0xb0] sm:$0xff]
      %v1334 = vld [vmem:[#allocation3 + $0xb8] sm:$0xff]
      %v1335 = vld [vmem:[#allocation3 + $0xc0] sm:$0xff]
      %v1336 = vld [vmem:[#allocation3 + $0xc8] sm:$0xff]
      %v1337 = vld [vmem:[#allocation3 + $0xd0] sm:$0xff]
      %v1338 = vld [vmem:[#allocation3 + $0xd8] sm:$0xff]
      %v1339 = vld [vmem:[#allocation3 + $0xe0] sm:$0xff]
      %v1340 = vld [vmem:[#allocation3 + $0xe8] sm:$0xff]
      %v1341 = vld [vmem:[#allocation3 + $0xf0] sm:$0xff]
      %v1342 = vld [vmem:[#allocation3 + $0xf8] sm:$0xff]
      %v1343 = vld [vmem:[%s1] sm:$0xff]
      %v1344 = vld [vmem:[%s1 + $0x8] sm:$0xff]
      %v1345 = vld [vmem:[%s1 + $0x10] sm:$0xff]
      %v1346 = vld [vmem:[%s1 + $0x18] sm:$0xff]
      %v1347 = vld [vmem:[%s1 + $0x20] sm:$0xff]
      %v1348 = vld [vmem:[%s1 + $0x28] sm:$0xff]
      %v1349 = vld [vmem:[%s1 + $0x30] sm:$0xff]
      %v1350 = vld [vmem:[%s1 + $0x38] sm:$0xff]
      %v1351 = vld [vmem:[%s1 + $0x40] sm:$0xff]
      %v1352 = vld [vmem:[%s1 + $0x48] sm:$0xff]
      %v1353 = vld [vmem:[%s1 + $0x50] sm:$0xff]
      %v1354 = vld [vmem:[%s1 + $0x58] sm:$0xff]
      %v1355 = vld [vmem:[%s1 + $0x60] sm:$0xff]
      %v1356 = vld [vmem:[%s1 + $0x68] sm:$0xff]
      %v1357 = vld [vmem:[%s1 + $0x70] sm:$0xff]
      %v1358 = vld [vmem:[%s1 + $0x78] sm:$0xff]
      %v1360 = vsel %vm901, %v1279, 0
      %v1363 = vsel %vm901, %v1280, 0
      %v1366 = vsel %vm901, %v1281, 0
      %v1369 = vsel %vm901, %v1282, 0
      %v1372 = vsel %vm901, %v1283, 0
      %v1375 = vsel %vm901, %v1284, 0
      %v1378 = vsel %vm901, %v1285, 0
      %v1381 = vsel %vm901, %v1286, 0
      %v1384 = vsel %vm901, %v1311, 0
      %v1387 = vsel %vm901, %v1312, 0
      %v1390 = vsel %vm901, %v1313, 0
      %v1393 = vsel %vm901, %v1314, 0
      %v1396 = vsel %vm901, %v1315, 0
      %v1399 = vsel %vm901, %v1316, 0
      %v1402 = vsel %vm901, %v1317, 0
      %v1405 = vsel %vm901, %v1318, 0
      %1407 = vmatprep.subr.bf16.mxu0 0
      %1408 = vmatpush1.bf16.xpose.msra.mxu0 %v1384
      %1409 = vmatprep.subr.bf16.mxu0 0
      %1410 = vmatpush1.bf16.xpose.msra.mxu0 %v1387
      %1411 = vmatprep.subr.bf16.mxu0 0
      %1412 = vmatpush1.bf16.xpose.msra.mxu0 %v1390
      %1413 = vmatprep.subr.bf16.mxu0 0
      %1414 = vmatpush1.bf16.xpose.msra.mxu0 %v1393
      %1415 = vmatprep.subr.bf16.mxu0 0
      %1416 = vmatpush1.bf16.xpose.msra.mxu0 %v1396
      %1417 = vmatprep.subr.bf16.mxu0 0
      %1418 = vmatpush1.bf16.xpose.msra.mxu0 %v1399
      %1419 = vmatprep.subr.bf16.mxu0 0
      %1420 = vmatpush1.bf16.xpose.msra.mxu0 %v1402
      %1421 = vmatprep.subr.bf16.mxu0 0
      %1422 = vmatpush1.bf16.xpose.msra.mxu0 %v1405
      %1423 = vmatprep.subr.bf16.mxu0 0
      %1424 = vmatpush1.bf16.xpose.msra.mxu0 0
      %1425 = vmatprep.subr.bf16.mxu0 0
      %1426 = vmatpush1.bf16.xpose.msra.mxu0 0
      %1427 = vmatprep.subr.bf16.mxu0 0
      %1428 = vmatpush1.bf16.xpose.msra.mxu0 0
      %1429 = vmatprep.subr.bf16.mxu0 0
      %1430 = vmatpush1.bf16.xpose.msra.mxu0 0
      %1431 = vmatprep.subr.bf16.mxu0 0
      %1432 = vmatpush1.bf16.xpose.msra.mxu0 0
      %1433 = vmatprep.subr.bf16.mxu0 0
      %1434 = vmatpush1.bf16.xpose.msra.mxu0 0
      %1435 = vmatprep.subr.bf16.mxu0 0
      %1436 = vmatpush1.bf16.xpose.msra.mxu0 0
      %1437 = vmatprep.subr.bf16.mxu0 0
      %1438 = vmatpush1.bf16.xpose.msra.mxu0 0
      %1439 = vmatprep.mubr.bf16.mxu0 0
      %1440 = vmatmul.mubr.bf16.gmra.mrb[0].mxu0 %v1360
      %v1441 = vpop.f32.mrb[0].mxu0
      %v1442 = vadd.f32 %v1343, %v1441
      %v1443 = vpop.f32.mrb[0].mxu0
      %v1444 = vpop.f32.mrb[0].mxu0
      %v1445 = vadd.f32 %v1344, %v1444
      %v1446 = vpop.f32.mrb[0].mxu0
      %1447 = vmatprep.mubr.bf16.mxu0 0
      %1448 = vmatmul.mubr.bf16.gmra.mrb[0].mxu0 %v1363
      %v1449 = vpop.f32.mrb[0].mxu0
      %v1450 = vadd.f32 %v1345, %v1449
      %v1451 = vpop.f32.mrb[0].mxu0
      %v1452 = vpop.f32.mrb[0].mxu0
      %v1453 = vadd.f32 %v1346, %v1452
      %v1454 = vpop.f32.mrb[0].mxu0
      %1455 = vmatprep.mubr.bf16.mxu0 0
      %1456 = vmatmul.mubr.bf16.gmra.mrb[0].mxu0 %v1366
      %v1457 = vpop.f32.mrb[0].mxu0
      %v1458 = vadd.f32 %v1347, %v1457
      %v1459 = vpop.f32.mrb[0].mxu0
      %v1460 = vpop.f32.mrb[0].mxu0
      %v1461 = vadd.f32 %v1348, %v1460
      %v1462 = vpop.f32.mrb[0].mxu0
      %1463 = vmatprep.mubr.bf16.mxu0 0
      %1464 = vmatmul.mubr.bf16.gmra.mrb[0].mxu0 %v1369
      %v1465 = vpop.f32.mrb[0].mxu0
      %v1466 = vadd.f32 %v1349, %v1465
      %v1467 = vpop.f32.mrb[0].mxu0
      %v1468 = vpop.f32.mrb[0].mxu0
      %v1469 = vadd.f32 %v1350, %v1468
      %v1470 = vpop.f32.mrb[0].mxu0
      %1471 = vmatprep.mubr.bf16.mxu0 0
      %1472 = vmatmul.mubr.bf16.gmra.mrb[0].mxu0 %v1372
      %v1473 = vpop.f32.mrb[0].mxu0
      %v1474 = vadd.f32 %v1351, %v1473
      %v1475 = vpop.f32.mrb[0].mxu0
      %v1476 = vpop.f32.mrb[0].mxu0
      %v1477 = vadd.f32 %v1352, %v1476
      %v1478 = vpop.f32.mrb[0].mxu0
      %1479 = vmatprep.mubr.bf16.mxu0 0
      %1480 = vmatmul.mubr.bf16.gmra.mrb[0].mxu0 %v1375
      %v1481 = vpop.f32.mrb[0].mxu0
      %v1482 = vadd.f32 %v1353, %v1481
      %v1483 = vpop.f32.mrb[0].mxu0
      %v1484 = vpop.f32.mrb[0].mxu0
      %v1485 = vadd.f32 %v1354, %v1484
      %v1486 = vpop.f32.mrb[0].mxu0
      %1487 = vmatprep.mubr.bf16.mxu0 0
      %1488 = vmatmul.mubr.bf16.gmra.mrb[0].mxu0 %v1378
      %v1489 = vpop.f32.mrb[0].mxu0
      %v1490 = vadd.f32 %v1355, %v1489
      %v1491 = vpop.f32.mrb[0].mxu0
      %v1492 = vpop.f32.mrb[0].mxu0
      %v1493 = vadd.f32 %v1356, %v1492
      %v1494 = vpop.f32.mrb[0].mxu0
      %1495 = vmatprep.mubr.bf16.mxu0 0
      %1496 = vmatmul.mubr.bf16.gmra.mrb[0].mxu0 %v1381
      %v1497 = vpop.f32.mrb[0].mxu0
      %v1498 = vadd.f32 %v1357, %v1497
      %v1499 = vpop.f32.mrb[0].mxu0
      %v1500 = vpop.f32.mrb[0].mxu0
      %v1501 = vadd.f32 %v1358, %v1500
      %v1502 = vpop.f32.mrb[0].mxu0
      %1503 = vdwg.mxu0
      %v1505 = vsel %vm901, %v1287, 0
      %v1508 = vsel %vm901, %v1288, 0
      %v1511 = vsel %vm901, %v1289, 0
      %v1514 = vsel %vm901, %v1290, 0
      %v1517 = vsel %vm901, %v1291, 0
      %v1520 = vsel %vm901, %v1292, 0
      %v1523 = vsel %vm901, %v1293, 0
      %v1526 = vsel %vm901, %v1294, 0
      %v1529 = vsel %vm901, %v1319, 0
      %v1532 = vsel %vm901, %v1320, 0
      %v1535 = vsel %vm901, %v1321, 0
      %v1538 = vsel %vm901, %v1322, 0
      %v1541 = vsel %vm901, %v1323, 0
      %v1544 = vsel %vm901, %v1324, 0
      %v1547 = vsel %vm901, %v1325, 0
      %v1550 = vsel %vm901, %v1326, 0
      %1552 = vmatprep.subr.bf16.mxu0 0
      %1553 = vmatpush1.bf16.xpose.msra.mxu0 %v1529
      %1554 = vmatprep.subr.bf16.mxu0 0
      %1555 = vmatpush1.bf16.xpose.msra.mxu0 %v1532
      %1556 = vmatprep.subr.bf16.mxu0 0
      %1557 = vmatpush1.bf16.xpose.msra.mxu0 %v1535
      %1558 = vmatprep.subr.bf16.mxu0 0
      %1559 = vmatpush1.bf16.xpose.msra.mxu0 %v1538
      %1560 = vmatprep.subr.bf16.mxu0 0
      %1561 = vmatpush1.bf16.xpose.msra.mxu0 %v1541
      %1562 = vmatprep.subr.bf16.mxu0 0
      %1563 = vmatpush1.bf16.xpose.msra.mxu0 %v1544
      %1564 = vmatprep.subr.bf16.mxu0 0
      %1565 = vmatpush1.bf16.xpose.msra.mxu0 %v1547
      %1566 = vmatprep.subr.bf16.mxu0 0
      %1567 = vmatpush1.bf16.xpose.msra.mxu0 %v1550
      %1568 = vmatprep.subr.bf16.mxu0 0
      %1569 = vmatpush1.bf16.xpose.msra.mxu0 0
      %1570 = vmatprep.subr.bf16.mxu0 0
      %1571 = vmatpush1.bf16.xpose.msra.mxu0 0
      %1572 = vmatprep.subr.bf16.mxu0 0
      %1573 = vmatpush1.bf16.xpose.msra.mxu0 0
      %1574 = vmatprep.subr.bf16.mxu0 0
      %1575 = vmatpush1.bf16.xpose.msra.mxu0 0
      %1576 = vmatprep.subr.bf16.mxu0 0
      %1577 = vmatpush1.bf16.xpose.msra.mxu0 0
      %1578 = vmatprep.subr.bf16.mxu0 0
      %1579 = vmatpush1.bf16.xpose.msra.mxu0 0
      %1580 = vmatprep.subr.bf16.mxu0 0
      %1581 = vmatpush1.bf16.xpose.msra.mxu0 0
      %1582 = vmatprep.subr.bf16.mxu0 0
      %1583 = vmatpush1.bf16.xpose.msra.mxu0 0
      %1584 = vmatprep.mubr.bf16.mxu0 0
      %1585 = vmatmul.mubr.bf16.gmra.mrb[0].mxu0 %v1505
      %v1586 = vpop.f32.mrb[0].mxu0
      %v1587 = vadd.f32 %v1343, %v1586
      %v1588 = vpop.f32.mrb[0].mxu0
      %v1589 = vpop.f32.mrb[0].mxu0
      %v1590 = vadd.f32 %v1344, %v1589
      %v1591 = vpop.f32.mrb[0].mxu0
      %1592 = vmatprep.mubr.bf16.mxu0 0
      %1593 = vmatmul.mubr.bf16.gmra.mrb[0].mxu0 %v1508
      %v1594 = vpop.f32.mrb[0].mxu0
      %v1595 = vadd.f32 %v1345, %v1594
      %v1596 = vpop.f32.mrb[0].mxu0
      %v1597 = vpop.f32.mrb[0].mxu0
      %v1598 = vadd.f32 %v1346, %v1597
      %v1599 = vpop.f32.mrb[0].mxu0
      %1600 = vmatprep.mubr.bf16.mxu0 0
      %1601 = vmatmul.mubr.bf16.gmra.mrb[0].mxu0 %v1511
      %v1602 = vpop.f32.mrb[0].mxu0
      %v1603 = vadd.f32 %v1347, %v1602
      %v1604 = vpop.f32.mrb[0].mxu0
      %v1605 = vpop.f32.mrb[0].mxu0
      %v1606 = vadd.f32 %v1348, %v1605
      %v1607 = vpop.f32.mrb[0].mxu0
      %1608 = vmatprep.mubr.bf16.mxu0 0
      %1609 = vmatmul.mubr.bf16.gmra.mrb[0].mxu0 %v1514
      %v1610 = vpop.f32.mrb[0].mxu0
      %v1611 = vadd.f32 %v1349, %v1610
      %v1612 = vpop.f32.mrb[0].mxu0
      %v1613 = vpop.f32.mrb[0].mxu0
      %v1614 = vadd.f32 %v1350, %v1613
      %v1615 = vpop.f32.mrb[0].mxu0
      %1616 = vmatprep.mubr.bf16.mxu0 0
      %1617 = vmatmul.mubr.bf16.gmra.mrb[0].mxu0 %v1517
      %v1618 = vpop.f32.mrb[0].mxu0
      %v1619 = vadd.f32 %v1351, %v1618
      %v1620 = vpop.f32.mrb[0].mxu0
      %v1621 = vpop.f32.mrb[0].mxu0
      %v1622 = vadd.f32 %v1352, %v1621
      %v1623 = vpop.f32.mrb[0].mxu0
      %1624 = vmatprep.mubr.bf16.mxu0 0
      %1625 = vmatmul.mubr.bf16.gmra.mrb[0].mxu0 %v1520
      %v1626 = vpop.f32.mrb[0].mxu0
      %v1627 = vadd.f32 %v1353, %v1626
      %v1628 = vpop.f32.mrb[0].mxu0
      %v1629 = vpop.f32.mrb[0].mxu0
      %v1630 = vadd.f32 %v1354, %v1629
      %v1631 = vpop.f32.mrb[0].mxu0
      %1632 = vmatprep.mubr.bf16.mxu0 0
      %1633 = vmatmul.mubr.bf16.gmra.mrb[0].mxu0 %v1523
      %v1634 = vpop.f32.mrb[0].mxu0
      %v1635 = vadd.f32 %v1355, %v1634
      %v1636 = vpop.f32.mrb[0].mxu0
      %v1637 = vpop.f32.mrb[0].mxu0
      %v1638 = vadd.f32 %v1356, %v1637
      %v1639 = vpop.f32.mrb[0].mxu0
      %1640 = vmatprep.mubr.bf16.mxu0 0
      %1641 = vmatmul.mubr.bf16.gmra.mrb[0].mxu0 %v1526
      %v1642 = vpop.f32.mrb[0].mxu0
      %v1643 = vadd.f32 %v1357, %v1642
      %v1644 = vpop.f32.mrb[0].mxu0
      %v1645 = vpop.f32.mrb[0].mxu0
      %v1646 = vadd.f32 %v1358, %v1645
      %v1647 = vpop.f32.mrb[0].mxu0
      %1648 = vdwg.mxu0
      %v1650 = vsel %vm901, %v1295, 0
      %v1653 = vsel %vm901, %v1296, 0
      %v1656 = vsel %vm901, %v1297, 0
      %v1659 = vsel %vm901, %v1298, 0
      %v1662 = vsel %vm901, %v1299, 0
      %v1665 = vsel %vm901, %v1300, 0
      %v1668 = vsel %vm901, %v1301, 0
      %v1671 = vsel %vm901, %v1302, 0
      %v1674 = vsel %vm901, %v1327, 0
      %v1677 = vsel %vm901, %v1328, 0
      %v1680 = vsel %vm901, %v1329, 0
      %v1683 = vsel %vm901, %v1330, 0
      %v1686 = vsel %vm901, %v1331, 0
      %v1689 = vsel %vm901, %v1332, 0
      %v1692 = vsel %vm901, %v1333, 0
      %v1695 = vsel %vm901, %v1334, 0
      %1697 = vmatprep.subr.bf16.mxu0 0
      %1698 = vmatpush1.bf16.xpose.msra.mxu0 %v1674
      %1699 = vmatprep.subr.bf16.mxu0 0
      %1700 = vmatpush1.bf16.xpose.msra.mxu0 %v1677
      %1701 = vmatprep.subr.bf16.mxu0 0
      %1702 = vmatpush1.bf16.xpose.msra.mxu0 %v1680
      %1703 = vmatprep.subr.bf16.mxu0 0
      %1704 = vmatpush1.bf16.xpose.msra.mxu0 %v1683
      %1705 = vmatprep.subr.bf16.mxu0 0
      %1706 = vmatpush1.bf16.xpose.msra.mxu0 %v1686
      %1707 = vmatprep.subr.bf16.mxu0 0
      %1708 = vmatpush1.bf16.xpose.msra.mxu0 %v1689
      %1709 = vmatprep.subr.bf16.mxu0 0
      %1710 = vmatpush1.bf16.xpose.msra.mxu0 %v1692
      %1711 = vmatprep.subr.bf16.mxu0 0
      %1712 = vmatpush1.bf16.xpose.msra.mxu0 %v1695
      %1713 = vmatprep.subr.bf16.mxu0 0
      %1714 = vmatpush1.bf16.xpose.msra.mxu0 0
      %1715 = vmatprep.subr.bf16.mxu0 0
      %1716 = vmatpush1.bf16.xpose.msra.mxu0 0
      %1717 = vmatprep.subr.bf16.mxu0 0
      %1718 = vmatpush1.bf16.xpose.msra.mxu0 0
      %1719 = vmatprep.subr.bf16.mxu0 0
      %1720 = vmatpush1.bf16.xpose.msra.mxu0 0
      %1721 = vmatprep.subr.bf16.mxu0 0
      %1722 = vmatpush1.bf16.xpose.msra.mxu0 0
      %1723 = vmatprep.subr.bf16.mxu0 0
      %1724 = vmatpush1.bf16.xpose.msra.mxu0 0
      %1725 = vmatprep.subr.bf16.mxu0 0
      %1726 = vmatpush1.bf16.xpose.msra.mxu0 0
      %1727 = vmatprep.subr.bf16.mxu0 0
      %1728 = vmatpush1.bf16.xpose.msra.mxu0 0
      %1729 = vmatprep.mubr.bf16.mxu0 0
      %1730 = vmatmul.mubr.bf16.gmra.mrb[0].mxu0 %v1650
      %v1731 = vpop.f32.mrb[0].mxu0
      %v1732 = vadd.f32 %v1343, %v1731
      %v1733 = vpop.f32.mrb[0].mxu0
      %v1734 = vpop.f32.mrb[0].mxu0
      %v1735 = vadd.f32 %v1344, %v1734
      %v1736 = vpop.f32.mrb[0].mxu0
      %1737 = vmatprep.mubr.bf16.mxu0 0
      %1738 = vmatmul.mubr.bf16.gmra.mrb[0].mxu0 %v1653
      %v1739 = vpop.f32.mrb[0].mxu0
      %v1740 = vadd.f32 %v1345, %v1739
      %v1741 = vpop.f32.mrb[0].mxu0
      %v1742 = vpop.f32.mrb[0].mxu0
      %v1743 = vadd.f32 %v1346, %v1742
      %v1744 = vpop.f32.mrb[0].mxu0
      %1745 = vmatprep.mubr.bf16.mxu0 0
      %1746 = vmatmul.mubr.bf16.gmra.mrb[0].mxu0 %v1656
      %v1747 = vpop.f32.mrb[0].mxu0
      %v1748 = vadd.f32 %v1347, %v1747
      %v1749 = vpop.f32.mrb[0].mxu0
      %v1750 = vpop.f32.mrb[0].mxu0
      %v1751 = vadd.f32 %v1348, %v1750
      %v1752 = vpop.f32.mrb[0].mxu0
      %1753 = vmatprep.mubr.bf16.mxu0 0
      %1754 = vmatmul.mubr.bf16.gmra.mrb[0].mxu0 %v1659
      %v1755 = vpop.f32.mrb[0].mxu0
      %v1756 = vadd.f32 %v1349, %v1755
      %v1757 = vpop.f32.mrb[0].mxu0
      %v1758 = vpop.f32.mrb[0].mxu0
      %v1759 = vadd.f32 %v1350, %v1758
      %v1760 = vpop.f32.mrb[0].mxu0
      %1761 = vmatprep.mubr.bf16.mxu0 0
      %1762 = vmatmul.mubr.bf16.gmra.mrb[0].mxu0 %v1662
      %v1763 = vpop.f32.mrb[0].mxu0
      %v1764 = vadd.f32 %v1351, %v1763
      %v1765 = vpop.f32.mrb[0].mxu0
      %v1766 = vpop.f32.mrb[0].mxu0
      %v1767 = vadd.f32 %v1352, %v1766
      %v1768 = vpop.f32.mrb[0].mxu0
      %1769 = vmatprep.mubr.bf16.mxu0 0
      %1770 = vmatmul.mubr.bf16.gmra.mrb[0].mxu0 %v1665
      %v1771 = vpop.f32.mrb[0].mxu0
      %v1772 = vadd.f32 %v1353, %v1771
      %v1773 = vpop.f32.mrb[0].mxu0
      %v1774 = vpop.f32.mrb[0].mxu0
      %v1775 = vadd.f32 %v1354, %v1774
      %v1776 = vpop.f32.mrb[0].mxu0
      %1777 = vmatprep.mubr.bf16.mxu0 0
      %1778 = vmatmul.mubr.bf16.gmra.mrb[0].mxu0 %v1668
      %v1779 = vpop.f32.mrb[0].mxu0
      %v1780 = vadd.f32 %v1355, %v1779
      %v1781 = vpop.f32.mrb[0].mxu0
      %v1782 = vpop.f32.mrb[0].mxu0
      %v1783 = vadd.f32 %v1356, %v1782
      %v1784 = vpop.f32.mrb[0].mxu0
      %1785 = vmatprep.mubr.bf16.mxu0 0
      %1786 = vmatmul.mubr.bf16.gmra.mrb[0].mxu0 %v1671
      %v1787 = vpop.f32.mrb[0].mxu0
      %v1788 = vadd.f32 %v1357, %v1787
      %v1789 = vpop.f32.mrb[0].mxu0
      %v1790 = vpop.f32.mrb[0].mxu0
      %v1791 = vadd.f32 %v1358, %v1790
      %v1792 = vpop.f32.mrb[0].mxu0
      %1793 = vdwg.mxu0
      %v1795 = vsel %vm901, %v1303, 0
      %v1798 = vsel %vm901, %v1304, 0
      %v1801 = vsel %vm901, %v1305, 0
      %v1804 = vsel %vm901, %v1306, 0
      %v1807 = vsel %vm901, %v1307, 0
      %v1810 = vsel %vm901, %v1308, 0
      %v1813 = vsel %vm901, %v1309, 0
      %v1816 = vsel %vm901, %v1310, 0
      %v1819 = vsel %vm901, %v1335, 0
      %v1822 = vsel %vm901, %v1336, 0
      %v1825 = vsel %vm901, %v1337, 0
      %v1828 = vsel %vm901, %v1338, 0
      %v1831 = vsel %vm901, %v1339, 0
      %v1834 = vsel %vm901, %v1340, 0
      %v1837 = vsel %vm901, %v1341, 0
      %v1840 = vsel %vm901, %v1342, 0
      %1842 = vmatprep.subr.bf16.mxu0 0
      %1843 = vmatpush1.bf16.xpose.msra.mxu0 %v1819
      %1844 = vmatprep.subr.bf16.mxu0 0
      %1845 = vmatpush1.bf16.xpose.msra.mxu0 %v1822
      %1846 = vmatprep.subr.bf16.mxu0 0
      %1847 = vmatpush1.bf16.xpose.msra.mxu0 %v1825
      %1848 = vmatprep.subr.bf16.mxu0 0
      %1849 = vmatpush1.bf16.xpose.msra.mxu0 %v1828
      %1850 = vmatprep.subr.bf16.mxu0 0
      %1851 = vmatpush1.bf16.xpose.msra.mxu0 %v1831
      %1852 = vmatprep.subr.bf16.mxu0 0
      %1853 = vmatpush1.bf16.xpose.msra.mxu0 %v1834
      %1854 = vmatprep.subr.bf16.mxu0 0
      %1855 = vmatpush1.bf16.xpose.msra.mxu0 %v1837
      %1856 = vmatprep.subr.bf16.mxu0 0
      %1857 = vmatpush1.bf16.xpose.msra.mxu0 %v1840
      %1858 = vmatprep.subr.bf16.mxu0 0
      %1859 = vmatpush1.bf16.xpose.msra.mxu0 0
      %1860 = vmatprep.subr.bf16.mxu0 0
      %1861 = vmatpush1.bf16.xpose.msra.mxu0 0
      %1862 = vmatprep.subr.bf16.mxu0 0
      %1863 = vmatpush1.bf16.xpose.msra.mxu0 0
      %1864 = vmatprep.subr.bf16.mxu0 0
      %1865 = vmatpush1.bf16.xpose.msra.mxu0 0
      %1866 = vmatprep.subr.bf16.mxu0 0
      %1867 = vmatpush1.bf16.xpose.msra.mxu0 0
      %1868 = vmatprep.subr.bf16.mxu0 0
      %1869 = vmatpush1.bf16.xpose.msra.mxu0 0
      %1870 = vmatprep.subr.bf16.mxu0 0
      %1871 = vmatpush1.bf16.xpose.msra.mxu0 0
      %1872 = vmatprep.subr.bf16.mxu0 0
      %1873 = vmatpush1.bf16.xpose.msra.mxu0 0
      %1874 = vmatprep.mubr.bf16.mxu0 0
      %1875 = vmatmul.mubr.bf16.gmra.mrb[0].mxu0 %v1795
      %v1876 = vpop.f32.mrb[0].mxu0
      %v1877 = vadd.f32 %v1343, %v1876
      %v1878 = vpop.f32.mrb[0].mxu0
      %v1879 = vpop.f32.mrb[0].mxu0
      %v1880 = vadd.f32 %v1344, %v1879
      %v1881 = vpop.f32.mrb[0].mxu0
      %1882 = vmatprep.mubr.bf16.mxu0 0
      %1883 = vmatmul.mubr.bf16.gmra.mrb[0].mxu0 %v1798
      %v1884 = vpop.f32.mrb[0].mxu0
      %v1885 = vadd.f32 %v1345, %v1884
      %v1886 = vpop.f32.mrb[0].mxu0
      %v1887 = vpop.f32.mrb[0].mxu0
      %v1888 = vadd.f32 %v1346, %v1887
      %v1889 = vpop.f32.mrb[0].mxu0
      %1890 = vmatprep.mubr.bf16.mxu0 0
      %1891 = vmatmul.mubr.bf16.gmra.mrb[0].mxu0 %v1801
      %v1892 = vpop.f32.mrb[0].mxu0
      %v1893 = vadd.f32 %v1347, %v1892
      %v1894 = vpop.f32.mrb[0].mxu0
      %v1895 = vpop.f32.mrb[0].mxu0
      %v1896 = vadd.f32 %v1348, %v1895
      %v1897 = vpop.f32.mrb[0].mxu0
      %1898 = vmatprep.mubr.bf16.mxu0 0
      %1899 = vmatmul.mubr.bf16.gmra.mrb[0].mxu0 %v1804
      %v1900 = vpop.f32.mrb[0].mxu0
      %v1901 = vadd.f32 %v1349, %v1900
      %v1902 = vpop.f32.mrb[0].mxu0
      %v1903 = vpop.f32.mrb[0].mxu0
      %v1904 = vadd.f32 %v1350, %v1903
      %v1905 = vpop.f32.mrb[0].mxu0
      %1906 = vmatprep.mubr.bf16.mxu0 0
      %1907 = vmatmul.mubr.bf16.gmra.mrb[0].mxu0 %v1807
      %v1908 = vpop.f32.mrb[0].mxu0
      %v1909 = vadd.f32 %v1351, %v1908
      %v1910 = vpop.f32.mrb[0].mxu0
      %v1911 = vpop.f32.mrb[0].mxu0
      %v1912 = vadd.f32 %v1352, %v1911
      %v1913 = vpop.f32.mrb[0].mxu0
      %1914 = vmatprep.mubr.bf16.mxu0 0
      %1915 = vmatmul.mubr.bf16.gmra.mrb[0].mxu0 %v1810
      %v1916 = vpop.f32.mrb[0].mxu0
      %v1917 = vadd.f32 %v1353, %v1916
      %v1918 = vpop.f32.mrb[0].mxu0
      %v1919 = vpop.f32.mrb[0].mxu0
      %v1920 = vadd.f32 %v1354, %v1919
      %v1921 = vpop.f32.mrb[0].mxu0
      %1922 = vmatprep.mubr.bf16.mxu0 0
      %1923 = vmatmul.mubr.bf16.gmra.mrb[0].mxu0 %v1813
      %v1924 = vpop.f32.mrb[0].mxu0
      %v1925 = vadd.f32 %v1355, %v1924
      %v1926 = vpop.f32.mrb[0].mxu0
      %v1927 = vpop.f32.mrb[0].mxu0
      %v1928 = vadd.f32 %v1356, %v1927
      %v1929 = vpop.f32.mrb[0].mxu0
      %1930 = vmatprep.mubr.bf16.mxu0 0
      %1931 = vmatmul.mubr.bf16.gmra.mrb[0].mxu0 %v1816
      %v1932 = vpop.f32.mrb[0].mxu0
      %v1933 = vadd.f32 %v1357, %v1932
      %v1934 = vpop.f32.mrb[0].mxu0
      %v1935 = vpop.f32.mrb[0].mxu0
      %v1936 = vadd.f32 %v1358, %v1935
      %v1937 = vpop.f32.mrb[0].mxu0
      %1938 = vdwg.mxu0
      %1939 = vmax.xlane.f32.xlu0 %v1442
      %v1940 = vpop.xlane.xlu0 %1939
      %1941 = vmax.xlane.f32.xlu0 %v1445
      %v1942 = vpop.xlane.xlu0 %1941
      %1943 = vmax.xlane.f32.xlu0 %v1450
      %v1944 = vpop.xlane.xlu0 %1943
      %1945 = vmax.xlane.f32.xlu0 %v1453
      %v1946 = vpop.xlane.xlu0 %1945
      %1947 = vmax.xlane.f32.xlu0 %v1458
      %v1948 = vpop.xlane.xlu0 %1947
      %1949 = vmax.xlane.f32.xlu0 %v1461
      %v1950 = vpop.xlane.xlu0 %1949
      %1951 = vmax.xlane.f32.xlu0 %v1466
      %v1952 = vpop.xlane.xlu0 %1951
      %1953 = vmax.xlane.f32.xlu0 %v1469
      %v1954 = vpop.xlane.xlu0 %1953
      %1955 = vmax.xlane.f32.xlu0 %v1474
      %v1956 = vpop.xlane.xlu0 %1955
      %1957 = vmax.xlane.f32.xlu0 %v1477
      %v1958 = vpop.xlane.xlu0 %1957
      %1959 = vmax.xlane.f32.xlu0 %v1482
      %v1960 = vpop.xlane.xlu0 %1959
      %1961 = vmax.xlane.f32.xlu0 %v1485
      %v1962 = vpop.xlane.xlu0 %1961
      %1963 = vmax.xlane.f32.xlu0 %v1490
      %v1964 = vpop.xlane.xlu0 %1963
      %1965 = vmax.xlane.f32.xlu0 %v1493
      %v1966 = vpop.xlane.xlu0 %1965
      %1967 = vmax.xlane.f32.xlu0 %v1498
      %v1968 = vpop.xlane.xlu0 %1967
      %1969 = vmax.xlane.f32.xlu0 %v1501
      %v1970 = vpop.xlane.xlu0 %1969
      %1971 = vmax.xlane.f32.xlu0 %v1587
      %v1972 = vpop.xlane.xlu0 %1971
      %1973 = vmax.xlane.f32.xlu0 %v1590
      %v1974 = vpop.xlane.xlu0 %1973
      %1975 = vmax.xlane.f32.xlu0 %v1595
      %v1976 = vpop.xlane.xlu0 %1975
      %1977 = vmax.xlane.f32.xlu0 %v1598
      %v1978 = vpop.xlane.xlu0 %1977
      %1979 = vmax.xlane.f32.xlu0 %v1603
      %v1980 = vpop.xlane.xlu0 %1979
      %1981 = vmax.xlane.f32.xlu0 %v1606
      %v1982 = vpop.xlane.xlu0 %1981
      %1983 = vmax.xlane.f32.xlu0 %v1611
      %v1984 = vpop.xlane.xlu0 %1983
      %1985 = vmax.xlane.f32.xlu0 %v1614
      %v1986 = vpop.xlane.xlu0 %1985
      %1987 = vmax.xlane.f32.xlu0 %v1619
      %v1988 = vpop.xlane.xlu0 %1987
      %1989 = vmax.xlane.f32.xlu0 %v1622
      %v1990 = vpop.xlane.xlu0 %1989
      %1991 = vmax.xlane.f32.xlu0 %v1627
      %v1992 = vpop.xlane.xlu0 %1991
      %1993 = vmax.xlane.f32.xlu0 %v1630
      %v1994 = vpop.xlane.xlu0 %1993
      %1995 = vmax.xlane.f32.xlu0 %v1635
      %v1996 = vpop.xlane.xlu0 %1995
      %1997 = vmax.xlane.f32.xlu0 %v1638
      %v1998 = vpop.xlane.xlu0 %1997
      %1999 = vmax.xlane.f32.xlu0 %v1643
      %v2000 = vpop.xlane.xlu0 %1999
      %2001 = vmax.xlane.f32.xlu0 %v1646
      %v2002 = vpop.xlane.xlu0 %2001
      %2003 = vmax.xlane.f32.xlu0 %v1732
      %v2004 = vpop.xlane.xlu0 %2003
      %2005 = vmax.xlane.f32.xlu0 %v1735
      %v2006 = vpop.xlane.xlu0 %2005
      %2007 = vmax.xlane.f32.xlu0 %v1740
      %v2008 = vpop.xlane.xlu0 %2007
      %2009 = vmax.xlane.f32.xlu0 %v1743
      %v2010 = vpop.xlane.xlu0 %2009
      %2011 = vmax.xlane.f32.xlu0 %v1748
      %v2012 = vpop.xlane.xlu0 %2011
      %2013 = vmax.xlane.f32.xlu0 %v1751
      %v2014 = vpop.xlane.xlu0 %2013
      %2015 = vmax.xlane.f32.xlu0 %v1756
      %v2016 = vpop.xlane.xlu0 %2015
      %2017 = vmax.xlane.f32.xlu0 %v1759
      %v2018 = vpop.xlane.xlu0 %2017
      %2019 = vmax.xlane.f32.xlu0 %v1764
      %v2020 = vpop.xlane.xlu0 %2019
      %2021 = vmax.xlane.f32.xlu0 %v1767
      %v2022 = vpop.xlane.xlu0 %2021
      %2023 = vmax.xlane.f32.xlu0 %v1772
      %v2024 = vpop.xlane.xlu0 %2023
      %2025 = vmax.xlane.f32.xlu0 %v1775
      %v2026 = vpop.xlane.xlu0 %2025
      %2027 = vmax.xlane.f32.xlu0 %v1780
      %v2028 = vpop.xlane.xlu0 %2027
      %2029 = vmax.xlane.f32.xlu0 %v1783
      %v2030 = vpop.xlane.xlu0 %2029
      %2031 = vmax.xlane.f32.xlu0 %v1788
      %v2032 = vpop.xlane.xlu0 %2031
      %2033 = vmax.xlane.f32.xlu0 %v1791
      %v2034 = vpop.xlane.xlu0 %2033
      %2035 = vmax.xlane.f32.xlu0 %v1877
      %v2036 = vpop.xlane.xlu0 %2035
      %2037 = vmax.xlane.f32.xlu0 %v1880
      %v2038 = vpop.xlane.xlu0 %2037
      %2039 = vmax.xlane.f32.xlu0 %v1885
      %v2040 = vpop.xlane.xlu0 %2039
      %2041 = vmax.xlane.f32.xlu0 %v1888
      %v2042 = vpop.xlane.xlu0 %2041
      %2043 = vmax.xlane.f32.xlu0 %v1893
      %v2044 = vpop.xlane.xlu0 %2043
      %2045 = vmax.xlane.f32.xlu0 %v1896
      %v2046 = vpop.xlane.xlu0 %2045
      %2047 = vmax.xlane.f32.xlu0 %v1901
      %v2048 = vpop.xlane.xlu0 %2047
      %2049 = vmax.xlane.f32.xlu0 %v1904
      %v2050 = vpop.xlane.xlu0 %2049
      %2051 = vmax.xlane.f32.xlu0 %v1909
      %v2052 = vpop.xlane.xlu0 %2051
      %2053 = vmax.xlane.f32.xlu0 %v1912
      %v2054 = vpop.xlane.xlu0 %2053
      %2055 = vmax.xlane.f32.xlu0 %v1917
      %v2056 = vpop.xlane.xlu0 %2055
      %2057 = vmax.xlane.f32.xlu0 %v1920
      %v2058 = vpop.xlane.xlu0 %2057
      %2059 = vmax.xlane.f32.xlu0 %v1925
      %v2060 = vpop.xlane.xlu0 %2059
      %2061 = vmax.xlane.f32.xlu0 %v1928
      %v2062 = vpop.xlane.xlu0 %2061
      %2063 = vmax.xlane.f32.xlu0 %v1933
      %v2064 = vpop.xlane.xlu0 %2063
      %2065 = vmax.xlane.f32.xlu0 %v1936
      %v2066 = vpop.xlane.xlu0 %2065
      %v2067 = vsub.f32 %v1442, %v1940
      %v2068 = vsub.f32 %v1445, %v1942
      %v2069 = vsub.f32 %v1450, %v1944
      %v2070 = vsub.f32 %v1453, %v1946
      %v2071 = vsub.f32 %v1458, %v1948
      %v2072 = vsub.f32 %v1461, %v1950
      %v2073 = vsub.f32 %v1466, %v1952
      %v2074 = vsub.f32 %v1469, %v1954
      %v2075 = vsub.f32 %v1474, %v1956
      %v2076 = vsub.f32 %v1477, %v1958
      %v2077 = vsub.f32 %v1482, %v1960
      %v2078 = vsub.f32 %v1485, %v1962
      %v2079 = vsub.f32 %v1490, %v1964
      %v2080 = vsub.f32 %v1493, %v1966
      %v2081 = vsub.f32 %v1498, %v1968
      %v2082 = vsub.f32 %v1501, %v1970
      %v2083 = vsub.f32 %v1587, %v1972
      %v2084 = vsub.f32 %v1590, %v1974
      %v2085 = vsub.f32 %v1595, %v1976
      %v2086 = vsub.f32 %v1598, %v1978
      %v2087 = vsub.f32 %v1603, %v1980
      %v2088 = vsub.f32 %v1606, %v1982
      %v2089 = vsub.f32 %v1611, %v1984
      %v2090 = vsub.f32 %v1614, %v1986
      %v2091 = vsub.f32 %v1619, %v1988
      %v2092 = vsub.f32 %v1622, %v1990
      %v2093 = vsub.f32 %v1627, %v1992
      %v2094 = vsub.f32 %v1630, %v1994
      %v2095 = vsub.f32 %v1635, %v1996
      %v2096 = vsub.f32 %v1638, %v1998
      %v2097 = vsub.f32 %v1643, %v2000
      %v2098 = vsub.f32 %v1646, %v2002
      %v2099 = vsub.f32 %v1732, %v2004
      %v2100 = vsub.f32 %v1735, %v2006
      %v2101 = vsub.f32 %v1740, %v2008
      %v2102 = vsub.f32 %v1743, %v2010
      %v2103 = vsub.f32 %v1748, %v2012
      %v2104 = vsub.f32 %v1751, %v2014
      %v2105 = vsub.f32 %v1756, %v2016
      %v2106 = vsub.f32 %v1759, %v2018
      %v2107 = vsub.f32 %v1764, %v2020
      %v2108 = vsub.f32 %v1767, %v2022
      %v2109 = vsub.f32 %v1772, %v2024
      %v2110 = vsub.f32 %v1775, %v2026
      %v2111 = vsub.f32 %v1780, %v2028
      %v2112 = vsub.f32 %v1783, %v2030
      %v2113 = vsub.f32 %v1788, %v2032
      %v2114 = vsub.f32 %v1791, %v2034
      %v2115 = vsub.f32 %v1877, %v2036
      %v2116 = vsub.f32 %v1880, %v2038
      %v2117 = vsub.f32 %v1885, %v2040
      %v2118 = vsub.f32 %v1888, %v2042
      %v2119 = vsub.f32 %v1893, %v2044
      %v2120 = vsub.f32 %v1896, %v2046
      %v2121 = vsub.f32 %v1901, %v2048
      %v2122 = vsub.f32 %v1904, %v2050
      %v2123 = vsub.f32 %v1909, %v2052
      %v2124 = vsub.f32 %v1912, %v2054
      %v2125 = vsub.f32 %v1917, %v2056
      %v2126 = vsub.f32 %v1920, %v2058
      %v2127 = vsub.f32 %v1925, %v2060
      %v2128 = vsub.f32 %v1928, %v2062
      %v2129 = vsub.f32 %v1933, %v2064
      %v2130 = vsub.f32 %v1936, %v2066
      %v2131 = vmul.f32 %v2067, 1.442695
      %v2132 = vpow.pop %v2131
      %v2133 = vmul.f32 %v2068, 1.442695
      %v2134 = vpow.pop %v2133
      %v2135 = vmul.f32 %v2069, 1.442695
      %v2136 = vpow.pop %v2135
      %v2137 = vmul.f32 %v2070, 1.442695
      %v2138 = vpow.pop %v2137
      %v2139 = vmul.f32 %v2071, 1.442695
      %v2140 = vpow.pop %v2139
      %v2141 = vmul.f32 %v2072, 1.442695
      %v2142 = vpow.pop %v2141
      %v2143 = vmul.f32 %v2073, 1.442695
      %v2144 = vpow.pop %v2143
      %v2145 = vmul.f32 %v2074, 1.442695
      %v2146 = vpow.pop %v2145
      %v2147 = vmul.f32 %v2075, 1.442695
      %v2148 = vpow.pop %v2147
      %v2149 = vmul.f32 %v2076, 1.442695
      %v2150 = vpow.pop %v2149
      %v2151 = vmul.f32 %v2077, 1.442695
      %v2152 = vpow.pop %v2151
      %v2153 = vmul.f32 %v2078, 1.442695
      %v2154 = vpow.pop %v2153
      %v2155 = vmul.f32 %v2079, 1.442695
      %v2156 = vpow.pop %v2155
      %v2157 = vmul.f32 %v2080, 1.442695
      %v2158 = vpow.pop %v2157
      %v2159 = vmul.f32 %v2081, 1.442695
      %v2160 = vpow.pop %v2159
      %v2161 = vmul.f32 %v2082, 1.442695
      %v2162 = vpow.pop %v2161
      %v2163 = vmul.f32 %v2083, 1.442695
      %v2164 = vpow.pop %v2163
      %v2165 = vmul.f32 %v2084, 1.442695
      %v2166 = vpow.pop %v2165
      %v2167 = vmul.f32 %v2085, 1.442695
      %v2168 = vpow.pop %v2167
      %v2169 = vmul.f32 %v2086, 1.442695
      %v2170 = vpow.pop %v2169
      %v2171 = vmul.f32 %v2087, 1.442695
      %v2172 = vpow.pop %v2171
      %v2173 = vmul.f32 %v2088, 1.442695
      %v2174 = vpow.pop %v2173
      %v2175 = vmul.f32 %v2089, 1.442695
      %v2176 = vpow.pop %v2175
      %v2177 = vmul.f32 %v2090, 1.442695
      %v2178 = vpow.pop %v2177
      %v2179 = vmul.f32 %v2091, 1.442695
      %v2180 = vpow.pop %v2179
      %v2181 = vmul.f32 %v2092, 1.442695
      %v2182 = vpow.pop %v2181
      %v2183 = vmul.f32 %v2093, 1.442695
      %v2184 = vpow.pop %v2183
      %v2185 = vmul.f32 %v2094, 1.442695
      %v2186 = vpow.pop %v2185
      %v2187 = vmul.f32 %v2095, 1.442695
      %v2188 = vpow.pop %v2187
      %v2189 = vmul.f32 %v2096, 1.442695
      %v2190 = vpow.pop %v2189
      %v2191 = vmul.f32 %v2097, 1.442695
      %v2192 = vpow.pop %v2191
      %v2193 = vmul.f32 %v2098, 1.442695
      %v2194 = vpow.pop %v2193
      %v2195 = vmul.f32 %v2099, 1.442695
      %v2196 = vpow.pop %v2195
      %v2197 = vmul.f32 %v2100, 1.442695
      %v2198 = vpow.pop %v2197
      %v2199 = vmul.f32 %v2101, 1.442695
      %v2200 = vpow.pop %v2199
      %v2201 = vmul.f32 %v2102, 1.442695
      %v2202 = vpow.pop %v2201
      %v2203 = vmul.f32 %v2103, 1.442695
      %v2204 = vpow.pop %v2203
      %v2205 = vmul.f32 %v2104, 1.442695
      %v2206 = vpow.pop %v2205
      %v2207 = vmul.f32 %v2105, 1.442695
      %v2208 = vpow.pop %v2207
      %v2209 = vmul.f32 %v2106, 1.442695
      %v2210 = vpow.pop %v2209
      %v2211 = vmul.f32 %v2107, 1.442695
      %v2212 = vpow.pop %v2211
      %v2213 = vmul.f32 %v2108, 1.442695
      %v2214 = vpow.pop %v2213
      %v2215 = vmul.f32 %v2109, 1.442695
      %v2216 = vpow.pop %v2215
      %v2217 = vmul.f32 %v2110, 1.442695
      %v2218 = vpow.pop %v2217
      %v2219 = vmul.f32 %v2111, 1.442695
      %v2220 = vpow.pop %v2219
      %v2221 = vmul.f32 %v2112, 1.442695
      %v2222 = vpow.pop %v2221
      %v2223 = vmul.f32 %v2113, 1.442695
      %v2224 = vpow.pop %v2223
      %v2225 = vmul.f32 %v2114, 1.442695
      %v2226 = vpow.pop %v2225
      %v2227 = vmul.f32 %v2115, 1.442695
      %v2228 = vpow.pop %v2227
      %v2229 = vmul.f32 %v2116, 1.442695
      %v2230 = vpow.pop %v2229
      %v2231 = vmul.f32 %v2117, 1.442695
      %v2232 = vpow.pop %v2231
      %v2233 = vmul.f32 %v2118, 1.442695
      %v2234 = vpow.pop %v2233
      %v2235 = vmul.f32 %v2119, 1.442695
      %v2236 = vpow.pop %v2235
      %v2237 = vmul.f32 %v2120, 1.442695
      %v2238 = vpow.pop %v2237
      %v2239 = vmul.f32 %v2121, 1.442695
      %v2240 = vpow.pop %v2239
      %v2241 = vmul.f32 %v2122, 1.442695
      %v2242 = vpow.pop %v2241
      %v2243 = vmul.f32 %v2123, 1.442695
      %v2244 = vpow.pop %v2243
      %v2245 = vmul.f32 %v2124, 1.442695
      %v2246 = vpow.pop %v2245
      %v2247 = vmul.f32 %v2125, 1.442695
      %v2248 = vpow.pop %v2247
      %v2249 = vmul.f32 %v2126, 1.442695
      %v2250 = vpow.pop %v2249
      %v2251 = vmul.f32 %v2127, 1.442695
      %v2252 = vpow.pop %v2251
      %v2253 = vmul.f32 %v2128, 1.442695
      %v2254 = vpow.pop %v2253
      %v2255 = vmul.f32 %v2129, 1.442695
      %v2256 = vpow.pop %v2255
      %v2257 = vmul.f32 %v2130, 1.442695
      %v2258 = vpow.pop %v2257
      %2259 = vadd.xlane.f32.xlu0 %v2132
      %v2260 = vpop.xlane.xlu0 %2259
      %2261 = vadd.xlane.f32.xlu0 %v2134
      %v2262 = vpop.xlane.xlu0 %2261
      %2263 = vadd.xlane.f32.xlu0 %v2136
      %v2264 = vpop.xlane.xlu0 %2263
      %2265 = vadd.xlane.f32.xlu0 %v2138
      %v2266 = vpop.xlane.xlu0 %2265
      %2267 = vadd.xlane.f32.xlu0 %v2140
      %v2268 = vpop.xlane.xlu0 %2267
      %2269 = vadd.xlane.f32.xlu0 %v2142
      %v2270 = vpop.xlane.xlu0 %2269
      %2271 = vadd.xlane.f32.xlu0 %v2144
      %v2272 = vpop.xlane.xlu0 %2271
      %2273 = vadd.xlane.f32.xlu0 %v2146
      %v2274 = vpop.xlane.xlu0 %2273
      %2275 = vadd.xlane.f32.xlu0 %v2148
      %v2276 = vpop.xlane.xlu0 %2275
      %2277 = vadd.xlane.f32.xlu0 %v2150
      %v2278 = vpop.xlane.xlu0 %2277
      %2279 = vadd.xlane.f32.xlu0 %v2152
      %v2280 = vpop.xlane.xlu0 %2279
      %2281 = vadd.xlane.f32.xlu0 %v2154
      %v2282 = vpop.xlane.xlu0 %2281
      %2283 = vadd.xlane.f32.xlu0 %v2156
      %v2284 = vpop.xlane.xlu0 %2283
      %2285 = vadd.xlane.f32.xlu0 %v2158
      %v2286 = vpop.xlane.xlu0 %2285
      %2287 = vadd.xlane.f32.xlu0 %v2160
      %v2288 = vpop.xlane.xlu0 %2287
      %2289 = vadd.xlane.f32.xlu0 %v2162
      %v2290 = vpop.xlane.xlu0 %2289
      %2291 = vadd.xlane.f32.xlu0 %v2164
      %v2292 = vpop.xlane.xlu0 %2291
      %2293 = vadd.xlane.f32.xlu0 %v2166
      %v2294 = vpop.xlane.xlu0 %2293
      %2295 = vadd.xlane.f32.xlu0 %v2168
      %v2296 = vpop.xlane.xlu0 %2295
      %2297 = vadd.xlane.f32.xlu0 %v2170
      %v2298 = vpop.xlane.xlu0 %2297
      %2299 = vadd.xlane.f32.xlu0 %v2172
      %v2300 = vpop.xlane.xlu0 %2299
      %2301 = vadd.xlane.f32.xlu0 %v2174
      %v2302 = vpop.xlane.xlu0 %2301
      %2303 = vadd.xlane.f32.xlu0 %v2176
      %v2304 = vpop.xlane.xlu0 %2303
      %2305 = vadd.xlane.f32.xlu0 %v2178
      %v2306 = vpop.xlane.xlu0 %2305
      %2307 = vadd.xlane.f32.xlu0 %v2180
      %v2308 = vpop.xlane.xlu0 %2307
      %2309 = vadd.xlane.f32.xlu0 %v2182
      %v2310 = vpop.xlane.xlu0 %2309
      %2311 = vadd.xlane.f32.xlu0 %v2184
      %v2312 = vpop.xlane.xlu0 %2311
      %2313 = vadd.xlane.f32.xlu0 %v2186
      %v2314 = vpop.xlane.xlu0 %2313
      %2315 = vadd.xlane.f32.xlu0 %v2188
      %v2316 = vpop.xlane.xlu0 %2315
      %2317 = vadd.xlane.f32.xlu0 %v2190
      %v2318 = vpop.xlane.xlu0 %2317
      %2319 = vadd.xlane.f32.xlu0 %v2192
      %v2320 = vpop.xlane.xlu0 %2319
      %2321 = vadd.xlane.f32.xlu0 %v2194
      %v2322 = vpop.xlane.xlu0 %2321
      %2323 = vadd.xlane.f32.xlu0 %v2196
      %v2324 = vpop.xlane.xlu0 %2323
      %2325 = vadd.xlane.f32.xlu0 %v2198
      %v2326 = vpop.xlane.xlu0 %2325
      %2327 = vadd.xlane.f32.xlu0 %v2200
      %v2328 = vpop.xlane.xlu0 %2327
      %2329 = vadd.xlane.f32.xlu0 %v2202
      %v2330 = vpop.xlane.xlu0 %2329
      %2331 = vadd.xlane.f32.xlu0 %v2204
      %v2332 = vpop.xlane.xlu0 %2331
      %2333 = vadd.xlane.f32.xlu0 %v2206
      %v2334 = vpop.xlane.xlu0 %2333
      %2335 = vadd.xlane.f32.xlu0 %v2208
      %v2336 = vpop.xlane.xlu0 %2335
      %2337 = vadd.xlane.f32.xlu0 %v2210
      %v2338 = vpop.xlane.xlu0 %2337
      %2339 = vadd.xlane.f32.xlu0 %v2212
      %v2340 = vpop.xlane.xlu0 %2339
      %2341 = vadd.xlane.f32.xlu0 %v2214
      %v2342 = vpop.xlane.xlu0 %2341
      %2343 = vadd.xlane.f32.xlu0 %v2216
      %v2344 = vpop.xlane.xlu0 %2343
      %2345 = vadd.xlane.f32.xlu0 %v2218
      %v2346 = vpop.xlane.xlu0 %2345
      %2347 = vadd.xlane.f32.xlu0 %v2220
      %v2348 = vpop.xlane.xlu0 %2347
      %2349 = vadd.xlane.f32.xlu0 %v2222
      %v2350 = vpop.xlane.xlu0 %2349
      %2351 = vadd.xlane.f32.xlu0 %v2224
      %v2352 = vpop.xlane.xlu0 %2351
      %2353 = vadd.xlane.f32.xlu0 %v2226
      %v2354 = vpop.xlane.xlu0 %2353
      %2355 = vadd.xlane.f32.xlu0 %v2228
      %v2356 = vpop.xlane.xlu0 %2355
      %2357 = vadd.xlane.f32.xlu0 %v2230
      %v2358 = vpop.xlane.xlu0 %2357
      %2359 = vadd.xlane.f32.xlu0 %v2232
      %v2360 = vpop.xlane.xlu0 %2359
      %2361 = vadd.xlane.f32.xlu0 %v2234
      %v2362 = vpop.xlane.xlu0 %2361
      %2363 = vadd.xlane.f32.xlu0 %v2236
      %v2364 = vpop.xlane.xlu0 %2363
      %2365 = vadd.xlane.f32.xlu0 %v2238
      %v2366 = vpop.xlane.xlu0 %2365
      %2367 = vadd.xlane.f32.xlu0 %v2240
      %v2368 = vpop.xlane.xlu0 %2367
      %2369 = vadd.xlane.f32.xlu0 %v2242
      %v2370 = vpop.xlane.xlu0 %2369
      %2371 = vadd.xlane.f32.xlu0 %v2244
      %v2372 = vpop.xlane.xlu0 %2371
      %2373 = vadd.xlane.f32.xlu0 %v2246
      %v2374 = vpop.xlane.xlu0 %2373
      %2375 = vadd.xlane.f32.xlu0 %v2248
      %v2376 = vpop.xlane.xlu0 %2375
      %2377 = vadd.xlane.f32.xlu0 %v2250
      %v2378 = vpop.xlane.xlu0 %2377
      %2379 = vadd.xlane.f32.xlu0 %v2252
      %v2380 = vpop.xlane.xlu0 %2379
      %2381 = vadd.xlane.f32.xlu0 %v2254
      %v2382 = vpop.xlane.xlu0 %2381
      %2383 = vadd.xlane.f32.xlu0 %v2256
      %v2384 = vpop.xlane.xlu0 %2383
      %2385 = vadd.xlane.f32.xlu0 %v2258
      %v2386 = vpop.xlane.xlu0 %2385
      %v2387 = vpack.c.bf16 %v2134, %v2132
      %v2388 = vpack.c.bf16 %v2138, %v2136
      %v2389 = vpack.c.bf16 %v2142, %v2140
      %v2390 = vpack.c.bf16 %v2146, %v2144
      %v2391 = vpack.c.bf16 %v2150, %v2148
      %v2392 = vpack.c.bf16 %v2154, %v2152
      %v2393 = vpack.c.bf16 %v2158, %v2156
      %v2394 = vpack.c.bf16 %v2162, %v2160
      %v2395 = vpack.c.bf16 %v2166, %v2164
      %v2396 = vpack.c.bf16 %v2170, %v2168
      %v2397 = vpack.c.bf16 %v2174, %v2172
      %v2398 = vpack.c.bf16 %v2178, %v2176
      %v2399 = vpack.c.bf16 %v2182, %v2180
      %v2400 = vpack.c.bf16 %v2186, %v2184
      %v2401 = vpack.c.bf16 %v2190, %v2188
      %v2402 = vpack.c.bf16 %v2194, %v2192
      %v2403 = vpack.c.bf16 %v2198, %v2196
      %v2404 = vpack.c.bf16 %v2202, %v2200
      %v2405 = vpack.c.bf16 %v2206, %v2204
      %v2406 = vpack.c.bf16 %v2210, %v2208
      %v2407 = vpack.c.bf16 %v2214, %v2212
      %v2408 = vpack.c.bf16 %v2218, %v2216
      %v2409 = vpack.c.bf16 %v2222, %v2220
      %v2410 = vpack.c.bf16 %v2226, %v2224
      %v2411 = vpack.c.bf16 %v2230, %v2228
      %v2412 = vpack.c.bf16 %v2234, %v2232
      %v2413 = vpack.c.bf16 %v2238, %v2236
      %v2414 = vpack.c.bf16 %v2242, %v2240
      %v2415 = vpack.c.bf16 %v2246, %v2244
      %v2416 = vpack.c.bf16 %v2250, %v2248
      %v2417 = vpack.c.bf16 %v2254, %v2252
      %v2418 = vpack.c.bf16 %v2258, %v2256
      %v2419 = vld [vmem:[#allocation4] sm:$0xff]
      %v2420 = vld [vmem:[#allocation4 + $0x8] sm:$0xff]
      %v2421 = vld [vmem:[#allocation4 + $0x10] sm:$0xff]
      %v2422 = vld [vmem:[#allocation4 + $0x18] sm:$0xff]
      %v2423 = vld [vmem:[#allocation4 + $0x20] sm:$0xff]
      %v2424 = vld [vmem:[#allocation4 + $0x28] sm:$0xff]
      %v2425 = vld [vmem:[#allocation4 + $0x30] sm:$0xff]
      %v2426 = vld [vmem:[#allocation4 + $0x38] sm:$0xff]
      %v2427 = vld [vmem:[#allocation4 + $0x40] sm:$0xff]
      %v2428 = vld [vmem:[#allocation4 + $0x48] sm:$0xff]
      %v2429 = vld [vmem:[#allocation4 + $0x50] sm:$0xff]
      %v2430 = vld [vmem:[#allocation4 + $0x58] sm:$0xff]
      %v2431 = vld [vmem:[#allocation4 + $0x60] sm:$0xff]
      %v2432 = vld [vmem:[#allocation4 + $0x68] sm:$0xff]
      %v2433 = vld [vmem:[#allocation4 + $0x70] sm:$0xff]
      %v2434 = vld [vmem:[#allocation4 + $0x78] sm:$0xff]
      %v2435 = vld [vmem:[#allocation4 + $0x80] sm:$0xff]
      %v2436 = vld [vmem:[#allocation4 + $0x88] sm:$0xff]
      %v2437 = vld [vmem:[#allocation4 + $0x90] sm:$0xff]
      %v2438 = vld [vmem:[#allocation4 + $0x98] sm:$0xff]
      %v2439 = vld [vmem:[#allocation4 + $0xa0] sm:$0xff]
      %v2440 = vld [vmem:[#allocation4 + $0xa8] sm:$0xff]
      %v2441 = vld [vmem:[#allocation4 + $0xb0] sm:$0xff]
      %v2442 = vld [vmem:[#allocation4 + $0xb8] sm:$0xff]
      %v2443 = vld [vmem:[#allocation4 + $0xc0] sm:$0xff]
      %v2444 = vld [vmem:[#allocation4 + $0xc8] sm:$0xff]
      %v2445 = vld [vmem:[#allocation4 + $0xd0] sm:$0xff]
      %v2446 = vld [vmem:[#allocation4 + $0xd8] sm:$0xff]
      %v2447 = vld [vmem:[#allocation4 + $0xe0] sm:$0xff]
      %v2448 = vld [vmem:[#allocation4 + $0xe8] sm:$0xff]
      %v2449 = vld [vmem:[#allocation4 + $0xf0] sm:$0xff]
      %v2450 = vld [vmem:[#allocation4 + $0xf8] sm:$0xff]
      %2451 = vmatprep.subr.bf16.mxu0 0
      %2452 = vmatpush1.bf16.msra.mxu0 %v2419
      %2453 = vmatprep.subr.bf16.mxu0 0
      %2454 = vmatpush1.bf16.msra.mxu0 %v2420
      %2455 = vmatprep.subr.bf16.mxu0 0
      %2456 = vmatpush1.bf16.msra.mxu0 %v2421
      %2457 = vmatprep.subr.bf16.mxu0 0
      %2458 = vmatpush1.bf16.msra.mxu0 %v2422
      %2459 = vmatprep.subr.bf16.mxu0 0
      %2460 = vmatpush1.bf16.msra.mxu0 %v2423
      %2461 = vmatprep.subr.bf16.mxu0 0
      %2462 = vmatpush1.bf16.msra.mxu0 %v2424
      %2463 = vmatprep.subr.bf16.mxu0 0
      %2464 = vmatpush1.bf16.msra.mxu0 %v2425
      %2465 = vmatprep.subr.bf16.mxu0 0
      %2466 = vmatpush1.bf16.msra.mxu0 %v2426
      %2467 = vmatprep.subr.bf16.mxu0 0
      %2468 = vmatpush1.bf16.msra.mxu0 0
      %2469 = vmatprep.subr.bf16.mxu0 0
      %2470 = vmatpush1.bf16.msra.mxu0 0
      %2471 = vmatprep.subr.bf16.mxu0 0
      %2472 = vmatpush1.bf16.msra.mxu0 0
      %2473 = vmatprep.subr.bf16.mxu0 0
      %2474 = vmatpush1.bf16.msra.mxu0 0
      %2475 = vmatprep.subr.bf16.mxu0 0
      %2476 = vmatpush1.bf16.msra.mxu0 0
      %2477 = vmatprep.subr.bf16.mxu0 0
      %2478 = vmatpush1.bf16.msra.mxu0 0
      %2479 = vmatprep.subr.bf16.mxu0 0
      %2480 = vmatpush1.bf16.msra.mxu0 0
      %2481 = vmatprep.subr.bf16.mxu0 0
      %2482 = vmatpush1.bf16.msra.mxu0 0
      %2483 = vmatprep.mubr.bf16.mxu0 0
      %2484 = vmatmul.mubr.bf16.gmra.mrb[0].mxu0 %v2387
      %v2485 = vpop.f32.mrb[0].mxu0
      %v2486 = vadd.f32 0.0, %v2485
      %v2487 = vpop.f32.mrb[0].mxu0
      %v2488 = vpop.f32.mrb[0].mxu0
      %v2489 = vadd.f32 0.0, %v2488
      %v2490 = vpop.f32.mrb[0].mxu0
      %2491 = vmatprep.mubr.bf16.mxu0 0
      %2492 = vmatmul.mubr.bf16.gmra.mrb[0].mxu0 %v2388
      %v2493 = vpop.f32.mrb[0].mxu0
      %v2494 = vadd.f32 0.0, %v2493
      %v2495 = vpop.f32.mrb[0].mxu0
      %v2496 = vpop.f32.mrb[0].mxu0
      %v2497 = vadd.f32 0.0, %v2496
      %v2498 = vpop.f32.mrb[0].mxu0
      %2499 = vmatprep.mubr.bf16.mxu0 0
      %2500 = vmatmul.mubr.bf16.gmra.mrb[0].mxu0 %v2389
      %v2501 = vpop.f32.mrb[0].mxu0
      %v2502 = vadd.f32 0.0, %v2501
      %v2503 = vpop.f32.mrb[0].mxu0
      %v2504 = vpop.f32.mrb[0].mxu0
      %v2505 = vadd.f32 0.0, %v2504
      %v2506 = vpop.f32.mrb[0].mxu0
      %2507 = vmatprep.mubr.bf16.mxu0 0
      %2508 = vmatmul.mubr.bf16.gmra.mrb[0].mxu0 %v2390
      %v2509 = vpop.f32.mrb[0].mxu0
      %v2510 = vadd.f32 0.0, %v2509
      %v2511 = vpop.f32.mrb[0].mxu0
      %v2512 = vpop.f32.mrb[0].mxu0
      %v2513 = vadd.f32 0.0, %v2512
      %v2514 = vpop.f32.mrb[0].mxu0
      %2515 = vmatprep.mubr.bf16.mxu0 0
      %2516 = vmatmul.mubr.bf16.gmra.mrb[0].mxu0 %v2391
      %v2517 = vpop.f32.mrb[0].mxu0
      %v2518 = vadd.f32 0.0, %v2517
      %v2519 = vpop.f32.mrb[0].mxu0
      %v2520 = vpop.f32.mrb[0].mxu0
      %v2521 = vadd.f32 0.0, %v2520
      %v2522 = vpop.f32.mrb[0].mxu0
      %2523 = vmatprep.mubr.bf16.mxu0 0
      %2524 = vmatmul.mubr.bf16.gmra.mrb[0].mxu0 %v2392
      %v2525 = vpop.f32.mrb[0].mxu0
      %v2526 = vadd.f32 0.0, %v2525
      %v2527 = vpop.f32.mrb[0].mxu0
      %v2528 = vpop.f32.mrb[0].mxu0
      %v2529 = vadd.f32 0.0, %v2528
      %v2530 = vpop.f32.mrb[0].mxu0
      %2531 = vmatprep.mubr.bf16.mxu0 0
      %2532 = vmatmul.mubr.bf16.gmra.mrb[0].mxu0 %v2393
      %v2533 = vpop.f32.mrb[0].mxu0
      %v2534 = vadd.f32 0.0, %v2533
      %v2535 = vpop.f32.mrb[0].mxu0
      %v2536 = vpop.f32.mrb[0].mxu0
      %v2537 = vadd.f32 0.0, %v2536
      %v2538 = vpop.f32.mrb[0].mxu0
      %2539 = vmatprep.mubr.bf16.mxu0 0
      %2540 = vmatmul.mubr.bf16.gmra.mrb[0].mxu0 %v2394
      %v2541 = vpop.f32.mrb[0].mxu0
      %v2542 = vadd.f32 0.0, %v2541
      %v2543 = vpop.f32.mrb[0].mxu0
      %v2544 = vpop.f32.mrb[0].mxu0
      %v2545 = vadd.f32 0.0, %v2544
      %v2546 = vpop.f32.mrb[0].mxu0
      %2547 = vdwg.mxu0
      %2548 = vmatprep.subr.bf16.mxu0 0
      %2549 = vmatpush1.bf16.msra.mxu0 %v2427
      %2550 = vmatprep.subr.bf16.mxu0 0
      %2551 = vmatpush1.bf16.msra.mxu0 %v2428
      %2552 = vmatprep.subr.bf16.mxu0 0
      %2553 = vmatpush1.bf16.msra.mxu0 %v2429
      %2554 = vmatprep.subr.bf16.mxu0 0
      %2555 = vmatpush1.bf16.msra.mxu0 %v2430
      %2556 = vmatprep.subr.bf16.mxu0 0
      %2557 = vmatpush1.bf16.msra.mxu0 %v2431
      %2558 = vmatprep.subr.bf16.mxu0 0
      %2559 = vmatpush1.bf16.msra.mxu0 %v2432
      %2560 = vmatprep.subr.bf16.mxu0 0
      %2561 = vmatpush1.bf16.msra.mxu0 %v2433
      %2562 = vmatprep.subr.bf16.mxu0 0
      %2563 = vmatpush1.bf16.msra.mxu0 %v2434
      %2564 = vmatprep.subr.bf16.mxu0 0
      %2565 = vmatpush1.bf16.msra.mxu0 0
      %2566 = vmatprep.subr.bf16.mxu0 0
      %2567 = vmatpush1.bf16.msra.mxu0 0
      %2568 = vmatprep.subr.bf16.mxu0 0
      %2569 = vmatpush1.bf16.msra.mxu0 0
      %2570 = vmatprep.subr.bf16.mxu0 0
      %2571 = vmatpush1.bf16.msra.mxu0 0
      %2572 = vmatprep.subr.bf16.mxu0 0
      %2573 = vmatpush1.bf16.msra.mxu0 0
      %2574 = vmatprep.subr.bf16.mxu0 0
      %2575 = vmatpush1.bf16.msra.mxu0 0
      %2576 = vmatprep.subr.bf16.mxu0 0
      %2577 = vmatpush1.bf16.msra.mxu0 0
      %2578 = vmatprep.subr.bf16.mxu0 0
      %2579 = vmatpush1.bf16.msra.mxu0 0
      %2580 = vmatprep.mubr.bf16.mxu0 0
      %2581 = vmatmul.mubr.bf16.gmra.mrb[0].mxu0 %v2395
      %v2582 = vpop.f32.mrb[0].mxu0
      %v2583 = vadd.f32 0.0, %v2582
      %v2584 = vpop.f32.mrb[0].mxu0
      %v2585 = vpop.f32.mrb[0].mxu0
      %v2586 = vadd.f32 0.0, %v2585
      %v2587 = vpop.f32.mrb[0].mxu0
      %2588 = vmatprep.mubr.bf16.mxu0 0
      %2589 = vmatmul.mubr.bf16.gmra.mrb[0].mxu0 %v2396
      %v2590 = vpop.f32.mrb[0].mxu0
      %v2591 = vadd.f32 0.0, %v2590
      %v2592 = vpop.f32.mrb[0].mxu0
      %v2593 = vpop.f32.mrb[0].mxu0
      %v2594 = vadd.f32 0.0, %v2593
      %v2595 = vpop.f32.mrb[0].mxu0
      %2596 = vmatprep.mubr.bf16.mxu0 0
      %2597 = vmatmul.mubr.bf16.gmra.mrb[0].mxu0 %v2397
      %v2598 = vpop.f32.mrb[0].mxu0
      %v2599 = vadd.f32 0.0, %v2598
      %v2600 = vpop.f32.mrb[0].mxu0
      %v2601 = vpop.f32.mrb[0].mxu0
      %v2602 = vadd.f32 0.0, %v2601
      %v2603 = vpop.f32.mrb[0].mxu0
      %2604 = vmatprep.mubr.bf16.mxu0 0
      %2605 = vmatmul.mubr.bf16.gmra.mrb[0].mxu0 %v2398
      %v2606 = vpop.f32.mrb[0].mxu0
      %v2607 = vadd.f32 0.0, %v2606
      %v2608 = vpop.f32.mrb[0].mxu0
      %v2609 = vpop.f32.mrb[0].mxu0
      %v2610 = vadd.f32 0.0, %v2609
      %v2611 = vpop.f32.mrb[0].mxu0
      %2612 = vmatprep.mubr.bf16.mxu0 0
      %2613 = vmatmul.mubr.bf16.gmra.mrb[0].mxu0 %v2399
      %v2614 = vpop.f32.mrb[0].mxu0
      %v2615 = vadd.f32 0.0, %v2614
      %v2616 = vpop.f32.mrb[0].mxu0
      %v2617 = vpop.f32.mrb[0].mxu0
      %v2618 = vadd.f32 0.0, %v2617
      %v2619 = vpop.f32.mrb[0].mxu0
      %2620 = vmatprep.mubr.bf16.mxu0 0
      %2621 = vmatmul.mubr.bf16.gmra.mrb[0].mxu0 %v2400
      %v2622 = vpop.f32.mrb[0].mxu0
      %v2623 = vadd.f32 0.0, %v2622
      %v2624 = vpop.f32.mrb[0].mxu0
      %v2625 = vpop.f32.mrb[0].mxu0
      %v2626 = vadd.f32 0.0, %v2625
      %v2627 = vpop.f32.mrb[0].mxu0
      %2628 = vmatprep.mubr.bf16.mxu0 0
      %2629 = vmatmul.mubr.bf16.gmra.mrb[0].mxu0 %v2401
      %v2630 = vpop.f32.mrb[0].mxu0
      %v2631 = vadd.f32 0.0, %v2630
      %v2632 = vpop.f32.mrb[0].mxu0
      %v2633 = vpop.f32.mrb[0].mxu0
      %v2634 = vadd.f32 0.0, %v2633
      %v2635 = vpop.f32.mrb[0].mxu0
      %2636 = vmatprep.mubr.bf16.mxu0 0
      %2637 = vmatmul.mubr.bf16.gmra.mrb[0].mxu0 %v2402
      %v2638 = vpop.f32.mrb[0].mxu0
      %v2639 = vadd.f32 0.0, %v2638
      %v2640 = vpop.f32.mrb[0].mxu0
      %v2641 = vpop.f32.mrb[0].mxu0
      %v2642 = vadd.f32 0.0, %v2641
      %v2643 = vpop.f32.mrb[0].mxu0
      %2644 = vdwg.mxu0
      %2645 = vmatprep.subr.bf16.mxu0 0
      %2646 = vmatpush1.bf16.msra.mxu0 %v2435
      %2647 = vmatprep.subr.bf16.mxu0 0
      %2648 = vmatpush1.bf16.msra.mxu0 %v2436
      %2649 = vmatprep.subr.bf16.mxu0 0
      %2650 = vmatpush1.bf16.msra.mxu0 %v2437
      %2651 = vmatprep.subr.bf16.mxu0 0
      %2652 = vmatpush1.bf16.msra.mxu0 %v2438
      %2653 = vmatprep.subr.bf16.mxu0 0
      %2654 = vmatpush1.bf16.msra.mxu0 %v2439
      %2655 = vmatprep.subr.bf16.mxu0 0
      %2656 = vmatpush1.bf16.msra.mxu0 %v2440
      %2657 = vmatprep.subr.bf16.mxu0 0
      %2658 = vmatpush1.bf16.msra.mxu0 %v2441
      %2659 = vmatprep.subr.bf16.mxu0 0
      %2660 = vmatpush1.bf16.msra.mxu0 %v2442
      %2661 = vmatprep.subr.bf16.mxu0 0
      %2662 = vmatpush1.bf16.msra.mxu0 0
      %2663 = vmatprep.subr.bf16.mxu0 0
      %2664 = vmatpush1.bf16.msra.mxu0 0
      %2665 = vmatprep.subr.bf16.mxu0 0
      %2666 = vmatpush1.bf16.msra.mxu0 0
      %2667 = vmatprep.subr.bf16.mxu0 0
      %2668 = vmatpush1.bf16.msra.mxu0 0
      %2669 = vmatprep.subr.bf16.mxu0 0
      %2670 = vmatpush1.bf16.msra.mxu0 0
      %2671 = vmatprep.subr.bf16.mxu0 0
      %2672 = vmatpush1.bf16.msra.mxu0 0
      %2673 = vmatprep.subr.bf16.mxu0 0
      %2674 = vmatpush1.bf16.msra.mxu0 0
      %2675 = vmatprep.subr.bf16.mxu0 0
      %2676 = vmatpush1.bf16.msra.mxu0 0
      %2677 = vmatprep.mubr.bf16.mxu0 0
      %2678 = vmatmul.mubr.bf16.gmra.mrb[0].mxu0 %v2403
      %v2679 = vpop.f32.mrb[0].mxu0
      %v2680 = vadd.f32 0.0, %v2679
      %v2681 = vpop.f32.mrb[0].mxu0
      %v2682 = vpop.f32.mrb[0].mxu0
      %v2683 = vadd.f32 0.0, %v2682
      %v2684 = vpop.f32.mrb[0].mxu0
      %2685 = vmatprep.mubr.bf16.mxu0 0
      %2686 = vmatmul.mubr.bf16.gmra.mrb[0].mxu0 %v2404
      %v2687 = vpop.f32.mrb[0].mxu0
      %v2688 = vadd.f32 0.0, %v2687
      %v2689 = vpop.f32.mrb[0].mxu0
      %v2690 = vpop.f32.mrb[0].mxu0
      %v2691 = vadd.f32 0.0, %v2690
      %v2692 = vpop.f32.mrb[0].mxu0
      %2693 = vmatprep.mubr.bf16.mxu0 0
      %2694 = vmatmul.mubr.bf16.gmra.mrb[0].mxu0 %v2405
      %v2695 = vpop.f32.mrb[0].mxu0
      %v2696 = vadd.f32 0.0, %v2695
      %v2697 = vpop.f32.mrb[0].mxu0
      %v2698 = vpop.f32.mrb[0].mxu0
      %v2699 = vadd.f32 0.0, %v2698
      %v2700 = vpop.f32.mrb[0].mxu0
      %2701 = vmatprep.mubr.bf16.mxu0 0
      %2702 = vmatmul.mubr.bf16.gmra.mrb[0].mxu0 %v2406
      %v2703 = vpop.f32.mrb[0].mxu0
      %v2704 = vadd.f32 0.0, %v2703
      %v2705 = vpop.f32.mrb[0].mxu0
      %v2706 = vpop.f32.mrb[0].mxu0
      %v2707 = vadd.f32 0.0, %v2706
      %v2708 = vpop.f32.mrb[0].mxu0
      %2709 = vmatprep.mubr.bf16.mxu0 0
      %2710 = vmatmul.mubr.bf16.gmra.mrb[0].mxu0 %v2407
      %v2711 = vpop.f32.mrb[0].mxu0
      %v2712 = vadd.f32 0.0, %v2711
      %v2713 = vpop.f32.mrb[0].mxu0
      %v2714 = vpop.f32.mrb[0].mxu0
      %v2715 = vadd.f32 0.0, %v2714
      %v2716 = vpop.f32.mrb[0].mxu0
      %2717 = vmatprep.mubr.bf16.mxu0 0
      %2718 = vmatmul.mubr.bf16.gmra.mrb[0].mxu0 %v2408
      %v2719 = vpop.f32.mrb[0].mxu0
      %v2720 = vadd.f32 0.0, %v2719
      %v2721 = vpop.f32.mrb[0].mxu0
      %v2722 = vpop.f32.mrb[0].mxu0
      %v2723 = vadd.f32 0.0, %v2722
      %v2724 = vpop.f32.mrb[0].mxu0
      %2725 = vmatprep.mubr.bf16.mxu0 0
      %2726 = vmatmul.mubr.bf16.gmra.mrb[0].mxu0 %v2409
      %v2727 = vpop.f32.mrb[0].mxu0
      %v2728 = vadd.f32 0.0, %v2727
      %v2729 = vpop.f32.mrb[0].mxu0
      %v2730 = vpop.f32.mrb[0].mxu0
      %v2731 = vadd.f32 0.0, %v2730
      %v2732 = vpop.f32.mrb[0].mxu0
      %2733 = vmatprep.mubr.bf16.mxu0 0
      %2734 = vmatmul.mubr.bf16.gmra.mrb[0].mxu0 %v2410
      %v2735 = vpop.f32.mrb[0].mxu0
      %v2736 = vadd.f32 0.0, %v2735
      %v2737 = vpop.f32.mrb[0].mxu0
      %v2738 = vpop.f32.mrb[0].mxu0
      %v2739 = vadd.f32 0.0, %v2738
      %v2740 = vpop.f32.mrb[0].mxu0
      %2741 = vdwg.mxu0
      %2742 = vmatprep.subr.bf16.mxu0 0
      %2743 = vmatpush1.bf16.msra.mxu0 %v2443
      %2744 = vmatprep.subr.bf16.mxu0 0
      %2745 = vmatpush1.bf16.msra.mxu0 %v2444
      %2746 = vmatprep.subr.bf16.mxu0 0
      %2747 = vmatpush1.bf16.msra.mxu0 %v2445
      %2748 = vmatprep.subr.bf16.mxu0 0
      %2749 = vmatpush1.bf16.msra.mxu0 %v2446
      %2750 = vmatprep.subr.bf16.mxu0 0
      %2751 = vmatpush1.bf16.msra.mxu0 %v2447
      %2752 = vmatprep.subr.bf16.mxu0 0
      %2753 = vmatpush1.bf16.msra.mxu0 %v2448
      %2754 = vmatprep.subr.bf16.mxu0 0
      %2755 = vmatpush1.bf16.msra.mxu0 %v2449
      %2756 = vmatprep.subr.bf16.mxu0 0
      %2757 = vmatpush1.bf16.msra.mxu0 %v2450
      %2758 = vmatprep.subr.bf16.mxu0 0
      %2759 = vmatpush1.bf16.msra.mxu0 0
      %2760 = vmatprep.subr.bf16.mxu0 0
      %2761 = vmatpush1.bf16.msra.mxu0 0
      %2762 = vmatprep.subr.bf16.mxu0 0
      %2763 = vmatpush1.bf16.msra.mxu0 0
      %2764 = vmatprep.subr.bf16.mxu0 0
      %2765 = vmatpush1.bf16.msra.mxu0 0
      %2766 = vmatprep.subr.bf16.mxu0 0
      %2767 = vmatpush1.bf16.msra.mxu0 0
      %2768 = vmatprep.subr.bf16.mxu0 0
      %2769 = vmatpush1.bf16.msra.mxu0 0
      %2770 = vmatprep.subr.bf16.mxu0 0
      %2771 = vmatpush1.bf16.msra.mxu0 0
      %2772 = vmatprep.subr.bf16.mxu0 0
      %2773 = vmatpush1.bf16.msra.mxu0 0
      %2774 = vmatprep.mubr.bf16.mxu0 0
      %2775 = vmatmul.mubr.bf16.gmra.mrb[0].mxu0 %v2411
      %v2776 = vpop.f32.mrb[0].mxu0
      %v2777 = vadd.f32 0.0, %v2776
      %v2778 = vpop.f32.mrb[0].mxu0
      %v2779 = vpop.f32.mrb[0].mxu0
      %v2780 = vadd.f32 0.0, %v2779
      %v2781 = vpop.f32.mrb[0].mxu0
      %2782 = vmatprep.mubr.bf16.mxu0 0
      %2783 = vmatmul.mubr.bf16.gmra.mrb[0].mxu0 %v2412
      %v2784 = vpop.f32.mrb[0].mxu0
      %v2785 = vadd.f32 0.0, %v2784
      %v2786 = vpop.f32.mrb[0].mxu0
      %v2787 = vpop.f32.mrb[0].mxu0
      %v2788 = vadd.f32 0.0, %v2787
      %v2789 = vpop.f32.mrb[0].mxu0
      %2790 = vmatprep.mubr.bf16.mxu0 0
      %2791 = vmatmul.mubr.bf16.gmra.mrb[0].mxu0 %v2413
      %v2792 = vpop.f32.mrb[0].mxu0
      %v2793 = vadd.f32 0.0, %v2792
      %v2794 = vpop.f32.mrb[0].mxu0
      %v2795 = vpop.f32.mrb[0].mxu0
      %v2796 = vadd.f32 0.0, %v2795
      %v2797 = vpop.f32.mrb[0].mxu0
      %2798 = vmatprep.mubr.bf16.mxu0 0
      %2799 = vmatmul.mubr.bf16.gmra.mrb[0].mxu0 %v2414
      %v2800 = vpop.f32.mrb[0].mxu0
      %v2801 = vadd.f32 0.0, %v2800
      %v2802 = vpop.f32.mrb[0].mxu0
      %v2803 = vpop.f32.mrb[0].mxu0
      %v2804 = vadd.f32 0.0, %v2803
      %v2805 = vpop.f32.mrb[0].mxu0
      %2806 = vmatprep.mubr.bf16.mxu0 0
      %2807 = vmatmul.mubr.bf16.gmra.mrb[0].mxu0 %v2415
      %v2808 = vpop.f32.mrb[0].mxu0
      %v2809 = vadd.f32 0.0, %v2808
      %v2810 = vpop.f32.mrb[0].mxu0
      %v2811 = vpop.f32.mrb[0].mxu0
      %v2812 = vadd.f32 0.0, %v2811
      %v2813 = vpop.f32.mrb[0].mxu0
      %2814 = vmatprep.mubr.bf16.mxu0 0
      %2815 = vmatmul.mubr.bf16.gmra.mrb[0].mxu0 %v2416
      %v2816 = vpop.f32.mrb[0].mxu0
      %v2817 = vadd.f32 0.0, %v2816
      %v2818 = vpop.f32.mrb[0].mxu0
      %v2819 = vpop.f32.mrb[0].mxu0
      %v2820 = vadd.f32 0.0, %v2819
      %v2821 = vpop.f32.mrb[0].mxu0
      %2822 = vmatprep.mubr.bf16.mxu0 0
      %2823 = vmatmul.mubr.bf16.gmra.mrb[0].mxu0 %v2417
      %v2824 = vpop.f32.mrb[0].mxu0
      %v2825 = vadd.f32 0.0, %v2824
      %v2826 = vpop.f32.mrb[0].mxu0
      %v2827 = vpop.f32.mrb[0].mxu0
      %v2828 = vadd.f32 0.0, %v2827
      %v2829 = vpop.f32.mrb[0].mxu0
      %2830 = vmatprep.mubr.bf16.mxu0 0
      %2831 = vmatmul.mubr.bf16.gmra.mrb[0].mxu0 %v2418
      %v2832 = vpop.f32.mrb[0].mxu0
      %v2833 = vadd.f32 0.0, %v2832
      %v2834 = vpop.f32.mrb[0].mxu0
      %v2835 = vpop.f32.mrb[0].mxu0
      %v2836 = vadd.f32 0.0, %v2835
      %v2837 = vpop.f32.mrb[0].mxu0
      %2838 = vdwg.mxu0
      %v2839 = vrcp.pop %v2260
      %v2840 = vrcp.pop %v2262
      %v2841 = vrcp.pop %v2264
      %v2842 = vrcp.pop %v2266
      %v2843 = vrcp.pop %v2268
      %v2844 = vrcp.pop %v2270
      %v2845 = vrcp.pop %v2272
      %v2846 = vrcp.pop %v2274
      %v2847 = vrcp.pop %v2276
      %v2848 = vrcp.pop %v2278
      %v2849 = vrcp.pop %v2280
      %v2850 = vrcp.pop %v2282
      %v2851 = vrcp.pop %v2284
      %v2852 = vrcp.pop %v2286
      %v2853 = vrcp.pop %v2288
      %v2854 = vrcp.pop %v2290
      %v2855 = vrcp.pop %v2292
      %v2856 = vrcp.pop %v2294
      %v2857 = vrcp.pop %v2296
      %v2858 = vrcp.pop %v2298
      %v2859 = vrcp.pop %v2300
      %v2860 = vrcp.pop %v2302
      %v2861 = vrcp.pop %v2304
      %v2862 = vrcp.pop %v2306
      %v2863 = vrcp.pop %v2308
      %v2864 = vrcp.pop %v2310
      %v2865 = vrcp.pop %v2312
      %v2866 = vrcp.pop %v2314
      %v2867 = vrcp.pop %v2316
      %v2868 = vrcp.pop %v2318
      %v2869 = vrcp.pop %v2320
      %v2870 = vrcp.pop %v2322
      %v2871 = vrcp.pop %v2324
      %v2872 = vrcp.pop %v2326
      %v2873 = vrcp.pop %v2328
      %v2874 = vrcp.pop %v2330
      %v2875 = vrcp.pop %v2332
      %v2876 = vrcp.pop %v2334
      %v2877 = vrcp.pop %v2336
      %v2878 = vrcp.pop %v2338
      %v2879 = vrcp.pop %v2340
      %v2880 = vrcp.pop %v2342
      %v2881 = vrcp.pop %v2344
      %v2882 = vrcp.pop %v2346
      %v2883 = vrcp.pop %v2348
      %v2884 = vrcp.pop %v2350
      %v2885 = vrcp.pop %v2352
      %v2886 = vrcp.pop %v2354
      %v2887 = vrcp.pop %v2356
      %v2888 = vrcp.pop %v2358
      %v2889 = vrcp.pop %v2360
      %v2890 = vrcp.pop %v2362
      %v2891 = vrcp.pop %v2364
      %v2892 = vrcp.pop %v2366
      %v2893 = vrcp.pop %v2368
      %v2894 = vrcp.pop %v2370
      %v2895 = vrcp.pop %v2372
      %v2896 = vrcp.pop %v2374
      %v2897 = vrcp.pop %v2376
      %v2898 = vrcp.pop %v2378
      %v2899 = vrcp.pop %v2380
      %v2900 = vrcp.pop %v2382
      %v2901 = vrcp.pop %v2384
      %v2902 = vrcp.pop %v2386
      %v2903 = vmul.f32 %v2486, %v2839
      %v2904 = vmul.f32 %v2489, %v2840
      %v2905 = vmul.f32 %v2494, %v2841
      %v2906 = vmul.f32 %v2497, %v2842
      %v2907 = vmul.f32 %v2502, %v2843
      %v2908 = vmul.f32 %v2505, %v2844
      %v2909 = vmul.f32 %v2510, %v2845
      %v2910 = vmul.f32 %v2513, %v2846
      %v2911 = vmul.f32 %v2518, %v2847
      %v2912 = vmul.f32 %v2521, %v2848
      %v2913 = vmul.f32 %v2526, %v2849
      %v2914 = vmul.f32 %v2529, %v2850
      %v2915 = vmul.f32 %v2534, %v2851
      %v2916 = vmul.f32 %v2537, %v2852
      %v2917 = vmul.f32 %v2542, %v2853
      %v2918 = vmul.f32 %v2545, %v2854
      %v2919 = vmul.f32 %v2583, %v2855
      %v2920 = vmul.f32 %v2586, %v2856
      %v2921 = vmul.f32 %v2591, %v2857
      %v2922 = vmul.f32 %v2594, %v2858
      %v2923 = vmul.f32 %v2599, %v2859
      %v2924 = vmul.f32 %v2602, %v2860
      %v2925 = vmul.f32 %v2607, %v2861
      %v2926 = vmul.f32 %v2610, %v2862
      %v2927 = vmul.f32 %v2615, %v2863
      %v2928 = vmul.f32 %v2618, %v2864
      %v2929 = vmul.f32 %v2623, %v2865
      %v2930 = vmul.f32 %v2626, %v2866
      %v2931 = vmul.f32 %v2631, %v2867
      %v2932 = vmul.f32 %v2634, %v2868
      %v2933 = vmul.f32 %v2639, %v2869
      %v2934 = vmul.f32 %v2642, %v2870
      %v2935 = vmul.f32 %v2680, %v2871
      %v2936 = vmul.f32 %v2683, %v2872
      %v2937 = vmul.f32 %v2688, %v2873
      %v2938 = vmul.f32 %v2691, %v2874
      %v2939 = vmul.f32 %v2696, %v2875
      %v2940 = vmul.f32 %v2699, %v2876
      %v2941 = vmul.f32 %v2704, %v2877
      %v2942 = vmul.f32 %v2707, %v2878
      %v2943 = vmul.f32 %v2712, %v2879
      %v2944 = vmul.f32 %v2715, %v2880
      %v2945 = vmul.f32 %v2720, %v2881
      %v2946 = vmul.f32 %v2723, %v2882
      %v2947 = vmul.f32 %v2728, %v2883
      %v2948 = vmul.f32 %v2731, %v2884
      %v2949 = vmul.f32 %v2736, %v2885
      %v2950 = vmul.f32 %v2739, %v2886
      %v2951 = vmul.f32 %v2777, %v2887
      %v2952 = vmul.f32 %v2780, %v2888
      %v2953 = vmul.f32 %v2785, %v2889
      %v2954 = vmul.f32 %v2788, %v2890
      %v2955 = vmul.f32 %v2793, %v2891
      %v2956 = vmul.f32 %v2796, %v2892
      %v2957 = vmul.f32 %v2801, %v2893
      %v2958 = vmul.f32 %v2804, %v2894
      %v2959 = vmul.f32 %v2809, %v2895
      %v2960 = vmul.f32 %v2812, %v2896
      %v2961 = vmul.f32 %v2817, %v2897
      %v2962 = vmul.f32 %v2820, %v2898
      %v2963 = vmul.f32 %v2825, %v2899
      %v2964 = vmul.f32 %v2828, %v2900
      %v2965 = vmul.f32 %v2833, %v2901
      %v2966 = vmul.f32 %v2836, %v2902
      %v2967 = vpack.c.bf16 %v2904, %v2903
      %v2968 = vpack.c.bf16 %v2906, %v2905
      %v2969 = vpack.c.bf16 %v2908, %v2907
      %v2970 = vpack.c.bf16 %v2910, %v2909
      %v2971 = vpack.c.bf16 %v2912, %v2911
      %v2972 = vpack.c.bf16 %v2914, %v2913
      %v2973 = vpack.c.bf16 %v2916, %v2915
      %v2974 = vpack.c.bf16 %v2918, %v2917
      %2975 = vst.msk [vmem:[#allocation5] sm:$0xff] %vm901, %v2967
      %2976 = vst.msk [vmem:[#allocation5 + $0x8] sm:$0xff] %vm901, %v2968
      %2977 = vst.msk [vmem:[#allocation5 + $0x10] sm:$0xff] %vm901, %v2969
      %2978 = vst.msk [vmem:[#allocation5 + $0x18] sm:$0xff] %vm901, %v2970
      %2979 = vst.msk [vmem:[#allocation5 + $0x20] sm:$0xff] %vm901, %v2971
      %2980 = vst.msk [vmem:[#allocation5 + $0x28] sm:$0xff] %vm901, %v2972
      %2981 = vst.msk [vmem:[#allocation5 + $0x30] sm:$0xff] %vm901, %v2973
      %2982 = vst.msk [vmem:[#allocation5 + $0x38] sm:$0xff] %vm901, %v2974
      %v2983 = vpack.c.bf16 %v2920, %v2919
      %v2984 = vpack.c.bf16 %v2922, %v2921
      %v2985 = vpack.c.bf16 %v2924, %v2923
      %v2986 = vpack.c.bf16 %v2926, %v2925
      %v2987 = vpack.c.bf16 %v2928, %v2927
      %v2988 = vpack.c.bf16 %v2930, %v2929
      %v2989 = vpack.c.bf16 %v2932, %v2931
      %v2990 = vpack.c.bf16 %v2934, %v2933
      %2999 = vrot.lane.b32.xlu0 %v2983, 8
      %v3000 = vpop.permute.xlu0 %2999
      %3001 = vrot.lane.b32.xlu0 %v2984, 8
      %v3002 = vpop.permute.xlu0 %3001
      %3003 = vrot.lane.b32.xlu0 %v2985, 8
      %v3004 = vpop.permute.xlu0 %3003
      %3005 = vrot.lane.b32.xlu0 %v2986, 8
      %v3006 = vpop.permute.xlu0 %3005
      %3007 = vrot.lane.b32.xlu0 %v2987, 8
      %v3008 = vpop.permute.xlu0 %3007
      %3009 = vrot.lane.b32.xlu0 %v2988, 8
      %v3010 = vpop.permute.xlu0 %3009
      %3011 = vrot.lane.b32.xlu0 %v2989, 8
      %v3012 = vpop.permute.xlu0 %3011
      %3013 = vrot.lane.b32.xlu0 %v2990, 8
      %v3014 = vpop.permute.xlu0 %3013
      %vm3023 = vcmask 130112
      %3024 = vst.msk [vmem:[#allocation5] sm:$0xff] %vm3023, %v3000
      %3025 = vst.msk [vmem:[#allocation5 + $0x8] sm:$0xff] %vm3023, %v3002
      %3026 = vst.msk [vmem:[#allocation5 + $0x10] sm:$0xff] %vm3023, %v3004
      %3027 = vst.msk [vmem:[#allocation5 + $0x18] sm:$0xff] %vm3023, %v3006
      %3028 = vst.msk [vmem:[#allocation5 + $0x20] sm:$0xff] %vm3023, %v3008
      %3029 = vst.msk [vmem:[#allocation5 + $0x28] sm:$0xff] %vm3023, %v3010
      %3030 = vst.msk [vmem:[#allocation5 + $0x30] sm:$0xff] %vm3023, %v3012
      %3031 = vst.msk [vmem:[#allocation5 + $0x38] sm:$0xff] %vm3023, %v3014
      %v3032 = vpack.c.bf16 %v2936, %v2935
      %v3033 = vpack.c.bf16 %v2938, %v2937
      %v3034 = vpack.c.bf16 %v2940, %v2939
      %v3035 = vpack.c.bf16 %v2942, %v2941
      %v3036 = vpack.c.bf16 %v2944, %v2943
      %v3037 = vpack.c.bf16 %v2946, %v2945
      %v3038 = vpack.c.bf16 %v2948, %v2947
      %v3039 = vpack.c.bf16 %v2950, %v2949
      %3048 = vrot.lane.b32.xlu0 %v3032, 16
      %v3049 = vpop.permute.xlu0 %3048
      %3050 = vrot.lane.b32.xlu0 %v3033, 16
      %v3051 = vpop.permute.xlu0 %3050
      %3052 = vrot.lane.b32.xlu0 %v3034, 16
      %v3053 = vpop.permute.xlu0 %3052
      %3054 = vrot.lane.b32.xlu0 %v3035, 16
      %v3055 = vpop.permute.xlu0 %3054
      %3056 = vrot.lane.b32.xlu0 %v3036, 16
      %v3057 = vpop.permute.xlu0 %3056
      %3058 = vrot.lane.b32.xlu0 %v3037, 16
      %v3059 = vpop.permute.xlu0 %3058
      %3060 = vrot.lane.b32.xlu0 %v3038, 16
      %v3061 = vpop.permute.xlu0 %3060
      %3062 = vrot.lane.b32.xlu0 %v3039, 16
      %v3063 = vpop.permute.xlu0 %3062
      %vm3072 = vcmask 195712
      %3073 = vst.msk [vmem:[#allocation5] sm:$0xff] %vm3072, %v3049
      %3074 = vst.msk [vmem:[#allocation5 + $0x8] sm:$0xff] %vm3072, %v3051
      %3075 = vst.msk [vmem:[#allocation5 + $0x10] sm:$0xff] %vm3072, %v3053
      %3076 = vst.msk [vmem:[#allocation5 + $0x18] sm:$0xff] %vm3072, %v3055
      %3077 = vst.msk [vmem:[#allocation5 + $0x20] sm:$0xff] %vm3072, %v3057
      %3078 = vst.msk [vmem:[#allocation5 + $0x28] sm:$0xff] %vm3072, %v3059
      %3079 = vst.msk [vmem:[#allocation5 + $0x30] sm:$0xff] %vm3072, %v3061
      %3080 = vst.msk [vmem:[#allocation5 + $0x38] sm:$0xff] %vm3072, %v3063
      %v3081 = vpack.c.bf16 %v2952, %v2951
      %v3082 = vpack.c.bf16 %v2954, %v2953
      %v3083 = vpack.c.bf16 %v2956, %v2955
      %v3084 = vpack.c.bf16 %v2958, %v2957
      %v3085 = vpack.c.bf16 %v2960, %v2959
      %v3086 = vpack.c.bf16 %v2962, %v2961
      %v3087 = vpack.c.bf16 %v2964, %v2963
      %v3088 = vpack.c.bf16 %v2966, %v2965
      %3097 = vrot.lane.b32.xlu0 %v3081, 24
      %v3098 = vpop.permute.xlu0 %3097
      %3099 = vrot.lane.b32.xlu0 %v3082, 24
      %v3100 = vpop.permute.xlu0 %3099
      %3101 = vrot.lane.b32.xlu0 %v3083, 24
      %v3102 = vpop.permute.xlu0 %3101
      %3103 = vrot.lane.b32.xlu0 %v3084, 24
      %v3104 = vpop.permute.xlu0 %3103
      %3105 = vrot.lane.b32.xlu0 %v3085, 24
      %v3106 = vpop.permute.xlu0 %3105
      %3107 = vrot.lane.b32.xlu0 %v3086, 24
      %v3108 = vpop.permute.xlu0 %3107
      %3109 = vrot.lane.b32.xlu0 %v3087, 24
      %v3110 = vpop.permute.xlu0 %3109
      %3111 = vrot.lane.b32.xlu0 %v3088, 24
      %v3112 = vpop.permute.xlu0 %3111
      %vm3121 = vcmask 261312
      %3122 = vst.msk [vmem:[#allocation5] sm:$0xff] %vm3121, %v3098
      %3123 = vst.msk [vmem:[#allocation5 + $0x8] sm:$0xff] %vm3121, %v3100
      %3124 = vst.msk [vmem:[#allocation5 + $0x10] sm:$0xff] %vm3121, %v3102
      %3125 = vst.msk [vmem:[#allocation5 + $0x18] sm:$0xff] %vm3121, %v3104
      %3126 = vst.msk [vmem:[#allocation5 + $0x20] sm:$0xff] %vm3121, %v3106
      %3127 = vst.msk [vmem:[#allocation5 + $0x28] sm:$0xff] %vm3121, %v3108
      %3128 = vst.msk [vmem:[#allocation5 + $0x30] sm:$0xff] %vm3121, %v3110
      %3129 = vst.msk [vmem:[#allocation5 + $0x38] sm:$0xff] %vm3121, %v3112
      %v3130 = vld [vmem:[#allocation5] sm:$0xff]
      %v3131 = vld [vmem:[#allocation5 + $0x8] sm:$0xff]
      %v3132 = vld [vmem:[#allocation5 + $0x10] sm:$0xff]
      %v3133 = vld [vmem:[#allocation5 + $0x18] sm:$0xff]
      %v3134 = vld [vmem:[#allocation5 + $0x20] sm:$0xff]
      %v3135 = vld [vmem:[#allocation5 + $0x28] sm:$0xff]
      %v3136 = vld [vmem:[#allocation5 + $0x30] sm:$0xff]
      %v3137 = vld [vmem:[#allocation5 + $0x38] sm:$0xff]
      %v3138 = vld [vmem:[%s6] sm:$0xf]
      %v3139 = vld [vmem:[%s6 + $0x4] sm:$0xf]
      %v3140 = vld [vmem:[%s6 + $0x8] sm:$0xf]
      %v3141 = vld [vmem:[%s6 + $0xc] sm:$0xf]
      %v3142 = vld [vmem:[%s7] sm:$0x1]
      %v3144 = vlaneseq
      %v3145 = vshrl.u32 %v3144, 7
      %v3146 = vsub.s32 0, %v3145
      %v3147 = vrot.slane %v3142, %v3146
      %v3153 = vunpack.c.l.b16 %v3138
      %v3154 = vunpack.c.l.b16 %v3139
      %v3155 = vunpack.c.l.b16 %v3140
      %v3156 = vunpack.c.l.b16 %v3141
      %v3157 = vpack.c.b16 %v3154, %v3153
      %v3158 = vpack.c.b16 %v3156, %v3155
      %v3162 = vsel %vm485, %v3130, 0
      %v3165 = vsel %vm485, %v3131, 0
      %v3168 = vsel %vm485, %v3132, 0
      %v3171 = vsel %vm485, %v3133, 0
      %v3174 = vsel %vm485, %v3134, 0
      %v3177 = vsel %vm485, %v3135, 0
      %v3180 = vsel %vm485, %v3136, 0
      %v3183 = vsel %vm485, %v3137, 0
      %3185 = vmatprep.subr.bf16.mxu0 0
      %3186 = vmatpush1.bf16.msra.mxu0 %v3157
      %3187 = vmatprep.subr.bf16.mxu0 0
      %3188 = vmatpush1.bf16.msra.mxu0 %v3158
      %3189 = vmatprep.subr.bf16.mxu0 0
      %3190 = vmatpush1.bf16.msra.mxu0 0
      %3191 = vmatprep.subr.bf16.mxu0 0
      %3192 = vmatpush1.bf16.msra.mxu0 0
      %3193 = vmatprep.subr.bf16.mxu0 0
      %3194 = vmatpush1.bf16.msra.mxu0 0
      %3195 = vmatprep.subr.bf16.mxu0 0
      %3196 = vmatpush1.bf16.msra.mxu0 0
      %3197 = vmatprep.subr.bf16.mxu0 0
      %3198 = vmatpush1.bf16.msra.mxu0 0
      %3199 = vmatprep.subr.bf16.mxu0 0
      %3200 = vmatpush1.bf16.msra.mxu0 0
      %3201 = vmatprep.subr.bf16.mxu0 0
      %3202 = vmatpush1.bf16.msra.mxu0 0
      %3203 = vmatprep.subr.bf16.mxu0 0
      %3204 = vmatpush1.bf16.msra.mxu0 0
      %3205 = vmatprep.subr.bf16.mxu0 0
      %3206 = vmatpush1.bf16.msra.mxu0 0
      %3207 = vmatprep.subr.bf16.mxu0 0
      %3208 = vmatpush1.bf16.msra.mxu0 0
      %3209 = vmatprep.subr.bf16.mxu0 0
      %3210 = vmatpush1.bf16.msra.mxu0 0
      %3211 = vmatprep.subr.bf16.mxu0 0
      %3212 = vmatpush1.bf16.msra.mxu0 0
      %3213 = vmatprep.subr.bf16.mxu0 0
      %3214 = vmatpush1.bf16.msra.mxu0 0
      %3215 = vmatprep.subr.bf16.mxu0 0
      %3216 = vmatpush1.bf16.msra.mxu0 0
      %3217 = vmatprep.mubr.bf16.mxu0 0
      %3218 = vmatmul.mubr.bf16.gmra.mrb[0].mxu0 %v3162
      %v3219 = vpop.f32.mrb[0].mxu0
      %v3220 = vadd.f32 %v3147, %v3219
      %v3221 = vpop.f32.mrb[0].mxu0
      %v3222 = vpop.f32.mrb[0].mxu0
      %v3223 = vadd.f32 %v3147, %v3222
      %v3224 = vpop.f32.mrb[0].mxu0
      %3225 = vmatprep.mubr.bf16.mxu0 0
      %3226 = vmatmul.mubr.bf16.gmra.mrb[0].mxu0 %v3165
      %v3227 = vpop.f32.mrb[0].mxu0
      %v3228 = vadd.f32 %v3147, %v3227
      %v3229 = vpop.f32.mrb[0].mxu0
      %v3230 = vpop.f32.mrb[0].mxu0
      %v3231 = vadd.f32 %v3147, %v3230
      %v3232 = vpop.f32.mrb[0].mxu0
      %3233 = vmatprep.mubr.bf16.mxu0 0
      %3234 = vmatmul.mubr.bf16.gmra.mrb[0].mxu0 %v3168
      %v3235 = vpop.f32.mrb[0].mxu0
      %v3236 = vadd.f32 %v3147, %v3235
      %v3237 = vpop.f32.mrb[0].mxu0
      %v3238 = vpop.f32.mrb[0].mxu0
      %v3239 = vadd.f32 %v3147, %v3238
      %v3240 = vpop.f32.mrb[0].mxu0
      %3241 = vmatprep.mubr.bf16.mxu0 0
      %3242 = vmatmul.mubr.bf16.gmra.mrb[0].mxu0 %v3171
      %v3243 = vpop.f32.mrb[0].mxu0
      %v3244 = vadd.f32 %v3147, %v3243
      %v3245 = vpop.f32.mrb[0].mxu0
      %v3246 = vpop.f32.mrb[0].mxu0
      %v3247 = vadd.f32 %v3147, %v3246
      %v3248 = vpop.f32.mrb[0].mxu0
      %3249 = vmatprep.mubr.bf16.mxu0 0
      %3250 = vmatmul.mubr.bf16.gmra.mrb[0].mxu0 %v3174
      %v3251 = vpop.f32.mrb[0].mxu0
      %v3252 = vadd.f32 %v3147, %v3251
      %v3253 = vpop.f32.mrb[0].mxu0
      %v3254 = vpop.f32.mrb[0].mxu0
      %v3255 = vadd.f32 %v3147, %v3254
      %v3256 = vpop.f32.mrb[0].mxu0
      %3257 = vmatprep.mubr.bf16.mxu0 0
      %3258 = vmatmul.mubr.bf16.gmra.mrb[0].mxu0 %v3177
      %v3259 = vpop.f32.mrb[0].mxu0
      %v3260 = vadd.f32 %v3147, %v3259
      %v3261 = vpop.f32.mrb[0].mxu0
      %v3262 = vpop.f32.mrb[0].mxu0
      %v3263 = vadd.f32 %v3147, %v3262
      %v3264 = vpop.f32.mrb[0].mxu0
      %3265 = vmatprep.mubr.bf16.mxu0 0
      %3266 = vmatmul.mubr.bf16.gmra.mrb[0].mxu0 %v3180
      %v3267 = vpop.f32.mrb[0].mxu0
      %v3268 = vadd.f32 %v3147, %v3267
      %v3269 = vpop.f32.mrb[0].mxu0
      %v3270 = vpop.f32.mrb[0].mxu0
      %v3271 = vadd.f32 %v3147, %v3270
      %v3272 = vpop.f32.mrb[0].mxu0
      %3273 = vmatprep.mubr.bf16.mxu0 0
      %3274 = vmatmul.mubr.bf16.gmra.mrb[0].mxu0 %v3183
      %v3275 = vpop.f32.mrb[0].mxu0
      %v3276 = vadd.f32 %v3147, %v3275
      %v3277 = vpop.f32.mrb[0].mxu0
      %v3278 = vpop.f32.mrb[0].mxu0
      %v3279 = vadd.f32 %v3147, %v3278
      %v3280 = vpop.f32.mrb[0].mxu0
      %3281 = vdwg.mxu0
      %v3282 = vadd.f32 %v3220, %v469
      %v3283 = vadd.f32 %v3223, %v470
      %v3284 = vadd.f32 %v3228, %v471
      %v3285 = vadd.f32 %v3231, %v472
      %v3286 = vadd.f32 %v3236, %v473
      %v3287 = vadd.f32 %v3239, %v474
      %v3288 = vadd.f32 %v3244, %v475
      %v3289 = vadd.f32 %v3247, %v476
      %v3290 = vadd.f32 %v3252, %v477
      %v3291 = vadd.f32 %v3255, %v478
      %v3292 = vadd.f32 %v3260, %v479
      %v3293 = vadd.f32 %v3263, %v480
      %v3294 = vadd.f32 %v3268, %v481
      %v3295 = vadd.f32 %v3271, %v482
      %v3296 = vadd.f32 %v3276, %v483
      %v3297 = vadd.f32 %v3279, %v484
      %v3298 = vsel %vm485, %v3282, 0.0
      %3299 = vadd.xlane.f32.xlu0 %v3298
      %v3300 = vpop.xlane.xlu0 %3299
      %v3301 = vsel %vm485, %v3283, 0.0
      %3302 = vadd.xlane.f32.xlu0 %v3301
      %v3303 = vpop.xlane.xlu0 %3302
      %v3304 = vsel %vm485, %v3284, 0.0
      %3305 = vadd.xlane.f32.xlu0 %v3304
      %v3306 = vpop.xlane.xlu0 %3305
      %v3307 = vsel %vm485, %v3285, 0.0
      %3308 = vadd.xlane.f32.xlu0 %v3307
      %v3309 = vpop.xlane.xlu0 %3308
      %v3310 = vsel %vm485, %v3286, 0.0
      %3311 = vadd.xlane.f32.xlu0 %v3310
      %v3312 = vpop.xlane.xlu0 %3311
      %v3313 = vsel %vm485, %v3287, 0.0
      %3314 = vadd.xlane.f32.xlu0 %v3313
      %v3315 = vpop.xlane.xlu0 %3314
      %v3316 = vsel %vm485, %v3288, 0.0
      %3317 = vadd.xlane.f32.xlu0 %v3316
      %v3318 = vpop.xlane.xlu0 %3317
      %v3319 = vsel %vm485, %v3289, 0.0
      %3320 = vadd.xlane.f32.xlu0 %v3319
      %v3321 = vpop.xlane.xlu0 %3320
      %v3322 = vsel %vm485, %v3290, 0.0
      %3323 = vadd.xlane.f32.xlu0 %v3322
      %v3324 = vpop.xlane.xlu0 %3323
      %v3325 = vsel %vm485, %v3291, 0.0
      %3326 = vadd.xlane.f32.xlu0 %v3325
      %v3327 = vpop.xlane.xlu0 %3326
      %v3328 = vsel %vm485, %v3292, 0.0
      %3329 = vadd.xlane.f32.xlu0 %v3328
      %v3330 = vpop.xlane.xlu0 %3329
      %v3331 = vsel %vm485, %v3293, 0.0
      %3332 = vadd.xlane.f32.xlu0 %v3331
      %v3333 = vpop.xlane.xlu0 %3332
      %v3334 = vsel %vm485, %v3294, 0.0
      %3335 = vadd.xlane.f32.xlu0 %v3334
      %v3336 = vpop.xlane.xlu0 %3335
      %v3337 = vsel %vm485, %v3295, 0.0
      %3338 = vadd.xlane.f32.xlu0 %v3337
      %v3339 = vpop.xlane.xlu0 %3338
      %v3340 = vsel %vm485, %v3296, 0.0
      %3341 = vadd.xlane.f32.xlu0 %v3340
      %v3342 = vpop.xlane.xlu0 %3341
      %v3343 = vsel %vm485, %v3297, 0.0
      %3344 = vadd.xlane.f32.xlu0 %v3343
      %v3345 = vpop.xlane.xlu0 %3344
      %v3346 = vmul.f32 %v3300, %v534
      %v3347 = vmul.f32 %v3303, %v534
      %v3348 = vmul.f32 %v3306, %v534
      %v3349 = vmul.f32 %v3309, %v534
      %v3350 = vmul.f32 %v3312, %v534
      %v3351 = vmul.f32 %v3315, %v534
      %v3352 = vmul.f32 %v3318, %v534
      %v3353 = vmul.f32 %v3321, %v534
      %v3354 = vmul.f32 %v3324, %v534
      %v3355 = vmul.f32 %v3327, %v534
      %v3356 = vmul.f32 %v3330, %v534
      %v3357 = vmul.f32 %v3333, %v534
      %v3358 = vmul.f32 %v3336, %v534
      %v3359 = vmul.f32 %v3339, %v534
      %v3360 = vmul.f32 %v3342, %v534
      %v3361 = vmul.f32 %v3345, %v534
      %v3362 = vsub.f32 %v3282, %v3346
      %v3363 = vsub.f32 %v3283, %v3347
      %v3364 = vsub.f32 %v3284, %v3348
      %v3365 = vsub.f32 %v3285, %v3349
      %v3366 = vsub.f32 %v3286, %v3350
      %v3367 = vsub.f32 %v3287, %v3351
      %v3368 = vsub.f32 %v3288, %v3352
      %v3369 = vsub.f32 %v3289, %v3353
      %v3370 = vsub.f32 %v3290, %v3354
      %v3371 = vsub.f32 %v3291, %v3355
      %v3372 = vsub.f32 %v3292, %v3356
      %v3373 = vsub.f32 %v3293, %v3357
      %v3374 = vsub.f32 %v3294, %v3358
      %v3375 = vsub.f32 %v3295, %v3359
      %v3376 = vsub.f32 %v3296, %v3360
      %v3377 = vsub.f32 %v3297, %v3361
      %v3378 = vmul.f32 %v3362, %v3362
      %v3379 = vmul.f32 %v3363, %v3363
      %v3380 = vmul.f32 %v3364, %v3364
      %v3381 = vmul.f32 %v3365, %v3365
      %v3382 = vmul.f32 %v3366, %v3366
      %v3383 = vmul.f32 %v3367, %v3367
      %v3384 = vmul.f32 %v3368, %v3368
      %v3385 = vmul.f32 %v3369, %v3369
      %v3386 = vmul.f32 %v3370, %v3370
      %v3387 = vmul.f32 %v3371, %v3371
      %v3388 = vmul.f32 %v3372, %v3372
      %v3389 = vmul.f32 %v3373, %v3373
      %v3390 = vmul.f32 %v3374, %v3374
      %v3391 = vmul.f32 %v3375, %v3375
      %v3392 = vmul.f32 %v3376, %v3376
      %v3393 = vmul.f32 %v3377, %v3377
      %v3394 = vsel %vm485, %v3378, 0.0
      %3395 = vadd.xlane.f32.xlu0 %v3394
      %v3396 = vpop.xlane.xlu0 %3395
      %v3397 = vsel %vm485, %v3379, 0.0
      %3398 = vadd.xlane.f32.xlu0 %v3397
      %v3399 = vpop.xlane.xlu0 %3398
      %v3400 = vsel %vm485, %v3380, 0.0
      %3401 = vadd.xlane.f32.xlu0 %v3400
      %v3402 = vpop.xlane.xlu0 %3401
      %v3403 = vsel %vm485, %v3381, 0.0
      %3404 = vadd.xlane.f32.xlu0 %v3403
      %v3405 = vpop.xlane.xlu0 %3404
      %v3406 = vsel %vm485, %v3382, 0.0
      %3407 = vadd.xlane.f32.xlu0 %v3406
      %v3408 = vpop.xlane.xlu0 %3407
      %v3409 = vsel %vm485, %v3383, 0.0
      %3410 = vadd.xlane.f32.xlu0 %v3409
      %v3411 = vpop.xlane.xlu0 %3410
      %v3412 = vsel %vm485, %v3384, 0.0
      %3413 = vadd.xlane.f32.xlu0 %v3412
      %v3414 = vpop.xlane.xlu0 %3413
      %v3415 = vsel %vm485, %v3385, 0.0
      %3416 = vadd.xlane.f32.xlu0 %v3415
      %v3417 = vpop.xlane.xlu0 %3416
      %v3418 = vsel %vm485, %v3386, 0.0
      %3419 = vadd.xlane.f32.xlu0 %v3418
      %v3420 = vpop.xlane.xlu0 %3419
      %v3421 = vsel %vm485, %v3387, 0.0
      %3422 = vadd.xlane.f32.xlu0 %v3421
      %v3423 = vpop.xlane.xlu0 %3422
      %v3424 = vsel %vm485, %v3388, 0.0
      %3425 = vadd.xlane.f32.xlu0 %v3424
      %v3426 = vpop.xlane.xlu0 %3425
      %v3427 = vsel %vm485, %v3389, 0.0
      %3428 = vadd.xlane.f32.xlu0 %v3427
      %v3429 = vpop.xlane.xlu0 %3428
      %v3430 = vsel %vm485, %v3390, 0.0
      %3431 = vadd.xlane.f32.xlu0 %v3430
      %v3432 = vpop.xlane.xlu0 %3431
      %v3433 = vsel %vm485, %v3391, 0.0
      %3434 = vadd.xlane.f32.xlu0 %v3433
      %v3435 = vpop.xlane.xlu0 %3434
      %v3436 = vsel %vm485, %v3392, 0.0
      %3437 = vadd.xlane.f32.xlu0 %v3436
      %v3438 = vpop.xlane.xlu0 %3437
      %v3439 = vsel %vm485, %v3393, 0.0
      %3440 = vadd.xlane.f32.xlu0 %v3439
      %v3441 = vpop.xlane.xlu0 %3440
      %v3442 = vmul.f32 %v3396, %v534
      %v3443 = vmul.f32 %v3399, %v534
      %v3444 = vmul.f32 %v3402, %v534
      %v3445 = vmul.f32 %v3405, %v534
      %v3446 = vmul.f32 %v3408, %v534
      %v3447 = vmul.f32 %v3411, %v534
      %v3448 = vmul.f32 %v3414, %v534
      %v3449 = vmul.f32 %v3417, %v534
      %v3450 = vmul.f32 %v3420, %v534
      %v3451 = vmul.f32 %v3423, %v534
      %v3452 = vmul.f32 %v3426, %v534
      %v3453 = vmul.f32 %v3429, %v534
      %v3454 = vmul.f32 %v3432, %v534
      %v3455 = vmul.f32 %v3435, %v534
      %v3456 = vmul.f32 %v3438, %v534
      %v3457 = vmul.f32 %v3441, %v534
      %v3458 = vadd.f32 %v3442, 1e-05
      %v3459 = vadd.f32 %v3443, 1e-05
      %v3460 = vadd.f32 %v3444, 1e-05
      %v3461 = vadd.f32 %v3445, 1e-05
      %v3462 = vadd.f32 %v3446, 1e-05
      %v3463 = vadd.f32 %v3447, 1e-05
      %v3464 = vadd.f32 %v3448, 1e-05
      %v3465 = vadd.f32 %v3449, 1e-05
      %v3466 = vadd.f32 %v3450, 1e-05
      %v3467 = vadd.f32 %v3451, 1e-05
      %v3468 = vadd.f32 %v3452, 1e-05
      %v3469 = vadd.f32 %v3453, 1e-05
      %v3470 = vadd.f32 %v3454, 1e-05
      %v3471 = vadd.f32 %v3455, 1e-05
      %v3472 = vadd.f32 %v3456, 1e-05
      %v3473 = vadd.f32 %v3457, 1e-05
      %v3474 = vrsqrt.pop %v3458
      %v3475 = vrsqrt.pop %v3459
      %v3476 = vrsqrt.pop %v3460
      %v3477 = vrsqrt.pop %v3461
      %v3478 = vrsqrt.pop %v3462
      %v3479 = vrsqrt.pop %v3463
      %v3480 = vrsqrt.pop %v3464
      %v3481 = vrsqrt.pop %v3465
      %v3482 = vrsqrt.pop %v3466
      %v3483 = vrsqrt.pop %v3467
      %v3484 = vrsqrt.pop %v3468
      %v3485 = vrsqrt.pop %v3469
      %v3486 = vrsqrt.pop %v3470
      %v3487 = vrsqrt.pop %v3471
      %v3488 = vrsqrt.pop %v3472
      %v3489 = vrsqrt.pop %v3473
      %v3490 = vmul.f32 %v3362, %v3474
      %v3491 = vmul.f32 %v3363, %v3475
      %v3492 = vmul.f32 %v3364, %v3476
      %v3493 = vmul.f32 %v3365, %v3477
      %v3494 = vmul.f32 %v3366, %v3478
      %v3495 = vmul.f32 %v3367, %v3479
      %v3496 = vmul.f32 %v3368, %v3480
      %v3497 = vmul.f32 %v3369, %v3481
      %v3498 = vmul.f32 %v3370, %v3482
      %v3499 = vmul.f32 %v3371, %v3483
      %v3500 = vmul.f32 %v3372, %v3484
      %v3501 = vmul.f32 %v3373, %v3485
      %v3502 = vmul.f32 %v3374, %v3486
      %v3503 = vmul.f32 %v3375, %v3487
      %v3504 = vmul.f32 %v3376, %v3488
      %v3505 = vmul.f32 %v3377, %v3489
      %v3506 = vld [vmem:[%s8] sm:$0x1]
      %v3508 = vlaneseq
      %v3509 = vshrl.u32 %v3508, 7
      %v3510 = vsub.s32 0, %v3509
      %v3511 = vrot.slane %v3506, %v3510
      %v3513 = vmul.f32 %v3490, %v3511
      %v3514 = vmul.f32 %v3491, %v3511
      %v3515 = vmul.f32 %v3492, %v3511
      %v3516 = vmul.f32 %v3493, %v3511
      %v3517 = vmul.f32 %v3494, %v3511
      %v3518 = vmul.f32 %v3495, %v3511
      %v3519 = vmul.f32 %v3496, %v3511
      %v3520 = vmul.f32 %v3497, %v3511
      %v3521 = vmul.f32 %v3498, %v3511
      %v3522 = vmul.f32 %v3499, %v3511
      %v3523 = vmul.f32 %v3500, %v3511
      %v3524 = vmul.f32 %v3501, %v3511
      %v3525 = vmul.f32 %v3502, %v3511
      %v3526 = vmul.f32 %v3503, %v3511
      %v3527 = vmul.f32 %v3504, %v3511
      %v3528 = vmul.f32 %v3505, %v3511
      %v3529 = vld [vmem:[%s9] sm:$0x1]
      %v3531 = vlaneseq
      %v3532 = vshrl.u32 %v3531, 7
      %v3533 = vsub.s32 0, %v3532
      %v3534 = vrot.slane %v3529, %v3533
      %v3536 = vadd.f32 %v3513, %v3534
      %v3537 = vadd.f32 %v3514, %v3534
      %v3538 = vadd.f32 %v3515, %v3534
      %v3539 = vadd.f32 %v3516, %v3534
      %v3540 = vadd.f32 %v3517, %v3534
      %v3541 = vadd.f32 %v3518, %v3534
      %v3542 = vadd.f32 %v3519, %v3534
      %v3543 = vadd.f32 %v3520, %v3534
      %v3544 = vadd.f32 %v3521, %v3534
      %v3545 = vadd.f32 %v3522, %v3534
      %v3546 = vadd.f32 %v3523, %v3534
      %v3547 = vadd.f32 %v3524, %v3534
      %v3548 = vadd.f32 %v3525, %v3534
      %v3549 = vadd.f32 %v3526, %v3534
      %v3550 = vadd.f32 %v3527, %v3534
      %v3551 = vadd.f32 %v3528, %v3534
      %v3552 = vpack.c.bf16 %v3537, %v3536
      %v3553 = vpack.c.bf16 %v3539, %v3538
      %v3554 = vpack.c.bf16 %v3541, %v3540
      %v3555 = vpack.c.bf16 %v3543, %v3542
      %v3556 = vpack.c.bf16 %v3545, %v3544
      %v3557 = vpack.c.bf16 %v3547, %v3546
      %v3558 = vpack.c.bf16 %v3549, %v3548
      %v3559 = vpack.c.bf16 %v3551, %v3550
      %v3560 = vld [vmem:[%s10] sm:$0xf]
      %v3561 = vld [vmem:[%s10 + $0x4] sm:$0xf]
      %v3562 = vld [vmem:[%s10 + $0x8] sm:$0xf]
      %v3563 = vld [vmem:[%s10 + $0xc] sm:$0xf]
      %v3564 = vld [vmem:[%s11] sm:$0x1]
      %v3566 = vlaneseq
      %v3567 = vshrl.u32 %v3566, 7
      %v3568 = vsub.s32 0, %v3567
      %v3569 = vrot.slane %v3564, %v3568
      %v3575 = vunpack.c.l.b16 %v3560
      %v3576 = vunpack.c.l.b16 %v3561
      %v3577 = vunpack.c.l.b16 %v3562
      %v3578 = vunpack.c.l.b16 %v3563
      %v3579 = vpack.c.b16 %v3576, %v3575
      %v3580 = vpack.c.b16 %v3578, %v3577
      %v3584 = vsel %vm485, %v3552, 0
      %v3587 = vsel %vm485, %v3553, 0
      %v3590 = vsel %vm485, %v3554, 0
      %v3593 = vsel %vm485, %v3555, 0
      %v3596 = vsel %vm485, %v3556, 0
      %v3599 = vsel %vm485, %v3557, 0
      %v3602 = vsel %vm485, %v3558, 0
      %v3605 = vsel %vm485, %v3559, 0
      %3607 = vmatprep.subr.bf16.mxu0 0
      %3608 = vmatpush1.bf16.msra.mxu0 %v3579
      %3609 = vmatprep.subr.bf16.mxu0 0
      %3610 = vmatpush1.bf16.msra.mxu0 %v3580
      %3611 = vmatprep.subr.bf16.mxu0 0
      %3612 = vmatpush1.bf16.msra.mxu0 0
      %3613 = vmatprep.subr.bf16.mxu0 0
      %3614 = vmatpush1.bf16.msra.mxu0 0
      %3615 = vmatprep.subr.bf16.mxu0 0
      %3616 = vmatpush1.bf16.msra.mxu0 0
      %3617 = vmatprep.subr.bf16.mxu0 0
      %3618 = vmatpush1.bf16.msra.mxu0 0
      %3619 = vmatprep.subr.bf16.mxu0 0
      %3620 = vmatpush1.bf16.msra.mxu0 0
      %3621 = vmatprep.subr.bf16.mxu0 0
      %3622 = vmatpush1.bf16.msra.mxu0 0
      %3623 = vmatprep.subr.bf16.mxu0 0
      %3624 = vmatpush1.bf16.msra.mxu0 0
      %3625 = vmatprep.subr.bf16.mxu0 0
      %3626 = vmatpush1.bf16.msra.mxu0 0
      %3627 = vmatprep.subr.bf16.mxu0 0
      %3628 = vmatpush1.bf16.msra.mxu0 0
      %3629 = vmatprep.subr.bf16.mxu0 0
      %3630 = vmatpush1.bf16.msra.mxu0 0
      %3631 = vmatprep.subr.bf16.mxu0 0
      %3632 = vmatpush1.bf16.msra.mxu0 0
      %3633 = vmatprep.subr.bf16.mxu0 0
      %3634 = vmatpush1.bf16.msra.mxu0 0
      %3635 = vmatprep.subr.bf16.mxu0 0
      %3636 = vmatpush1.bf16.msra.mxu0 0
      %3637 = vmatprep.subr.bf16.mxu0 0
      %3638 = vmatpush1.bf16.msra.mxu0 0
      %3639 = vmatprep.mubr.bf16.mxu0 0
      %3640 = vmatmul.mubr.bf16.gmra.mrb[0].mxu0 %v3584
      %v3641 = vpop.f32.mrb[0].mxu0
      %v3642 = vadd.f32 %v3569, %v3641
      %v3643 = vpop.f32.mrb[0].mxu0
      %v3644 = vpop.f32.mrb[0].mxu0
      %v3645 = vadd.f32 %v3569, %v3644
      %v3646 = vpop.f32.mrb[0].mxu0
      %3647 = vmatprep.mubr.bf16.mxu0 0
      %3648 = vmatmul.mubr.bf16.gmra.mrb[0].mxu0 %v3587
      %v3649 = vpop.f32.mrb[0].mxu0
      %v3650 = vadd.f32 %v3569, %v3649
      %v3651 = vpop.f32.mrb[0].mxu0
      %v3652 = vpop.f32.mrb[0].mxu0
      %v3653 = vadd.f32 %v3569, %v3652
      %v3654 = vpop.f32.mrb[0].mxu0
      %3655 = vmatprep.mubr.bf16.mxu0 0
      %3656 = vmatmul.mubr.bf16.gmra.mrb[0].mxu0 %v3590
      %v3657 = vpop.f32.mrb[0].mxu0
      %v3658 = vadd.f32 %v3569, %v3657
      %v3659 = vpop.f32.mrb[0].mxu0
      %v3660 = vpop.f32.mrb[0].mxu0
      %v3661 = vadd.f32 %v3569, %v3660
      %v3662 = vpop.f32.mrb[0].mxu0
      %3663 = vmatprep.mubr.bf16.mxu0 0
      %3664 = vmatmul.mubr.bf16.gmra.mrb[0].mxu0 %v3593
      %v3665 = vpop.f32.mrb[0].mxu0
      %v3666 = vadd.f32 %v3569, %v3665
      %v3667 = vpop.f32.mrb[0].mxu0
      %v3668 = vpop.f32.mrb[0].mxu0
      %v3669 = vadd.f32 %v3569, %v3668
      %v3670 = vpop.f32.mrb[0].mxu0
      %3671 = vmatprep.mubr.bf16.mxu0 0
      %3672 = vmatmul.mubr.bf16.gmra.mrb[0].mxu0 %v3596
      %v3673 = vpop.f32.mrb[0].mxu0
      %v3674 = vadd.f32 %v3569, %v3673
      %v3675 = vpop.f32.mrb[0].mxu0
      %v3676 = vpop.f32.mrb[0].mxu0
      %v3677 = vadd.f32 %v3569, %v3676
      %v3678 = vpop.f32.mrb[0].mxu0
      %3679 = vmatprep.mubr.bf16.mxu0 0
      %3680 = vmatmul.mubr.bf16.gmra.mrb[0].mxu0 %v3599
      %v3681 = vpop.f32.mrb[0].mxu0
      %v3682 = vadd.f32 %v3569, %v3681
      %v3683 = vpop.f32.mrb[0].mxu0
      %v3684 = vpop.f32.mrb[0].mxu0
      %v3685 = vadd.f32 %v3569, %v3684
      %v3686 = vpop.f32.mrb[0].mxu0
      %3687 = vmatprep.mubr.bf16.mxu0 0
      %3688 = vmatmul.mubr.bf16.gmra.mrb[0].mxu0 %v3602
      %v3689 = vpop.f32.mrb[0].mxu0
      %v3690 = vadd.f32 %v3569, %v3689
      %v3691 = vpop.f32.mrb[0].mxu0
      %v3692 = vpop.f32.mrb[0].mxu0
      %v3693 = vadd.f32 %v3569, %v3692
      %v3694 = vpop.f32.mrb[0].mxu0
      %3695 = vmatprep.mubr.bf16.mxu0 0
      %3696 = vmatmul.mubr.bf16.gmra.mrb[0].mxu0 %v3605
      %v3697 = vpop.f32.mrb[0].mxu0
      %v3698 = vadd.f32 %v3569, %v3697
      %v3699 = vpop.f32.mrb[0].mxu0
      %v3700 = vpop.f32.mrb[0].mxu0
      %v3701 = vadd.f32 %v3569, %v3700
      %v3702 = vpop.f32.mrb[0].mxu0
      %3703 = vdwg.mxu0
      %v3704 = vmul.f32 %v3642, 1.702
      %v3705 = vmul.f32 %v3645, 1.702
      %v3706 = vmul.f32 %v3650, 1.702
      %v3707 = vmul.f32 %v3653, 1.702
      %v3708 = vmul.f32 %v3658, 1.702
      %v3709 = vmul.f32 %v3661, 1.702
      %v3710 = vmul.f32 %v3666, 1.702
      %v3711 = vmul.f32 %v3669, 1.702
      %v3712 = vmul.f32 %v3674, 1.702
      %v3713 = vmul.f32 %v3677, 1.702
      %v3714 = vmul.f32 %v3682, 1.702
      %v3715 = vmul.f32 %v3685, 1.702
      %v3716 = vmul.f32 %v3690, 1.702
      %v3717 = vmul.f32 %v3693, 1.702
      %v3718 = vmul.f32 %v3698, 1.702
      %v3719 = vmul.f32 %v3701, 1.702
      %v3720 = vxor.u32 %v3704, 2147483648
      %v3721 = vxor.u32 %v3705, 2147483648
      %v3722 = vxor.u32 %v3706, 2147483648
      %v3723 = vxor.u32 %v3707, 2147483648
      %v3724 = vxor.u32 %v3708, 2147483648
      %v3725 = vxor.u32 %v3709, 2147483648
      %v3726 = vxor.u32 %v3710, 2147483648
      %v3727 = vxor.u32 %v3711, 2147483648
      %v3728 = vxor.u32 %v3712, 2147483648
      %v3729 = vxor.u32 %v3713, 2147483648
      %v3730 = vxor.u32 %v3714, 2147483648
      %v3731 = vxor.u32 %v3715, 2147483648
      %v3732 = vxor.u32 %v3716, 2147483648
      %v3733 = vxor.u32 %v3717, 2147483648
      %v3734 = vxor.u32 %v3718, 2147483648
      %v3735 = vxor.u32 %v3719, 2147483648
      %v3736 = vmul.f32 %v3720, 1.442695
      %v3737 = vpow.pop %v3736
      %v3738 = vmul.f32 %v3721, 1.442695
      %v3739 = vpow.pop %v3738
      %v3740 = vmul.f32 %v3722, 1.442695
      %v3741 = vpow.pop %v3740
      %v3742 = vmul.f32 %v3723, 1.442695
      %v3743 = vpow.pop %v3742
      %v3744 = vmul.f32 %v3724, 1.442695
      %v3745 = vpow.pop %v3744
      %v3746 = vmul.f32 %v3725, 1.442695
      %v3747 = vpow.pop %v3746
      %v3748 = vmul.f32 %v3726, 1.442695
      %v3749 = vpow.pop %v3748
      %v3750 = vmul.f32 %v3727, 1.442695
      %v3751 = vpow.pop %v3750
      %v3752 = vmul.f32 %v3728, 1.442695
      %v3753 = vpow.pop %v3752
      %v3754 = vmul.f32 %v3729, 1.442695
      %v3755 = vpow.pop %v3754
      %v3756 = vmul.f32 %v3730, 1.442695
      %v3757 = vpow.pop %v3756
      %v3758 = vmul.f32 %v3731, 1.442695
      %v3759 = vpow.pop %v3758
      %v3760 = vmul.f32 %v3732, 1.442695
      %v3761 = vpow.pop %v3760
      %v3762 = vmul.f32 %v3733, 1.442695
      %v3763 = vpow.pop %v3762
      %v3764 = vmul.f32 %v3734, 1.442695
      %v3765 = vpow.pop %v3764
      %v3766 = vmul.f32 %v3735, 1.442695
      %v3767 = vpow.pop %v3766
      %v3768 = vadd.f32 %v3737, 1.0
      %v3769 = vadd.f32 %v3739, 1.0
      %v3770 = vadd.f32 %v3741, 1.0
      %v3771 = vadd.f32 %v3743, 1.0
      %v3772 = vadd.f32 %v3745, 1.0
      %v3773 = vadd.f32 %v3747, 1.0
      %v3774 = vadd.f32 %v3749, 1.0
      %v3775 = vadd.f32 %v3751, 1.0
      %v3776 = vadd.f32 %v3753, 1.0
      %v3777 = vadd.f32 %v3755, 1.0
      %v3778 = vadd.f32 %v3757, 1.0
      %v3779 = vadd.f32 %v3759, 1.0
      %v3780 = vadd.f32 %v3761, 1.0
      %v3781 = vadd.f32 %v3763, 1.0
      %v3782 = vadd.f32 %v3765, 1.0
      %v3783 = vadd.f32 %v3767, 1.0
      %v3784 = vrcp.pop %v3768
      %v3785 = vmul.f32 1.0, %v3784
      %v3786 = vrcp.pop %v3769
      %v3787 = vmul.f32 1.0, %v3786
      %v3788 = vrcp.pop %v3770
      %v3789 = vmul.f32 1.0, %v3788
      %v3790 = vrcp.pop %v3771
      %v3791 = vmul.f32 1.0, %v3790
      %v3792 = vrcp.pop %v3772
      %v3793 = vmul.f32 1.0, %v3792
      %v3794 = vrcp.pop %v3773
      %v3795 = vmul.f32 1.0, %v3794
      %v3796 = vrcp.pop %v3774
      %v3797 = vmul.f32 1.0, %v3796
      %v3798 = vrcp.pop %v3775
      %v3799 = vmul.f32 1.0, %v3798
      %v3800 = vrcp.pop %v3776
      %v3801 = vmul.f32 1.0, %v3800
      %v3802 = vrcp.pop %v3777
      %v3803 = vmul.f32 1.0, %v3802
      %v3804 = vrcp.pop %v3778
      %v3805 = vmul.f32 1.0, %v3804
      %v3806 = vrcp.pop %v3779
      %v3807 = vmul.f32 1.0, %v3806
      %v3808 = vrcp.pop %v3780
      %v3809 = vmul.f32 1.0, %v3808
      %v3810 = vrcp.pop %v3781
      %v3811 = vmul.f32 1.0, %v3810
      %v3812 = vrcp.pop %v3782
      %v3813 = vmul.f32 1.0, %v3812
      %v3814 = vrcp.pop %v3783
      %v3815 = vmul.f32 1.0, %v3814
      %v3816 = vmul.f32 %v3642, %v3785
      %v3817 = vmul.f32 %v3645, %v3787
      %v3818 = vmul.f32 %v3650, %v3789
      %v3819 = vmul.f32 %v3653, %v3791
      %v3820 = vmul.f32 %v3658, %v3793
      %v3821 = vmul.f32 %v3661, %v3795
      %v3822 = vmul.f32 %v3666, %v3797
      %v3823 = vmul.f32 %v3669, %v3799
      %v3824 = vmul.f32 %v3674, %v3801
      %v3825 = vmul.f32 %v3677, %v3803
      %v3826 = vmul.f32 %v3682, %v3805
      %v3827 = vmul.f32 %v3685, %v3807
      %v3828 = vmul.f32 %v3690, %v3809
      %v3829 = vmul.f32 %v3693, %v3811
      %v3830 = vmul.f32 %v3698, %v3813
      %v3831 = vmul.f32 %v3701, %v3815
      %v3832 = vpack.c.bf16 %v3817, %v3816
      %v3833 = vpack.c.bf16 %v3819, %v3818
      %v3834 = vpack.c.bf16 %v3821, %v3820
      %v3835 = vpack.c.bf16 %v3823, %v3822
      %v3836 = vpack.c.bf16 %v3825, %v3824
      %v3837 = vpack.c.bf16 %v3827, %v3826
      %v3838 = vpack.c.bf16 %v3829, %v3828
      %v3839 = vpack.c.bf16 %v3831, %v3830
      %v3840 = vld [vmem:[%s12] sm:$0xf]
      %v3841 = vld [vmem:[%s12 + $0x4] sm:$0xf]
      %v3842 = vld [vmem:[%s12 + $0x8] sm:$0xf]
      %v3843 = vld [vmem:[%s12 + $0xc] sm:$0xf]
      %v3844 = vld [vmem:[%s12 + $0x10] sm:$0xf]
      %v3845 = vld [vmem:[%s12 + $0x14] sm:$0xf]
      %v3846 = vld [vmem:[%s12 + $0x18] sm:$0xf]
      %v3847 = vld [vmem:[%s12 + $0x1c] sm:$0xf]
      %v3848 = vld [vmem:[%s12 + $0x20] sm:$0xf]
      %v3849 = vld [vmem:[%s12 + $0x24] sm:$0xf]
      %v3850 = vld [vmem:[%s12 + $0x28] sm:$0xf]
      %v3851 = vld [vmem:[%s12 + $0x2c] sm:$0xf]
      %v3852 = vld [vmem:[%s12 + $0x30] sm:$0xf]
      %v3853 = vld [vmem:[%s12 + $0x34] sm:$0xf]
      %v3854 = vld [vmem:[%s12 + $0x38] sm:$0xf]
      %v3855 = vld [vmem:[%s12 + $0x3c] sm:$0xf]
      %v3856 = vld [vmem:[%s13] sm:$0x1]
      %v3858 = vlaneseq
      %v3859 = vshrl.u32 %v3858, 7
      %v3860 = vsub.s32 0, %v3859
      %v3861 = vrot.slane %v3856, %v3860
      %v3879 = vunpack.c.l.b16 %v3840
      %v3880 = vunpack.c.l.b16 %v3841
      %v3881 = vunpack.c.l.b16 %v3842
      %v3882 = vunpack.c.l.b16 %v3843
      %v3883 = vunpack.c.l.b16 %v3844
      %v3884 = vunpack.c.l.b16 %v3845
      %v3885 = vunpack.c.l.b16 %v3846
      %v3886 = vunpack.c.l.b16 %v3847
      %v3887 = vunpack.c.l.b16 %v3848
      %v3888 = vunpack.c.l.b16 %v3849
      %v3889 = vunpack.c.l.b16 %v3850
      %v3890 = vunpack.c.l.b16 %v3851
      %v3891 = vunpack.c.l.b16 %v3852
      %v3892 = vunpack.c.l.b16 %v3853
      %v3893 = vunpack.c.l.b16 %v3854
      %v3894 = vunpack.c.l.b16 %v3855
      %v3895 = vpack.c.b16 %v3880, %v3879
      %v3896 = vpack.c.b16 %v3882, %v3881
      %v3897 = vpack.c.b16 %v3884, %v3883
      %v3898 = vpack.c.b16 %v3886, %v3885
      %v3899 = vpack.c.b16 %v3888, %v3887
      %v3900 = vpack.c.b16 %v3890, %v3889
      %v3901 = vpack.c.b16 %v3892, %v3891
      %v3902 = vpack.c.b16 %v3894, %v3893
      %3911 = vmatprep.subr.bf16.mxu0 0
      %3912 = vmatpush1.bf16.msra.mxu0 %v3895
      %3913 = vmatprep.subr.bf16.mxu0 0
      %3914 = vmatpush1.bf16.msra.mxu0 %v3896
      %3915 = vmatprep.subr.bf16.mxu0 0
      %3916 = vmatpush1.bf16.msra.mxu0 %v3897
      %3917 = vmatprep.subr.bf16.mxu0 0
      %3918 = vmatpush1.bf16.msra.mxu0 %v3898
      %3919 = vmatprep.subr.bf16.mxu0 0
      %3920 = vmatpush1.bf16.msra.mxu0 %v3899
      %3921 = vmatprep.subr.bf16.mxu0 0
      %3922 = vmatpush1.bf16.msra.mxu0 %v3900
      %3923 = vmatprep.subr.bf16.mxu0 0
      %3924 = vmatpush1.bf16.msra.mxu0 %v3901
      %3925 = vmatprep.subr.bf16.mxu0 0
      %3926 = vmatpush1.bf16.msra.mxu0 %v3902
      %3927 = vmatprep.subr.bf16.mxu0 0
      %3928 = vmatpush1.bf16.msra.mxu0 0
      %3929 = vmatprep.subr.bf16.mxu0 0
      %3930 = vmatpush1.bf16.msra.mxu0 0
      %3931 = vmatprep.subr.bf16.mxu0 0
      %3932 = vmatpush1.bf16.msra.mxu0 0
      %3933 = vmatprep.subr.bf16.mxu0 0
      %3934 = vmatpush1.bf16.msra.mxu0 0
      %3935 = vmatprep.subr.bf16.mxu0 0
      %3936 = vmatpush1.bf16.msra.mxu0 0
      %3937 = vmatprep.subr.bf16.mxu0 0
      %3938 = vmatpush1.bf16.msra.mxu0 0
      %3939 = vmatprep.subr.bf16.mxu0 0
      %3940 = vmatpush1.bf16.msra.mxu0 0
      %3941 = vmatprep.subr.bf16.mxu0 0
      %3942 = vmatpush1.bf16.msra.mxu0 0
      %3943 = vmatprep.mubr.bf16.mxu0 0
      %3944 = vmatmul.mubr.bf16.gmra.mrb[0].mxu0 %v3832
      %v3945 = vpop.f32.mrb[0].mxu0
      %v3946 = vadd.f32 %v3861, %v3945
      %v3947 = vpop.f32.mrb[0].mxu0
      %v3948 = vpop.f32.mrb[0].mxu0
      %v3949 = vadd.f32 %v3861, %v3948
      %v3950 = vpop.f32.mrb[0].mxu0
      %3951 = vmatprep.mubr.bf16.mxu0 0
      %3952 = vmatmul.mubr.bf16.gmra.mrb[0].mxu0 %v3833
      %v3953 = vpop.f32.mrb[0].mxu0
      %v3954 = vadd.f32 %v3861, %v3953
      %v3955 = vpop.f32.mrb[0].mxu0
      %v3956 = vpop.f32.mrb[0].mxu0
      %v3957 = vadd.f32 %v3861, %v3956
      %v3958 = vpop.f32.mrb[0].mxu0
      %3959 = vmatprep.mubr.bf16.mxu0 0
      %3960 = vmatmul.mubr.bf16.gmra.mrb[0].mxu0 %v3834
      %v3961 = vpop.f32.mrb[0].mxu0
      %v3962 = vadd.f32 %v3861, %v3961
      %v3963 = vpop.f32.mrb[0].mxu0
      %v3964 = vpop.f32.mrb[0].mxu0
      %v3965 = vadd.f32 %v3861, %v3964
      %v3966 = vpop.f32.mrb[0].mxu0
      %3967 = vmatprep.mubr.bf16.mxu0 0
      %3968 = vmatmul.mubr.bf16.gmra.mrb[0].mxu0 %v3835
      %v3969 = vpop.f32.mrb[0].mxu0
      %v3970 = vadd.f32 %v3861, %v3969
      %v3971 = vpop.f32.mrb[0].mxu0
      %v3972 = vpop.f32.mrb[0].mxu0
      %v3973 = vadd.f32 %v3861, %v3972
      %v3974 = vpop.f32.mrb[0].mxu0
      %3975 = vmatprep.mubr.bf16.mxu0 0
      %3976 = vmatmul.mubr.bf16.gmra.mrb[0].mxu0 %v3836
      %v3977 = vpop.f32.mrb[0].mxu0
      %v3978 = vadd.f32 %v3861, %v3977
      %v3979 = vpop.f32.mrb[0].mxu0
      %v3980 = vpop.f32.mrb[0].mxu0
      %v3981 = vadd.f32 %v3861, %v3980
      %v3982 = vpop.f32.mrb[0].mxu0
      %3983 = vmatprep.mubr.bf16.mxu0 0
      %3984 = vmatmul.mubr.bf16.gmra.mrb[0].mxu0 %v3837
      %v3985 = vpop.f32.mrb[0].mxu0
      %v3986 = vadd.f32 %v3861, %v3985
      %v3987 = vpop.f32.mrb[0].mxu0
      %v3988 = vpop.f32.mrb[0].mxu0
      %v3989 = vadd.f32 %v3861, %v3988
      %v3990 = vpop.f32.mrb[0].mxu0
      %3991 = vmatprep.mubr.bf16.mxu0 0
      %3992 = vmatmul.mubr.bf16.gmra.mrb[0].mxu0 %v3838
      %v3993 = vpop.f32.mrb[0].mxu0
      %v3994 = vadd.f32 %v3861, %v3993
      %v3995 = vpop.f32.mrb[0].mxu0
      %v3996 = vpop.f32.mrb[0].mxu0
      %v3997 = vadd.f32 %v3861, %v3996
      %v3998 = vpop.f32.mrb[0].mxu0
      %3999 = vmatprep.mubr.bf16.mxu0 0
      %4000 = vmatmul.mubr.bf16.gmra.mrb[0].mxu0 %v3839
      %v4001 = vpop.f32.mrb[0].mxu0
      %v4002 = vadd.f32 %v3861, %v4001
      %v4003 = vpop.f32.mrb[0].mxu0
      %v4004 = vpop.f32.mrb[0].mxu0
      %v4005 = vadd.f32 %v3861, %v4004
      %v4006 = vpop.f32.mrb[0].mxu0
      %4007 = vdwg.mxu0
      %v4008 = vadd.f32 %v3946, %v3282
      %v4009 = vadd.f32 %v3949, %v3283
      %v4010 = vadd.f32 %v3954, %v3284
      %v4011 = vadd.f32 %v3957, %v3285
      %v4012 = vadd.f32 %v3962, %v3286
      %v4013 = vadd.f32 %v3965, %v3287
      %v4014 = vadd.f32 %v3970, %v3288
      %v4015 = vadd.f32 %v3973, %v3289
      %v4016 = vadd.f32 %v3978, %v3290
      %v4017 = vadd.f32 %v3981, %v3291
      %v4018 = vadd.f32 %v3986, %v3292
      %v4019 = vadd.f32 %v3989, %v3293
      %v4020 = vadd.f32 %v3994, %v3294
      %v4021 = vadd.f32 %v3997, %v3295
      %v4022 = vadd.f32 %v4002, %v3296
      %v4023 = vadd.f32 %v4005, %v3297
      %4024 = vst.msk [vmem:[%s467] sm:$0xff] %vm485, %v4008
      %4025 = vst.msk [vmem:[%s467 + $0x8] sm:$0xff] %vm485, %v4009
      %4026 = vst.msk [vmem:[%s467 + $0x10] sm:$0xff] %vm485, %v4010
      %4027 = vst.msk [vmem:[%s467 + $0x18] sm:$0xff] %vm485, %v4011
      %4028 = vst.msk [vmem:[%s467 + $0x20] sm:$0xff] %vm485, %v4012
      %4029 = vst.msk [vmem:[%s467 + $0x28] sm:$0xff] %vm485, %v4013
      %4030 = vst.msk [vmem:[%s467 + $0x30] sm:$0xff] %vm485, %v4014
      %4031 = vst.msk [vmem:[%s467 + $0x38] sm:$0xff] %vm485, %v4015
      %4032 = vst.msk [vmem:[%s467 + $0x40] sm:$0xff] %vm485, %v4016
      %4033 = vst.msk [vmem:[%s467 + $0x48] sm:$0xff] %vm485, %v4017
      %4034 = vst.msk [vmem:[%s467 + $0x50] sm:$0xff] %vm485, %v4018
      %4035 = vst.msk [vmem:[%s467 + $0x58] sm:$0xff] %vm485, %v4019
      %4036 = vst.msk [vmem:[%s467 + $0x60] sm:$0xff] %vm485, %v4020
      %4037 = vst.msk [vmem:[%s467 + $0x68] sm:$0xff] %vm485, %v4021
      %4038 = vst.msk [vmem:[%s467 + $0x70] sm:$0xff] %vm485, %v4022
      %4039 = vst.msk [vmem:[%s467 + $0x78] sm:$0xff] %vm485, %v4023
      %p4040 = scmp.lt.s32.totalorder %s25, 1
      %s4041 = scalar_select %p4040, %s25, 1
      %s4042 = smul.addr %s4041, 16
      %s4043 = smul.addr %s4042, 8
      %s4044 = scalar_lea.vmem %s14, %s4043
      // Predicated region
      $region77: #{tpu_custom_call.1} parent=75 // pred_check
        %p4045 = pneg %p342
      $region78: #{tpu_custom_call.1} parent=75 // pred_check_branch
        %4047 = sbr.rel (%p4045) target = $region80
      $region79: #{tpu_custom_call.1} parent=75 // pred_region
        _
      $region80: #{tpu_custom_call.1} parent=75 // pred_fallthru
        _
    $region76: #{tpu_custom_call.1} parent=5 // pred_fallthru
      _
    %p4048 = scmp.le.s32.totalorder 2, %s20
    // Predicated region
    $region81: #{tpu_custom_call.1} parent=5 // pred_check
      %p4049 = pneg %p4048
    $region82: #{tpu_custom_call.1} parent=5 // pred_check_branch
      %4051 = sbr.rel (%p4049) target = $region84
    $region83: #{tpu_custom_call.1} parent=5 // pred_region
      %s4052 = ssub.s32 %s20, 2
      // Predicated region
      $region85: #{tpu_custom_call.1} parent=83 // pred_check
        %p4053 = pneg %p348
      $region86: #{tpu_custom_call.1} parent=83 // pred_check_branch
        %4055 = sbr.rel (%p4053) target = $region88
      $region87: #{tpu_custom_call.1} parent=83 // pred_region
        %p4056 = scmp.lt.s32.totalorder %s26, 1
        %s4057 = scalar_select %p4056, %s26, 1
        %s4058 = smul.addr %s4057, 16
        %s4059 = smul.addr %s4058, 8
        %s4060 = scalar_lea.vmem %s14, %s4059
      $region88: #{tpu_custom_call.1} parent=83 // pred_fallthru
        _
    $region84: #{tpu_custom_call.1} parent=5 // pred_fallthru
      _
  $region6: #{tpu_custom_call.1} parent=0 // loop_footer
    %s24 = sadd.s32 1, %s20
  $region7: #{tpu_custom_call.1} parent=0 // loop_footer_branch
    %19 = sbr.rel target = $region3
  $region8: #{tpu_custom_call.1} parent=0 // loop_exit
    _

</llo_original>
